<compile_context>
chip_gen: v5e
topology: v5e:2x2
jax: 0.10.0
libtpu: 0.0.40
codegen_flags: <defaults>
</compile_context>

<pallas_src>
import math
from functools import partial

import jax
import jax.numpy as jnp
from jax.experimental import pallas as pl
from jax.experimental.pallas import tpu as pltpu


# Canonical per-layer parameter ordering (flat ref list passed to the fused kernel).
LAYER_PARAM_NAMES = (
    "sa_wq", "sa_bq", "sa_wkv", "sa_bkv", "sa_wo", "sa_bo", "ln1_g", "ln1_b",
    "ca_wq", "ca_bq", "ca_wkv", "ca_bkv", "ca_wo", "ca_bo", "ln2_g", "ln2_b",
    "w1", "b1", "w2", "b2", "ln3_g", "ln3_b",
)


# ----------------------------- fully fused forward kernel -----------------------------

def _fused_decoder_kernel(*refs, num_layers, nhead, B, S, Sm, eps, matmul_dtype):
    """Entire TransformerDecoder forward (all layers + output projection) in one kernel.

    refs layout: x (B*S, D), memory (B, Sm, D), num_layers groups of LAYER_PARAM_NAMES,
    w_out_pad (D, V_pad), b_out_pad (1, V_pad), out (B*S, V_pad).
    """
    n_lp = len(LAYER_PARAM_NAMES)
    x_ref, mem_ref = refs[0], refs[1]
    layer_refs = [refs[2 + i * n_lp: 2 + (i + 1) * n_lp] for i in range(num_layers)]
    w_out_ref = refs[2 + num_layers * n_lp]
    b_out_ref = refs[3 + num_layers * n_lp]
    out_ref = refs[4 + num_layers * n_lp]

    D = x_ref.shape[-1]
    Dh = D // nhead

    x = x_ref[...]                                   # (B*S, D) fp32, rows batch-major
    mem_blocks = [mem_ref[b] for b in range(B)]      # B x (Sm, D), read once, reused per layer

    def mm(a, w_ref):
        # MXU matmul with optional bf16 operands, fp32 accumulation.
        return jnp.dot(a.astype(matmul_dtype), w_ref[...].astype(matmul_dtype),
                       preferred_element_type=jnp.float32)

    def layer_norm(z, g_ref, b_ref):
        mu = jnp.mean(z, axis=-1, keepdims=True)
        var = jnp.mean((z - mu) ** 2, axis=-1, keepdims=True)
        return (z - mu) * jax.lax.rsqrt(var + eps) * g_ref[...] + b_ref[...]

    def attend_heads(qb, kb, vb):
        # qb: (Sq, D); kb, vb: (Skv, D).  Per-head lane slices; scale already folded into wq.
        outs = []
        for h in range(nhead):
            qh = qb[:, h * Dh:(h + 1) * Dh]
            kh = kb[:, h * Dh:(h + 1) * Dh]
            vh = vb[:, h * Dh:(h + 1) * Dh]
            s = jax.lax.dot_general(
                qh.astype(matmul_dtype), kh.astype(matmul_dtype),
                (((1,), (1,)), ((), ())), preferred_element_type=jnp.float32)   # (Sq, Skv)
            m = jnp.max(s, axis=-1, keepdims=True)
            p = jnp.exp(s - m)
            p = p / jnp.sum(p, axis=-1, keepdims=True)                          # exact softmax
            outs.append(jnp.dot(p.astype(matmul_dtype), vh.astype(matmul_dtype),
                                preferred_element_type=jnp.float32))            # (Sq, Dh)
        return jnp.concatenate(outs, axis=-1)                                   # (Sq, D)

    def mha(q_all, seq_q, kv_blocks, wq, bq, wkv, bkv, wo, bo):
        # Full-width projections: one (., D)@(D, D) for Q, one (., D)@(D, 2D) per batch for K|V.
        q = mm(q_all, wq) + bq[...]                                             # (B*seq_q, D)
        ctx = []
        for b in range(B):
            kv = mm(kv_blocks[b], wkv) + bkv[...]                               # (Skv, 2D)
            ctx.append(attend_heads(q[b * seq_q:(b + 1) * seq_q], kv[:, :D], kv[:, D:]))
        ctx = jnp.concatenate(ctx, axis=0)                                      # (B*seq_q, D)
        return mm(ctx, wo) + bo[...]

    for lr in layer_refs:
        (sa_wq, sa_bq, sa_wkv, sa_bkv, sa_wo, sa_bo, ln1_g, ln1_b,
         ca_wq, ca_bq, ca_wkv, ca_bkv, ca_wo, ca_bo, ln2_g, ln2_b,
         w1, b1, w2, b2, ln3_g, ln3_b) = lr

        # Self-attention block (post-norm, norm_first=False).  KV comes from aligned
        # per-batch row slices (S is a multiple of 8 sublanes).
        sa = mha(x, S, [x[b * S:(b + 1) * S] for b in range(B)],
                 sa_wq, sa_bq, sa_wkv, sa_bkv, sa_wo, sa_bo)
        x = layer_norm(x + sa, ln1_g, ln1_b)

        # Cross-attention block (KV from encoder memory).
        ca = mha(x, S, mem_blocks, ca_wq, ca_bq, ca_wkv, ca_bkv, ca_wo, ca_bo)
        x = layer_norm(x + ca, ln2_g, ln2_b)

        # Feed-forward block (linear -> ReLU -> linear).
        h = jnp.maximum(mm(x, w1) + b1[...], 0.0)
        x = layer_norm(x + mm(h, w2) + b2[...], ln3_g, ln3_b)

    # Final output projection onto the 128-lane-padded vocab slab (unmasked stores).
    out_ref[...] = mm(x, w_out_ref) + b_out_ref[...]


# ----------------------------- model forward (one pallas_call) -----------------------------

def transformer_decoder_forward(params, tgt_ids, memory, *, nhead, vocab_size,
                                matmul_dtype=jnp.float32):
    """Equivalent of TransformerDecoder.forward(tgt, memory, tgt_mask=None, memory_mask=None)."""
    B, S = tgt_ids.shape
    _, Sm, D = memory.shape

    # Plain-JAX glue: embedding gather + positional-encoding add (tiny elementwise op; a
    # dedicated kernel for it would be pure launch overhead per the perf review).
    x = jnp.take(params["embedding"], tgt_ids, axis=0) + params["pe"][:, :S]

    flat_inputs = [x.reshape(B * S, D), memory]
    for lp in params["layers"]:
        flat_inputs.extend(lp[name] for name in LAYER_PARAM_NAMES)
    flat_inputs.append(params["w_out_pad"])
    flat_inputs.append(params["b_out_pad"])
    v_pad = params["w_out_pad"].shape[1]

    kernel = partial(
        _fused_decoder_kernel,
        num_layers=len(params["layers"]), nhead=nhead, B=B, S=S, Sm=Sm,
        eps=1e-5, matmul_dtype=matmul_dtype,
    )
    logits_pad = pl.pallas_call(
        kernel,
        out_shape=jax.ShapeDtypeStruct((B * S, v_pad), jnp.float32),
    )(*flat_inputs)
    return logits_pad.reshape(B, S, v_pad)[:, :, :vocab_size]


# ----------------------------- pure-JAX reference (correctness check) -----------------------------

def reference_forward(params, tgt_ids, memory, *, nhead, vocab_size):
    D = params["embedding"].shape[1]
    B, S = tgt_ids.shape
    Dh = D // nhead
    x = jnp.take(params["embedding"], tgt_ids, axis=0) + params["pe"][:, :S]

    def heads(t):  # (B, L, D) -> (B, H, L, Dh)
        return t.reshape(t.shape[0], t.shape[1], nhead, Dh).transpose(0, 2, 1, 3)

    def mha(q_in, kv_in, lp, pfx):
        q = q_in @ lp[pfx + "_wq"] + lp[pfx + "_bq"]          # scale pre-folded into wq/bq
        kv = kv_in @ lp[pfx + "_wkv"] + lp[pfx + "_bkv"]
        k, v = kv[..., :D], kv[..., D:]
        a = jax.nn.softmax(jnp.einsum("bhqe,bhke->bhqk", heads(q), heads(k)), axis=-1)
        o = jnp.einsum("bhqk,bhke->bhqe", a, heads(v))
        o = o.transpose(0, 2, 1, 3).reshape(q_in.shape[0], q_in.shape[1], D)
        return o @ lp[pfx + "_wo"] + lp[pfx + "_bo"]

    def ln(z, g, b):
        m = z.mean(-1, keepdims=True)
        v = ((z - m) ** 2).mean(-1, keepdims=True)
        return (z - m) * jax.lax.rsqrt(v + 1e-5) * g + b

    for lp in params["layers"]:
        x = ln(x + mha(x, x, lp, "sa"), lp["ln1_g"], lp["ln1_b"])
        x = ln(x + mha(x, memory, lp, "ca"), lp["ln2_g"], lp["ln2_b"])
        h = jax.nn.relu(x @ lp["w1"] + lp["b1"])
        x = ln(x + (h @ lp["w2"] + lp["b2"]), lp["ln3_g"], lp["ln3_b"])
    return (x @ params["w_out_pad"] + params["b_out_pad"])[..., :vocab_size]


# ----------------------------- parameter init -----------------------------

def make_positional_encoding(d_model, max_len):
    position = jnp.arange(max_len, dtype=jnp.float32)[:, None]
    div_term = jnp.exp(
        jnp.arange(0, d_model, 2, dtype=jnp.float32) * (-math.log(10000.0) / d_model)
    )
    pe = jnp.zeros((max_len, d_model), dtype=jnp.float32)
    pe = pe.at[:, 0::2].set(jnp.sin(position * div_term))
    pe = pe.at[:, 1::2].set(jnp.cos(position * div_term))
    return pe[None]  # (1, max_len, d_model)


def init_params(key, vocab_size, d_model, nhead, num_layers, dff, max_len):
    dh = d_model // nhead
    scale = 1.0 / math.sqrt(dh)
    # Exact key budget: 3 top-level + per layer (2 MHA x 6 + 4 FFN) = 16.
    n_keys = 3 + num_layers * 16
    keys = iter(jax.random.split(key, n_keys))

    def dense(k, shape, s=0.05):
        return s * jax.random.normal(k, shape, dtype=jnp.float32)

    def mha_params(prefix):
        # Fused-head layout: Q weight (D, D), K|V weight (D, 2D), output (D, D).
        # The 1/sqrt(Dh) softmax scale is folded into wq / bq once, here.
        return {
            prefix + "_wq": dense(next(keys), (d_model, d_model)) * scale,
            prefix + "_bq": dense(next(keys), (1, d_model)) * scale,
            prefix + "_wkv": dense(next(keys), (d_model, 2 * d_model)),
            prefix + "_bkv": dense(next(keys), (1, 2 * d_model)),
            prefix + "_wo": dense(next(keys), (d_model, d_model)),
            prefix + "_bo": dense(next(keys), (1, d_model)),
        }

    embedding = jax.random.normal(next(keys), (vocab_size, d_model), dtype=jnp.float32)
    w_out = dense(next(keys), (d_model, vocab_size))
    b_out = dense(next(keys), (1, vocab_size))
    v_pad = max(128, ((vocab_size + 127) // 128) * 128)     # lane-dense logits slab

    params = {
        "embedding": embedding,
        "pe": make_positional_encoding(d_model, max_len),
        "w_out_pad": jnp.pad(w_out, ((0, 0), (0, v_pad - vocab_size))),
        "b_out_pad": jnp.pad(b_out, ((0, 0), (0, v_pad - vocab_size))),
        "layers": [],
    }
    for _ in range(num_layers):
        lp = {}
        lp.update(mha_params("sa"))
        lp.update(mha_params("ca"))
        lp.update({
            "w1": dense(next(keys), (d_model, dff)),
            "b1": dense(next(keys), (1, dff)),
            "w2": dense(next(keys), (dff, d_model)),
            "b2": dense(next(keys), (1, d_model)),
            "ln1_g": jnp.ones((1, d_model), jnp.float32),
            "ln1_b": jnp.zeros((1, d_model), jnp.float32),
            "ln2_g": jnp.ones((1, d_model), jnp.float32),
            "ln2_b": jnp.zeros((1, d_model), jnp.float32),
            "ln3_g": jnp.ones((1, d_model), jnp.float32),
            "ln3_b": jnp.zeros((1, d_model), jnp.float32),
        })
        params["layers"].append(lp)
    return params


# ----------------------------- main -----------------------------

if __name__ == "__main__":
    VOCAB = 20
    D_MODEL = 128        # lane-dense model dim (constructor arg; PyTorch default is 256)
    NHEAD = 4
    NUM_LAYERS = 2
    DFF = 512            # dim_feedforward hardcoded in the PyTorch __init__
    MAX_LEN = 36
    B, S_TGT, S_MEM = 2, 8, 10

    root = jax.random.PRNGKey(0)
    k_param, k_tgt, k_mem = jax.random.split(root, 3)

    params = init_params(k_param, VOCAB, D_MODEL, NHEAD, NUM_LAYERS, DFF, MAX_LEN)
    tgt = jax.random.randint(k_tgt, (B, S_TGT), 0, VOCAB, dtype=jnp.int32)
    memory = jax.random.normal(k_mem, (B, S_MEM, D_MODEL), dtype=jnp.float32)

    # fp32 path (exact-parity check vs pure-JAX reference).
    fwd_f32 = jax.jit(partial(transformer_decoder_forward,
                              nhead=NHEAD, vocab_size=VOCAB, matmul_dtype=jnp.float32))
    logits = jax.block_until_ready(fwd_f32(params, tgt, memory))
    assert logits.shape == (B, S_TGT, VOCAB), logits.shape
    assert bool(jnp.all(jnp.isfinite(logits)))

    ref = jax.block_until_ready(
        jax.jit(partial(reference_forward, nhead=NHEAD, vocab_size=VOCAB))(params, tgt, memory))
    max_err = float(jnp.max(jnp.abs(logits - ref)))
    assert bool(jnp.allclose(logits, ref, rtol=1e-3, atol=1e-3)), max_err

    # bf16 MXU-operand path (v6e/v7x feedback): fp32 accumulation, fp32 softmax/LayerNorm.
    fwd_bf16 = jax.jit(partial(transformer_decoder_forward,
                               nhead=NHEAD, vocab_size=VOCAB, matmul_dtype=jnp.bfloat16))
    logits_bf16 = jax.block_until_ready(fwd_bf16(params, tgt, memory))
    assert logits_bf16.shape == (B, S_TGT, VOCAB)
    assert bool(jnp.all(jnp.isfinite(logits_bf16)))
    assert float(jnp.max(jnp.abs(logits_bf16 - logits))) < 0.2   # bf16-operand tolerance

    print("KERNEL_OK")
</pallas_src>

<mosaic_0001>
module attributes {stable_mosaic.version = 11 : i64} {
  func.func @_fused_decoder_kernel(%arg0: memref<16x128xf32, #tpu.memory_space<vmem>>, %arg1: memref<2x10x128xf32, #tpu.memory_space<vmem>>, %arg2: memref<128x128xf32, #tpu.memory_space<vmem>>, %arg3: memref<1x128xf32, #tpu.memory_space<vmem>>, %arg4: memref<128x256xf32, #tpu.memory_space<vmem>>, %arg5: memref<1x256xf32, #tpu.memory_space<vmem>>, %arg6: memref<128x128xf32, #tpu.memory_space<vmem>>, %arg7: memref<1x128xf32, #tpu.memory_space<vmem>>, %arg8: memref<1x128xf32, #tpu.memory_space<vmem>>, %arg9: memref<1x128xf32, #tpu.memory_space<vmem>>, %arg10: memref<128x128xf32, #tpu.memory_space<vmem>>, %arg11: memref<1x128xf32, #tpu.memory_space<vmem>>, %arg12: memref<128x256xf32, #tpu.memory_space<vmem>>, %arg13: memref<1x256xf32, #tpu.memory_space<vmem>>, %arg14: memref<128x128xf32, #tpu.memory_space<vmem>>, %arg15: memref<1x128xf32, #tpu.memory_space<vmem>>, %arg16: memref<1x128xf32, #tpu.memory_space<vmem>>, %arg17: memref<1x128xf32, #tpu.memory_space<vmem>>, %arg18: memref<128x512xf32, #tpu.memory_space<vmem>>, %arg19: memref<1x512xf32, #tpu.memory_space<vmem>>, %arg20: memref<512x128xf32, #tpu.memory_space<vmem>>, %arg21: memref<1x128xf32, #tpu.memory_space<vmem>>, %arg22: memref<1x128xf32, #tpu.memory_space<vmem>>, %arg23: memref<1x128xf32, #tpu.memory_space<vmem>>, %arg24: memref<128x128xf32, #tpu.memory_space<vmem>>, %arg25: memref<1x128xf32, #tpu.memory_space<vmem>>, %arg26: memref<128x256xf32, #tpu.memory_space<vmem>>, %arg27: memref<1x256xf32, #tpu.memory_space<vmem>>, %arg28: memref<128x128xf32, #tpu.memory_space<vmem>>, %arg29: memref<1x128xf32, #tpu.memory_space<vmem>>, %arg30: memref<1x128xf32, #tpu.memory_space<vmem>>, %arg31: memref<1x128xf32, #tpu.memory_space<vmem>>, %arg32: memref<128x128xf32, #tpu.memory_space<vmem>>, %arg33: memref<1x128xf32, #tpu.memory_space<vmem>>, %arg34: memref<128x256xf32, #tpu.memory_space<vmem>>, %arg35: memref<1x256xf32, #tpu.memory_space<vmem>>, %arg36: memref<128x128xf32, #tpu.memory_space<vmem>>, %arg37: memref<1x128xf32, #tpu.memory_space<vmem>>, %arg38: memref<1x128xf32, #tpu.memory_space<vmem>>, %arg39: memref<1x128xf32, #tpu.memory_space<vmem>>, %arg40: memref<128x512xf32, #tpu.memory_space<vmem>>, %arg41: memref<1x512xf32, #tpu.memory_space<vmem>>, %arg42: memref<512x128xf32, #tpu.memory_space<vmem>>, %arg43: memref<1x128xf32, #tpu.memory_space<vmem>>, %arg44: memref<1x128xf32, #tpu.memory_space<vmem>>, %arg45: memref<1x128xf32, #tpu.memory_space<vmem>>, %arg46: memref<128x128xf32, #tpu.memory_space<vmem>>, %arg47: memref<1x128xf32, #tpu.memory_space<vmem>>, %arg48: memref<16x128xf32, #tpu.memory_space<vmem>>) attributes {dimension_semantics = [], scalar_prefetch = 0 : i64, scratch_operands = 0 : i64, tpu.core_type = #tpu.core_type<tc>} {
    %c0 = arith.constant 0 : index
    %c0_0 = arith.constant 0 : index
    %0 = vector.load %arg0[%c0, %c0_0] : memref<16x128xf32, #tpu.memory_space<vmem>>, vector<16x128xf32>
    %c0_1 = arith.constant 0 : index
    %c0_2 = arith.constant 0 : index
    %c0_3 = arith.constant 0 : index
    %1 = vector.load %arg1[%c0_1, %c0_2, %c0_3] : memref<2x10x128xf32, #tpu.memory_space<vmem>>, vector<1x10x128xf32>
    %2 = vector.shape_cast %1 : vector<1x10x128xf32> to vector<10x128xf32>
    %c1 = arith.constant 1 : index
    %c0_4 = arith.constant 0 : index
    %c0_5 = arith.constant 0 : index
    %3 = vector.load %arg1[%c1, %c0_4, %c0_5] : memref<2x10x128xf32, #tpu.memory_space<vmem>>, vector<1x10x128xf32>
    %4 = vector.shape_cast %3 : vector<1x10x128xf32> to vector<10x128xf32>
    %5 = vector.extract_strided_slice %0 {offsets = [0, 0], sizes = [8, 128], strides = [1, 1]} : vector<16x128xf32> to vector<8x128xf32>
    %6 = vector.extract_strided_slice %0 {offsets = [8, 0], sizes = [8, 128], strides = [1, 1]} : vector<16x128xf32> to vector<8x128xf32>
    %c0_6 = arith.constant 0 : index
    %c0_7 = arith.constant 0 : index
    %7 = vector.load %arg2[%c0_6, %c0_7] : memref<128x128xf32, #tpu.memory_space<vmem>>, vector<128x128xf32>
    %cst = arith.constant dense<0.000000e+00> : vector<16x128xf32>
    %8 = tpu.matmul %0, %7, %cst {dimension_numbers = #tpu.dot_dimension_numbers<[1], [0], [0], [1], [0, 0, 1, 1], [], []>} : vector<16x128xf32>, vector<128x128xf32>, vector<16x128xf32> -> vector<16x128xf32>
    %c0_8 = arith.constant 0 : index
    %c0_9 = arith.constant 0 : index
    %9 = vector.load %arg3[%c0_8, %c0_9] : memref<1x128xf32, #tpu.memory_space<vmem>>, vector<1x128xf32>
    %10 = vector.broadcast %9 : vector<1x128xf32> to vector<16x128xf32>
    %11 = arith.addf %8, %10 : vector<16x128xf32>
    %c0_10 = arith.constant 0 : index
    %c0_11 = arith.constant 0 : index
    %12 = vector.load %arg4[%c0_10, %c0_11] : memref<128x256xf32, #tpu.memory_space<vmem>>, vector<128x256xf32>
    %cst_12 = arith.constant dense<0.000000e+00> : vector<8x256xf32>
    %13 = tpu.matmul %5, %12, %cst_12 {dimension_numbers = #tpu.dot_dimension_numbers<[1], [0], [0], [1], [0, 0, 1, 1], [], []>} : vector<8x128xf32>, vector<128x256xf32>, vector<8x256xf32> -> vector<8x256xf32>
    %c0_13 = arith.constant 0 : index
    %c0_14 = arith.constant 0 : index
    %14 = vector.load %arg5[%c0_13, %c0_14] : memref<1x256xf32, #tpu.memory_space<vmem>>, vector<1x256xf32>
    %15 = vector.broadcast %14 : vector<1x256xf32> to vector<8x256xf32>
    %16 = arith.addf %13, %15 : vector<8x256xf32>
    %17 = vector.extract_strided_slice %11 {offsets = [0, 0], sizes = [8, 128], strides = [1, 1]} : vector<16x128xf32> to vector<8x128xf32>
    %18 = vector.extract_strided_slice %16 {offsets = [0, 0], sizes = [8, 128], strides = [1, 1]} : vector<8x256xf32> to vector<8x128xf32>
    %19 = vector.extract_strided_slice %16 {offsets = [0, 128], sizes = [8, 128], strides = [1, 1]} : vector<8x256xf32> to vector<8x128xf32>
    %20 = vector.extract_strided_slice %17 {offsets = [0, 0], sizes = [8, 32], strides = [1, 1]} : vector<8x128xf32> to vector<8x32xf32>
    %21 = vector.extract_strided_slice %18 {offsets = [0, 0], sizes = [8, 32], strides = [1, 1]} : vector<8x128xf32> to vector<8x32xf32>
    %22 = vector.extract_strided_slice %19 {offsets = [0, 0], sizes = [8, 32], strides = [1, 1]} : vector<8x128xf32> to vector<8x32xf32>
    %cst_15 = arith.constant dense<0.000000e+00> : vector<8x8xf32>
    %23 = tpu.matmul %20, %21, %cst_15 {dimension_numbers = #tpu.dot_dimension_numbers<[1], [1], [0], [0], [0, 0, 1, 0], [], []>} : vector<8x32xf32>, vector<8x32xf32>, vector<8x8xf32> -> vector<8x8xf32>
    %cst_16 = arith.constant dense<0xFF800000> : vector<8xf32>
    %24 = vector.multi_reduction <maximumf>, %23, %cst_16 [1] : vector<8x8xf32> to vector<8xf32>
    %25 = vector.shape_cast %24 : vector<8xf32> to vector<8x1xf32>
    %26 = vector.broadcast %25 : vector<8x1xf32> to vector<8x8xf32>
    %27 = arith.subf %23, %26 : vector<8x8xf32>
    %28 = math.exp %27 : vector<8x8xf32>
    %cst_17 = arith.constant dense<0.000000e+00> : vector<8xf32>
    %29 = vector.multi_reduction <add>, %28, %cst_17 [1] : vector<8x8xf32> to vector<8xf32>
    %30 = vector.shape_cast %29 : vector<8xf32> to vector<8x1xf32>
    %31 = vector.broadcast %30 : vector<8x1xf32> to vector<8x8xf32>
    %32 = arith.divf %28, %31 : vector<8x8xf32>
    %cst_18 = arith.constant dense<0.000000e+00> : vector<8x32xf32>
    %33 = tpu.matmul %32, %22, %cst_18 {dimension_numbers = #tpu.dot_dimension_numbers<[1], [0], [0], [1], [0, 0, 1, 1], [], []>} : vector<8x8xf32>, vector<8x32xf32>, vector<8x32xf32> -> vector<8x32xf32>
    %34 = vector.extract_strided_slice %17 {offsets = [0, 32], sizes = [8, 32], strides = [1, 1]} : vector<8x128xf32> to vector<8x32xf32>
    %35 = vector.extract_strided_slice %18 {offsets = [0, 32], sizes = [8, 32], strides = [1, 1]} : vector<8x128xf32> to vector<8x32xf32>
    %36 = vector.extract_strided_slice %19 {offsets = [0, 32], sizes = [8, 32], strides = [1, 1]} : vector<8x128xf32> to vector<8x32xf32>
    %cst_19 = arith.constant dense<0.000000e+00> : vector<8x8xf32>
    %37 = tpu.matmul %34, %35, %cst_19 {dimension_numbers = #tpu.dot_dimension_numbers<[1], [1], [0], [0], [0, 0, 1, 0], [], []>} : vector<8x32xf32>, vector<8x32xf32>, vector<8x8xf32> -> vector<8x8xf32>
    %cst_20 = arith.constant dense<0xFF800000> : vector<8xf32>
    %38 = vector.multi_reduction <maximumf>, %37, %cst_20 [1] : vector<8x8xf32> to vector<8xf32>
    %39 = vector.shape_cast %38 : vector<8xf32> to vector<8x1xf32>
    %40 = vector.broadcast %39 : vector<8x1xf32> to vector<8x8xf32>
    %41 = arith.subf %37, %40 : vector<8x8xf32>
    %42 = math.exp %41 : vector<8x8xf32>
    %cst_21 = arith.constant dense<0.000000e+00> : vector<8xf32>
    %43 = vector.multi_reduction <add>, %42, %cst_21 [1] : vector<8x8xf32> to vector<8xf32>
    %44 = vector.shape_cast %43 : vector<8xf32> to vector<8x1xf32>
    %45 = vector.broadcast %44 : vector<8x1xf32> to vector<8x8xf32>
    %46 = arith.divf %42, %45 : vector<8x8xf32>
    %cst_22 = arith.constant dense<0.000000e+00> : vector<8x32xf32>
    %47 = tpu.matmul %46, %36, %cst_22 {dimension_numbers = #tpu.dot_dimension_numbers<[1], [0], [0], [1], [0, 0, 1, 1], [], []>} : vector<8x8xf32>, vector<8x32xf32>, vector<8x32xf32> -> vector<8x32xf32>
    %48 = vector.extract_strided_slice %17 {offsets = [0, 64], sizes = [8, 32], strides = [1, 1]} : vector<8x128xf32> to vector<8x32xf32>
    %49 = vector.extract_strided_slice %18 {offsets = [0, 64], sizes = [8, 32], strides = [1, 1]} : vector<8x128xf32> to vector<8x32xf32>
    %50 = vector.extract_strided_slice %19 {offsets = [0, 64], sizes = [8, 32], strides = [1, 1]} : vector<8x128xf32> to vector<8x32xf32>
    %cst_23 = arith.constant dense<0.000000e+00> : vector<8x8xf32>
    %51 = tpu.matmul %48, %49, %cst_23 {dimension_numbers = #tpu.dot_dimension_numbers<[1], [1], [0], [0], [0, 0, 1, 0], [], []>} : vector<8x32xf32>, vector<8x32xf32>, vector<8x8xf32> -> vector<8x8xf32>
    %cst_24 = arith.constant dense<0xFF800000> : vector<8xf32>
    %52 = vector.multi_reduction <maximumf>, %51, %cst_24 [1] : vector<8x8xf32> to vector<8xf32>
    %53 = vector.shape_cast %52 : vector<8xf32> to vector<8x1xf32>
    %54 = vector.broadcast %53 : vector<8x1xf32> to vector<8x8xf32>
    %55 = arith.subf %51, %54 : vector<8x8xf32>
    %56 = math.exp %55 : vector<8x8xf32>
    %cst_25 = arith.constant dense<0.000000e+00> : vector<8xf32>
    %57 = vector.multi_reduction <add>, %56, %cst_25 [1] : vector<8x8xf32> to vector<8xf32>
    %58 = vector.shape_cast %57 : vector<8xf32> to vector<8x1xf32>
    %59 = vector.broadcast %58 : vector<8x1xf32> to vector<8x8xf32>
    %60 = arith.divf %56, %59 : vector<8x8xf32>
    %cst_26 = arith.constant dense<0.000000e+00> : vector<8x32xf32>
    %61 = tpu.matmul %60, %50, %cst_26 {dimension_numbers = #tpu.dot_dimension_numbers<[1], [0], [0], [1], [0, 0, 1, 1], [], []>} : vector<8x8xf32>, vector<8x32xf32>, vector<8x32xf32> -> vector<8x32xf32>
    %62 = vector.extract_strided_slice %17 {offsets = [0, 96], sizes = [8, 32], strides = [1, 1]} : vector<8x128xf32> to vector<8x32xf32>
    %63 = vector.extract_strided_slice %18 {offsets = [0, 96], sizes = [8, 32], strides = [1, 1]} : vector<8x128xf32> to vector<8x32xf32>
    %64 = vector.extract_strided_slice %19 {offsets = [0, 96], sizes = [8, 32], strides = [1, 1]} : vector<8x128xf32> to vector<8x32xf32>
    %cst_27 = arith.constant dense<0.000000e+00> : vector<8x8xf32>
    %65 = tpu.matmul %62, %63, %cst_27 {dimension_numbers = #tpu.dot_dimension_numbers<[1], [1], [0], [0], [0, 0, 1, 0], [], []>} : vector<8x32xf32>, vector<8x32xf32>, vector<8x8xf32> -> vector<8x8xf32>
    %cst_28 = arith.constant dense<0xFF800000> : vector<8xf32>
    %66 = vector.multi_reduction <maximumf>, %65, %cst_28 [1] : vector<8x8xf32> to vector<8xf32>
    %67 = vector.shape_cast %66 : vector<8xf32> to vector<8x1xf32>
    %68 = vector.broadcast %67 : vector<8x1xf32> to vector<8x8xf32>
    %69 = arith.subf %65, %68 : vector<8x8xf32>
    %70 = math.exp %69 : vector<8x8xf32>
    %cst_29 = arith.constant dense<0.000000e+00> : vector<8xf32>
    %71 = vector.multi_reduction <add>, %70, %cst_29 [1] : vector<8x8xf32> to vector<8xf32>
    %72 = vector.shape_cast %71 : vector<8xf32> to vector<8x1xf32>
    %73 = vector.broadcast %72 : vector<8x1xf32> to vector<8x8xf32>
    %74 = arith.divf %70, %73 : vector<8x8xf32>
    %cst_30 = arith.constant dense<0.000000e+00> : vector<8x32xf32>
    %75 = tpu.matmul %74, %64, %cst_30 {dimension_numbers = #tpu.dot_dimension_numbers<[1], [0], [0], [1], [0, 0, 1, 1], [], []>} : vector<8x8xf32>, vector<8x32xf32>, vector<8x32xf32> -> vector<8x32xf32>
    %76 = tpu.concatenate %33, %47, %61, %75 in 1 : vector<8x32xf32>, vector<8x32xf32>, vector<8x32xf32>, vector<8x32xf32> -> vector<8x128xf32>
    %c0_31 = arith.constant 0 : index
    %c0_32 = arith.constant 0 : index
    %77 = vector.load %arg4[%c0_31, %c0_32] : memref<128x256xf32, #tpu.memory_space<vmem>>, vector<128x256xf32>
    %cst_33 = arith.constant dense<0.000000e+00> : vector<8x256xf32>
    %78 = tpu.matmul %6, %77, %cst_33 {dimension_numbers = #tpu.dot_dimension_numbers<[1], [0], [0], [1], [0, 0, 1, 1], [], []>} : vector<8x128xf32>, vector<128x256xf32>, vector<8x256xf32> -> vector<8x256xf32>
    %c0_34 = arith.constant 0 : index
    %c0_35 = arith.constant 0 : index
    %79 = vector.load %arg5[%c0_34, %c0_35] : memref<1x256xf32, #tpu.memory_space<vmem>>, vector<1x256xf32>
    %80 = vector.broadcast %79 : vector<1x256xf32> to vector<8x256xf32>
    %81 = arith.addf %78, %80 : vector<8x256xf32>
    %82 = vector.extract_strided_slice %11 {offsets = [8, 0], sizes = [8, 128], strides = [1, 1]} : vector<16x128xf32> to vector<8x128xf32>
    %83 = vector.extract_strided_slice %81 {offsets = [0, 0], sizes = [8, 128], strides = [1, 1]} : vector<8x256xf32> to vector<8x128xf32>
    %84 = vector.extract_strided_slice %81 {offsets = [0, 128], sizes = [8, 128], strides = [1, 1]} : vector<8x256xf32> to vector<8x128xf32>
    %85 = vector.extract_strided_slice %82 {offsets = [0, 0], sizes = [8, 32], strides = [1, 1]} : vector<8x128xf32> to vector<8x32xf32>
    %86 = vector.extract_strided_slice %83 {offsets = [0, 0], sizes = [8, 32], strides = [1, 1]} : vector<8x128xf32> to vector<8x32xf32>
    %87 = vector.extract_strided_slice %84 {offsets = [0, 0], sizes = [8, 32], strides = [1, 1]} : vector<8x128xf32> to vector<8x32xf32>
    %cst_36 = arith.constant dense<0.000000e+00> : vector<8x8xf32>
    %88 = tpu.matmul %85, %86, %cst_36 {dimension_numbers = #tpu.dot_dimension_numbers<[1], [1], [0], [0], [0, 0, 1, 0], [], []>} : vector<8x32xf32>, vector<8x32xf32>, vector<8x8xf32> -> vector<8x8xf32>
    %cst_37 = arith.constant dense<0xFF800000> : vector<8xf32>
    %89 = vector.multi_reduction <maximumf>, %88, %cst_37 [1] : vector<8x8xf32> to vector<8xf32>
    %90 = vector.shape_cast %89 : vector<8xf32> to vector<8x1xf32>
    %91 = vector.broadcast %90 : vector<8x1xf32> to vector<8x8xf32>
    %92 = arith.subf %88, %91 : vector<8x8xf32>
    %93 = math.exp %92 : vector<8x8xf32>
    %cst_38 = arith.constant dense<0.000000e+00> : vector<8xf32>
    %94 = vector.multi_reduction <add>, %93, %cst_38 [1] : vector<8x8xf32> to vector<8xf32>
    %95 = vector.shape_cast %94 : vector<8xf32> to vector<8x1xf32>
    %96 = vector.broadcast %95 : vector<8x1xf32> to vector<8x8xf32>
    %97 = arith.divf %93, %96 : vector<8x8xf32>
    %cst_39 = arith.constant dense<0.000000e+00> : vector<8x32xf32>
    %98 = tpu.matmul %97, %87, %cst_39 {dimension_numbers = #tpu.dot_dimension_numbers<[1], [0], [0], [1], [0, 0, 1, 1], [], []>} : vector<8x8xf32>, vector<8x32xf32>, vector<8x32xf32> -> vector<8x32xf32>
    %99 = vector.extract_strided_slice %82 {offsets = [0, 32], sizes = [8, 32], strides = [1, 1]} : vector<8x128xf32> to vector<8x32xf32>
    %100 = vector.extract_strided_slice %83 {offsets = [0, 32], sizes = [8, 32], strides = [1, 1]} : vector<8x128xf32> to vector<8x32xf32>
    %101 = vector.extract_strided_slice %84 {offsets = [0, 32], sizes = [8, 32], strides = [1, 1]} : vector<8x128xf32> to vector<8x32xf32>
    %cst_40 = arith.constant dense<0.000000e+00> : vector<8x8xf32>
    %102 = tpu.matmul %99, %100, %cst_40 {dimension_numbers = #tpu.dot_dimension_numbers<[1], [1], [0], [0], [0, 0, 1, 0], [], []>} : vector<8x32xf32>, vector<8x32xf32>, vector<8x8xf32> -> vector<8x8xf32>
    %cst_41 = arith.constant dense<0xFF800000> : vector<8xf32>
    %103 = vector.multi_reduction <maximumf>, %102, %cst_41 [1] : vector<8x8xf32> to vector<8xf32>
    %104 = vector.shape_cast %103 : vector<8xf32> to vector<8x1xf32>
    %105 = vector.broadcast %104 : vector<8x1xf32> to vector<8x8xf32>
    %106 = arith.subf %102, %105 : vector<8x8xf32>
    %107 = math.exp %106 : vector<8x8xf32>
    %cst_42 = arith.constant dense<0.000000e+00> : vector<8xf32>
    %108 = vector.multi_reduction <add>, %107, %cst_42 [1] : vector<8x8xf32> to vector<8xf32>
    %109 = vector.shape_cast %108 : vector<8xf32> to vector<8x1xf32>
    %110 = vector.broadcast %109 : vector<8x1xf32> to vector<8x8xf32>
    %111 = arith.divf %107, %110 : vector<8x8xf32>
    %cst_43 = arith.constant dense<0.000000e+00> : vector<8x32xf32>
    %112 = tpu.matmul %111, %101, %cst_43 {dimension_numbers = #tpu.dot_dimension_numbers<[1], [0], [0], [1], [0, 0, 1, 1], [], []>} : vector<8x8xf32>, vector<8x32xf32>, vector<8x32xf32> -> vector<8x32xf32>
    %113 = vector.extract_strided_slice %82 {offsets = [0, 64], sizes = [8, 32], strides = [1, 1]} : vector<8x128xf32> to vector<8x32xf32>
    %114 = vector.extract_strided_slice %83 {offsets = [0, 64], sizes = [8, 32], strides = [1, 1]} : vector<8x128xf32> to vector<8x32xf32>
    %115 = vector.extract_strided_slice %84 {offsets = [0, 64], sizes = [8, 32], strides = [1, 1]} : vector<8x128xf32> to vector<8x32xf32>
    %cst_44 = arith.constant dense<0.000000e+00> : vector<8x8xf32>
    %116 = tpu.matmul %113, %114, %cst_44 {dimension_numbers = #tpu.dot_dimension_numbers<[1], [1], [0], [0], [0, 0, 1, 0], [], []>} : vector<8x32xf32>, vector<8x32xf32>, vector<8x8xf32> -> vector<8x8xf32>
    %cst_45 = arith.constant dense<0xFF800000> : vector<8xf32>
    %117 = vector.multi_reduction <maximumf>, %116, %cst_45 [1] : vector<8x8xf32> to vector<8xf32>
    %118 = vector.shape_cast %117 : vector<8xf32> to vector<8x1xf32>
    %119 = vector.broadcast %118 : vector<8x1xf32> to vector<8x8xf32>
    %120 = arith.subf %116, %119 : vector<8x8xf32>
    %121 = math.exp %120 : vector<8x8xf32>
    %cst_46 = arith.constant dense<0.000000e+00> : vector<8xf32>
    %122 = vector.multi_reduction <add>, %121, %cst_46 [1] : vector<8x8xf32> to vector<8xf32>
    %123 = vector.shape_cast %122 : vector<8xf32> to vector<8x1xf32>
    %124 = vector.broadcast %123 : vector<8x1xf32> to vector<8x8xf32>
    %125 = arith.divf %121, %124 : vector<8x8xf32>
    %cst_47 = arith.constant dense<0.000000e+00> : vector<8x32xf32>
    %126 = tpu.matmul %125, %115, %cst_47 {dimension_numbers = #tpu.dot_dimension_numbers<[1], [0], [0], [1], [0, 0, 1, 1], [], []>} : vector<8x8xf32>, vector<8x32xf32>, vector<8x32xf32> -> vector<8x32xf32>
    %127 = vector.extract_strided_slice %82 {offsets = [0, 96], sizes = [8, 32], strides = [1, 1]} : vector<8x128xf32> to vector<8x32xf32>
    %128 = vector.extract_strided_slice %83 {offsets = [0, 96], sizes = [8, 32], strides = [1, 1]} : vector<8x128xf32> to vector<8x32xf32>
    %129 = vector.extract_strided_slice %84 {offsets = [0, 96], sizes = [8, 32], strides = [1, 1]} : vector<8x128xf32> to vector<8x32xf32>
    %cst_48 = arith.constant dense<0.000000e+00> : vector<8x8xf32>
    %130 = tpu.matmul %127, %128, %cst_48 {dimension_numbers = #tpu.dot_dimension_numbers<[1], [1], [0], [0], [0, 0, 1, 0], [], []>} : vector<8x32xf32>, vector<8x32xf32>, vector<8x8xf32> -> vector<8x8xf32>
    %cst_49 = arith.constant dense<0xFF800000> : vector<8xf32>
    %131 = vector.multi_reduction <maximumf>, %130, %cst_49 [1] : vector<8x8xf32> to vector<8xf32>
    %132 = vector.shape_cast %131 : vector<8xf32> to vector<8x1xf32>
    %133 = vector.broadcast %132 : vector<8x1xf32> to vector<8x8xf32>
    %134 = arith.subf %130, %133 : vector<8x8xf32>
    %135 = math.exp %134 : vector<8x8xf32>
    %cst_50 = arith.constant dense<0.000000e+00> : vector<8xf32>
    %136 = vector.multi_reduction <add>, %135, %cst_50 [1] : vector<8x8xf32> to vector<8xf32>
    %137 = vector.shape_cast %136 : vector<8xf32> to vector<8x1xf32>
    %138 = vector.broadcast %137 : vector<8x1xf32> to vector<8x8xf32>
    %139 = arith.divf %135, %138 : vector<8x8xf32>
    %cst_51 = arith.constant dense<0.000000e+00> : vector<8x32xf32>
    %140 = tpu.matmul %139, %129, %cst_51 {dimension_numbers = #tpu.dot_dimension_numbers<[1], [0], [0], [1], [0, 0, 1, 1], [], []>} : vector<8x8xf32>, vector<8x32xf32>, vector<8x32xf32> -> vector<8x32xf32>
    %141 = tpu.concatenate %98, %112, %126, %140 in 1 : vector<8x32xf32>, vector<8x32xf32>, vector<8x32xf32>, vector<8x32xf32> -> vector<8x128xf32>
    %142 = tpu.concatenate %76, %141 in 0 : vector<8x128xf32>, vector<8x128xf32> -> vector<16x128xf32>
    %c0_52 = arith.constant 0 : index
    %c0_53 = arith.constant 0 : index
    %143 = vector.load %arg6[%c0_52, %c0_53] : memref<128x128xf32, #tpu.memory_space<vmem>>, vector<128x128xf32>
    %cst_54 = arith.constant dense<0.000000e+00> : vector<16x128xf32>
    %144 = tpu.matmul %142, %143, %cst_54 {dimension_numbers = #tpu.dot_dimension_numbers<[1], [0], [0], [1], [0, 0, 1, 1], [], []>} : vector<16x128xf32>, vector<128x128xf32>, vector<16x128xf32> -> vector<16x128xf32>
    %c0_55 = arith.constant 0 : index
    %c0_56 = arith.constant 0 : index
    %145 = vector.load %arg7[%c0_55, %c0_56] : memref<1x128xf32, #tpu.memory_space<vmem>>, vector<1x128xf32>
    %146 = vector.broadcast %145 : vector<1x128xf32> to vector<16x128xf32>
    %147 = arith.addf %144, %146 : vector<16x128xf32>
    %148 = arith.addf %0, %147 : vector<16x128xf32>
    %cst_57 = arith.constant dense<0.000000e+00> : vector<16xf32>
    %149 = vector.multi_reduction <add>, %148, %cst_57 [1] : vector<16x128xf32> to vector<16xf32>
    %150 = vector.shape_cast %149 : vector<16xf32> to vector<16x1xf32>
    %cst_58 = arith.constant 1.280000e+02 : f32
    %151 = vector.broadcast %cst_58 : f32 to vector<16x1xf32>
    %152 = arith.divf %150, %151 : vector<16x1xf32>
    %153 = vector.broadcast %152 : vector<16x1xf32> to vector<16x128xf32>
    %154 = arith.subf %148, %153 : vector<16x128xf32>
    %155 = arith.mulf %154, %154 : vector<16x128xf32>
    %cst_59 = arith.constant dense<0.000000e+00> : vector<16xf32>
    %156 = vector.multi_reduction <add>, %155, %cst_59 [1] : vector<16x128xf32> to vector<16xf32>
    %157 = vector.shape_cast %156 : vector<16xf32> to vector<16x1xf32>
    %cst_60 = arith.constant 1.280000e+02 : f32
    %158 = vector.broadcast %cst_60 : f32 to vector<16x1xf32>
    %159 = arith.divf %157, %158 : vector<16x1xf32>
    %160 = vector.broadcast %152 : vector<16x1xf32> to vector<16x128xf32>
    %161 = arith.subf %148, %160 : vector<16x128xf32>
    %cst_61 = arith.constant 9.99999974E-6 : f32
    %162 = vector.broadcast %cst_61 : f32 to vector<16x1xf32>
    %163 = arith.addf %159, %162 : vector<16x1xf32>
    %164 = math.rsqrt %163 : vector<16x1xf32>
    %165 = vector.broadcast %164 : vector<16x1xf32> to vector<16x128xf32>
    %166 = arith.mulf %161, %165 : vector<16x128xf32>
    %c0_62 = arith.constant 0 : index
    %c0_63 = arith.constant 0 : index
    %167 = vector.load %arg8[%c0_62, %c0_63] : memref<1x128xf32, #tpu.memory_space<vmem>>, vector<1x128xf32>
    %168 = vector.broadcast %167 : vector<1x128xf32> to vector<16x128xf32>
    %169 = arith.mulf %166, %168 : vector<16x128xf32>
    %c0_64 = arith.constant 0 : index
    %c0_65 = arith.constant 0 : index
    %170 = vector.load %arg9[%c0_64, %c0_65] : memref<1x128xf32, #tpu.memory_space<vmem>>, vector<1x128xf32>
    %171 = vector.broadcast %170 : vector<1x128xf32> to vector<16x128xf32>
    %172 = arith.addf %169, %171 : vector<16x128xf32>
    %c0_66 = arith.constant 0 : index
    %c0_67 = arith.constant 0 : index
    %173 = vector.load %arg10[%c0_66, %c0_67] : memref<128x128xf32, #tpu.memory_space<vmem>>, vector<128x128xf32>
    %cst_68 = arith.constant dense<0.000000e+00> : vector<16x128xf32>
    %174 = tpu.matmul %172, %173, %cst_68 {dimension_numbers = #tpu.dot_dimension_numbers<[1], [0], [0], [1], [0, 0, 1, 1], [], []>} : vector<16x128xf32>, vector<128x128xf32>, vector<16x128xf32> -> vector<16x128xf32>
    %c0_69 = arith.constant 0 : index
    %c0_70 = arith.constant 0 : index
    %175 = vector.load %arg11[%c0_69, %c0_70] : memref<1x128xf32, #tpu.memory_space<vmem>>, vector<1x128xf32>
    %176 = vector.broadcast %175 : vector<1x128xf32> to vector<16x128xf32>
    %177 = arith.addf %174, %176 : vector<16x128xf32>
    %c0_71 = arith.constant 0 : index
    %c0_72 = arith.constant 0 : index
    %178 = vector.load %arg12[%c0_71, %c0_72] : memref<128x256xf32, #tpu.memory_space<vmem>>, vector<128x256xf32>
    %cst_73 = arith.constant dense<0.000000e+00> : vector<10x256xf32>
    %179 = tpu.matmul %2, %178, %cst_73 {dimension_numbers = #tpu.dot_dimension_numbers<[1], [0], [0], [1], [0, 0, 1, 1], [], []>} : vector<10x128xf32>, vector<128x256xf32>, vector<10x256xf32> -> vector<10x256xf32>
    %c0_74 = arith.constant 0 : index
    %c0_75 = arith.constant 0 : index
    %180 = vector.load %arg13[%c0_74, %c0_75] : memref<1x256xf32, #tpu.memory_space<vmem>>, vector<1x256xf32>
    %181 = vector.broadcast %180 : vector<1x256xf32> to vector<10x256xf32>
    %182 = arith.addf %179, %181 : vector<10x256xf32>
    %183 = vector.extract_strided_slice %177 {offsets = [0, 0], sizes = [8, 128], strides = [1, 1]} : vector<16x128xf32> to vector<8x128xf32>
    %184 = vector.extract_strided_slice %182 {offsets = [0, 0], sizes = [10, 128], strides = [1, 1]} : vector<10x256xf32> to vector<10x128xf32>
    %185 = vector.extract_strided_slice %182 {offsets = [0, 128], sizes = [10, 128], strides = [1, 1]} : vector<10x256xf32> to vector<10x128xf32>
    %186 = vector.extract_strided_slice %183 {offsets = [0, 0], sizes = [8, 32], strides = [1, 1]} : vector<8x128xf32> to vector<8x32xf32>
    %187 = vector.extract_strided_slice %184 {offsets = [0, 0], sizes = [10, 32], strides = [1, 1]} : vector<10x128xf32> to vector<10x32xf32>
    %188 = vector.extract_strided_slice %185 {offsets = [0, 0], sizes = [10, 32], strides = [1, 1]} : vector<10x128xf32> to vector<10x32xf32>
    %cst_76 = arith.constant dense<0.000000e+00> : vector<8x10xf32>
    %189 = tpu.matmul %186, %187, %cst_76 {dimension_numbers = #tpu.dot_dimension_numbers<[1], [1], [0], [0], [0, 0, 1, 0], [], []>} : vector<8x32xf32>, vector<10x32xf32>, vector<8x10xf32> -> vector<8x10xf32>
    %cst_77 = arith.constant dense<0xFF800000> : vector<8xf32>
    %190 = vector.multi_reduction <maximumf>, %189, %cst_77 [1] : vector<8x10xf32> to vector<8xf32>
    %191 = vector.shape_cast %190 : vector<8xf32> to vector<8x1xf32>
    %192 = vector.broadcast %191 : vector<8x1xf32> to vector<8x10xf32>
    %193 = arith.subf %189, %192 : vector<8x10xf32>
    %194 = math.exp %193 : vector<8x10xf32>
    %cst_78 = arith.constant dense<0.000000e+00> : vector<8xf32>
    %195 = vector.multi_reduction <add>, %194, %cst_78 [1] : vector<8x10xf32> to vector<8xf32>
    %196 = vector.shape_cast %195 : vector<8xf32> to vector<8x1xf32>
    %197 = vector.broadcast %196 : vector<8x1xf32> to vector<8x10xf32>
    %198 = arith.divf %194, %197 : vector<8x10xf32>
    %cst_79 = arith.constant dense<0.000000e+00> : vector<8x32xf32>
    %199 = tpu.matmul %198, %188, %cst_79 {dimension_numbers = #tpu.dot_dimension_numbers<[1], [0], [0], [1], [0, 0, 1, 1], [], []>} : vector<8x10xf32>, vector<10x32xf32>, vector<8x32xf32> -> vector<8x32xf32>
    %200 = vector.extract_strided_slice %183 {offsets = [0, 32], sizes = [8, 32], strides = [1, 1]} : vector<8x128xf32> to vector<8x32xf32>
    %201 = vector.extract_strided_slice %184 {offsets = [0, 32], sizes = [10, 32], strides = [1, 1]} : vector<10x128xf32> to vector<10x32xf32>
    %202 = vector.extract_strided_slice %185 {offsets = [0, 32], sizes = [10, 32], strides = [1, 1]} : vector<10x128xf32> to vector<10x32xf32>
    %cst_80 = arith.constant dense<0.000000e+00> : vector<8x10xf32>
    %203 = tpu.matmul %200, %201, %cst_80 {dimension_numbers = #tpu.dot_dimension_numbers<[1], [1], [0], [0], [0, 0, 1, 0], [], []>} : vector<8x32xf32>, vector<10x32xf32>, vector<8x10xf32> -> vector<8x10xf32>
    %cst_81 = arith.constant dense<0xFF800000> : vector<8xf32>
    %204 = vector.multi_reduction <maximumf>, %203, %cst_81 [1] : vector<8x10xf32> to vector<8xf32>
    %205 = vector.shape_cast %204 : vector<8xf32> to vector<8x1xf32>
    %206 = vector.broadcast %205 : vector<8x1xf32> to vector<8x10xf32>
    %207 = arith.subf %203, %206 : vector<8x10xf32>
    %208 = math.exp %207 : vector<8x10xf32>
    %cst_82 = arith.constant dense<0.000000e+00> : vector<8xf32>
    %209 = vector.multi_reduction <add>, %208, %cst_82 [1] : vector<8x10xf32> to vector<8xf32>
    %210 = vector.shape_cast %209 : vector<8xf32> to vector<8x1xf32>
    %211 = vector.broadcast %210 : vector<8x1xf32> to vector<8x10xf32>
    %212 = arith.divf %208, %211 : vector<8x10xf32>
    %cst_83 = arith.constant dense<0.000000e+00> : vector<8x32xf32>
    %213 = tpu.matmul %212, %202, %cst_83 {dimension_numbers = #tpu.dot_dimension_numbers<[1], [0], [0], [1], [0, 0, 1, 1], [], []>} : vector<8x10xf32>, vector<10x32xf32>, vector<8x32xf32> -> vector<8x32xf32>
    %214 = vector.extract_strided_slice %183 {offsets = [0, 64], sizes = [8, 32], strides = [1, 1]} : vector<8x128xf32> to vector<8x32xf32>
    %215 = vector.extract_strided_slice %184 {offsets = [0, 64], sizes = [10, 32], strides = [1, 1]} : vector<10x128xf32> to vector<10x32xf32>
    %216 = vector.extract_strided_slice %185 {offsets = [0, 64], sizes = [10, 32], strides = [1, 1]} : vector<10x128xf32> to vector<10x32xf32>
    %cst_84 = arith.constant dense<0.000000e+00> : vector<8x10xf32>
    %217 = tpu.matmul %214, %215, %cst_84 {dimension_numbers = #tpu.dot_dimension_numbers<[1], [1], [0], [0], [0, 0, 1, 0], [], []>} : vector<8x32xf32>, vector<10x32xf32>, vector<8x10xf32> -> vector<8x10xf32>
    %cst_85 = arith.constant dense<0xFF800000> : vector<8xf32>
    %218 = vector.multi_reduction <maximumf>, %217, %cst_85 [1] : vector<8x10xf32> to vector<8xf32>
    %219 = vector.shape_cast %218 : vector<8xf32> to vector<8x1xf32>
    %220 = vector.broadcast %219 : vector<8x1xf32> to vector<8x10xf32>
    %221 = arith.subf %217, %220 : vector<8x10xf32>
    %222 = math.exp %221 : vector<8x10xf32>
    %cst_86 = arith.constant dense<0.000000e+00> : vector<8xf32>
    %223 = vector.multi_reduction <add>, %222, %cst_86 [1] : vector<8x10xf32> to vector<8xf32>
    %224 = vector.shape_cast %223 : vector<8xf32> to vector<8x1xf32>
    %225 = vector.broadcast %224 : vector<8x1xf32> to vector<8x10xf32>
    %226 = arith.divf %222, %225 : vector<8x10xf32>
    %cst_87 = arith.constant dense<0.000000e+00> : vector<8x32xf32>
    %227 = tpu.matmul %226, %216, %cst_87 {dimension_numbers = #tpu.dot_dimension_numbers<[1], [0], [0], [1], [0, 0, 1, 1], [], []>} : vector<8x10xf32>, vector<10x32xf32>, vector<8x32xf32> -> vector<8x32xf32>
    %228 = vector.extract_strided_slice %183 {offsets = [0, 96], sizes = [8, 32], strides = [1, 1]} : vector<8x128xf32> to vector<8x32xf32>
    %229 = vector.extract_strided_slice %184 {offsets = [0, 96], sizes = [10, 32], strides = [1, 1]} : vector<10x128xf32> to vector<10x32xf32>
    %230 = vector.extract_strided_slice %185 {offsets = [0, 96], sizes = [10, 32], strides = [1, 1]} : vector<10x128xf32> to vector<10x32xf32>
    %cst_88 = arith.constant dense<0.000000e+00> : vector<8x10xf32>
    %231 = tpu.matmul %228, %229, %cst_88 {dimension_numbers = #tpu.dot_dimension_numbers<[1], [1], [0], [0], [0, 0, 1, 0], [], []>} : vector<8x32xf32>, vector<10x32xf32>, vector<8x10xf32> -> vector<8x10xf32>
    %cst_89 = arith.constant dense<0xFF800000> : vector<8xf32>
    %232 = vector.multi_reduction <maximumf>, %231, %cst_89 [1] : vector<8x10xf32> to vector<8xf32>
    %233 = vector.shape_cast %232 : vector<8xf32> to vector<8x1xf32>
    %234 = vector.broadcast %233 : vector<8x1xf32> to vector<8x10xf32>
    %235 = arith.subf %231, %234 : vector<8x10xf32>
    %236 = math.exp %235 : vector<8x10xf32>
    %cst_90 = arith.constant dense<0.000000e+00> : vector<8xf32>
    %237 = vector.multi_reduction <add>, %236, %cst_90 [1] : vector<8x10xf32> to vector<8xf32>
    %238 = vector.shape_cast %237 : vector<8xf32> to vector<8x1xf32>
    %239 = vector.broadcast %238 : vector<8x1xf32> to vector<8x10xf32>
    %240 = arith.divf %236, %239 : vector<8x10xf32>
    %cst_91 = arith.constant dense<0.000000e+00> : vector<8x32xf32>
    %241 = tpu.matmul %240, %230, %cst_91 {dimension_numbers = #tpu.dot_dimension_numbers<[1], [0], [0], [1], [0, 0, 1, 1], [], []>} : vector<8x10xf32>, vector<10x32xf32>, vector<8x32xf32> -> vector<8x32xf32>
    %242 = tpu.concatenate %199, %213, %227, %241 in 1 : vector<8x32xf32>, vector<8x32xf32>, vector<8x32xf32>, vector<8x32xf32> -> vector<8x128xf32>
    %c0_92 = arith.constant 0 : index
    %c0_93 = arith.constant 0 : index
    %243 = vector.load %arg12[%c0_92, %c0_93] : memref<128x256xf32, #tpu.memory_space<vmem>>, vector<128x256xf32>
    %cst_94 = arith.constant dense<0.000000e+00> : vector<10x256xf32>
    %244 = tpu.matmul %4, %243, %cst_94 {dimension_numbers = #tpu.dot_dimension_numbers<[1], [0], [0], [1], [0, 0, 1, 1], [], []>} : vector<10x128xf32>, vector<128x256xf32>, vector<10x256xf32> -> vector<10x256xf32>
    %c0_95 = arith.constant 0 : index
    %c0_96 = arith.constant 0 : index
    %245 = vector.load %arg13[%c0_95, %c0_96] : memref<1x256xf32, #tpu.memory_space<vmem>>, vector<1x256xf32>
    %246 = vector.broadcast %245 : vector<1x256xf32> to vector<10x256xf32>
    %247 = arith.addf %244, %246 : vector<10x256xf32>
    %248 = vector.extract_strided_slice %177 {offsets = [8, 0], sizes = [8, 128], strides = [1, 1]} : vector<16x128xf32> to vector<8x128xf32>
    %249 = vector.extract_strided_slice %247 {offsets = [0, 0], sizes = [10, 128], strides = [1, 1]} : vector<10x256xf32> to vector<10x128xf32>
    %250 = vector.extract_strided_slice %247 {offsets = [0, 128], sizes = [10, 128], strides = [1, 1]} : vector<10x256xf32> to vector<10x128xf32>
    %251 = vector.extract_strided_slice %248 {offsets = [0, 0], sizes = [8, 32], strides = [1, 1]} : vector<8x128xf32> to vector<8x32xf32>
    %252 = vector.extract_strided_slice %249 {offsets = [0, 0], sizes = [10, 32], strides = [1, 1]} : vector<10x128xf32> to vector<10x32xf32>
    %253 = vector.extract_strided_slice %250 {offsets = [0, 0], sizes = [10, 32], strides = [1, 1]} : vector<10x128xf32> to vector<10x32xf32>
    %cst_97 = arith.constant dense<0.000000e+00> : vector<8x10xf32>
    %254 = tpu.matmul %251, %252, %cst_97 {dimension_numbers = #tpu.dot_dimension_numbers<[1], [1], [0], [0], [0, 0, 1, 0], [], []>} : vector<8x32xf32>, vector<10x32xf32>, vector<8x10xf32> -> vector<8x10xf32>
    %cst_98 = arith.constant dense<0xFF800000> : vector<8xf32>
    %255 = vector.multi_reduction <maximumf>, %254, %cst_98 [1] : vector<8x10xf32> to vector<8xf32>
    %256 = vector.shape_cast %255 : vector<8xf32> to vector<8x1xf32>
    %257 = vector.broadcast %256 : vector<8x1xf32> to vector<8x10xf32>
    %258 = arith.subf %254, %257 : vector<8x10xf32>
    %259 = math.exp %258 : vector<8x10xf32>
    %cst_99 = arith.constant dense<0.000000e+00> : vector<8xf32>
    %260 = vector.multi_reduction <add>, %259, %cst_99 [1] : vector<8x10xf32> to vector<8xf32>
    %261 = vector.shape_cast %260 : vector<8xf32> to vector<8x1xf32>
    %262 = vector.broadcast %261 : vector<8x1xf32> to vector<8x10xf32>
    %263 = arith.divf %259, %262 : vector<8x10xf32>
    %cst_100 = arith.constant dense<0.000000e+00> : vector<8x32xf32>
    %264 = tpu.matmul %263, %253, %cst_100 {dimension_numbers = #tpu.dot_dimension_numbers<[1], [0], [0], [1], [0, 0, 1, 1], [], []>} : vector<8x10xf32>, vector<10x32xf32>, vector<8x32xf32> -> vector<8x32xf32>
    %265 = vector.extract_strided_slice %248 {offsets = [0, 32], sizes = [8, 32], strides = [1, 1]} : vector<8x128xf32> to vector<8x32xf32>
    %266 = vector.extract_strided_slice %249 {offsets = [0, 32], sizes = [10, 32], strides = [1, 1]} : vector<10x128xf32> to vector<10x32xf32>
    %267 = vector.extract_strided_slice %250 {offsets = [0, 32], sizes = [10, 32], strides = [1, 1]} : vector<10x128xf32> to vector<10x32xf32>
    %cst_101 = arith.constant dense<0.000000e+00> : vector<8x10xf32>
    %268 = tpu.matmul %265, %266, %cst_101 {dimension_numbers = #tpu.dot_dimension_numbers<[1], [1], [0], [0], [0, 0, 1, 0], [], []>} : vector<8x32xf32>, vector<10x32xf32>, vector<8x10xf32> -> vector<8x10xf32>
    %cst_102 = arith.constant dense<0xFF800000> : vector<8xf32>
    %269 = vector.multi_reduction <maximumf>, %268, %cst_102 [1] : vector<8x10xf32> to vector<8xf32>
    %270 = vector.shape_cast %269 : vector<8xf32> to vector<8x1xf32>
    %271 = vector.broadcast %270 : vector<8x1xf32> to vector<8x10xf32>
    %272 = arith.subf %268, %271 : vector<8x10xf32>
    %273 = math.exp %272 : vector<8x10xf32>
    %cst_103 = arith.constant dense<0.000000e+00> : vector<8xf32>
    %274 = vector.multi_reduction <add>, %273, %cst_103 [1] : vector<8x10xf32> to vector<8xf32>
    %275 = vector.shape_cast %274 : vector<8xf32> to vector<8x1xf32>
    %276 = vector.broadcast %275 : vector<8x1xf32> to vector<8x10xf32>
    %277 = arith.divf %273, %276 : vector<8x10xf32>
    %cst_104 = arith.constant dense<0.000000e+00> : vector<8x32xf32>
    %278 = tpu.matmul %277, %267, %cst_104 {dimension_numbers = #tpu.dot_dimension_numbers<[1], [0], [0], [1], [0, 0, 1, 1], [], []>} : vector<8x10xf32>, vector<10x32xf32>, vector<8x32xf32> -> vector<8x32xf32>
    %279 = vector.extract_strided_slice %248 {offsets = [0, 64], sizes = [8, 32], strides = [1, 1]} : vector<8x128xf32> to vector<8x32xf32>
    %280 = vector.extract_strided_slice %249 {offsets = [0, 64], sizes = [10, 32], strides = [1, 1]} : vector<10x128xf32> to vector<10x32xf32>
    %281 = vector.extract_strided_slice %250 {offsets = [0, 64], sizes = [10, 32], strides = [1, 1]} : vector<10x128xf32> to vector<10x32xf32>
    %cst_105 = arith.constant dense<0.000000e+00> : vector<8x10xf32>
    %282 = tpu.matmul %279, %280, %cst_105 {dimension_numbers = #tpu.dot_dimension_numbers<[1], [1], [0], [0], [0, 0, 1, 0], [], []>} : vector<8x32xf32>, vector<10x32xf32>, vector<8x10xf32> -> vector<8x10xf32>
    %cst_106 = arith.constant dense<0xFF800000> : vector<8xf32>
    %283 = vector.multi_reduction <maximumf>, %282, %cst_106 [1] : vector<8x10xf32> to vector<8xf32>
    %284 = vector.shape_cast %283 : vector<8xf32> to vector<8x1xf32>
    %285 = vector.broadcast %284 : vector<8x1xf32> to vector<8x10xf32>
    %286 = arith.subf %282, %285 : vector<8x10xf32>
    %287 = math.exp %286 : vector<8x10xf32>
    %cst_107 = arith.constant dense<0.000000e+00> : vector<8xf32>
    %288 = vector.multi_reduction <add>, %287, %cst_107 [1] : vector<8x10xf32> to vector<8xf32>
    %289 = vector.shape_cast %288 : vector<8xf32> to vector<8x1xf32>
    %290 = vector.broadcast %289 : vector<8x1xf32> to vector<8x10xf32>
    %291 = arith.divf %287, %290 : vector<8x10xf32>
    %cst_108 = arith.constant dense<0.000000e+00> : vector<8x32xf32>
    %292 = tpu.matmul %291, %281, %cst_108 {dimension_numbers = #tpu.dot_dimension_numbers<[1], [0], [0], [1], [0, 0, 1, 1], [], []>} : vector<8x10xf32>, vector<10x32xf32>, vector<8x32xf32> -> vector<8x32xf32>
    %293 = vector.extract_strided_slice %248 {offsets = [0, 96], sizes = [8, 32], strides = [1, 1]} : vector<8x128xf32> to vector<8x32xf32>
    %294 = vector.extract_strided_slice %249 {offsets = [0, 96], sizes = [10, 32], strides = [1, 1]} : vector<10x128xf32> to vector<10x32xf32>
    %295 = vector.extract_strided_slice %250 {offsets = [0, 96], sizes = [10, 32], strides = [1, 1]} : vector<10x128xf32> to vector<10x32xf32>
    %cst_109 = arith.constant dense<0.000000e+00> : vector<8x10xf32>
    %296 = tpu.matmul %293, %294, %cst_109 {dimension_numbers = #tpu.dot_dimension_numbers<[1], [1], [0], [0], [0, 0, 1, 0], [], []>} : vector<8x32xf32>, vector<10x32xf32>, vector<8x10xf32> -> vector<8x10xf32>
    %cst_110 = arith.constant dense<0xFF800000> : vector<8xf32>
    %297 = vector.multi_reduction <maximumf>, %296, %cst_110 [1] : vector<8x10xf32> to vector<8xf32>
    %298 = vector.shape_cast %297 : vector<8xf32> to vector<8x1xf32>
    %299 = vector.broadcast %298 : vector<8x1xf32> to vector<8x10xf32>
    %300 = arith.subf %296, %299 : vector<8x10xf32>
    %301 = math.exp %300 : vector<8x10xf32>
    %cst_111 = arith.constant dense<0.000000e+00> : vector<8xf32>
    %302 = vector.multi_reduction <add>, %301, %cst_111 [1] : vector<8x10xf32> to vector<8xf32>
    %303 = vector.shape_cast %302 : vector<8xf32> to vector<8x1xf32>
    %304 = vector.broadcast %303 : vector<8x1xf32> to vector<8x10xf32>
    %305 = arith.divf %301, %304 : vector<8x10xf32>
    %cst_112 = arith.constant dense<0.000000e+00> : vector<8x32xf32>
    %306 = tpu.matmul %305, %295, %cst_112 {dimension_numbers = #tpu.dot_dimension_numbers<[1], [0], [0], [1], [0, 0, 1, 1], [], []>} : vector<8x10xf32>, vector<10x32xf32>, vector<8x32xf32> -> vector<8x32xf32>
    %307 = tpu.concatenate %264, %278, %292, %306 in 1 : vector<8x32xf32>, vector<8x32xf32>, vector<8x32xf32>, vector<8x32xf32> -> vector<8x128xf32>
    %308 = tpu.concatenate %242, %307 in 0 : vector<8x128xf32>, vector<8x128xf32> -> vector<16x128xf32>
    %c0_113 = arith.constant 0 : index
    %c0_114 = arith.constant 0 : index
    %309 = vector.load %arg14[%c0_113, %c0_114] : memref<128x128xf32, #tpu.memory_space<vmem>>, vector<128x128xf32>
    %cst_115 = arith.constant dense<0.000000e+00> : vector<16x128xf32>
    %310 = tpu.matmul %308, %309, %cst_115 {dimension_numbers = #tpu.dot_dimension_numbers<[1], [0], [0], [1], [0, 0, 1, 1], [], []>} : vector<16x128xf32>, vector<128x128xf32>, vector<16x128xf32> -> vector<16x128xf32>
    %c0_116 = arith.constant 0 : index
    %c0_117 = arith.constant 0 : index
    %311 = vector.load %arg15[%c0_116, %c0_117] : memref<1x128xf32, #tpu.memory_space<vmem>>, vector<1x128xf32>
    %312 = vector.broadcast %311 : vector<1x128xf32> to vector<16x128xf32>
    %313 = arith.addf %310, %312 : vector<16x128xf32>
    %314 = arith.addf %172, %313 : vector<16x128xf32>
    %cst_118 = arith.constant dense<0.000000e+00> : vector<16xf32>
    %315 = vector.multi_reduction <add>, %314, %cst_118 [1] : vector<16x128xf32> to vector<16xf32>
    %316 = vector.shape_cast %315 : vector<16xf32> to vector<16x1xf32>
    %cst_119 = arith.constant 1.280000e+02 : f32
    %317 = vector.broadcast %cst_119 : f32 to vector<16x1xf32>
    %318 = arith.divf %316, %317 : vector<16x1xf32>
    %319 = vector.broadcast %318 : vector<16x1xf32> to vector<16x128xf32>
    %320 = arith.subf %314, %319 : vector<16x128xf32>
    %321 = arith.mulf %320, %320 : vector<16x128xf32>
    %cst_120 = arith.constant dense<0.000000e+00> : vector<16xf32>
    %322 = vector.multi_reduction <add>, %321, %cst_120 [1] : vector<16x128xf32> to vector<16xf32>
    %323 = vector.shape_cast %322 : vector<16xf32> to vector<16x1xf32>
    %cst_121 = arith.constant 1.280000e+02 : f32
    %324 = vector.broadcast %cst_121 : f32 to vector<16x1xf32>
    %325 = arith.divf %323, %324 : vector<16x1xf32>
    %326 = vector.broadcast %318 : vector<16x1xf32> to vector<16x128xf32>
    %327 = arith.subf %314, %326 : vector<16x128xf32>
    %cst_122 = arith.constant 9.99999974E-6 : f32
    %328 = vector.broadcast %cst_122 : f32 to vector<16x1xf32>
    %329 = arith.addf %325, %328 : vector<16x1xf32>
    %330 = math.rsqrt %329 : vector<16x1xf32>
    %331 = vector.broadcast %330 : vector<16x1xf32> to vector<16x128xf32>
    %332 = arith.mulf %327, %331 : vector<16x128xf32>
    %c0_123 = arith.constant 0 : index
    %c0_124 = arith.constant 0 : index
    %333 = vector.load %arg16[%c0_123, %c0_124] : memref<1x128xf32, #tpu.memory_space<vmem>>, vector<1x128xf32>
    %334 = vector.broadcast %333 : vector<1x128xf32> to vector<16x128xf32>
    %335 = arith.mulf %332, %334 : vector<16x128xf32>
    %c0_125 = arith.constant 0 : index
    %c0_126 = arith.constant 0 : index
    %336 = vector.load %arg17[%c0_125, %c0_126] : memref<1x128xf32, #tpu.memory_space<vmem>>, vector<1x128xf32>
    %337 = vector.broadcast %336 : vector<1x128xf32> to vector<16x128xf32>
    %338 = arith.addf %335, %337 : vector<16x128xf32>
    %c0_127 = arith.constant 0 : index
    %c0_128 = arith.constant 0 : index
    %339 = vector.load %arg18[%c0_127, %c0_128] : memref<128x512xf32, #tpu.memory_space<vmem>>, vector<128x512xf32>
    %cst_129 = arith.constant dense<0.000000e+00> : vector<16x512xf32>
    %340 = tpu.matmul %338, %339, %cst_129 {dimension_numbers = #tpu.dot_dimension_numbers<[1], [0], [0], [1], [0, 0, 1, 1], [], []>} : vector<16x128xf32>, vector<128x512xf32>, vector<16x512xf32> -> vector<16x512xf32>
    %c0_130 = arith.constant 0 : index
    %c0_131 = arith.constant 0 : index
    %341 = vector.load %arg19[%c0_130, %c0_131] : memref<1x512xf32, #tpu.memory_space<vmem>>, vector<1x512xf32>
    %342 = vector.broadcast %341 : vector<1x512xf32> to vector<16x512xf32>
    %343 = arith.addf %340, %342 : vector<16x512xf32>
    %cst_132 = arith.constant 0.000000e+00 : f32
    %344 = vector.broadcast %cst_132 : f32 to vector<16x512xf32>
    %345 = arith.maximumf %343, %344 : vector<16x512xf32>
    %c0_133 = arith.constant 0 : index
    %c0_134 = arith.constant 0 : index
    %346 = vector.load %arg20[%c0_133, %c0_134] : memref<512x128xf32, #tpu.memory_space<vmem>>, vector<512x128xf32>
    %cst_135 = arith.constant dense<0.000000e+00> : vector<16x128xf32>
    %347 = tpu.matmul %345, %346, %cst_135 {dimension_numbers = #tpu.dot_dimension_numbers<[1], [0], [0], [1], [0, 0, 1, 1], [], []>} : vector<16x512xf32>, vector<512x128xf32>, vector<16x128xf32> -> vector<16x128xf32>
    %348 = arith.addf %338, %347 : vector<16x128xf32>
    %c0_136 = arith.constant 0 : index
    %c0_137 = arith.constant 0 : index
    %349 = vector.load %arg21[%c0_136, %c0_137] : memref<1x128xf32, #tpu.memory_space<vmem>>, vector<1x128xf32>
    %350 = vector.broadcast %349 : vector<1x128xf32> to vector<16x128xf32>
    %351 = arith.addf %348, %350 : vector<16x128xf32>
    %cst_138 = arith.constant dense<0.000000e+00> : vector<16xf32>
    %352 = vector.multi_reduction <add>, %351, %cst_138 [1] : vector<16x128xf32> to vector<16xf32>
    %353 = vector.shape_cast %352 : vector<16xf32> to vector<16x1xf32>
    %cst_139 = arith.constant 1.280000e+02 : f32
    %354 = vector.broadcast %cst_139 : f32 to vector<16x1xf32>
    %355 = arith.divf %353, %354 : vector<16x1xf32>
    %356 = vector.broadcast %355 : vector<16x1xf32> to vector<16x128xf32>
    %357 = arith.subf %351, %356 : vector<16x128xf32>
    %358 = arith.mulf %357, %357 : vector<16x128xf32>
    %cst_140 = arith.constant dense<0.000000e+00> : vector<16xf32>
    %359 = vector.multi_reduction <add>, %358, %cst_140 [1] : vector<16x128xf32> to vector<16xf32>
    %360 = vector.shape_cast %359 : vector<16xf32> to vector<16x1xf32>
    %cst_141 = arith.constant 1.280000e+02 : f32
    %361 = vector.broadcast %cst_141 : f32 to vector<16x1xf32>
    %362 = arith.divf %360, %361 : vector<16x1xf32>
    %363 = vector.broadcast %355 : vector<16x1xf32> to vector<16x128xf32>
    %364 = arith.subf %351, %363 : vector<16x128xf32>
    %cst_142 = arith.constant 9.99999974E-6 : f32
    %365 = vector.broadcast %cst_142 : f32 to vector<16x1xf32>
    %366 = arith.addf %362, %365 : vector<16x1xf32>
    %367 = math.rsqrt %366 : vector<16x1xf32>
    %368 = vector.broadcast %367 : vector<16x1xf32> to vector<16x128xf32>
    %369 = arith.mulf %364, %368 : vector<16x128xf32>
    %c0_143 = arith.constant 0 : index
    %c0_144 = arith.constant 0 : index
    %370 = vector.load %arg22[%c0_143, %c0_144] : memref<1x128xf32, #tpu.memory_space<vmem>>, vector<1x128xf32>
    %371 = vector.broadcast %370 : vector<1x128xf32> to vector<16x128xf32>
    %372 = arith.mulf %369, %371 : vector<16x128xf32>
    %c0_145 = arith.constant 0 : index
    %c0_146 = arith.constant 0 : index
    %373 = vector.load %arg23[%c0_145, %c0_146] : memref<1x128xf32, #tpu.memory_space<vmem>>, vector<1x128xf32>
    %374 = vector.broadcast %373 : vector<1x128xf32> to vector<16x128xf32>
    %375 = arith.addf %372, %374 : vector<16x128xf32>
    %376 = vector.extract_strided_slice %375 {offsets = [0, 0], sizes = [8, 128], strides = [1, 1]} : vector<16x128xf32> to vector<8x128xf32>
    %377 = vector.extract_strided_slice %375 {offsets = [8, 0], sizes = [8, 128], strides = [1, 1]} : vector<16x128xf32> to vector<8x128xf32>
    %c0_147 = arith.constant 0 : index
    %c0_148 = arith.constant 0 : index
    %378 = vector.load %arg24[%c0_147, %c0_148] : memref<128x128xf32, #tpu.memory_space<vmem>>, vector<128x128xf32>
    %cst_149 = arith.constant dense<0.000000e+00> : vector<16x128xf32>
    %379 = tpu.matmul %375, %378, %cst_149 {dimension_numbers = #tpu.dot_dimension_numbers<[1], [0], [0], [1], [0, 0, 1, 1], [], []>} : vector<16x128xf32>, vector<128x128xf32>, vector<16x128xf32> -> vector<16x128xf32>
    %c0_150 = arith.constant 0 : index
    %c0_151 = arith.constant 0 : index
    %380 = vector.load %arg25[%c0_150, %c0_151] : memref<1x128xf32, #tpu.memory_space<vmem>>, vector<1x128xf32>
    %381 = vector.broadcast %380 : vector<1x128xf32> to vector<16x128xf32>
    %382 = arith.addf %379, %381 : vector<16x128xf32>
    %c0_152 = arith.constant 0 : index
    %c0_153 = arith.constant 0 : index
    %383 = vector.load %arg26[%c0_152, %c0_153] : memref<128x256xf32, #tpu.memory_space<vmem>>, vector<128x256xf32>
    %cst_154 = arith.constant dense<0.000000e+00> : vector<8x256xf32>
    %384 = tpu.matmul %376, %383, %cst_154 {dimension_numbers = #tpu.dot_dimension_numbers<[1], [0], [0], [1], [0, 0, 1, 1], [], []>} : vector<8x128xf32>, vector<128x256xf32>, vector<8x256xf32> -> vector<8x256xf32>
    %c0_155 = arith.constant 0 : index
    %c0_156 = arith.constant 0 : index
    %385 = vector.load %arg27[%c0_155, %c0_156] : memref<1x256xf32, #tpu.memory_space<vmem>>, vector<1x256xf32>
    %386 = vector.broadcast %385 : vector<1x256xf32> to vector<8x256xf32>
    %387 = arith.addf %384, %386 : vector<8x256xf32>
    %388 = vector.extract_strided_slice %382 {offsets = [0, 0], sizes = [8, 128], strides = [1, 1]} : vector<16x128xf32> to vector<8x128xf32>
    %389 = vector.extract_strided_slice %387 {offsets = [0, 0], sizes = [8, 128], strides = [1, 1]} : vector<8x256xf32> to vector<8x128xf32>
    %390 = vector.extract_strided_slice %387 {offsets = [0, 128], sizes = [8, 128], strides = [1, 1]} : vector<8x256xf32> to vector<8x128xf32>
    %391 = vector.extract_strided_slice %388 {offsets = [0, 0], sizes = [8, 32], strides = [1, 1]} : vector<8x128xf32> to vector<8x32xf32>
    %392 = vector.extract_strided_slice %389 {offsets = [0, 0], sizes = [8, 32], strides = [1, 1]} : vector<8x128xf32> to vector<8x32xf32>
    %393 = vector.extract_strided_slice %390 {offsets = [0, 0], sizes = [8, 32], strides = [1, 1]} : vector<8x128xf32> to vector<8x32xf32>
    %cst_157 = arith.constant dense<0.000000e+00> : vector<8x8xf32>
    %394 = tpu.matmul %391, %392, %cst_157 {dimension_numbers = #tpu.dot_dimension_numbers<[1], [1], [0], [0], [0, 0, 1, 0], [], []>} : vector<8x32xf32>, vector<8x32xf32>, vector<8x8xf32> -> vector<8x8xf32>
    %cst_158 = arith.constant dense<0xFF800000> : vector<8xf32>
    %395 = vector.multi_reduction <maximumf>, %394, %cst_158 [1] : vector<8x8xf32> to vector<8xf32>
    %396 = vector.shape_cast %395 : vector<8xf32> to vector<8x1xf32>
    %397 = vector.broadcast %396 : vector<8x1xf32> to vector<8x8xf32>
    %398 = arith.subf %394, %397 : vector<8x8xf32>
    %399 = math.exp %398 : vector<8x8xf32>
    %cst_159 = arith.constant dense<0.000000e+00> : vector<8xf32>
    %400 = vector.multi_reduction <add>, %399, %cst_159 [1] : vector<8x8xf32> to vector<8xf32>
    %401 = vector.shape_cast %400 : vector<8xf32> to vector<8x1xf32>
    %402 = vector.broadcast %401 : vector<8x1xf32> to vector<8x8xf32>
    %403 = arith.divf %399, %402 : vector<8x8xf32>
    %cst_160 = arith.constant dense<0.000000e+00> : vector<8x32xf32>
    %404 = tpu.matmul %403, %393, %cst_160 {dimension_numbers = #tpu.dot_dimension_numbers<[1], [0], [0], [1], [0, 0, 1, 1], [], []>} : vector<8x8xf32>, vector<8x32xf32>, vector<8x32xf32> -> vector<8x32xf32>
    %405 = vector.extract_strided_slice %388 {offsets = [0, 32], sizes = [8, 32], strides = [1, 1]} : vector<8x128xf32> to vector<8x32xf32>
    %406 = vector.extract_strided_slice %389 {offsets = [0, 32], sizes = [8, 32], strides = [1, 1]} : vector<8x128xf32> to vector<8x32xf32>
    %407 = vector.extract_strided_slice %390 {offsets = [0, 32], sizes = [8, 32], strides = [1, 1]} : vector<8x128xf32> to vector<8x32xf32>
    %cst_161 = arith.constant dense<0.000000e+00> : vector<8x8xf32>
    %408 = tpu.matmul %405, %406, %cst_161 {dimension_numbers = #tpu.dot_dimension_numbers<[1], [1], [0], [0], [0, 0, 1, 0], [], []>} : vector<8x32xf32>, vector<8x32xf32>, vector<8x8xf32> -> vector<8x8xf32>
    %cst_162 = arith.constant dense<0xFF800000> : vector<8xf32>
    %409 = vector.multi_reduction <maximumf>, %408, %cst_162 [1] : vector<8x8xf32> to vector<8xf32>
    %410 = vector.shape_cast %409 : vector<8xf32> to vector<8x1xf32>
    %411 = vector.broadcast %410 : vector<8x1xf32> to vector<8x8xf32>
    %412 = arith.subf %408, %411 : vector<8x8xf32>
    %413 = math.exp %412 : vector<8x8xf32>
    %cst_163 = arith.constant dense<0.000000e+00> : vector<8xf32>
    %414 = vector.multi_reduction <add>, %413, %cst_163 [1] : vector<8x8xf32> to vector<8xf32>
    %415 = vector.shape_cast %414 : vector<8xf32> to vector<8x1xf32>
    %416 = vector.broadcast %415 : vector<8x1xf32> to vector<8x8xf32>
    %417 = arith.divf %413, %416 : vector<8x8xf32>
    %cst_164 = arith.constant dense<0.000000e+00> : vector<8x32xf32>
    %418 = tpu.matmul %417, %407, %cst_164 {dimension_numbers = #tpu.dot_dimension_numbers<[1], [0], [0], [1], [0, 0, 1, 1], [], []>} : vector<8x8xf32>, vector<8x32xf32>, vector<8x32xf32> -> vector<8x32xf32>
    %419 = vector.extract_strided_slice %388 {offsets = [0, 64], sizes = [8, 32], strides = [1, 1]} : vector<8x128xf32> to vector<8x32xf32>
    %420 = vector.extract_strided_slice %389 {offsets = [0, 64], sizes = [8, 32], strides = [1, 1]} : vector<8x128xf32> to vector<8x32xf32>
    %421 = vector.extract_strided_slice %390 {offsets = [0, 64], sizes = [8, 32], strides = [1, 1]} : vector<8x128xf32> to vector<8x32xf32>
    %cst_165 = arith.constant dense<0.000000e+00> : vector<8x8xf32>
    %422 = tpu.matmul %419, %420, %cst_165 {dimension_numbers = #tpu.dot_dimension_numbers<[1], [1], [0], [0], [0, 0, 1, 0], [], []>} : vector<8x32xf32>, vector<8x32xf32>, vector<8x8xf32> -> vector<8x8xf32>
    %cst_166 = arith.constant dense<0xFF800000> : vector<8xf32>
    %423 = vector.multi_reduction <maximumf>, %422, %cst_166 [1] : vector<8x8xf32> to vector<8xf32>
    %424 = vector.shape_cast %423 : vector<8xf32> to vector<8x1xf32>
    %425 = vector.broadcast %424 : vector<8x1xf32> to vector<8x8xf32>
    %426 = arith.subf %422, %425 : vector<8x8xf32>
    %427 = math.exp %426 : vector<8x8xf32>
    %cst_167 = arith.constant dense<0.000000e+00> : vector<8xf32>
    %428 = vector.multi_reduction <add>, %427, %cst_167 [1] : vector<8x8xf32> to vector<8xf32>
    %429 = vector.shape_cast %428 : vector<8xf32> to vector<8x1xf32>
    %430 = vector.broadcast %429 : vector<8x1xf32> to vector<8x8xf32>
    %431 = arith.divf %427, %430 : vector<8x8xf32>
    %cst_168 = arith.constant dense<0.000000e+00> : vector<8x32xf32>
    %432 = tpu.matmul %431, %421, %cst_168 {dimension_numbers = #tpu.dot_dimension_numbers<[1], [0], [0], [1], [0, 0, 1, 1], [], []>} : vector<8x8xf32>, vector<8x32xf32>, vector<8x32xf32> -> vector<8x32xf32>
    %433 = vector.extract_strided_slice %388 {offsets = [0, 96], sizes = [8, 32], strides = [1, 1]} : vector<8x128xf32> to vector<8x32xf32>
    %434 = vector.extract_strided_slice %389 {offsets = [0, 96], sizes = [8, 32], strides = [1, 1]} : vector<8x128xf32> to vector<8x32xf32>
    %435 = vector.extract_strided_slice %390 {offsets = [0, 96], sizes = [8, 32], strides = [1, 1]} : vector<8x128xf32> to vector<8x32xf32>
    %cst_169 = arith.constant dense<0.000000e+00> : vector<8x8xf32>
    %436 = tpu.matmul %433, %434, %cst_169 {dimension_numbers = #tpu.dot_dimension_numbers<[1], [1], [0], [0], [0, 0, 1, 0], [], []>} : vector<8x32xf32>, vector<8x32xf32>, vector<8x8xf32> -> vector<8x8xf32>
    %cst_170 = arith.constant dense<0xFF800000> : vector<8xf32>
    %437 = vector.multi_reduction <maximumf>, %436, %cst_170 [1] : vector<8x8xf32> to vector<8xf32>
    %438 = vector.shape_cast %437 : vector<8xf32> to vector<8x1xf32>
    %439 = vector.broadcast %438 : vector<8x1xf32> to vector<8x8xf32>
    %440 = arith.subf %436, %439 : vector<8x8xf32>
    %441 = math.exp %440 : vector<8x8xf32>
    %cst_171 = arith.constant dense<0.000000e+00> : vector<8xf32>
    %442 = vector.multi_reduction <add>, %441, %cst_171 [1] : vector<8x8xf32> to vector<8xf32>
    %443 = vector.shape_cast %442 : vector<8xf32> to vector<8x1xf32>
    %444 = vector.broadcast %443 : vector<8x1xf32> to vector<8x8xf32>
    %445 = arith.divf %441, %444 : vector<8x8xf32>
    %cst_172 = arith.constant dense<0.000000e+00> : vector<8x32xf32>
    %446 = tpu.matmul %445, %435, %cst_172 {dimension_numbers = #tpu.dot_dimension_numbers<[1], [0], [0], [1], [0, 0, 1, 1], [], []>} : vector<8x8xf32>, vector<8x32xf32>, vector<8x32xf32> -> vector<8x32xf32>
    %447 = tpu.concatenate %404, %418, %432, %446 in 1 : vector<8x32xf32>, vector<8x32xf32>, vector<8x32xf32>, vector<8x32xf32> -> vector<8x128xf32>
    %c0_173 = arith.constant 0 : index
    %c0_174 = arith.constant 0 : index
    %448 = vector.load %arg26[%c0_173, %c0_174] : memref<128x256xf32, #tpu.memory_space<vmem>>, vector<128x256xf32>
    %cst_175 = arith.constant dense<0.000000e+00> : vector<8x256xf32>
    %449 = tpu.matmul %377, %448, %cst_175 {dimension_numbers = #tpu.dot_dimension_numbers<[1], [0], [0], [1], [0, 0, 1, 1], [], []>} : vector<8x128xf32>, vector<128x256xf32>, vector<8x256xf32> -> vector<8x256xf32>
    %c0_176 = arith.constant 0 : index
    %c0_177 = arith.constant 0 : index
    %450 = vector.load %arg27[%c0_176, %c0_177] : memref<1x256xf32, #tpu.memory_space<vmem>>, vector<1x256xf32>
    %451 = vector.broadcast %450 : vector<1x256xf32> to vector<8x256xf32>
    %452 = arith.addf %449, %451 : vector<8x256xf32>
    %453 = vector.extract_strided_slice %382 {offsets = [8, 0], sizes = [8, 128], strides = [1, 1]} : vector<16x128xf32> to vector<8x128xf32>
    %454 = vector.extract_strided_slice %452 {offsets = [0, 0], sizes = [8, 128], strides = [1, 1]} : vector<8x256xf32> to vector<8x128xf32>
    %455 = vector.extract_strided_slice %452 {offsets = [0, 128], sizes = [8, 128], strides = [1, 1]} : vector<8x256xf32> to vector<8x128xf32>
    %456 = vector.extract_strided_slice %453 {offsets = [0, 0], sizes = [8, 32], strides = [1, 1]} : vector<8x128xf32> to vector<8x32xf32>
    %457 = vector.extract_strided_slice %454 {offsets = [0, 0], sizes = [8, 32], strides = [1, 1]} : vector<8x128xf32> to vector<8x32xf32>
    %458 = vector.extract_strided_slice %455 {offsets = [0, 0], sizes = [8, 32], strides = [1, 1]} : vector<8x128xf32> to vector<8x32xf32>
    %cst_178 = arith.constant dense<0.000000e+00> : vector<8x8xf32>
    %459 = tpu.matmul %456, %457, %cst_178 {dimension_numbers = #tpu.dot_dimension_numbers<[1], [1], [0], [0], [0, 0, 1, 0], [], []>} : vector<8x32xf32>, vector<8x32xf32>, vector<8x8xf32> -> vector<8x8xf32>
    %cst_179 = arith.constant dense<0xFF800000> : vector<8xf32>
    %460 = vector.multi_reduction <maximumf>, %459, %cst_179 [1] : vector<8x8xf32> to vector<8xf32>
    %461 = vector.shape_cast %460 : vector<8xf32> to vector<8x1xf32>
    %462 = vector.broadcast %461 : vector<8x1xf32> to vector<8x8xf32>
    %463 = arith.subf %459, %462 : vector<8x8xf32>
    %464 = math.exp %463 : vector<8x8xf32>
    %cst_180 = arith.constant dense<0.000000e+00> : vector<8xf32>
    %465 = vector.multi_reduction <add>, %464, %cst_180 [1] : vector<8x8xf32> to vector<8xf32>
    %466 = vector.shape_cast %465 : vector<8xf32> to vector<8x1xf32>
    %467 = vector.broadcast %466 : vector<8x1xf32> to vector<8x8xf32>
    %468 = arith.divf %464, %467 : vector<8x8xf32>
    %cst_181 = arith.constant dense<0.000000e+00> : vector<8x32xf32>
    %469 = tpu.matmul %468, %458, %cst_181 {dimension_numbers = #tpu.dot_dimension_numbers<[1], [0], [0], [1], [0, 0, 1, 1], [], []>} : vector<8x8xf32>, vector<8x32xf32>, vector<8x32xf32> -> vector<8x32xf32>
    %470 = vector.extract_strided_slice %453 {offsets = [0, 32], sizes = [8, 32], strides = [1, 1]} : vector<8x128xf32> to vector<8x32xf32>
    %471 = vector.extract_strided_slice %454 {offsets = [0, 32], sizes = [8, 32], strides = [1, 1]} : vector<8x128xf32> to vector<8x32xf32>
    %472 = vector.extract_strided_slice %455 {offsets = [0, 32], sizes = [8, 32], strides = [1, 1]} : vector<8x128xf32> to vector<8x32xf32>
    %cst_182 = arith.constant dense<0.000000e+00> : vector<8x8xf32>
    %473 = tpu.matmul %470, %471, %cst_182 {dimension_numbers = #tpu.dot_dimension_numbers<[1], [1], [0], [0], [0, 0, 1, 0], [], []>} : vector<8x32xf32>, vector<8x32xf32>, vector<8x8xf32> -> vector<8x8xf32>
    %cst_183 = arith.constant dense<0xFF800000> : vector<8xf32>
    %474 = vector.multi_reduction <maximumf>, %473, %cst_183 [1] : vector<8x8xf32> to vector<8xf32>
    %475 = vector.shape_cast %474 : vector<8xf32> to vector<8x1xf32>
    %476 = vector.broadcast %475 : vector<8x1xf32> to vector<8x8xf32>
    %477 = arith.subf %473, %476 : vector<8x8xf32>
    %478 = math.exp %477 : vector<8x8xf32>
    %cst_184 = arith.constant dense<0.000000e+00> : vector<8xf32>
    %479 = vector.multi_reduction <add>, %478, %cst_184 [1] : vector<8x8xf32> to vector<8xf32>
    %480 = vector.shape_cast %479 : vector<8xf32> to vector<8x1xf32>
    %481 = vector.broadcast %480 : vector<8x1xf32> to vector<8x8xf32>
    %482 = arith.divf %478, %481 : vector<8x8xf32>
    %cst_185 = arith.constant dense<0.000000e+00> : vector<8x32xf32>
    %483 = tpu.matmul %482, %472, %cst_185 {dimension_numbers = #tpu.dot_dimension_numbers<[1], [0], [0], [1], [0, 0, 1, 1], [], []>} : vector<8x8xf32>, vector<8x32xf32>, vector<8x32xf32> -> vector<8x32xf32>
    %484 = vector.extract_strided_slice %453 {offsets = [0, 64], sizes = [8, 32], strides = [1, 1]} : vector<8x128xf32> to vector<8x32xf32>
    %485 = vector.extract_strided_slice %454 {offsets = [0, 64], sizes = [8, 32], strides = [1, 1]} : vector<8x128xf32> to vector<8x32xf32>
    %486 = vector.extract_strided_slice %455 {offsets = [0, 64], sizes = [8, 32], strides = [1, 1]} : vector<8x128xf32> to vector<8x32xf32>
    %cst_186 = arith.constant dense<0.000000e+00> : vector<8x8xf32>
    %487 = tpu.matmul %484, %485, %cst_186 {dimension_numbers = #tpu.dot_dimension_numbers<[1], [1], [0], [0], [0, 0, 1, 0], [], []>} : vector<8x32xf32>, vector<8x32xf32>, vector<8x8xf32> -> vector<8x8xf32>
    %cst_187 = arith.constant dense<0xFF800000> : vector<8xf32>
    %488 = vector.multi_reduction <maximumf>, %487, %cst_187 [1] : vector<8x8xf32> to vector<8xf32>
    %489 = vector.shape_cast %488 : vector<8xf32> to vector<8x1xf32>
    %490 = vector.broadcast %489 : vector<8x1xf32> to vector<8x8xf32>
    %491 = arith.subf %487, %490 : vector<8x8xf32>
    %492 = math.exp %491 : vector<8x8xf32>
    %cst_188 = arith.constant dense<0.000000e+00> : vector<8xf32>
    %493 = vector.multi_reduction <add>, %492, %cst_188 [1] : vector<8x8xf32> to vector<8xf32>
    %494 = vector.shape_cast %493 : vector<8xf32> to vector<8x1xf32>
    %495 = vector.broadcast %494 : vector<8x1xf32> to vector<8x8xf32>
    %496 = arith.divf %492, %495 : vector<8x8xf32>
    %cst_189 = arith.constant dense<0.000000e+00> : vector<8x32xf32>
    %497 = tpu.matmul %496, %486, %cst_189 {dimension_numbers = #tpu.dot_dimension_numbers<[1], [0], [0], [1], [0, 0, 1, 1], [], []>} : vector<8x8xf32>, vector<8x32xf32>, vector<8x32xf32> -> vector<8x32xf32>
    %498 = vector.extract_strided_slice %453 {offsets = [0, 96], sizes = [8, 32], strides = [1, 1]} : vector<8x128xf32> to vector<8x32xf32>
    %499 = vector.extract_strided_slice %454 {offsets = [0, 96], sizes = [8, 32], strides = [1, 1]} : vector<8x128xf32> to vector<8x32xf32>
    %500 = vector.extract_strided_slice %455 {offsets = [0, 96], sizes = [8, 32], strides = [1, 1]} : vector<8x128xf32> to vector<8x32xf32>
    %cst_190 = arith.constant dense<0.000000e+00> : vector<8x8xf32>
    %501 = tpu.matmul %498, %499, %cst_190 {dimension_numbers = #tpu.dot_dimension_numbers<[1], [1], [0], [0], [0, 0, 1, 0], [], []>} : vector<8x32xf32>, vector<8x32xf32>, vector<8x8xf32> -> vector<8x8xf32>
    %cst_191 = arith.constant dense<0xFF800000> : vector<8xf32>
    %502 = vector.multi_reduction <maximumf>, %501, %cst_191 [1] : vector<8x8xf32> to vector<8xf32>
    %503 = vector.shape_cast %502 : vector<8xf32> to vector<8x1xf32>
    %504 = vector.broadcast %503 : vector<8x1xf32> to vector<8x8xf32>
    %505 = arith.subf %501, %504 : vector<8x8xf32>
    %506 = math.exp %505 : vector<8x8xf32>
    %cst_192 = arith.constant dense<0.000000e+00> : vector<8xf32>
    %507 = vector.multi_reduction <add>, %506, %cst_192 [1] : vector<8x8xf32> to vector<8xf32>
    %508 = vector.shape_cast %507 : vector<8xf32> to vector<8x1xf32>
    %509 = vector.broadcast %508 : vector<8x1xf32> to vector<8x8xf32>
    %510 = arith.divf %506, %509 : vector<8x8xf32>
    %cst_193 = arith.constant dense<0.000000e+00> : vector<8x32xf32>
    %511 = tpu.matmul %510, %500, %cst_193 {dimension_numbers = #tpu.dot_dimension_numbers<[1], [0], [0], [1], [0, 0, 1, 1], [], []>} : vector<8x8xf32>, vector<8x32xf32>, vector<8x32xf32> -> vector<8x32xf32>
    %512 = tpu.concatenate %469, %483, %497, %511 in 1 : vector<8x32xf32>, vector<8x32xf32>, vector<8x32xf32>, vector<8x32xf32> -> vector<8x128xf32>
    %513 = tpu.concatenate %447, %512 in 0 : vector<8x128xf32>, vector<8x128xf32> -> vector<16x128xf32>
    %c0_194 = arith.constant 0 : index
    %c0_195 = arith.constant 0 : index
    %514 = vector.load %arg28[%c0_194, %c0_195] : memref<128x128xf32, #tpu.memory_space<vmem>>, vector<128x128xf32>
    %cst_196 = arith.constant dense<0.000000e+00> : vector<16x128xf32>
    %515 = tpu.matmul %513, %514, %cst_196 {dimension_numbers = #tpu.dot_dimension_numbers<[1], [0], [0], [1], [0, 0, 1, 1], [], []>} : vector<16x128xf32>, vector<128x128xf32>, vector<16x128xf32> -> vector<16x128xf32>
    %c0_197 = arith.constant 0 : index
    %c0_198 = arith.constant 0 : index
    %516 = vector.load %arg29[%c0_197, %c0_198] : memref<1x128xf32, #tpu.memory_space<vmem>>, vector<1x128xf32>
    %517 = vector.broadcast %516 : vector<1x128xf32> to vector<16x128xf32>
    %518 = arith.addf %515, %517 : vector<16x128xf32>
    %519 = arith.addf %375, %518 : vector<16x128xf32>
    %cst_199 = arith.constant dense<0.000000e+00> : vector<16xf32>
    %520 = vector.multi_reduction <add>, %519, %cst_199 [1] : vector<16x128xf32> to vector<16xf32>
    %521 = vector.shape_cast %520 : vector<16xf32> to vector<16x1xf32>
    %cst_200 = arith.constant 1.280000e+02 : f32
    %522 = vector.broadcast %cst_200 : f32 to vector<16x1xf32>
    %523 = arith.divf %521, %522 : vector<16x1xf32>
    %524 = vector.broadcast %523 : vector<16x1xf32> to vector<16x128xf32>
    %525 = arith.subf %519, %524 : vector<16x128xf32>
    %526 = arith.mulf %525, %525 : vector<16x128xf32>
    %cst_201 = arith.constant dense<0.000000e+00> : vector<16xf32>
    %527 = vector.multi_reduction <add>, %526, %cst_201 [1] : vector<16x128xf32> to vector<16xf32>
    %528 = vector.shape_cast %527 : vector<16xf32> to vector<16x1xf32>
    %cst_202 = arith.constant 1.280000e+02 : f32
    %529 = vector.broadcast %cst_202 : f32 to vector<16x1xf32>
    %530 = arith.divf %528, %529 : vector<16x1xf32>
    %531 = vector.broadcast %523 : vector<16x1xf32> to vector<16x128xf32>
    %532 = arith.subf %519, %531 : vector<16x128xf32>
    %cst_203 = arith.constant 9.99999974E-6 : f32
    %533 = vector.broadcast %cst_203 : f32 to vector<16x1xf32>
    %534 = arith.addf %530, %533 : vector<16x1xf32>
    %535 = math.rsqrt %534 : vector<16x1xf32>
    %536 = vector.broadcast %535 : vector<16x1xf32> to vector<16x128xf32>
    %537 = arith.mulf %532, %536 : vector<16x128xf32>
    %c0_204 = arith.constant 0 : index
    %c0_205 = arith.constant 0 : index
    %538 = vector.load %arg30[%c0_204, %c0_205] : memref<1x128xf32, #tpu.memory_space<vmem>>, vector<1x128xf32>
    %539 = vector.broadcast %538 : vector<1x128xf32> to vector<16x128xf32>
    %540 = arith.mulf %537, %539 : vector<16x128xf32>
    %c0_206 = arith.constant 0 : index
    %c0_207 = arith.constant 0 : index
    %541 = vector.load %arg31[%c0_206, %c0_207] : memref<1x128xf32, #tpu.memory_space<vmem>>, vector<1x128xf32>
    %542 = vector.broadcast %541 : vector<1x128xf32> to vector<16x128xf32>
    %543 = arith.addf %540, %542 : vector<16x128xf32>
    %c0_208 = arith.constant 0 : index
    %c0_209 = arith.constant 0 : index
    %544 = vector.load %arg32[%c0_208, %c0_209] : memref<128x128xf32, #tpu.memory_space<vmem>>, vector<128x128xf32>
    %cst_210 = arith.constant dense<0.000000e+00> : vector<16x128xf32>
    %545 = tpu.matmul %543, %544, %cst_210 {dimension_numbers = #tpu.dot_dimension_numbers<[1], [0], [0], [1], [0, 0, 1, 1], [], []>} : vector<16x128xf32>, vector<128x128xf32>, vector<16x128xf32> -> vector<16x128xf32>
    %c0_211 = arith.constant 0 : index
    %c0_212 = arith.constant 0 : index
    %546 = vector.load %arg33[%c0_211, %c0_212] : memref<1x128xf32, #tpu.memory_space<vmem>>, vector<1x128xf32>
    %547 = vector.broadcast %546 : vector<1x128xf32> to vector<16x128xf32>
    %548 = arith.addf %545, %547 : vector<16x128xf32>
    %c0_213 = arith.constant 0 : index
    %c0_214 = arith.constant 0 : index
    %549 = vector.load %arg34[%c0_213, %c0_214] : memref<128x256xf32, #tpu.memory_space<vmem>>, vector<128x256xf32>
    %cst_215 = arith.constant dense<0.000000e+00> : vector<10x256xf32>
    %550 = tpu.matmul %2, %549, %cst_215 {dimension_numbers = #tpu.dot_dimension_numbers<[1], [0], [0], [1], [0, 0, 1, 1], [], []>} : vector<10x128xf32>, vector<128x256xf32>, vector<10x256xf32> -> vector<10x256xf32>
    %c0_216 = arith.constant 0 : index
    %c0_217 = arith.constant 0 : index
    %551 = vector.load %arg35[%c0_216, %c0_217] : memref<1x256xf32, #tpu.memory_space<vmem>>, vector<1x256xf32>
    %552 = vector.broadcast %551 : vector<1x256xf32> to vector<10x256xf32>
    %553 = arith.addf %550, %552 : vector<10x256xf32>
    %554 = vector.extract_strided_slice %548 {offsets = [0, 0], sizes = [8, 128], strides = [1, 1]} : vector<16x128xf32> to vector<8x128xf32>
    %555 = vector.extract_strided_slice %553 {offsets = [0, 0], sizes = [10, 128], strides = [1, 1]} : vector<10x256xf32> to vector<10x128xf32>
    %556 = vector.extract_strided_slice %553 {offsets = [0, 128], sizes = [10, 128], strides = [1, 1]} : vector<10x256xf32> to vector<10x128xf32>
    %557 = vector.extract_strided_slice %554 {offsets = [0, 0], sizes = [8, 32], strides = [1, 1]} : vector<8x128xf32> to vector<8x32xf32>
    %558 = vector.extract_strided_slice %555 {offsets = [0, 0], sizes = [10, 32], strides = [1, 1]} : vector<10x128xf32> to vector<10x32xf32>
    %559 = vector.extract_strided_slice %556 {offsets = [0, 0], sizes = [10, 32], strides = [1, 1]} : vector<10x128xf32> to vector<10x32xf32>
    %cst_218 = arith.constant dense<0.000000e+00> : vector<8x10xf32>
    %560 = tpu.matmul %557, %558, %cst_218 {dimension_numbers = #tpu.dot_dimension_numbers<[1], [1], [0], [0], [0, 0, 1, 0], [], []>} : vector<8x32xf32>, vector<10x32xf32>, vector<8x10xf32> -> vector<8x10xf32>
    %cst_219 = arith.constant dense<0xFF800000> : vector<8xf32>
    %561 = vector.multi_reduction <maximumf>, %560, %cst_219 [1] : vector<8x10xf32> to vector<8xf32>
    %562 = vector.shape_cast %561 : vector<8xf32> to vector<8x1xf32>
    %563 = vector.broadcast %562 : vector<8x1xf32> to vector<8x10xf32>
    %564 = arith.subf %560, %563 : vector<8x10xf32>
    %565 = math.exp %564 : vector<8x10xf32>
    %cst_220 = arith.constant dense<0.000000e+00> : vector<8xf32>
    %566 = vector.multi_reduction <add>, %565, %cst_220 [1] : vector<8x10xf32> to vector<8xf32>
    %567 = vector.shape_cast %566 : vector<8xf32> to vector<8x1xf32>
    %568 = vector.broadcast %567 : vector<8x1xf32> to vector<8x10xf32>
    %569 = arith.divf %565, %568 : vector<8x10xf32>
    %cst_221 = arith.constant dense<0.000000e+00> : vector<8x32xf32>
    %570 = tpu.matmul %569, %559, %cst_221 {dimension_numbers = #tpu.dot_dimension_numbers<[1], [0], [0], [1], [0, 0, 1, 1], [], []>} : vector<8x10xf32>, vector<10x32xf32>, vector<8x32xf32> -> vector<8x32xf32>
    %571 = vector.extract_strided_slice %554 {offsets = [0, 32], sizes = [8, 32], strides = [1, 1]} : vector<8x128xf32> to vector<8x32xf32>
    %572 = vector.extract_strided_slice %555 {offsets = [0, 32], sizes = [10, 32], strides = [1, 1]} : vector<10x128xf32> to vector<10x32xf32>
    %573 = vector.extract_strided_slice %556 {offsets = [0, 32], sizes = [10, 32], strides = [1, 1]} : vector<10x128xf32> to vector<10x32xf32>
    %cst_222 = arith.constant dense<0.000000e+00> : vector<8x10xf32>
    %574 = tpu.matmul %571, %572, %cst_222 {dimension_numbers = #tpu.dot_dimension_numbers<[1], [1], [0], [0], [0, 0, 1, 0], [], []>} : vector<8x32xf32>, vector<10x32xf32>, vector<8x10xf32> -> vector<8x10xf32>
    %cst_223 = arith.constant dense<0xFF800000> : vector<8xf32>
    %575 = vector.multi_reduction <maximumf>, %574, %cst_223 [1] : vector<8x10xf32> to vector<8xf32>
    %576 = vector.shape_cast %575 : vector<8xf32> to vector<8x1xf32>
    %577 = vector.broadcast %576 : vector<8x1xf32> to vector<8x10xf32>
    %578 = arith.subf %574, %577 : vector<8x10xf32>
    %579 = math.exp %578 : vector<8x10xf32>
    %cst_224 = arith.constant dense<0.000000e+00> : vector<8xf32>
    %580 = vector.multi_reduction <add>, %579, %cst_224 [1] : vector<8x10xf32> to vector<8xf32>
    %581 = vector.shape_cast %580 : vector<8xf32> to vector<8x1xf32>
    %582 = vector.broadcast %581 : vector<8x1xf32> to vector<8x10xf32>
    %583 = arith.divf %579, %582 : vector<8x10xf32>
    %cst_225 = arith.constant dense<0.000000e+00> : vector<8x32xf32>
    %584 = tpu.matmul %583, %573, %cst_225 {dimension_numbers = #tpu.dot_dimension_numbers<[1], [0], [0], [1], [0, 0, 1, 1], [], []>} : vector<8x10xf32>, vector<10x32xf32>, vector<8x32xf32> -> vector<8x32xf32>
    %585 = vector.extract_strided_slice %554 {offsets = [0, 64], sizes = [8, 32], strides = [1, 1]} : vector<8x128xf32> to vector<8x32xf32>
    %586 = vector.extract_strided_slice %555 {offsets = [0, 64], sizes = [10, 32], strides = [1, 1]} : vector<10x128xf32> to vector<10x32xf32>
    %587 = vector.extract_strided_slice %556 {offsets = [0, 64], sizes = [10, 32], strides = [1, 1]} : vector<10x128xf32> to vector<10x32xf32>
    %cst_226 = arith.constant dense<0.000000e+00> : vector<8x10xf32>
    %588 = tpu.matmul %585, %586, %cst_226 {dimension_numbers = #tpu.dot_dimension_numbers<[1], [1], [0], [0], [0, 0, 1, 0], [], []>} : vector<8x32xf32>, vector<10x32xf32>, vector<8x10xf32> -> vector<8x10xf32>
    %cst_227 = arith.constant dense<0xFF800000> : vector<8xf32>
    %589 = vector.multi_reduction <maximumf>, %588, %cst_227 [1] : vector<8x10xf32> to vector<8xf32>
    %590 = vector.shape_cast %589 : vector<8xf32> to vector<8x1xf32>
    %591 = vector.broadcast %590 : vector<8x1xf32> to vector<8x10xf32>
    %592 = arith.subf %588, %591 : vector<8x10xf32>
    %593 = math.exp %592 : vector<8x10xf32>
    %cst_228 = arith.constant dense<0.000000e+00> : vector<8xf32>
    %594 = vector.multi_reduction <add>, %593, %cst_228 [1] : vector<8x10xf32> to vector<8xf32>
    %595 = vector.shape_cast %594 : vector<8xf32> to vector<8x1xf32>
    %596 = vector.broadcast %595 : vector<8x1xf32> to vector<8x10xf32>
    %597 = arith.divf %593, %596 : vector<8x10xf32>
    %cst_229 = arith.constant dense<0.000000e+00> : vector<8x32xf32>
    %598 = tpu.matmul %597, %587, %cst_229 {dimension_numbers = #tpu.dot_dimension_numbers<[1], [0], [0], [1], [0, 0, 1, 1], [], []>} : vector<8x10xf32>, vector<10x32xf32>, vector<8x32xf32> -> vector<8x32xf32>
    %599 = vector.extract_strided_slice %554 {offsets = [0, 96], sizes = [8, 32], strides = [1, 1]} : vector<8x128xf32> to vector<8x32xf32>
    %600 = vector.extract_strided_slice %555 {offsets = [0, 96], sizes = [10, 32], strides = [1, 1]} : vector<10x128xf32> to vector<10x32xf32>
    %601 = vector.extract_strided_slice %556 {offsets = [0, 96], sizes = [10, 32], strides = [1, 1]} : vector<10x128xf32> to vector<10x32xf32>
    %cst_230 = arith.constant dense<0.000000e+00> : vector<8x10xf32>
    %602 = tpu.matmul %599, %600, %cst_230 {dimension_numbers = #tpu.dot_dimension_numbers<[1], [1], [0], [0], [0, 0, 1, 0], [], []>} : vector<8x32xf32>, vector<10x32xf32>, vector<8x10xf32> -> vector<8x10xf32>
    %cst_231 = arith.constant dense<0xFF800000> : vector<8xf32>
    %603 = vector.multi_reduction <maximumf>, %602, %cst_231 [1] : vector<8x10xf32> to vector<8xf32>
    %604 = vector.shape_cast %603 : vector<8xf32> to vector<8x1xf32>
    %605 = vector.broadcast %604 : vector<8x1xf32> to vector<8x10xf32>
    %606 = arith.subf %602, %605 : vector<8x10xf32>
    %607 = math.exp %606 : vector<8x10xf32>
    %cst_232 = arith.constant dense<0.000000e+00> : vector<8xf32>
    %608 = vector.multi_reduction <add>, %607, %cst_232 [1] : vector<8x10xf32> to vector<8xf32>
    %609 = vector.shape_cast %608 : vector<8xf32> to vector<8x1xf32>
    %610 = vector.broadcast %609 : vector<8x1xf32> to vector<8x10xf32>
    %611 = arith.divf %607, %610 : vector<8x10xf32>
    %cst_233 = arith.constant dense<0.000000e+00> : vector<8x32xf32>
    %612 = tpu.matmul %611, %601, %cst_233 {dimension_numbers = #tpu.dot_dimension_numbers<[1], [0], [0], [1], [0, 0, 1, 1], [], []>} : vector<8x10xf32>, vector<10x32xf32>, vector<8x32xf32> -> vector<8x32xf32>
    %613 = tpu.concatenate %570, %584, %598, %612 in 1 : vector<8x32xf32>, vector<8x32xf32>, vector<8x32xf32>, vector<8x32xf32> -> vector<8x128xf32>
    %c0_234 = arith.constant 0 : index
    %c0_235 = arith.constant 0 : index
    %614 = vector.load %arg34[%c0_234, %c0_235] : memref<128x256xf32, #tpu.memory_space<vmem>>, vector<128x256xf32>
    %cst_236 = arith.constant dense<0.000000e+00> : vector<10x256xf32>
    %615 = tpu.matmul %4, %614, %cst_236 {dimension_numbers = #tpu.dot_dimension_numbers<[1], [0], [0], [1], [0, 0, 1, 1], [], []>} : vector<10x128xf32>, vector<128x256xf32>, vector<10x256xf32> -> vector<10x256xf32>
    %c0_237 = arith.constant 0 : index
    %c0_238 = arith.constant 0 : index
    %616 = vector.load %arg35[%c0_237, %c0_238] : memref<1x256xf32, #tpu.memory_space<vmem>>, vector<1x256xf32>
    %617 = vector.broadcast %616 : vector<1x256xf32> to vector<10x256xf32>
    %618 = arith.addf %615, %617 : vector<10x256xf32>
    %619 = vector.extract_strided_slice %548 {offsets = [8, 0], sizes = [8, 128], strides = [1, 1]} : vector<16x128xf32> to vector<8x128xf32>
    %620 = vector.extract_strided_slice %618 {offsets = [0, 0], sizes = [10, 128], strides = [1, 1]} : vector<10x256xf32> to vector<10x128xf32>
    %621 = vector.extract_strided_slice %618 {offsets = [0, 128], sizes = [10, 128], strides = [1, 1]} : vector<10x256xf32> to vector<10x128xf32>
    %622 = vector.extract_strided_slice %619 {offsets = [0, 0], sizes = [8, 32], strides = [1, 1]} : vector<8x128xf32> to vector<8x32xf32>
    %623 = vector.extract_strided_slice %620 {offsets = [0, 0], sizes = [10, 32], strides = [1, 1]} : vector<10x128xf32> to vector<10x32xf32>
    %624 = vector.extract_strided_slice %621 {offsets = [0, 0], sizes = [10, 32], strides = [1, 1]} : vector<10x128xf32> to vector<10x32xf32>
    %cst_239 = arith.constant dense<0.000000e+00> : vector<8x10xf32>
    %625 = tpu.matmul %622, %623, %cst_239 {dimension_numbers = #tpu.dot_dimension_numbers<[1], [1], [0], [0], [0, 0, 1, 0], [], []>} : vector<8x32xf32>, vector<10x32xf32>, vector<8x10xf32> -> vector<8x10xf32>
    %cst_240 = arith.constant dense<0xFF800000> : vector<8xf32>
    %626 = vector.multi_reduction <maximumf>, %625, %cst_240 [1] : vector<8x10xf32> to vector<8xf32>
    %627 = vector.shape_cast %626 : vector<8xf32> to vector<8x1xf32>
    %628 = vector.broadcast %627 : vector<8x1xf32> to vector<8x10xf32>
    %629 = arith.subf %625, %628 : vector<8x10xf32>
    %630 = math.exp %629 : vector<8x10xf32>
    %cst_241 = arith.constant dense<0.000000e+00> : vector<8xf32>
    %631 = vector.multi_reduction <add>, %630, %cst_241 [1] : vector<8x10xf32> to vector<8xf32>
    %632 = vector.shape_cast %631 : vector<8xf32> to vector<8x1xf32>
    %633 = vector.broadcast %632 : vector<8x1xf32> to vector<8x10xf32>
    %634 = arith.divf %630, %633 : vector<8x10xf32>
    %cst_242 = arith.constant dense<0.000000e+00> : vector<8x32xf32>
    %635 = tpu.matmul %634, %624, %cst_242 {dimension_numbers = #tpu.dot_dimension_numbers<[1], [0], [0], [1], [0, 0, 1, 1], [], []>} : vector<8x10xf32>, vector<10x32xf32>, vector<8x32xf32> -> vector<8x32xf32>
    %636 = vector.extract_strided_slice %619 {offsets = [0, 32], sizes = [8, 32], strides = [1, 1]} : vector<8x128xf32> to vector<8x32xf32>
    %637 = vector.extract_strided_slice %620 {offsets = [0, 32], sizes = [10, 32], strides = [1, 1]} : vector<10x128xf32> to vector<10x32xf32>
    %638 = vector.extract_strided_slice %621 {offsets = [0, 32], sizes = [10, 32], strides = [1, 1]} : vector<10x128xf32> to vector<10x32xf32>
    %cst_243 = arith.constant dense<0.000000e+00> : vector<8x10xf32>
    %639 = tpu.matmul %636, %637, %cst_243 {dimension_numbers = #tpu.dot_dimension_numbers<[1], [1], [0], [0], [0, 0, 1, 0], [], []>} : vector<8x32xf32>, vector<10x32xf32>, vector<8x10xf32> -> vector<8x10xf32>
    %cst_244 = arith.constant dense<0xFF800000> : vector<8xf32>
    %640 = vector.multi_reduction <maximumf>, %639, %cst_244 [1] : vector<8x10xf32> to vector<8xf32>
    %641 = vector.shape_cast %640 : vector<8xf32> to vector<8x1xf32>
    %642 = vector.broadcast %641 : vector<8x1xf32> to vector<8x10xf32>
    %643 = arith.subf %639, %642 : vector<8x10xf32>
    %644 = math.exp %643 : vector<8x10xf32>
    %cst_245 = arith.constant dense<0.000000e+00> : vector<8xf32>
    %645 = vector.multi_reduction <add>, %644, %cst_245 [1] : vector<8x10xf32> to vector<8xf32>
    %646 = vector.shape_cast %645 : vector<8xf32> to vector<8x1xf32>
    %647 = vector.broadcast %646 : vector<8x1xf32> to vector<8x10xf32>
    %648 = arith.divf %644, %647 : vector<8x10xf32>
    %cst_246 = arith.constant dense<0.000000e+00> : vector<8x32xf32>
    %649 = tpu.matmul %648, %638, %cst_246 {dimension_numbers = #tpu.dot_dimension_numbers<[1], [0], [0], [1], [0, 0, 1, 1], [], []>} : vector<8x10xf32>, vector<10x32xf32>, vector<8x32xf32> -> vector<8x32xf32>
    %650 = vector.extract_strided_slice %619 {offsets = [0, 64], sizes = [8, 32], strides = [1, 1]} : vector<8x128xf32> to vector<8x32xf32>
    %651 = vector.extract_strided_slice %620 {offsets = [0, 64], sizes = [10, 32], strides = [1, 1]} : vector<10x128xf32> to vector<10x32xf32>
    %652 = vector.extract_strided_slice %621 {offsets = [0, 64], sizes = [10, 32], strides = [1, 1]} : vector<10x128xf32> to vector<10x32xf32>
    %cst_247 = arith.constant dense<0.000000e+00> : vector<8x10xf32>
    %653 = tpu.matmul %650, %651, %cst_247 {dimension_numbers = #tpu.dot_dimension_numbers<[1], [1], [0], [0], [0, 0, 1, 0], [], []>} : vector<8x32xf32>, vector<10x32xf32>, vector<8x10xf32> -> vector<8x10xf32>
    %cst_248 = arith.constant dense<0xFF800000> : vector<8xf32>
    %654 = vector.multi_reduction <maximumf>, %653, %cst_248 [1] : vector<8x10xf32> to vector<8xf32>
    %655 = vector.shape_cast %654 : vector<8xf32> to vector<8x1xf32>
    %656 = vector.broadcast %655 : vector<8x1xf32> to vector<8x10xf32>
    %657 = arith.subf %653, %656 : vector<8x10xf32>
    %658 = math.exp %657 : vector<8x10xf32>
    %cst_249 = arith.constant dense<0.000000e+00> : vector<8xf32>
    %659 = vector.multi_reduction <add>, %658, %cst_249 [1] : vector<8x10xf32> to vector<8xf32>
    %660 = vector.shape_cast %659 : vector<8xf32> to vector<8x1xf32>
    %661 = vector.broadcast %660 : vector<8x1xf32> to vector<8x10xf32>
    %662 = arith.divf %658, %661 : vector<8x10xf32>
    %cst_250 = arith.constant dense<0.000000e+00> : vector<8x32xf32>
    %663 = tpu.matmul %662, %652, %cst_250 {dimension_numbers = #tpu.dot_dimension_numbers<[1], [0], [0], [1], [0, 0, 1, 1], [], []>} : vector<8x10xf32>, vector<10x32xf32>, vector<8x32xf32> -> vector<8x32xf32>
    %664 = vector.extract_strided_slice %619 {offsets = [0, 96], sizes = [8, 32], strides = [1, 1]} : vector<8x128xf32> to vector<8x32xf32>
    %665 = vector.extract_strided_slice %620 {offsets = [0, 96], sizes = [10, 32], strides = [1, 1]} : vector<10x128xf32> to vector<10x32xf32>
    %666 = vector.extract_strided_slice %621 {offsets = [0, 96], sizes = [10, 32], strides = [1, 1]} : vector<10x128xf32> to vector<10x32xf32>
    %cst_251 = arith.constant dense<0.000000e+00> : vector<8x10xf32>
    %667 = tpu.matmul %664, %665, %cst_251 {dimension_numbers = #tpu.dot_dimension_numbers<[1], [1], [0], [0], [0, 0, 1, 0], [], []>} : vector<8x32xf32>, vector<10x32xf32>, vector<8x10xf32> -> vector<8x10xf32>
    %cst_252 = arith.constant dense<0xFF800000> : vector<8xf32>
    %668 = vector.multi_reduction <maximumf>, %667, %cst_252 [1] : vector<8x10xf32> to vector<8xf32>
    %669 = vector.shape_cast %668 : vector<8xf32> to vector<8x1xf32>
    %670 = vector.broadcast %669 : vector<8x1xf32> to vector<8x10xf32>
    %671 = arith.subf %667, %670 : vector<8x10xf32>
    %672 = math.exp %671 : vector<8x10xf32>
    %cst_253 = arith.constant dense<0.000000e+00> : vector<8xf32>
    %673 = vector.multi_reduction <add>, %672, %cst_253 [1] : vector<8x10xf32> to vector<8xf32>
    %674 = vector.shape_cast %673 : vector<8xf32> to vector<8x1xf32>
    %675 = vector.broadcast %674 : vector<8x1xf32> to vector<8x10xf32>
    %676 = arith.divf %672, %675 : vector<8x10xf32>
    %cst_254 = arith.constant dense<0.000000e+00> : vector<8x32xf32>
    %677 = tpu.matmul %676, %666, %cst_254 {dimension_numbers = #tpu.dot_dimension_numbers<[1], [0], [0], [1], [0, 0, 1, 1], [], []>} : vector<8x10xf32>, vector<10x32xf32>, vector<8x32xf32> -> vector<8x32xf32>
    %678 = tpu.concatenate %635, %649, %663, %677 in 1 : vector<8x32xf32>, vector<8x32xf32>, vector<8x32xf32>, vector<8x32xf32> -> vector<8x128xf32>
    %679 = tpu.concatenate %613, %678 in 0 : vector<8x128xf32>, vector<8x128xf32> -> vector<16x128xf32>
    %c0_255 = arith.constant 0 : index
    %c0_256 = arith.constant 0 : index
    %680 = vector.load %arg36[%c0_255, %c0_256] : memref<128x128xf32, #tpu.memory_space<vmem>>, vector<128x128xf32>
    %cst_257 = arith.constant dense<0.000000e+00> : vector<16x128xf32>
    %681 = tpu.matmul %679, %680, %cst_257 {dimension_numbers = #tpu.dot_dimension_numbers<[1], [0], [0], [1], [0, 0, 1, 1], [], []>} : vector<16x128xf32>, vector<128x128xf32>, vector<16x128xf32> -> vector<16x128xf32>
    %c0_258 = arith.constant 0 : index
    %c0_259 = arith.constant 0 : index
    %682 = vector.load %arg37[%c0_258, %c0_259] : memref<1x128xf32, #tpu.memory_space<vmem>>, vector<1x128xf32>
    %683 = vector.broadcast %682 : vector<1x128xf32> to vector<16x128xf32>
    %684 = arith.addf %681, %683 : vector<16x128xf32>
    %685 = arith.addf %543, %684 : vector<16x128xf32>
    %cst_260 = arith.constant dense<0.000000e+00> : vector<16xf32>
    %686 = vector.multi_reduction <add>, %685, %cst_260 [1] : vector<16x128xf32> to vector<16xf32>
    %687 = vector.shape_cast %686 : vector<16xf32> to vector<16x1xf32>
    %cst_261 = arith.constant 1.280000e+02 : f32
    %688 = vector.broadcast %cst_261 : f32 to vector<16x1xf32>
    %689 = arith.divf %687, %688 : vector<16x1xf32>
    %690 = vector.broadcast %689 : vector<16x1xf32> to vector<16x128xf32>
    %691 = arith.subf %685, %690 : vector<16x128xf32>
    %692 = arith.mulf %691, %691 : vector<16x128xf32>
    %cst_262 = arith.constant dense<0.000000e+00> : vector<16xf32>
    %693 = vector.multi_reduction <add>, %692, %cst_262 [1] : vector<16x128xf32> to vector<16xf32>
    %694 = vector.shape_cast %693 : vector<16xf32> to vector<16x1xf32>
    %cst_263 = arith.constant 1.280000e+02 : f32
    %695 = vector.broadcast %cst_263 : f32 to vector<16x1xf32>
    %696 = arith.divf %694, %695 : vector<16x1xf32>
    %697 = vector.broadcast %689 : vector<16x1xf32> to vector<16x128xf32>
    %698 = arith.subf %685, %697 : vector<16x128xf32>
    %cst_264 = arith.constant 9.99999974E-6 : f32
    %699 = vector.broadcast %cst_264 : f32 to vector<16x1xf32>
    %700 = arith.addf %696, %699 : vector<16x1xf32>
    %701 = math.rsqrt %700 : vector<16x1xf32>
    %702 = vector.broadcast %701 : vector<16x1xf32> to vector<16x128xf32>
    %703 = arith.mulf %698, %702 : vector<16x128xf32>
    %c0_265 = arith.constant 0 : index
    %c0_266 = arith.constant 0 : index
    %704 = vector.load %arg38[%c0_265, %c0_266] : memref<1x128xf32, #tpu.memory_space<vmem>>, vector<1x128xf32>
    %705 = vector.broadcast %704 : vector<1x128xf32> to vector<16x128xf32>
    %706 = arith.mulf %703, %705 : vector<16x128xf32>
    %c0_267 = arith.constant 0 : index
    %c0_268 = arith.constant 0 : index
    %707 = vector.load %arg39[%c0_267, %c0_268] : memref<1x128xf32, #tpu.memory_space<vmem>>, vector<1x128xf32>
    %708 = vector.broadcast %707 : vector<1x128xf32> to vector<16x128xf32>
    %709 = arith.addf %706, %708 : vector<16x128xf32>
    %c0_269 = arith.constant 0 : index
    %c0_270 = arith.constant 0 : index
    %710 = vector.load %arg40[%c0_269, %c0_270] : memref<128x512xf32, #tpu.memory_space<vmem>>, vector<128x512xf32>
    %cst_271 = arith.constant dense<0.000000e+00> : vector<16x512xf32>
    %711 = tpu.matmul %709, %710, %cst_271 {dimension_numbers = #tpu.dot_dimension_numbers<[1], [0], [0], [1], [0, 0, 1, 1], [], []>} : vector<16x128xf32>, vector<128x512xf32>, vector<16x512xf32> -> vector<16x512xf32>
    %c0_272 = arith.constant 0 : index
    %c0_273 = arith.constant 0 : index
    %712 = vector.load %arg41[%c0_272, %c0_273] : memref<1x512xf32, #tpu.memory_space<vmem>>, vector<1x512xf32>
    %713 = vector.broadcast %712 : vector<1x512xf32> to vector<16x512xf32>
    %714 = arith.addf %711, %713 : vector<16x512xf32>
    %cst_274 = arith.constant 0.000000e+00 : f32
    %715 = vector.broadcast %cst_274 : f32 to vector<16x512xf32>
    %716 = arith.maximumf %714, %715 : vector<16x512xf32>
    %c0_275 = arith.constant 0 : index
    %c0_276 = arith.constant 0 : index
    %717 = vector.load %arg42[%c0_275, %c0_276] : memref<512x128xf32, #tpu.memory_space<vmem>>, vector<512x128xf32>
    %cst_277 = arith.constant dense<0.000000e+00> : vector<16x128xf32>
    %718 = tpu.matmul %716, %717, %cst_277 {dimension_numbers = #tpu.dot_dimension_numbers<[1], [0], [0], [1], [0, 0, 1, 1], [], []>} : vector<16x512xf32>, vector<512x128xf32>, vector<16x128xf32> -> vector<16x128xf32>
    %719 = arith.addf %709, %718 : vector<16x128xf32>
    %c0_278 = arith.constant 0 : index
    %c0_279 = arith.constant 0 : index
    %720 = vector.load %arg43[%c0_278, %c0_279] : memref<1x128xf32, #tpu.memory_space<vmem>>, vector<1x128xf32>
    %721 = vector.broadcast %720 : vector<1x128xf32> to vector<16x128xf32>
    %722 = arith.addf %719, %721 : vector<16x128xf32>
    %cst_280 = arith.constant dense<0.000000e+00> : vector<16xf32>
    %723 = vector.multi_reduction <add>, %722, %cst_280 [1] : vector<16x128xf32> to vector<16xf32>
    %724 = vector.shape_cast %723 : vector<16xf32> to vector<16x1xf32>
    %cst_281 = arith.constant 1.280000e+02 : f32
    %725 = vector.broadcast %cst_281 : f32 to vector<16x1xf32>
    %726 = arith.divf %724, %725 : vector<16x1xf32>
    %727 = vector.broadcast %726 : vector<16x1xf32> to vector<16x128xf32>
    %728 = arith.subf %722, %727 : vector<16x128xf32>
    %729 = arith.mulf %728, %728 : vector<16x128xf32>
    %cst_282 = arith.constant dense<0.000000e+00> : vector<16xf32>
    %730 = vector.multi_reduction <add>, %729, %cst_282 [1] : vector<16x128xf32> to vector<16xf32>
    %731 = vector.shape_cast %730 : vector<16xf32> to vector<16x1xf32>
    %cst_283 = arith.constant 1.280000e+02 : f32
    %732 = vector.broadcast %cst_283 : f32 to vector<16x1xf32>
    %733 = arith.divf %731, %732 : vector<16x1xf32>
    %734 = vector.broadcast %726 : vector<16x1xf32> to vector<16x128xf32>
    %735 = arith.subf %722, %734 : vector<16x128xf32>
    %cst_284 = arith.constant 9.99999974E-6 : f32
    %736 = vector.broadcast %cst_284 : f32 to vector<16x1xf32>
    %737 = arith.addf %733, %736 : vector<16x1xf32>
    %738 = math.rsqrt %737 : vector<16x1xf32>
    %739 = vector.broadcast %738 : vector<16x1xf32> to vector<16x128xf32>
    %740 = arith.mulf %735, %739 : vector<16x128xf32>
    %c0_285 = arith.constant 0 : index
    %c0_286 = arith.constant 0 : index
    %741 = vector.load %arg44[%c0_285, %c0_286] : memref<1x128xf32, #tpu.memory_space<vmem>>, vector<1x128xf32>
    %742 = vector.broadcast %741 : vector<1x128xf32> to vector<16x128xf32>
    %743 = arith.mulf %740, %742 : vector<16x128xf32>
    %c0_287 = arith.constant 0 : index
    %c0_288 = arith.constant 0 : index
    %744 = vector.load %arg45[%c0_287, %c0_288] : memref<1x128xf32, #tpu.memory_space<vmem>>, vector<1x128xf32>
    %745 = vector.broadcast %744 : vector<1x128xf32> to vector<16x128xf32>
    %746 = arith.addf %743, %745 : vector<16x128xf32>
    %c0_289 = arith.constant 0 : index
    %c0_290 = arith.constant 0 : index
    %747 = vector.load %arg46[%c0_289, %c0_290] : memref<128x128xf32, #tpu.memory_space<vmem>>, vector<128x128xf32>
    %cst_291 = arith.constant dense<0.000000e+00> : vector<16x128xf32>
    %748 = tpu.matmul %746, %747, %cst_291 {dimension_numbers = #tpu.dot_dimension_numbers<[1], [0], [0], [1], [0, 0, 1, 1], [], []>} : vector<16x128xf32>, vector<128x128xf32>, vector<16x128xf32> -> vector<16x128xf32>
    %c0_292 = arith.constant 0 : index
    %c0_293 = arith.constant 0 : index
    %749 = vector.load %arg47[%c0_292, %c0_293] : memref<1x128xf32, #tpu.memory_space<vmem>>, vector<1x128xf32>
    %750 = vector.broadcast %749 : vector<1x128xf32> to vector<16x128xf32>
    %751 = arith.addf %748, %750 : vector<16x128xf32>
    %c0_294 = arith.constant 0 : index
    %c0_295 = arith.constant 0 : index
    %752 = vector.load %arg48[%c0_294, %c0_295] : memref<16x128xf32, #tpu.memory_space<vmem>>, vector<16x128xf32>
    tpu.vector_store %arg48[%c0_294, %c0_295], %751 {strides = array<i32>} : memref<16x128xf32, #tpu.memory_space<vmem>>, vector<16x128xf32>,
    return
  }
}

</mosaic_0001>

<llo_original>
// kernel: transformer_decoder_forward.1
$region0: #{transformer_decoder_forward.1}
  #allocation0 [shape = 'u32[]', space=smem, size = 0x4, offset = 0x4, fixed_abs, tag = 'smem constant byte address 0x4 - core index']
  #allocation1 [shape = 'u32[72,128]{1,0:T(1,128)}', space=vmem, size = 0x9000, scoped, tag = 'internal scratch']
  %s0 = inlined_call_operand.smem [shape: u32[49], index: -1, kind: input, shape index: {}]
  %s1 = sld [smem:[%s0]]
  %s2 = scalar_lea.smem %s0, 1
  %s3 = sld [smem:[%s2]]
  %s4 = scalar_lea.smem %s0, 2
  %s5 = sld [smem:[%s4]]
  %s6 = scalar_lea.smem %s0, 3
  %s7 = sld [smem:[%s6]]
  %s8 = scalar_lea.smem %s0, 4
  %s9 = sld [smem:[%s8]]
  %s10 = scalar_lea.smem %s0, 5
  %s11 = sld [smem:[%s10]]
  %s12 = scalar_lea.smem %s0, 6
  %s13 = sld [smem:[%s12]]
  %s14 = scalar_lea.smem %s0, 7
  %s15 = sld [smem:[%s14]]
  %s16 = scalar_lea.smem %s0, 8
  %s17 = sld [smem:[%s16]]
  %s18 = scalar_lea.smem %s0, 9
  %s19 = sld [smem:[%s18]]
  %s20 = scalar_lea.smem %s0, 10
  %s21 = sld [smem:[%s20]]
  %s22 = scalar_lea.smem %s0, 11
  %s23 = sld [smem:[%s22]]
  %s24 = scalar_lea.smem %s0, 12
  %s25 = sld [smem:[%s24]]
  %s26 = scalar_lea.smem %s0, 13
  %s27 = sld [smem:[%s26]]
  %s28 = scalar_lea.smem %s0, 14
  %s29 = sld [smem:[%s28]]
  %s30 = scalar_lea.smem %s0, 15
  %s31 = sld [smem:[%s30]]
  %s32 = scalar_lea.smem %s0, 16
  %s33 = sld [smem:[%s32]]
  %s34 = scalar_lea.smem %s0, 17
  %s35 = sld [smem:[%s34]]
  %s36 = scalar_lea.smem %s0, 18
  %s37 = sld [smem:[%s36]]
  %s38 = scalar_lea.smem %s0, 19
  %s39 = sld [smem:[%s38]]
  %s40 = scalar_lea.smem %s0, 20
  %s41 = sld [smem:[%s40]]
  %s42 = scalar_lea.smem %s0, 21
  %s43 = sld [smem:[%s42]]
  %s44 = scalar_lea.smem %s0, 22
  %s45 = sld [smem:[%s44]]
  %s46 = scalar_lea.smem %s0, 23
  %s47 = sld [smem:[%s46]]
  %s48 = scalar_lea.smem %s0, 24
  %s49 = sld [smem:[%s48]]
  %s50 = scalar_lea.smem %s0, 25
  %s51 = sld [smem:[%s50]]
  %s52 = scalar_lea.smem %s0, 26
  %s53 = sld [smem:[%s52]]
  %s54 = scalar_lea.smem %s0, 27
  %s55 = sld [smem:[%s54]]
  %s56 = scalar_lea.smem %s0, 28
  %s57 = sld [smem:[%s56]]
  %s58 = scalar_lea.smem %s0, 29
  %s59 = sld [smem:[%s58]]
  %s60 = scalar_lea.smem %s0, 30
  %s61 = sld [smem:[%s60]]
  %s62 = scalar_lea.smem %s0, 31
  %s63 = sld [smem:[%s62]]
  %s64 = scalar_lea.smem %s0, 32
  %s65 = sld [smem:[%s64]]
  %s66 = scalar_lea.smem %s0, 33
  %s67 = sld [smem:[%s66]]
  %s68 = scalar_lea.smem %s0, 34
  %s69 = sld [smem:[%s68]]
  %s70 = scalar_lea.smem %s0, 35
  %s71 = sld [smem:[%s70]]
  %s72 = scalar_lea.smem %s0, 36
  %s73 = sld [smem:[%s72]]
  %s74 = scalar_lea.smem %s0, 37
  %s75 = sld [smem:[%s74]]
  %s76 = scalar_lea.smem %s0, 38
  %s77 = sld [smem:[%s76]]
  %s78 = scalar_lea.smem %s0, 39
  %s79 = sld [smem:[%s78]]
  %s80 = scalar_lea.smem %s0, 40
  %s81 = sld [smem:[%s80]]
  %s82 = scalar_lea.smem %s0, 41
  %s83 = sld [smem:[%s82]]
  %s84 = scalar_lea.smem %s0, 42
  %s85 = sld [smem:[%s84]]
  %s86 = scalar_lea.smem %s0, 43
  %s87 = sld [smem:[%s86]]
  %s88 = scalar_lea.smem %s0, 44
  %s89 = sld [smem:[%s88]]
  %s90 = scalar_lea.smem %s0, 45
  %s91 = sld [smem:[%s90]]
  %s92 = scalar_lea.smem %s0, 46
  %s93 = sld [smem:[%s92]]
  %s94 = scalar_lea.smem %s0, 47
  %s95 = sld [smem:[%s94]]
  %s96 = scalar_lea.smem %s0, 48
  %s97 = sld [smem:[%s96]]
  %s98 = sld [smem:[#allocation0]]
  $region266: #{transformer_decoder_forward.1} parent=0
    _
  %s100 = ssub.s32 1, %s98
  %s101 = scalar_select 0, %s100, %s98
  $region1: #{transformer_decoder_forward.1} parent=0
    #allocation2 [shape = 'u8[131072]{0}', space=vmem, size = 0x20000, scoped, tag = 'input window, operand 4, single buffered']
    #allocation3 [shape = 's32[1]{0}', space=sflag, size = 0x4, scoped, tag = 'scoped memory for transformer_decoder_forward.1']
    #allocation4 [shape = 's32[1]{0}', space=sflag, size = 0x4, scoped, tag = 'scoped memory for transformer_decoder_forward.1']
    #allocation5 [shape = 'u8[65536]{0}', space=vmem, size = 0x10000, scoped, tag = 'input window, operand 6, single buffered']
    #allocation6 [shape = 's32[1]{0}', space=sflag, size = 0x4, scoped, tag = 'scoped memory for transformer_decoder_forward.1']
    #allocation7 [shape = 'u8[65536]{0}', space=vmem, size = 0x10000, scoped, tag = 'input window, operand 10, single buffered']
    #allocation8 [shape = 'u8[131072]{0}', space=vmem, size = 0x20000, scoped, tag = 'input window, operand 12, single buffered']
    #allocation9 [shape = 's32[1]{0}', space=sflag, size = 0x4, scoped, tag = 'scoped memory for transformer_decoder_forward.1']
    #allocation10 [shape = 'u8[65536]{0}', space=vmem, size = 0x10000, scoped, tag = 'input window, operand 14, single buffered']
    #allocation11 [shape = 'u8[262144]{0}', space=vmem, size = 0x40000, scoped, tag = 'input window, operand 18, single buffered']
    #allocation12 [shape = 's32[1]{0}', space=sflag, size = 0x4, scoped, tag = 'scoped memory for transformer_decoder_forward.1']
    #allocation13 [shape = 'u8[262144]{0}', space=vmem, size = 0x40000, scoped, tag = 'input window, operand 20, single buffered']
    #allocation14 [shape = 'u8[65536]{0}', space=vmem, size = 0x10000, scoped, tag = 'input window, operand 24, single buffered']
    #allocation15 [shape = 's32[1]{0}', space=sflag, size = 0x4, scoped, tag = 'scoped memory for transformer_decoder_forward.1']
    #allocation16 [shape = 'u8[131072]{0}', space=vmem, size = 0x20000, scoped, tag = 'input window, operand 26, single buffered']
    #allocation17 [shape = 'u8[65536]{0}', space=vmem, size = 0x10000, scoped, tag = 'input window, operand 28, single buffered']
    #allocation18 [shape = 's32[1]{0}', space=sflag, size = 0x4, scoped, tag = 'scoped memory for transformer_decoder_forward.1']
    #allocation19 [shape = 'u8[65536]{0}', space=vmem, size = 0x10000, scoped, tag = 'input window, operand 32, single buffered']
    #allocation20 [shape = 'u8[131072]{0}', space=vmem, size = 0x20000, scoped, tag = 'input window, operand 34, single buffered']
    #allocation21 [shape = 's32[1]{0}', space=sflag, size = 0x4, scoped, tag = 'scoped memory for transformer_decoder_forward.1']
    #allocation22 [shape = 'u8[65536]{0}', space=vmem, size = 0x10000, scoped, tag = 'input window, operand 36, single buffered']
    #allocation23 [shape = 'u8[262144]{0}', space=vmem, size = 0x40000, scoped, tag = 'input window, operand 40, single buffered']
    #allocation24 [shape = 's32[1]{0}', space=sflag, size = 0x4, scoped, tag = 'scoped memory for transformer_decoder_forward.1']
    #allocation25 [shape = 'u8[262144]{0}', space=vmem, size = 0x40000, scoped, tag = 'input window, operand 42, single buffered']
    #allocation26 [shape = 'u8[65536]{0}', space=vmem, size = 0x10000, scoped, tag = 'input window, operand 46, single buffered']
    #allocation27 [shape = 's32[1]{0}', space=sflag, size = 0x4, scoped, tag = 'scoped memory for transformer_decoder_forward.1']
    #allocation28 [shape = 'u8[8192]{0}', space=vmem, size = 0x2000, scoped, tag = 'output window, operand 0, single buffered']
    %102 = vsyncpa [#allocation3], 0
    %103 = vsyncpa [#allocation6], 0
    %104 = vsyncpa [#allocation9], 0
    %105 = vsyncpa [#allocation12], 0
    %106 = vsyncpa [#allocation15], 0
    %107 = vsyncpa [#allocation18], 0
    %108 = vsyncpa [#allocation21], 0
    %109 = vsyncpa [#allocation24], 0
    %110 = vsyncpa [#allocation27], 0
    %111 = vsyncpa [#allocation4], 0
    // Predicated region
    $region2: #{transformer_decoder_forward.1} parent=1 // pred_check
      _
    $region3: #{transformer_decoder_forward.1} parent=1 // pred_check_branch
      %113 = sbr.rel (0) target = $region5
    $region4: #{transformer_decoder_forward.1} parent=1 // pred_region
      _
    $region5: #{transformer_decoder_forward.1} parent=1 // pred_fallthru
      _
    // Predicated region
    $region6: #{transformer_decoder_forward.1} parent=1 // pred_check
      _
    $region7: #{transformer_decoder_forward.1} parent=1 // pred_check_branch
      %115 = sbr.rel (0) target = $region9
    $region8: #{transformer_decoder_forward.1} parent=1 // pred_region
      _
    $region9: #{transformer_decoder_forward.1} parent=1 // pred_fallthru
      _
    // Predicated region
    $region10: #{transformer_decoder_forward.1} parent=1 // pred_check
      _
    $region11: #{transformer_decoder_forward.1} parent=1 // pred_check_branch
      %117 = sbr.rel (0) target = $region13
    $region12: #{transformer_decoder_forward.1} parent=1 // pred_region
      _
    $region13: #{transformer_decoder_forward.1} parent=1 // pred_fallthru
      _
    // Predicated region
    $region14: #{transformer_decoder_forward.1} parent=1 // pred_check
      _
    $region15: #{transformer_decoder_forward.1} parent=1 // pred_check_branch
      %119 = sbr.rel (0) target = $region17
    $region16: #{transformer_decoder_forward.1} parent=1 // pred_region
      _
    $region17: #{transformer_decoder_forward.1} parent=1 // pred_fallthru
      _
    // Predicated region
    $region18: #{transformer_decoder_forward.1} parent=1 // pred_check
      _
    $region19: #{transformer_decoder_forward.1} parent=1 // pred_check_branch
      %121 = sbr.rel (0) target = $region21
    $region20: #{transformer_decoder_forward.1} parent=1 // pred_region
      %123 = vsyncadd [#allocation3], 0
      %s124 = sshll.u32 %s9, 4
      %s125 = int_to_ptr.hbm [resolvable:$true] %s124
      %s126 = sshll.u32 [#allocation2], 4
      %s127 = int_to_ptr.vmem [resolvable:$true] %s126
      %132 = dma.hbm_to_vmem [thread:$0]  %s125, 4096, %s127, [#allocation3], 256, 256, 16
    $region21: #{transformer_decoder_forward.1} parent=1 // pred_fallthru
      _
    // Predicated region
    $region22: #{transformer_decoder_forward.1} parent=1 // pred_check
      _
    $region23: #{transformer_decoder_forward.1} parent=1 // pred_check_branch
      %134 = sbr.rel (0) target = $region25
    $region24: #{transformer_decoder_forward.1} parent=1 // pred_region
      _
    $region25: #{transformer_decoder_forward.1} parent=1 // pred_fallthru
      _
    // Predicated region
    $region26: #{transformer_decoder_forward.1} parent=1 // pred_check
      _
    $region27: #{transformer_decoder_forward.1} parent=1 // pred_check_branch
      %136 = sbr.rel (0) target = $region29
    $region28: #{transformer_decoder_forward.1} parent=1 // pred_region
      %138 = vsyncadd [#allocation6], 0
      %s139 = sshll.u32 %s13, 4
      %s140 = int_to_ptr.hbm [resolvable:$true] %s139
      %s141 = sshll.u32 [#allocation5], 4
      %s142 = int_to_ptr.vmem [resolvable:$true] %s141
      %147 = dma.hbm_to_vmem [thread:$0]  %s140, 2048, %s142, [#allocation6], 128, 128, 8
    $region29: #{transformer_decoder_forward.1} parent=1 // pred_fallthru
      _
    // Predicated region
    $region30: #{transformer_decoder_forward.1} parent=1 // pred_check
      _
    $region31: #{transformer_decoder_forward.1} parent=1 // pred_check_branch
      %149 = sbr.rel (0) target = $region33
    $region32: #{transformer_decoder_forward.1} parent=1 // pred_region
      _
    $region33: #{transformer_decoder_forward.1} parent=1 // pred_fallthru
      _
    // Predicated region
    $region34: #{transformer_decoder_forward.1} parent=1 // pred_check
      _
    $region35: #{transformer_decoder_forward.1} parent=1 // pred_check_branch
      %151 = sbr.rel (0) target = $region37
    $region36: #{transformer_decoder_forward.1} parent=1 // pred_region
      _
    $region37: #{transformer_decoder_forward.1} parent=1 // pred_fallthru
      _
    // Predicated region
    $region38: #{transformer_decoder_forward.1} parent=1 // pred_check
      _
    $region39: #{transformer_decoder_forward.1} parent=1 // pred_check_branch
      %153 = sbr.rel (0) target = $region41
    $region40: #{transformer_decoder_forward.1} parent=1 // pred_region
      _
    $region41: #{transformer_decoder_forward.1} parent=1 // pred_fallthru
      _
    // Predicated region
    $region42: #{transformer_decoder_forward.1} parent=1 // pred_check
      _
    $region43: #{transformer_decoder_forward.1} parent=1 // pred_check_branch
      %155 = sbr.rel (0) target = $region45
    $region44: #{transformer_decoder_forward.1} parent=1 // pred_region
      %157 = vsyncadd [#allocation6], 0
      %s158 = sshll.u32 %s21, 4
      %s159 = int_to_ptr.hbm [resolvable:$true] %s158
      %s160 = sshll.u32 [#allocation7], 4
      %s161 = int_to_ptr.vmem [resolvable:$true] %s160
      %166 = dma.hbm_to_vmem [thread:$0]  %s159, 2048, %s161, [#allocation6], 128, 128, 8
    $region45: #{transformer_decoder_forward.1} parent=1 // pred_fallthru
      _
    // Predicated region
    $region46: #{transformer_decoder_forward.1} parent=1 // pred_check
      _
    $region47: #{transformer_decoder_forward.1} parent=1 // pred_check_branch
      %168 = sbr.rel (0) target = $region49
    $region48: #{transformer_decoder_forward.1} parent=1 // pred_region
      _
    $region49: #{transformer_decoder_forward.1} parent=1 // pred_fallthru
      _
    // Predicated region
    $region50: #{transformer_decoder_forward.1} parent=1 // pred_check
      _
    $region51: #{transformer_decoder_forward.1} parent=1 // pred_check_branch
      %170 = sbr.rel (0) target = $region53
    $region52: #{transformer_decoder_forward.1} parent=1 // pred_region
      %172 = vsyncadd [#allocation9], 0
      %s173 = sshll.u32 %s25, 4
      %s174 = int_to_ptr.hbm [resolvable:$true] %s173
      %s175 = sshll.u32 [#allocation8], 4
      %s176 = int_to_ptr.vmem [resolvable:$true] %s175
      %181 = dma.hbm_to_vmem [thread:$0]  %s174, 4096, %s176, [#allocation9], 256, 256, 16
    $region53: #{transformer_decoder_forward.1} parent=1 // pred_fallthru
      _
    // Predicated region
    $region54: #{transformer_decoder_forward.1} parent=1 // pred_check
      _
    $region55: #{transformer_decoder_forward.1} parent=1 // pred_check_branch
      %183 = sbr.rel (0) target = $region57
    $region56: #{transformer_decoder_forward.1} parent=1 // pred_region
      _
    $region57: #{transformer_decoder_forward.1} parent=1 // pred_fallthru
      _
    // Predicated region
    $region58: #{transformer_decoder_forward.1} parent=1 // pred_check
      _
    $region59: #{transformer_decoder_forward.1} parent=1 // pred_check_branch
      %185 = sbr.rel (0) target = $region61
    $region60: #{transformer_decoder_forward.1} parent=1 // pred_region
      %187 = vsyncadd [#allocation9], 0
      %s188 = sshll.u32 %s29, 4
      %s189 = int_to_ptr.hbm [resolvable:$true] %s188
      %s190 = sshll.u32 [#allocation10], 4
      %s191 = int_to_ptr.vmem [resolvable:$true] %s190
      %196 = dma.hbm_to_vmem [thread:$0]  %s189, 2048, %s191, [#allocation9], 128, 128, 8
    $region61: #{transformer_decoder_forward.1} parent=1 // pred_fallthru
      _
    // Predicated region
    $region62: #{transformer_decoder_forward.1} parent=1 // pred_check
      _
    $region63: #{transformer_decoder_forward.1} parent=1 // pred_check_branch
      %198 = sbr.rel (0) target = $region65
    $region64: #{transformer_decoder_forward.1} parent=1 // pred_region
      _
    $region65: #{transformer_decoder_forward.1} parent=1 // pred_fallthru
      _
    // Predicated region
    $region66: #{transformer_decoder_forward.1} parent=1 // pred_check
      _
    $region67: #{transformer_decoder_forward.1} parent=1 // pred_check_branch
      %200 = sbr.rel (0) target = $region69
    $region68: #{transformer_decoder_forward.1} parent=1 // pred_region
      _
    $region69: #{transformer_decoder_forward.1} parent=1 // pred_fallthru
      _
    // Predicated region
    $region70: #{transformer_decoder_forward.1} parent=1 // pred_check
      _
    $region71: #{transformer_decoder_forward.1} parent=1 // pred_check_branch
      %202 = sbr.rel (0) target = $region73
    $region72: #{transformer_decoder_forward.1} parent=1 // pred_region
      _
    $region73: #{transformer_decoder_forward.1} parent=1 // pred_fallthru
      _
    // Predicated region
    $region74: #{transformer_decoder_forward.1} parent=1 // pred_check
      _
    $region75: #{transformer_decoder_forward.1} parent=1 // pred_check_branch
      %204 = sbr.rel (0) target = $region77
    $region76: #{transformer_decoder_forward.1} parent=1 // pred_region
      %206 = vsyncadd [#allocation12], 0
      %s207 = sshll.u32 %s37, 4
      %s208 = int_to_ptr.hbm [resolvable:$true] %s207
      %s209 = sshll.u32 [#allocation11], 4
      %s210 = int_to_ptr.vmem [resolvable:$true] %s209
      %215 = dma.hbm_to_vmem [thread:$0]  %s208, 8192, %s210, [#allocation12], 512, 512, 32
    $region77: #{transformer_decoder_forward.1} parent=1 // pred_fallthru
      _
    // Predicated region
    $region78: #{transformer_decoder_forward.1} parent=1 // pred_check
      _
    $region79: #{transformer_decoder_forward.1} parent=1 // pred_check_branch
      %217 = sbr.rel (0) target = $region81
    $region80: #{transformer_decoder_forward.1} parent=1 // pred_region
      _
    $region81: #{transformer_decoder_forward.1} parent=1 // pred_fallthru
      _
    // Predicated region
    $region82: #{transformer_decoder_forward.1} parent=1 // pred_check
      _
    $region83: #{transformer_decoder_forward.1} parent=1 // pred_check_branch
      %219 = sbr.rel (0) target = $region85
    $region84: #{transformer_decoder_forward.1} parent=1 // pred_region
      %221 = vsyncadd [#allocation12], 0
      %s222 = sshll.u32 %s41, 4
      %s223 = int_to_ptr.hbm [resolvable:$true] %s222
      %s224 = sshll.u32 [#allocation13], 4
      %s225 = int_to_ptr.vmem [resolvable:$true] %s224
      %230 = dma.hbm_to_vmem [thread:$0]  %s223, 8192, %s225, [#allocation12], 128, 128, 8
    $region85: #{transformer_decoder_forward.1} parent=1 // pred_fallthru
      _
    // Predicated region
    $region86: #{transformer_decoder_forward.1} parent=1 // pred_check
      _
    $region87: #{transformer_decoder_forward.1} parent=1 // pred_check_branch
      %232 = sbr.rel (0) target = $region89
    $region88: #{transformer_decoder_forward.1} parent=1 // pred_region
      _
    $region89: #{transformer_decoder_forward.1} parent=1 // pred_fallthru
      _
    // Predicated region
    $region90: #{transformer_decoder_forward.1} parent=1 // pred_check
      _
    $region91: #{transformer_decoder_forward.1} parent=1 // pred_check_branch
      %234 = sbr.rel (0) target = $region93
    $region92: #{transformer_decoder_forward.1} parent=1 // pred_region
      _
    $region93: #{transformer_decoder_forward.1} parent=1 // pred_fallthru
      _
    // Predicated region
    $region94: #{transformer_decoder_forward.1} parent=1 // pred_check
      _
    $region95: #{transformer_decoder_forward.1} parent=1 // pred_check_branch
      %236 = sbr.rel (0) target = $region97
    $region96: #{transformer_decoder_forward.1} parent=1 // pred_region
      _
    $region97: #{transformer_decoder_forward.1} parent=1 // pred_fallthru
      _
    // Predicated region
    $region98: #{transformer_decoder_forward.1} parent=1 // pred_check
      _
    $region99: #{transformer_decoder_forward.1} parent=1 // pred_check_branch
      %238 = sbr.rel (0) target = $region101
    $region100: #{transformer_decoder_forward.1} parent=1 // pred_region
      %240 = vsyncadd [#allocation15], 0
      %s241 = sshll.u32 %s49, 4
      %s242 = int_to_ptr.hbm [resolvable:$true] %s241
      %s243 = sshll.u32 [#allocation14], 4
      %s244 = int_to_ptr.vmem [resolvable:$true] %s243
      %249 = dma.hbm_to_vmem [thread:$0]  %s242, 2048, %s244, [#allocation15], 128, 128, 8
    $region101: #{transformer_decoder_forward.1} parent=1 // pred_fallthru
      _
    // Predicated region
    $region102: #{transformer_decoder_forward.1} parent=1 // pred_check
      _
    $region103: #{transformer_decoder_forward.1} parent=1 // pred_check_branch
      %251 = sbr.rel (0) target = $region105
    $region104: #{transformer_decoder_forward.1} parent=1 // pred_region
      _
    $region105: #{transformer_decoder_forward.1} parent=1 // pred_fallthru
      _
    // Predicated region
    $region106: #{transformer_decoder_forward.1} parent=1 // pred_check
      _
    $region107: #{transformer_decoder_forward.1} parent=1 // pred_check_branch
      %253 = sbr.rel (0) target = $region109
    $region108: #{transformer_decoder_forward.1} parent=1 // pred_region
      %255 = vsyncadd [#allocation15], 0
      %s256 = sshll.u32 %s53, 4
      %s257 = int_to_ptr.hbm [resolvable:$true] %s256
      %s258 = sshll.u32 [#allocation16], 4
      %s259 = int_to_ptr.vmem [resolvable:$true] %s258
      %264 = dma.hbm_to_vmem [thread:$0]  %s257, 4096, %s259, [#allocation15], 256, 256, 16
    $region109: #{transformer_decoder_forward.1} parent=1 // pred_fallthru
      _
    // Predicated region
    $region110: #{transformer_decoder_forward.1} parent=1 // pred_check
      _
    $region111: #{transformer_decoder_forward.1} parent=1 // pred_check_branch
      %266 = sbr.rel (0) target = $region113
    $region112: #{transformer_decoder_forward.1} parent=1 // pred_region
      _
    $region113: #{transformer_decoder_forward.1} parent=1 // pred_fallthru
      _
    // Predicated region
    $region114: #{transformer_decoder_forward.1} parent=1 // pred_check
      _
    $region115: #{transformer_decoder_forward.1} parent=1 // pred_check_branch
      %268 = sbr.rel (0) target = $region117
    $region116: #{transformer_decoder_forward.1} parent=1 // pred_region
      %270 = vsyncadd [#allocation18], 0
      %s271 = sshll.u32 %s57, 4
      %s272 = int_to_ptr.hbm [resolvable:$true] %s271
      %s273 = sshll.u32 [#allocation17], 4
      %s274 = int_to_ptr.vmem [resolvable:$true] %s273
      %279 = dma.hbm_to_vmem [thread:$0]  %s272, 2048, %s274, [#allocation18], 128, 128, 8
    $region117: #{transformer_decoder_forward.1} parent=1 // pred_fallthru
      _
    // Predicated region
    $region118: #{transformer_decoder_forward.1} parent=1 // pred_check
      _
    $region119: #{transformer_decoder_forward.1} parent=1 // pred_check_branch
      %281 = sbr.rel (0) target = $region121
    $region120: #{transformer_decoder_forward.1} parent=1 // pred_region
      _
    $region121: #{transformer_decoder_forward.1} parent=1 // pred_fallthru
      _
    // Predicated region
    $region122: #{transformer_decoder_forward.1} parent=1 // pred_check
      _
    $region123: #{transformer_decoder_forward.1} parent=1 // pred_check_branch
      %283 = sbr.rel (0) target = $region125
    $region124: #{transformer_decoder_forward.1} parent=1 // pred_region
      _
    $region125: #{transformer_decoder_forward.1} parent=1 // pred_fallthru
      _
    // Predicated region
    $region126: #{transformer_decoder_forward.1} parent=1 // pred_check
      _
    $region127: #{transformer_decoder_forward.1} parent=1 // pred_check_branch
      %285 = sbr.rel (0) target = $region129
    $region128: #{transformer_decoder_forward.1} parent=1 // pred_region
      _
    $region129: #{transformer_decoder_forward.1} parent=1 // pred_fallthru
      _
    // Predicated region
    $region130: #{transformer_decoder_forward.1} parent=1 // pred_check
      _
    $region131: #{transformer_decoder_forward.1} parent=1 // pred_check_branch
      %287 = sbr.rel (0) target = $region133
    $region132: #{transformer_decoder_forward.1} parent=1 // pred_region
      %289 = vsyncadd [#allocation18], 0
      %s290 = sshll.u32 %s65, 4
      %s291 = int_to_ptr.hbm [resolvable:$true] %s290
      %s292 = sshll.u32 [#allocation19], 4
      %s293 = int_to_ptr.vmem [resolvable:$true] %s292
      %298 = dma.hbm_to_vmem [thread:$0]  %s291, 2048, %s293, [#allocation18], 128, 128, 8
    $region133: #{transformer_decoder_forward.1} parent=1 // pred_fallthru
      _
    // Predicated region
    $region134: #{transformer_decoder_forward.1} parent=1 // pred_check
      _
    $region135: #{transformer_decoder_forward.1} parent=1 // pred_check_branch
      %300 = sbr.rel (0) target = $region137
    $region136: #{transformer_decoder_forward.1} parent=1 // pred_region
      _
    $region137: #{transformer_decoder_forward.1} parent=1 // pred_fallthru
      _
    // Predicated region
    $region138: #{transformer_decoder_forward.1} parent=1 // pred_check
      _
    $region139: #{transformer_decoder_forward.1} parent=1 // pred_check_branch
      %302 = sbr.rel (0) target = $region141
    $region140: #{transformer_decoder_forward.1} parent=1 // pred_region
      %304 = vsyncadd [#allocation21], 0
      %s305 = sshll.u32 %s69, 4
      %s306 = int_to_ptr.hbm [resolvable:$true] %s305
      %s307 = sshll.u32 [#allocation20], 4
      %s308 = int_to_ptr.vmem [resolvable:$true] %s307
      %313 = dma.hbm_to_vmem [thread:$0]  %s306, 4096, %s308, [#allocation21], 256, 256, 16
    $region141: #{transformer_decoder_forward.1} parent=1 // pred_fallthru
      _
    // Predicated region
    $region142: #{transformer_decoder_forward.1} parent=1 // pred_check
      _
    $region143: #{transformer_decoder_forward.1} parent=1 // pred_check_branch
      %315 = sbr.rel (0) target = $region145
    $region144: #{transformer_decoder_forward.1} parent=1 // pred_region
      _
    $region145: #{transformer_decoder_forward.1} parent=1 // pred_fallthru
      _
    // Predicated region
    $region146: #{transformer_decoder_forward.1} parent=1 // pred_check
      _
    $region147: #{transformer_decoder_forward.1} parent=1 // pred_check_branch
      %317 = sbr.rel (0) target = $region149
    $region148: #{transformer_decoder_forward.1} parent=1 // pred_region
      %319 = vsyncadd [#allocation21], 0
      %s320 = sshll.u32 %s73, 4
      %s321 = int_to_ptr.hbm [resolvable:$true] %s320
      %s322 = sshll.u32 [#allocation22], 4
      %s323 = int_to_ptr.vmem [resolvable:$true] %s322
      %328 = dma.hbm_to_vmem [thread:$0]  %s321, 2048, %s323, [#allocation21], 128, 128, 8
    $region149: #{transformer_decoder_forward.1} parent=1 // pred_fallthru
      _
    // Predicated region
    $region150: #{transformer_decoder_forward.1} parent=1 // pred_check
      _
    $region151: #{transformer_decoder_forward.1} parent=1 // pred_check_branch
      %330 = sbr.rel (0) target = $region153
    $region152: #{transformer_decoder_forward.1} parent=1 // pred_region
      _
    $region153: #{transformer_decoder_forward.1} parent=1 // pred_fallthru
      _
    // Predicated region
    $region154: #{transformer_decoder_forward.1} parent=1 // pred_check
      _
    $region155: #{transformer_decoder_forward.1} parent=1 // pred_check_branch
      %332 = sbr.rel (0) target = $region157
    $region156: #{transformer_decoder_forward.1} parent=1 // pred_region
      _
    $region157: #{transformer_decoder_forward.1} parent=1 // pred_fallthru
      _
    // Predicated region
    $region158: #{transformer_decoder_forward.1} parent=1 // pred_check
      _
    $region159: #{transformer_decoder_forward.1} parent=1 // pred_check_branch
      %334 = sbr.rel (0) target = $region161
    $region160: #{transformer_decoder_forward.1} parent=1 // pred_region
      _
    $region161: #{transformer_decoder_forward.1} parent=1 // pred_fallthru
      _
    // Predicated region
    $region162: #{transformer_decoder_forward.1} parent=1 // pred_check
      _
    $region163: #{transformer_decoder_forward.1} parent=1 // pred_check_branch
      %336 = sbr.rel (0) target = $region165
    $region164: #{transformer_decoder_forward.1} parent=1 // pred_region
      %338 = vsyncadd [#allocation24], 0
      %s339 = sshll.u32 %s81, 4
      %s340 = int_to_ptr.hbm [resolvable:$true] %s339
      %s341 = sshll.u32 [#allocation23], 4
      %s342 = int_to_ptr.vmem [resolvable:$true] %s341
      %347 = dma.hbm_to_vmem [thread:$0]  %s340, 8192, %s342, [#allocation24], 512, 512, 32
    $region165: #{transformer_decoder_forward.1} parent=1 // pred_fallthru
      _
    // Predicated region
    $region166: #{transformer_decoder_forward.1} parent=1 // pred_check
      _
    $region167: #{transformer_decoder_forward.1} parent=1 // pred_check_branch
      %349 = sbr.rel (0) target = $region169
    $region168: #{transformer_decoder_forward.1} parent=1 // pred_region
      _
    $region169: #{transformer_decoder_forward.1} parent=1 // pred_fallthru
      _
    // Predicated region
    $region170: #{transformer_decoder_forward.1} parent=1 // pred_check
      _
    $region171: #{transformer_decoder_forward.1} parent=1 // pred_check_branch
      %351 = sbr.rel (0) target = $region173
    $region172: #{transformer_decoder_forward.1} parent=1 // pred_region
      %353 = vsyncadd [#allocation24], 0
      %s354 = sshll.u32 %s85, 4
      %s355 = int_to_ptr.hbm [resolvable:$true] %s354
      %s356 = sshll.u32 [#allocation25], 4
      %s357 = int_to_ptr.vmem [resolvable:$true] %s356
      %362 = dma.hbm_to_vmem [thread:$0]  %s355, 8192, %s357, [#allocation24], 128, 128, 8
    $region173: #{transformer_decoder_forward.1} parent=1 // pred_fallthru
      _
    // Predicated region
    $region174: #{transformer_decoder_forward.1} parent=1 // pred_check
      _
    $region175: #{transformer_decoder_forward.1} parent=1 // pred_check_branch
      %364 = sbr.rel (0) target = $region177
    $region176: #{transformer_decoder_forward.1} parent=1 // pred_region
      _
    $region177: #{transformer_decoder_forward.1} parent=1 // pred_fallthru
      _
    // Predicated region
    $region178: #{transformer_decoder_forward.1} parent=1 // pred_check
      _
    $region179: #{transformer_decoder_forward.1} parent=1 // pred_check_branch
      %366 = sbr.rel (0) target = $region181
    $region180: #{transformer_decoder_forward.1} parent=1 // pred_region
      _
    $region181: #{transformer_decoder_forward.1} parent=1 // pred_fallthru
      _
    // Predicated region
    $region182: #{transformer_decoder_forward.1} parent=1 // pred_check
      _
    $region183: #{transformer_decoder_forward.1} parent=1 // pred_check_branch
      %368 = sbr.rel (0) target = $region185
    $region184: #{transformer_decoder_forward.1} parent=1 // pred_region
      _
    $region185: #{transformer_decoder_forward.1} parent=1 // pred_fallthru
      _
    // Predicated region
    $region186: #{transformer_decoder_forward.1} parent=1 // pred_check
      _
    $region187: #{transformer_decoder_forward.1} parent=1 // pred_check_branch
      %370 = sbr.rel (0) target = $region189
    $region188: #{transformer_decoder_forward.1} parent=1 // pred_region
      %372 = vsyncadd [#allocation27], 0
      %s373 = sshll.u32 %s93, 4
      %s374 = int_to_ptr.hbm [resolvable:$true] %s373
      %s375 = sshll.u32 [#allocation26], 4
      %s376 = int_to_ptr.vmem [resolvable:$true] %s375
      %381 = dma.hbm_to_vmem [thread:$0]  %s374, 2048, %s376, [#allocation27], 128, 128, 8
    $region189: #{transformer_decoder_forward.1} parent=1 // pred_fallthru
      _
    // Predicated region
    $region190: #{transformer_decoder_forward.1} parent=1 // pred_check
      _
    $region191: #{transformer_decoder_forward.1} parent=1 // pred_check_branch
      %383 = sbr.rel (0) target = $region193
    $region192: #{transformer_decoder_forward.1} parent=1 // pred_region
      _
    $region193: #{transformer_decoder_forward.1} parent=1 // pred_fallthru
      _
    // Predicated region
    $region194: #{transformer_decoder_forward.1} parent=1 // pred_check
      _
    $region195: #{transformer_decoder_forward.1} parent=1 // pred_check_branch
      %385 = sbr.rel (0) target = $region197
    $region196: #{transformer_decoder_forward.1} parent=1 // pred_region
      %387 = dma.done [#allocation3], 4096
    $region197: #{transformer_decoder_forward.1} parent=1 // pred_fallthru
      _
    // Predicated region
    $region198: #{transformer_decoder_forward.1} parent=1 // pred_check
      _
    $region199: #{transformer_decoder_forward.1} parent=1 // pred_check_branch
      %389 = sbr.rel (0) target = $region201
    $region200: #{transformer_decoder_forward.1} parent=1 // pred_region
      %391 = dma.done [#allocation6], 2048
    $region201: #{transformer_decoder_forward.1} parent=1 // pred_fallthru
      _
    // Predicated region
    $region202: #{transformer_decoder_forward.1} parent=1 // pred_check
      _
    $region203: #{transformer_decoder_forward.1} parent=1 // pred_check_branch
      %393 = sbr.rel (0) target = $region205
    $region204: #{transformer_decoder_forward.1} parent=1 // pred_region
      %395 = dma.done [#allocation6], 2048
    $region205: #{transformer_decoder_forward.1} parent=1 // pred_fallthru
      _
    // Predicated region
    $region206: #{transformer_decoder_forward.1} parent=1 // pred_check
      _
    $region207: #{transformer_decoder_forward.1} parent=1 // pred_check_branch
      %397 = sbr.rel (0) target = $region209
    $region208: #{transformer_decoder_forward.1} parent=1 // pred_region
      %399 = dma.done [#allocation9], 4096
    $region209: #{transformer_decoder_forward.1} parent=1 // pred_fallthru
      _
    // Predicated region
    $region210: #{transformer_decoder_forward.1} parent=1 // pred_check
      _
    $region211: #{transformer_decoder_forward.1} parent=1 // pred_check_branch
      %401 = sbr.rel (0) target = $region213
    $region212: #{transformer_decoder_forward.1} parent=1 // pred_region
      %403 = dma.done [#allocation9], 2048
    $region213: #{transformer_decoder_forward.1} parent=1 // pred_fallthru
      _
    // Predicated region
    $region214: #{transformer_decoder_forward.1} parent=1 // pred_check
      _
    $region215: #{transformer_decoder_forward.1} parent=1 // pred_check_branch
      %405 = sbr.rel (0) target = $region217
    $region216: #{transformer_decoder_forward.1} parent=1 // pred_region
      %407 = dma.done [#allocation12], 8192
    $region217: #{transformer_decoder_forward.1} parent=1 // pred_fallthru
      _
    // Predicated region
    $region218: #{transformer_decoder_forward.1} parent=1 // pred_check
      _
    $region219: #{transformer_decoder_forward.1} parent=1 // pred_check_branch
      %409 = sbr.rel (0) target = $region221
    $region220: #{transformer_decoder_forward.1} parent=1 // pred_region
      %411 = dma.done [#allocation12], 8192
    $region221: #{transformer_decoder_forward.1} parent=1 // pred_fallthru
      _
    // Predicated region
    $region222: #{transformer_decoder_forward.1} parent=1 // pred_check
      _
    $region223: #{transformer_decoder_forward.1} parent=1 // pred_check_branch
      %413 = sbr.rel (0) target = $region225
    $region224: #{transformer_decoder_forward.1} parent=1 // pred_region
      %415 = dma.done [#allocation15], 2048
    $region225: #{transformer_decoder_forward.1} parent=1 // pred_fallthru
      _
    // Predicated region
    $region226: #{transformer_decoder_forward.1} parent=1 // pred_check
      _
    $region227: #{transformer_decoder_forward.1} parent=1 // pred_check_branch
      %417 = sbr.rel (0) target = $region229
    $region228: #{transformer_decoder_forward.1} parent=1 // pred_region
      %419 = dma.done [#allocation15], 4096
    $region229: #{transformer_decoder_forward.1} parent=1 // pred_fallthru
      _
    // Predicated region
    $region230: #{transformer_decoder_forward.1} parent=1 // pred_check
      _
    $region231: #{transformer_decoder_forward.1} parent=1 // pred_check_branch
      %421 = sbr.rel (0) target = $region233
    $region232: #{transformer_decoder_forward.1} parent=1 // pred_region
      %423 = dma.done [#allocation18], 2048
    $region233: #{transformer_decoder_forward.1} parent=1 // pred_fallthru
      _
    // Predicated region
    $region234: #{transformer_decoder_forward.1} parent=1 // pred_check
      _
    $region235: #{transformer_decoder_forward.1} parent=1 // pred_check_branch
      %425 = sbr.rel (0) target = $region237
    $region236: #{transformer_decoder_forward.1} parent=1 // pred_region
      %427 = dma.done [#allocation18], 2048
    $region237: #{transformer_decoder_forward.1} parent=1 // pred_fallthru
      _
    // Predicated region
    $region238: #{transformer_decoder_forward.1} parent=1 // pred_check
      _
    $region239: #{transformer_decoder_forward.1} parent=1 // pred_check_branch
      %429 = sbr.rel (0) target = $region241
    $region240: #{transformer_decoder_forward.1} parent=1 // pred_region
      %431 = dma.done [#allocation21], 4096
    $region241: #{transformer_decoder_forward.1} parent=1 // pred_fallthru
      _
    // Predicated region
    $region242: #{transformer_decoder_forward.1} parent=1 // pred_check
      _
    $region243: #{transformer_decoder_forward.1} parent=1 // pred_check_branch
      %433 = sbr.rel (0) target = $region245
    $region244: #{transformer_decoder_forward.1} parent=1 // pred_region
      %435 = dma.done [#allocation21], 2048
    $region245: #{transformer_decoder_forward.1} parent=1 // pred_fallthru
      _
    // Predicated region
    $region246: #{transformer_decoder_forward.1} parent=1 // pred_check
      _
    $region247: #{transformer_decoder_forward.1} parent=1 // pred_check_branch
      %437 = sbr.rel (0) target = $region249
    $region248: #{transformer_decoder_forward.1} parent=1 // pred_region
      %439 = dma.done [#allocation24], 8192
    $region249: #{transformer_decoder_forward.1} parent=1 // pred_fallthru
      _
    // Predicated region
    $region250: #{transformer_decoder_forward.1} parent=1 // pred_check
      _
    $region251: #{transformer_decoder_forward.1} parent=1 // pred_check_branch
      %441 = sbr.rel (0) target = $region253
    $region252: #{transformer_decoder_forward.1} parent=1 // pred_region
      %443 = dma.done [#allocation24], 8192
    $region253: #{transformer_decoder_forward.1} parent=1 // pred_fallthru
      _
    // Predicated region
    $region254: #{transformer_decoder_forward.1} parent=1 // pred_check
      _
    $region255: #{transformer_decoder_forward.1} parent=1 // pred_check_branch
      %445 = sbr.rel (0) target = $region257
    $region256: #{transformer_decoder_forward.1} parent=1 // pred_region
      %447 = dma.done [#allocation27], 2048
    $region257: #{transformer_decoder_forward.1} parent=1 // pred_fallthru
      _
    %v448 = vld [vmem:[%s1] sm:$0xff]
    %v449 = vld [vmem:[%s1 + $0x8] sm:$0xff]
    %v450 = vld [vmem:[%s3] sm:$0xff]
    %v451 = vld [vmem:[%s3 + $0x8] sm:$0x3]
    %s452 = scalar_lea.vmem %s3, 16
    %v453 = vld [vmem:[%s452] sm:$0xff]
    %v454 = vld [vmem:[%s452 + $0x8] sm:$0x3]
    %v455 = vld [vmem:[%s5] sm:$0xff]
    %v456 = vld [vmem:[%s5 + $0x8] sm:$0xff]
    %v457 = vld [vmem:[%s5 + $0x10] sm:$0xff]
    %v458 = vld [vmem:[%s5 + $0x18] sm:$0xff]
    %v459 = vld [vmem:[%s5 + $0x20] sm:$0xff]
    %v460 = vld [vmem:[%s5 + $0x28] sm:$0xff]
    %v461 = vld [vmem:[%s5 + $0x30] sm:$0xff]
    %v462 = vld [vmem:[%s5 + $0x38] sm:$0xff]
    %v463 = vld [vmem:[%s5 + $0x40] sm:$0xff]
    %v464 = vld [vmem:[%s5 + $0x48] sm:$0xff]
    %v465 = vld [vmem:[%s5 + $0x50] sm:$0xff]
    %v466 = vld [vmem:[%s5 + $0x58] sm:$0xff]
    %v467 = vld [vmem:[%s5 + $0x60] sm:$0xff]
    %v468 = vld [vmem:[%s5 + $0x68] sm:$0xff]
    %v469 = vld [vmem:[%s5 + $0x70] sm:$0xff]
    %v470 = vld [vmem:[%s5 + $0x78] sm:$0xff]
    %v471 = vld [vmem:[%s7] sm:$0x1]
    %v473 = vperm.slane %v471, 0
    %475 = vmatpush.msra.mxu0 %v470
    %476 = vmatpush.msra.mxu0 %v469
    %477 = vmatpush.msra.mxu0 %v468
    %478 = vmatpush.msra.mxu0 %v467
    %479 = vmatpush.msra.mxu0 %v466
    %480 = vmatpush.msra.mxu0 %v465
    %481 = vmatpush.msra.mxu0 %v464
    %482 = vmatpush.msra.mxu0 %v463
    %483 = vmatpush.msra.mxu0 %v462
    %484 = vmatpush.msra.mxu0 %v461
    %485 = vmatpush.msra.mxu0 %v460
    %486 = vmatpush.msra.mxu0 %v459
    %487 = vmatpush.msra.mxu0 %v458
    %488 = vmatpush.msra.mxu0 %v457
    %489 = vmatpush.msra.mxu0 %v456
    %490 = vmatpush.msra.mxu0 %v455
    %491 = vmatmul.f32.gmra.mxu0 %v448
    %v492 = vpop.f32.mrf.mxu0
    %v493 = vadd.f32 %v473, %v492
    %494 = vmatmul.f32.gmra.mxu0 %v449
    %v495 = vpop.f32.mrf.mxu0
    %v496 = vadd.f32 %v473, %v495
    %497 = vdwg.mxu0
    %v498 = vld [vmem:[#allocation2] sm:$0xff]
    %v499 = vld [vmem:[#allocation2 + $0x8] sm:$0xff]
    %v500 = vld [vmem:[#allocation2 + $0x10] sm:$0xff]
    %v501 = vld [vmem:[#allocation2 + $0x18] sm:$0xff]
    %v502 = vld [vmem:[#allocation2 + $0x20] sm:$0xff]
    %v503 = vld [vmem:[#allocation2 + $0x28] sm:$0xff]
    %v504 = vld [vmem:[#allocation2 + $0x30] sm:$0xff]
    %v505 = vld [vmem:[#allocation2 + $0x38] sm:$0xff]
    %v506 = vld [vmem:[#allocation2 + $0x40] sm:$0xff]
    %v507 = vld [vmem:[#allocation2 + $0x48] sm:$0xff]
    %v508 = vld [vmem:[#allocation2 + $0x50] sm:$0xff]
    %v509 = vld [vmem:[#allocation2 + $0x58] sm:$0xff]
    %v510 = vld [vmem:[#allocation2 + $0x60] sm:$0xff]
    %v511 = vld [vmem:[#allocation2 + $0x68] sm:$0xff]
    %v512 = vld [vmem:[#allocation2 + $0x70] sm:$0xff]
    %v513 = vld [vmem:[#allocation2 + $0x78] sm:$0xff]
    %v514 = vld [vmem:[#allocation2 + $0x80] sm:$0xff]
    %v515 = vld [vmem:[#allocation2 + $0x88] sm:$0xff]
    %v516 = vld [vmem:[#allocation2 + $0x90] sm:$0xff]
    %v517 = vld [vmem:[#allocation2 + $0x98] sm:$0xff]
    %v518 = vld [vmem:[#allocation2 + $0xa0] sm:$0xff]
    %v519 = vld [vmem:[#allocation2 + $0xa8] sm:$0xff]
    %v520 = vld [vmem:[#allocation2 + $0xb0] sm:$0xff]
    %v521 = vld [vmem:[#allocation2 + $0xb8] sm:$0xff]
    %v522 = vld [vmem:[#allocation2 + $0xc0] sm:$0xff]
    %v523 = vld [vmem:[#allocation2 + $0xc8] sm:$0xff]
    %v524 = vld [vmem:[#allocation2 + $0xd0] sm:$0xff]
    %v525 = vld [vmem:[#allocation2 + $0xd8] sm:$0xff]
    %v526 = vld [vmem:[#allocation2 + $0xe0] sm:$0xff]
    %v527 = vld [vmem:[#allocation2 + $0xe8] sm:$0xff]
    %v528 = vld [vmem:[#allocation2 + $0xf0] sm:$0xff]
    %v529 = vld [vmem:[#allocation2 + $0xf8] sm:$0xff]
    %v530 = vld [vmem:[%s11] sm:$0x3]
    %v532 = vperm.slane %v530, 0
    %v533 = vperm.slane %v530, 1
    %536 = vmatpush.msra.mxu0 %v528
    %537 = vmatpush.msra.mxu0 %v526
    %538 = vmatpush.msra.mxu0 %v524
    %539 = vmatpush.msra.mxu0 %v522
    %540 = vmatpush.msra.mxu0 %v520
    %541 = vmatpush.msra.mxu0 %v518
    %542 = vmatpush.msra.mxu0 %v516
    %543 = vmatpush.msra.mxu0 %v514
    %544 = vmatpush.msra.mxu0 %v512
    %545 = vmatpush.msra.mxu0 %v510
    %546 = vmatpush.msra.mxu0 %v508
    %547 = vmatpush.msra.mxu0 %v506
    %548 = vmatpush.msra.mxu0 %v504
    %549 = vmatpush.msra.mxu0 %v502
    %550 = vmatpush.msra.mxu0 %v500
    %551 = vmatpush.msra.mxu0 %v498
    %552 = vmatmul.f32.gmra.mxu0 %v448
    %v553 = vpop.f32.mrf.mxu0
    %v554 = vadd.f32 %v532, %v553
    %555 = vdwg.mxu0
    %556 = vmatpush.msra.mxu0 %v529
    %557 = vmatpush.msra.mxu0 %v527
    %558 = vmatpush.msra.mxu0 %v525
    %559 = vmatpush.msra.mxu0 %v523
    %560 = vmatpush.msra.mxu0 %v521
    %561 = vmatpush.msra.mxu0 %v519
    %562 = vmatpush.msra.mxu0 %v517
    %563 = vmatpush.msra.mxu0 %v515
    %564 = vmatpush.msra.mxu0 %v513
    %565 = vmatpush.msra.mxu0 %v511
    %566 = vmatpush.msra.mxu0 %v509
    %567 = vmatpush.msra.mxu0 %v507
    %568 = vmatpush.msra.mxu0 %v505
    %569 = vmatpush.msra.mxu0 %v503
    %570 = vmatpush.msra.mxu0 %v501
    %571 = vmatpush.msra.mxu0 %v499
    %572 = vmatmul.f32.gmra.mxu0 %v448
    %v573 = vpop.f32.mrf.mxu0
    %v574 = vadd.f32 %v533, %v573
    %575 = vdwg.mxu0
    %vm576 = vcmask 261120
    %v578 = vsel %vm576, %v493, 0
    %v581 = vsel %vm576, %v554, 0
    %583 = vmatpush.xpose.msra.mxu0 0.0
    %584 = vmatpush.xpose.msra.mxu0 0.0
    %585 = vmatpush.xpose.msra.mxu0 0.0
    %586 = vmatpush.xpose.msra.mxu0 0.0
    %587 = vmatpush.xpose.msra.mxu0 0.0
    %588 = vmatpush.xpose.msra.mxu0 0.0
    %589 = vmatpush.xpose.msra.mxu0 0.0
    %590 = vmatpush.xpose.msra.mxu0 0.0
    %591 = vmatpush.xpose.msra.mxu0 0.0
    %592 = vmatpush.xpose.msra.mxu0 0.0
    %593 = vmatpush.xpose.msra.mxu0 0.0
    %594 = vmatpush.xpose.msra.mxu0 0.0
    %595 = vmatpush.xpose.msra.mxu0 0.0
    %596 = vmatpush.xpose.msra.mxu0 0.0
    %597 = vmatpush.xpose.msra.mxu0 0.0
    %598 = vmatpush.xpose.msra.mxu0 %v581
    %599 = vmatmul.f32.gmra.mxu0 %v578
    %v600 = vpop.f32.mrf.mxu0
    %v601 = vadd.f32 0.0, %v600
    %602 = vdwg.mxu0
    %vm603 = vcmask 64512
    %v604 = vsel %vm603, %v601, -inf
    %605 = vmax.xlane.f32.xlu0 %v604
    %v606 = vpop.xlane.xlu0 %605
    %v607 = vsub.f32 %v601, %v606
    %v608 = vmul.f32 %v607, 1.442695
    %v609 = vpow.pop %v608
    %v610 = vsel %vm603, %v609, 0.0
    %611 = vadd.xlane.f32.xlu0 %v610
    %v612 = vpop.xlane.xlu0 %611
    %v613 = vrcp.pop %v612
    %v614 = vmul.f32 %v612, %v613
    %v615 = vsub.f32 1.0, %v614
    %v616 = vmul.f32 %v613, %v615
    %v617 = vadd.f32 %v613, %v616
    %vm618 = vweird.f32 %v612
    %vm619 = vweird.f32 %v613
    %vm620 = vmor %vm618, %vm619
    %v621 = vsel %vm620, %v613, %v617
    %v622 = vand.u32 2147483647, %v612
    %vm623 = vcmp.eq.f32.partialorder %v622, 8.507059e+37
    %v624 = vand.u32 %v612, 2147483648
    %v625 = vor.u32 1.1754944e-38, %v624
    %v626 = vsel %vm623, %v625, %v621
    %v627 = vmul.f32 %v609, %v626
    %v629 = vsel %vm603, %v627, 0
    %631 = vmatpush.msra.mxu0 0.0
    %632 = vmatpush.msra.mxu0 0.0
    %633 = vmatpush.msra.mxu0 0.0
    %634 = vmatpush.msra.mxu0 0.0
    %635 = vmatpush.msra.mxu0 0.0
    %636 = vmatpush.msra.mxu0 0.0
    %637 = vmatpush.msra.mxu0 0.0
    %638 = vmatpush.msra.mxu0 0.0
    %639 = vmatpush.msra.mxu0 0.0
    %640 = vmatpush.msra.mxu0 0.0
    %641 = vmatpush.msra.mxu0 0.0
    %642 = vmatpush.msra.mxu0 0.0
    %643 = vmatpush.msra.mxu0 0.0
    %644 = vmatpush.msra.mxu0 0.0
    %645 = vmatpush.msra.mxu0 0.0
    %646 = vmatpush.msra.mxu0 %v574
    %647 = vmatmul.f32.gmra.mxu0 %v629
    %v648 = vpop.f32.mrf.mxu0
    %v649 = vadd.f32 0.0, %v648
    %650 = vdwg.mxu0
    %651 = vrot.lane.b32.xlu0 %v493, 96
    %v652 = vpop.permute.xlu0 %651
    %653 = vrot.lane.b32.xlu0 %v554, 96
    %v654 = vpop.permute.xlu0 %653
    %v655 = vsel %vm576, %v652, 0
    %v657 = vsel %vm576, %v654, 0
    %659 = vmatpush.xpose.msra.mxu0 0.0
    %660 = vmatpush.xpose.msra.mxu0 0.0
    %661 = vmatpush.xpose.msra.mxu0 0.0
    %662 = vmatpush.xpose.msra.mxu0 0.0
    %663 = vmatpush.xpose.msra.mxu0 0.0
    %664 = vmatpush.xpose.msra.mxu0 0.0
    %665 = vmatpush.xpose.msra.mxu0 0.0
    %666 = vmatpush.xpose.msra.mxu0 0.0
    %667 = vmatpush.xpose.msra.mxu0 0.0
    %668 = vmatpush.xpose.msra.mxu0 0.0
    %669 = vmatpush.xpose.msra.mxu0 0.0
    %670 = vmatpush.xpose.msra.mxu0 0.0
    %671 = vmatpush.xpose.msra.mxu0 0.0
    %672 = vmatpush.xpose.msra.mxu0 0.0
    %673 = vmatpush.xpose.msra.mxu0 0.0
    %674 = vmatpush.xpose.msra.mxu0 %v657
    %675 = vmatmul.f32.gmra.mxu0 %v655
    %v676 = vpop.f32.mrf.mxu0
    %v677 = vadd.f32 0.0, %v676
    %678 = vdwg.mxu0
    %v679 = vsel %vm603, %v677, -inf
    %680 = vmax.xlane.f32.xlu0 %v679
    %v681 = vpop.xlane.xlu0 %680
    %v682 = vsub.f32 %v677, %v681
    %v683 = vmul.f32 %v682, 1.442695
    %v684 = vpow.pop %v683
    %v685 = vsel %vm603, %v684, 0.0
    %686 = vadd.xlane.f32.xlu0 %v685
    %v687 = vpop.xlane.xlu0 %686
    %v688 = vrcp.pop %v687
    %v689 = vmul.f32 %v687, %v688
    %v690 = vsub.f32 1.0, %v689
    %v691 = vmul.f32 %v688, %v690
    %v692 = vadd.f32 %v688, %v691
    %vm693 = vweird.f32 %v687
    %vm694 = vweird.f32 %v688
    %vm695 = vmor %vm693, %vm694
    %v696 = vsel %vm695, %v688, %v692
    %v697 = vand.u32 2147483647, %v687
    %vm698 = vcmp.eq.f32.partialorder %v697, 8.507059e+37
    %v699 = vand.u32 %v687, 2147483648
    %v700 = vor.u32 1.1754944e-38, %v699
    %v701 = vsel %vm698, %v700, %v696
    %v702 = vmul.f32 %v684, %v701
    %704 = vrot.lane.b32.xlu0 %v574, 96
    %v705 = vpop.permute.xlu0 %704
    %v708 = vsel %vm603, %v702, 0
    %710 = vmatpush.msra.mxu0 0.0
    %711 = vmatpush.msra.mxu0 0.0
    %712 = vmatpush.msra.mxu0 0.0
    %713 = vmatpush.msra.mxu0 0.0
    %714 = vmatpush.msra.mxu0 0.0
    %715 = vmatpush.msra.mxu0 0.0
    %716 = vmatpush.msra.mxu0 0.0
    %717 = vmatpush.msra.mxu0 0.0
    %718 = vmatpush.msra.mxu0 0.0
    %719 = vmatpush.msra.mxu0 0.0
    %720 = vmatpush.msra.mxu0 0.0
    %721 = vmatpush.msra.mxu0 0.0
    %722 = vmatpush.msra.mxu0 0.0
    %723 = vmatpush.msra.mxu0 0.0
    %724 = vmatpush.msra.mxu0 0.0
    %725 = vmatpush.msra.mxu0 %v705
    %726 = vmatmul.f32.gmra.mxu0 %v708
    %v727 = vpop.f32.mrf.mxu0
    %v728 = vadd.f32 0.0, %v727
    %729 = vdwg.mxu0
    %730 = vrot.lane.b32.xlu0 %v493, 64
    %v731 = vpop.permute.xlu0 %730
    %732 = vrot.lane.b32.xlu0 %v554, 64
    %v733 = vpop.permute.xlu0 %732
    %v734 = vsel %vm576, %v731, 0
    %v736 = vsel %vm576, %v733, 0
    %738 = vmatpush.xpose.msra.mxu0 0.0
    %739 = vmatpush.xpose.msra.mxu0 0.0
    %740 = vmatpush.xpose.msra.mxu0 0.0
    %741 = vmatpush.xpose.msra.mxu0 0.0
    %742 = vmatpush.xpose.msra.mxu0 0.0
    %743 = vmatpush.xpose.msra.mxu0 0.0
    %744 = vmatpush.xpose.msra.mxu0 0.0
    %745 = vmatpush.xpose.msra.mxu0 0.0
    %746 = vmatpush.xpose.msra.mxu0 0.0
    %747 = vmatpush.xpose.msra.mxu0 0.0
    %748 = vmatpush.xpose.msra.mxu0 0.0
    %749 = vmatpush.xpose.msra.mxu0 0.0
    %750 = vmatpush.xpose.msra.mxu0 0.0
    %751 = vmatpush.xpose.msra.mxu0 0.0
    %752 = vmatpush.xpose.msra.mxu0 0.0
    %753 = vmatpush.xpose.msra.mxu0 %v736
    %754 = vmatmul.f32.gmra.mxu0 %v734
    %v755 = vpop.f32.mrf.mxu0
    %v756 = vadd.f32 0.0, %v755
    %757 = vdwg.mxu0
    %v758 = vsel %vm603, %v756, -inf
    %759 = vmax.xlane.f32.xlu0 %v758
    %v760 = vpop.xlane.xlu0 %759
    %v761 = vsub.f32 %v756, %v760
    %v762 = vmul.f32 %v761, 1.442695
    %v763 = vpow.pop %v762
    %v764 = vsel %vm603, %v763, 0.0
    %765 = vadd.xlane.f32.xlu0 %v764
    %v766 = vpop.xlane.xlu0 %765
    %v767 = vrcp.pop %v766
    %v768 = vmul.f32 %v766, %v767
    %v769 = vsub.f32 1.0, %v768
    %v770 = vmul.f32 %v767, %v769
    %v771 = vadd.f32 %v767, %v770
    %vm772 = vweird.f32 %v766
    %vm773 = vweird.f32 %v767
    %vm774 = vmor %vm772, %vm773
    %v775 = vsel %vm774, %v767, %v771
    %v776 = vand.u32 2147483647, %v766
    %vm777 = vcmp.eq.f32.partialorder %v776, 8.507059e+37
    %v778 = vand.u32 %v766, 2147483648
    %v779 = vor.u32 1.1754944e-38, %v778
    %v780 = vsel %vm777, %v779, %v775
    %v781 = vmul.f32 %v763, %v780
    %782 = vrot.lane.b32.xlu0 %v574, 64
    %v783 = vpop.permute.xlu0 %782
    %v786 = vsel %vm603, %v781, 0
    %788 = vmatpush.msra.mxu0 0.0
    %789 = vmatpush.msra.mxu0 0.0
    %790 = vmatpush.msra.mxu0 0.0
    %791 = vmatpush.msra.mxu0 0.0
    %792 = vmatpush.msra.mxu0 0.0
    %793 = vmatpush.msra.mxu0 0.0
    %794 = vmatpush.msra.mxu0 0.0
    %795 = vmatpush.msra.mxu0 0.0
    %796 = vmatpush.msra.mxu0 0.0
    %797 = vmatpush.msra.mxu0 0.0
    %798 = vmatpush.msra.mxu0 0.0
    %799 = vmatpush.msra.mxu0 0.0
    %800 = vmatpush.msra.mxu0 0.0
    %801 = vmatpush.msra.mxu0 0.0
    %802 = vmatpush.msra.mxu0 0.0
    %803 = vmatpush.msra.mxu0 %v783
    %804 = vmatmul.f32.gmra.mxu0 %v786
    %v805 = vpop.f32.mrf.mxu0
    %v806 = vadd.f32 0.0, %v805
    %807 = vdwg.mxu0
    %808 = vrot.lane.b32.xlu0 %v493, 32
    %v809 = vpop.permute.xlu0 %808
    %810 = vrot.lane.b32.xlu0 %v554, 32
    %v811 = vpop.permute.xlu0 %810
    %v812 = vsel %vm576, %v809, 0
    %v814 = vsel %vm576, %v811, 0
    %816 = vmatpush.xpose.msra.mxu0 0.0
    %817 = vmatpush.xpose.msra.mxu0 0.0
    %818 = vmatpush.xpose.msra.mxu0 0.0
    %819 = vmatpush.xpose.msra.mxu0 0.0
    %820 = vmatpush.xpose.msra.mxu0 0.0
    %821 = vmatpush.xpose.msra.mxu0 0.0
    %822 = vmatpush.xpose.msra.mxu0 0.0
    %823 = vmatpush.xpose.msra.mxu0 0.0
    %824 = vmatpush.xpose.msra.mxu0 0.0
    %825 = vmatpush.xpose.msra.mxu0 0.0
    %826 = vmatpush.xpose.msra.mxu0 0.0
    %827 = vmatpush.xpose.msra.mxu0 0.0
    %828 = vmatpush.xpose.msra.mxu0 0.0
    %829 = vmatpush.xpose.msra.mxu0 0.0
    %830 = vmatpush.xpose.msra.mxu0 0.0
    %831 = vmatpush.xpose.msra.mxu0 %v814
    %832 = vmatmul.f32.gmra.mxu0 %v812
    %v833 = vpop.f32.mrf.mxu0
    %v834 = vadd.f32 0.0, %v833
    %835 = vdwg.mxu0
    %v836 = vsel %vm603, %v834, -inf
    %837 = vmax.xlane.f32.xlu0 %v836
    %v838 = vpop.xlane.xlu0 %837
    %v839 = vsub.f32 %v834, %v838
    %v840 = vmul.f32 %v839, 1.442695
    %v841 = vpow.pop %v840
    %v842 = vsel %vm603, %v841, 0.0
    %843 = vadd.xlane.f32.xlu0 %v842
    %v844 = vpop.xlane.xlu0 %843
    %v845 = vrcp.pop %v844
    %v846 = vmul.f32 %v844, %v845
    %v847 = vsub.f32 1.0, %v846
    %v848 = vmul.f32 %v845, %v847
    %v849 = vadd.f32 %v845, %v848
    %vm850 = vweird.f32 %v844
    %vm851 = vweird.f32 %v845
    %vm852 = vmor %vm850, %vm851
    %v853 = vsel %vm852, %v845, %v849
    %v854 = vand.u32 2147483647, %v844
    %vm855 = vcmp.eq.f32.partialorder %v854, 8.507059e+37
    %v856 = vand.u32 %v844, 2147483648
    %v857 = vor.u32 1.1754944e-38, %v856
    %v858 = vsel %vm855, %v857, %v853
    %v859 = vmul.f32 %v841, %v858
    %860 = vrot.lane.b32.xlu0 %v574, 32
    %v861 = vpop.permute.xlu0 %860
    %v864 = vsel %vm603, %v859, 0
    %866 = vmatpush.msra.mxu0 0.0
    %867 = vmatpush.msra.mxu0 0.0
    %868 = vmatpush.msra.mxu0 0.0
    %869 = vmatpush.msra.mxu0 0.0
    %870 = vmatpush.msra.mxu0 0.0
    %871 = vmatpush.msra.mxu0 0.0
    %872 = vmatpush.msra.mxu0 0.0
    %873 = vmatpush.msra.mxu0 0.0
    %874 = vmatpush.msra.mxu0 0.0
    %875 = vmatpush.msra.mxu0 0.0
    %876 = vmatpush.msra.mxu0 0.0
    %877 = vmatpush.msra.mxu0 0.0
    %878 = vmatpush.msra.mxu0 0.0
    %879 = vmatpush.msra.mxu0 0.0
    %880 = vmatpush.msra.mxu0 0.0
    %881 = vmatpush.msra.mxu0 %v861
    %882 = vmatmul.f32.gmra.mxu0 %v864
    %v883 = vpop.f32.mrf.mxu0
    %v884 = vadd.f32 0.0, %v883
    %885 = vdwg.mxu0
    %887 = vrot.lane.b32.xlu0 %v728, 32
    %v888 = vpop.permute.xlu0 %887
    %891 = vrot.lane.b32.xlu0 %v806, 64
    %v892 = vpop.permute.xlu0 %891
    %895 = vrot.lane.b32.xlu0 %v884, 96
    %v896 = vpop.permute.xlu0 %895
    %v898 = vsel %vm576, %v649, %v888
    %vm899 = vcmask 523264
    %v900 = vsel %vm899, %v898, %v892
    %vm901 = vcmask 785408
    %v902 = vsel %vm901, %v900, %v896
    %903 = vmatpush.msra.mxu0 %v528
    %904 = vmatpush.msra.mxu0 %v526
    %905 = vmatpush.msra.mxu0 %v524
    %906 = vmatpush.msra.mxu0 %v522
    %907 = vmatpush.msra.mxu0 %v520
    %908 = vmatpush.msra.mxu0 %v518
    %909 = vmatpush.msra.mxu0 %v516
    %910 = vmatpush.msra.mxu0 %v514
    %911 = vmatpush.msra.mxu0 %v512
    %912 = vmatpush.msra.mxu0 %v510
    %913 = vmatpush.msra.mxu0 %v508
    %914 = vmatpush.msra.mxu0 %v506
    %915 = vmatpush.msra.mxu0 %v504
    %916 = vmatpush.msra.mxu0 %v502
    %917 = vmatpush.msra.mxu0 %v500
    %918 = vmatpush.msra.mxu0 %v498
    %919 = vmatmul.f32.gmra.mxu0 %v449
    %v920 = vpop.f32.mrf.mxu0
    %v921 = vadd.f32 %v532, %v920
    %922 = vdwg.mxu0
    %923 = vmatpush.msra.mxu0 %v529
    %924 = vmatpush.msra.mxu0 %v527
    %925 = vmatpush.msra.mxu0 %v525
    %926 = vmatpush.msra.mxu0 %v523
    %927 = vmatpush.msra.mxu0 %v521
    %928 = vmatpush.msra.mxu0 %v519
    %929 = vmatpush.msra.mxu0 %v517
    %930 = vmatpush.msra.mxu0 %v515
    %931 = vmatpush.msra.mxu0 %v513
    %932 = vmatpush.msra.mxu0 %v511
    %933 = vmatpush.msra.mxu0 %v509
    %934 = vmatpush.msra.mxu0 %v507
    %935 = vmatpush.msra.mxu0 %v505
    %936 = vmatpush.msra.mxu0 %v503
    %937 = vmatpush.msra.mxu0 %v501
    %938 = vmatpush.msra.mxu0 %v499
    %939 = vmatmul.f32.gmra.mxu0 %v449
    %v940 = vpop.f32.mrf.mxu0
    %v941 = vadd.f32 %v533, %v940
    %942 = vdwg.mxu0
    %v944 = vsel %vm576, %v496, 0
    %v947 = vsel %vm576, %v921, 0
    %949 = vmatpush.xpose.msra.mxu0 0.0
    %950 = vmatpush.xpose.msra.mxu0 0.0
    %951 = vmatpush.xpose.msra.mxu0 0.0
    %952 = vmatpush.xpose.msra.mxu0 0.0
    %953 = vmatpush.xpose.msra.mxu0 0.0
    %954 = vmatpush.xpose.msra.mxu0 0.0
    %955 = vmatpush.xpose.msra.mxu0 0.0
    %956 = vmatpush.xpose.msra.mxu0 0.0
    %957 = vmatpush.xpose.msra.mxu0 0.0
    %958 = vmatpush.xpose.msra.mxu0 0.0
    %959 = vmatpush.xpose.msra.mxu0 0.0
    %960 = vmatpush.xpose.msra.mxu0 0.0
    %961 = vmatpush.xpose.msra.mxu0 0.0
    %962 = vmatpush.xpose.msra.mxu0 0.0
    %963 = vmatpush.xpose.msra.mxu0 0.0
    %964 = vmatpush.xpose.msra.mxu0 %v947
    %965 = vmatmul.f32.gmra.mxu0 %v944
    %v966 = vpop.f32.mrf.mxu0
    %v967 = vadd.f32 0.0, %v966
    %968 = vdwg.mxu0
    %v969 = vsel %vm603, %v967, -inf
    %970 = vmax.xlane.f32.xlu0 %v969
    %v971 = vpop.xlane.xlu0 %970
    %v972 = vsub.f32 %v967, %v971
    %v973 = vmul.f32 %v972, 1.442695
    %v974 = vpow.pop %v973
    %v975 = vsel %vm603, %v974, 0.0
    %976 = vadd.xlane.f32.xlu0 %v975
    %v977 = vpop.xlane.xlu0 %976
    %v978 = vrcp.pop %v977
    %v979 = vmul.f32 %v977, %v978
    %v980 = vsub.f32 1.0, %v979
    %v981 = vmul.f32 %v978, %v980
    %v982 = vadd.f32 %v978, %v981
    %vm983 = vweird.f32 %v977
    %vm984 = vweird.f32 %v978
    %vm985 = vmor %vm983, %vm984
    %v986 = vsel %vm985, %v978, %v982
    %v987 = vand.u32 2147483647, %v977
    %vm988 = vcmp.eq.f32.partialorder %v987, 8.507059e+37
    %v989 = vand.u32 %v977, 2147483648
    %v990 = vor.u32 1.1754944e-38, %v989
    %v991 = vsel %vm988, %v990, %v986
    %v992 = vmul.f32 %v974, %v991
    %v994 = vsel %vm603, %v992, 0
    %996 = vmatpush.msra.mxu0 0.0
    %997 = vmatpush.msra.mxu0 0.0
    %998 = vmatpush.msra.mxu0 0.0
    %999 = vmatpush.msra.mxu0 0.0
    %1000 = vmatpush.msra.mxu0 0.0
    %1001 = vmatpush.msra.mxu0 0.0
    %1002 = vmatpush.msra.mxu0 0.0
    %1003 = vmatpush.msra.mxu0 0.0
    %1004 = vmatpush.msra.mxu0 0.0
    %1005 = vmatpush.msra.mxu0 0.0
    %1006 = vmatpush.msra.mxu0 0.0
    %1007 = vmatpush.msra.mxu0 0.0
    %1008 = vmatpush.msra.mxu0 0.0
    %1009 = vmatpush.msra.mxu0 0.0
    %1010 = vmatpush.msra.mxu0 0.0
    %1011 = vmatpush.msra.mxu0 %v941
    %1012 = vmatmul.f32.gmra.mxu0 %v994
    %v1013 = vpop.f32.mrf.mxu0
    %v1014 = vadd.f32 0.0, %v1013
    %1015 = vdwg.mxu0
    %1016 = vrot.lane.b32.xlu0 %v496, 96
    %v1017 = vpop.permute.xlu0 %1016
    %1018 = vrot.lane.b32.xlu0 %v921, 96
    %v1019 = vpop.permute.xlu0 %1018
    %v1020 = vsel %vm576, %v1017, 0
    %v1022 = vsel %vm576, %v1019, 0
    %1024 = vmatpush.xpose.msra.mxu0 0.0
    %1025 = vmatpush.xpose.msra.mxu0 0.0
    %1026 = vmatpush.xpose.msra.mxu0 0.0
    %1027 = vmatpush.xpose.msra.mxu0 0.0
    %1028 = vmatpush.xpose.msra.mxu0 0.0
    %1029 = vmatpush.xpose.msra.mxu0 0.0
    %1030 = vmatpush.xpose.msra.mxu0 0.0
    %1031 = vmatpush.xpose.msra.mxu0 0.0
    %1032 = vmatpush.xpose.msra.mxu0 0.0
    %1033 = vmatpush.xpose.msra.mxu0 0.0
    %1034 = vmatpush.xpose.msra.mxu0 0.0
    %1035 = vmatpush.xpose.msra.mxu0 0.0
    %1036 = vmatpush.xpose.msra.mxu0 0.0
    %1037 = vmatpush.xpose.msra.mxu0 0.0
    %1038 = vmatpush.xpose.msra.mxu0 0.0
    %1039 = vmatpush.xpose.msra.mxu0 %v1022
    %1040 = vmatmul.f32.gmra.mxu0 %v1020
    %v1041 = vpop.f32.mrf.mxu0
    %v1042 = vadd.f32 0.0, %v1041
    %1043 = vdwg.mxu0
    %v1044 = vsel %vm603, %v1042, -inf
    %1045 = vmax.xlane.f32.xlu0 %v1044
    %v1046 = vpop.xlane.xlu0 %1045
    %v1047 = vsub.f32 %v1042, %v1046
    %v1048 = vmul.f32 %v1047, 1.442695
    %v1049 = vpow.pop %v1048
    %v1050 = vsel %vm603, %v1049, 0.0
    %1051 = vadd.xlane.f32.xlu0 %v1050
    %v1052 = vpop.xlane.xlu0 %1051
    %v1053 = vrcp.pop %v1052
    %v1054 = vmul.f32 %v1052, %v1053
    %v1055 = vsub.f32 1.0, %v1054
    %v1056 = vmul.f32 %v1053, %v1055
    %v1057 = vadd.f32 %v1053, %v1056
    %vm1058 = vweird.f32 %v1052
    %vm1059 = vweird.f32 %v1053
    %vm1060 = vmor %vm1058, %vm1059
    %v1061 = vsel %vm1060, %v1053, %v1057
    %v1062 = vand.u32 2147483647, %v1052
    %vm1063 = vcmp.eq.f32.partialorder %v1062, 8.507059e+37
    %v1064 = vand.u32 %v1052, 2147483648
    %v1065 = vor.u32 1.1754944e-38, %v1064
    %v1066 = vsel %vm1063, %v1065, %v1061
    %v1067 = vmul.f32 %v1049, %v1066
    %1069 = vrot.lane.b32.xlu0 %v941, 96
    %v1070 = vpop.permute.xlu0 %1069
    %v1073 = vsel %vm603, %v1067, 0
    %1075 = vmatpush.msra.mxu0 0.0
    %1076 = vmatpush.msra.mxu0 0.0
    %1077 = vmatpush.msra.mxu0 0.0
    %1078 = vmatpush.msra.mxu0 0.0
    %1079 = vmatpush.msra.mxu0 0.0
    %1080 = vmatpush.msra.mxu0 0.0
    %1081 = vmatpush.msra.mxu0 0.0
    %1082 = vmatpush.msra.mxu0 0.0
    %1083 = vmatpush.msra.mxu0 0.0
    %1084 = vmatpush.msra.mxu0 0.0
    %1085 = vmatpush.msra.mxu0 0.0
    %1086 = vmatpush.msra.mxu0 0.0
    %1087 = vmatpush.msra.mxu0 0.0
    %1088 = vmatpush.msra.mxu0 0.0
    %1089 = vmatpush.msra.mxu0 0.0
    %1090 = vmatpush.msra.mxu0 %v1070
    %1091 = vmatmul.f32.gmra.mxu0 %v1073
    %v1092 = vpop.f32.mrf.mxu0
    %v1093 = vadd.f32 0.0, %v1092
    %1094 = vdwg.mxu0
    %1095 = vrot.lane.b32.xlu0 %v496, 64
    %v1096 = vpop.permute.xlu0 %1095
    %1097 = vrot.lane.b32.xlu0 %v921, 64
    %v1098 = vpop.permute.xlu0 %1097
    %v1099 = vsel %vm576, %v1096, 0
    %v1101 = vsel %vm576, %v1098, 0
    %1103 = vmatpush.xpose.msra.mxu0 0.0
    %1104 = vmatpush.xpose.msra.mxu0 0.0
    %1105 = vmatpush.xpose.msra.mxu0 0.0
    %1106 = vmatpush.xpose.msra.mxu0 0.0
    %1107 = vmatpush.xpose.msra.mxu0 0.0
    %1108 = vmatpush.xpose.msra.mxu0 0.0
    %1109 = vmatpush.xpose.msra.mxu0 0.0
    %1110 = vmatpush.xpose.msra.mxu0 0.0
    %1111 = vmatpush.xpose.msra.mxu0 0.0
    %1112 = vmatpush.xpose.msra.mxu0 0.0
    %1113 = vmatpush.xpose.msra.mxu0 0.0
    %1114 = vmatpush.xpose.msra.mxu0 0.0
    %1115 = vmatpush.xpose.msra.mxu0 0.0
    %1116 = vmatpush.xpose.msra.mxu0 0.0
    %1117 = vmatpush.xpose.msra.mxu0 0.0
    %1118 = vmatpush.xpose.msra.mxu0 %v1101
    %1119 = vmatmul.f32.gmra.mxu0 %v1099
    %v1120 = vpop.f32.mrf.mxu0
    %v1121 = vadd.f32 0.0, %v1120
    %1122 = vdwg.mxu0
    %v1123 = vsel %vm603, %v1121, -inf
    %1124 = vmax.xlane.f32.xlu0 %v1123
    %v1125 = vpop.xlane.xlu0 %1124
    %v1126 = vsub.f32 %v1121, %v1125
    %v1127 = vmul.f32 %v1126, 1.442695
    %v1128 = vpow.pop %v1127
    %v1129 = vsel %vm603, %v1128, 0.0
    %1130 = vadd.xlane.f32.xlu0 %v1129
    %v1131 = vpop.xlane.xlu0 %1130
    %v1132 = vrcp.pop %v1131
    %v1133 = vmul.f32 %v1131, %v1132
    %v1134 = vsub.f32 1.0, %v1133
    %v1135 = vmul.f32 %v1132, %v1134
    %v1136 = vadd.f32 %v1132, %v1135
    %vm1137 = vweird.f32 %v1131
    %vm1138 = vweird.f32 %v1132
    %vm1139 = vmor %vm1137, %vm1138
    %v1140 = vsel %vm1139, %v1132, %v1136
    %v1141 = vand.u32 2147483647, %v1131
    %vm1142 = vcmp.eq.f32.partialorder %v1141, 8.507059e+37
    %v1143 = vand.u32 %v1131, 2147483648
    %v1144 = vor.u32 1.1754944e-38, %v1143
    %v1145 = vsel %vm1142, %v1144, %v1140
    %v1146 = vmul.f32 %v1128, %v1145
    %1147 = vrot.lane.b32.xlu0 %v941, 64
    %v1148 = vpop.permute.xlu0 %1147
    %v1151 = vsel %vm603, %v1146, 0
    %1153 = vmatpush.msra.mxu0 0.0
    %1154 = vmatpush.msra.mxu0 0.0
    %1155 = vmatpush.msra.mxu0 0.0
    %1156 = vmatpush.msra.mxu0 0.0
    %1157 = vmatpush.msra.mxu0 0.0
    %1158 = vmatpush.msra.mxu0 0.0
    %1159 = vmatpush.msra.mxu0 0.0
    %1160 = vmatpush.msra.mxu0 0.0
    %1161 = vmatpush.msra.mxu0 0.0
    %1162 = vmatpush.msra.mxu0 0.0
    %1163 = vmatpush.msra.mxu0 0.0
    %1164 = vmatpush.msra.mxu0 0.0
    %1165 = vmatpush.msra.mxu0 0.0
    %1166 = vmatpush.msra.mxu0 0.0
    %1167 = vmatpush.msra.mxu0 0.0
    %1168 = vmatpush.msra.mxu0 %v1148
    %1169 = vmatmul.f32.gmra.mxu0 %v1151
    %v1170 = vpop.f32.mrf.mxu0
    %v1171 = vadd.f32 0.0, %v1170
    %1172 = vdwg.mxu0
    %1173 = vrot.lane.b32.xlu0 %v496, 32
    %v1174 = vpop.permute.xlu0 %1173
    %1175 = vrot.lane.b32.xlu0 %v921, 32
    %v1176 = vpop.permute.xlu0 %1175
    %v1177 = vsel %vm576, %v1174, 0
    %v1179 = vsel %vm576, %v1176, 0
    %1181 = vmatpush.xpose.msra.mxu0 0.0
    %1182 = vmatpush.xpose.msra.mxu0 0.0
    %1183 = vmatpush.xpose.msra.mxu0 0.0
    %1184 = vmatpush.xpose.msra.mxu0 0.0
    %1185 = vmatpush.xpose.msra.mxu0 0.0
    %1186 = vmatpush.xpose.msra.mxu0 0.0
    %1187 = vmatpush.xpose.msra.mxu0 0.0
    %1188 = vmatpush.xpose.msra.mxu0 0.0
    %1189 = vmatpush.xpose.msra.mxu0 0.0
    %1190 = vmatpush.xpose.msra.mxu0 0.0
    %1191 = vmatpush.xpose.msra.mxu0 0.0
    %1192 = vmatpush.xpose.msra.mxu0 0.0
    %1193 = vmatpush.xpose.msra.mxu0 0.0
    %1194 = vmatpush.xpose.msra.mxu0 0.0
    %1195 = vmatpush.xpose.msra.mxu0 0.0
    %1196 = vmatpush.xpose.msra.mxu0 %v1179
    %1197 = vmatmul.f32.gmra.mxu0 %v1177
    %v1198 = vpop.f32.mrf.mxu0
    %v1199 = vadd.f32 0.0, %v1198
    %1200 = vdwg.mxu0
    %v1201 = vsel %vm603, %v1199, -inf
    %1202 = vmax.xlane.f32.xlu0 %v1201
    %v1203 = vpop.xlane.xlu0 %1202
    %v1204 = vsub.f32 %v1199, %v1203
    %v1205 = vmul.f32 %v1204, 1.442695
    %v1206 = vpow.pop %v1205
    %v1207 = vsel %vm603, %v1206, 0.0
    %1208 = vadd.xlane.f32.xlu0 %v1207
    %v1209 = vpop.xlane.xlu0 %1208
    %v1210 = vrcp.pop %v1209
    %v1211 = vmul.f32 %v1209, %v1210
    %v1212 = vsub.f32 1.0, %v1211
    %v1213 = vmul.f32 %v1210, %v1212
    %v1214 = vadd.f32 %v1210, %v1213
    %vm1215 = vweird.f32 %v1209
    %vm1216 = vweird.f32 %v1210
    %vm1217 = vmor %vm1215, %vm1216
    %v1218 = vsel %vm1217, %v1210, %v1214
    %v1219 = vand.u32 2147483647, %v1209
    %vm1220 = vcmp.eq.f32.partialorder %v1219, 8.507059e+37
    %v1221 = vand.u32 %v1209, 2147483648
    %v1222 = vor.u32 1.1754944e-38, %v1221
    %v1223 = vsel %vm1220, %v1222, %v1218
    %v1224 = vmul.f32 %v1206, %v1223
    %1225 = vrot.lane.b32.xlu0 %v941, 32
    %v1226 = vpop.permute.xlu0 %1225
    %v1229 = vsel %vm603, %v1224, 0
    %1231 = vmatpush.msra.mxu0 0.0
    %1232 = vmatpush.msra.mxu0 0.0
    %1233 = vmatpush.msra.mxu0 0.0
    %1234 = vmatpush.msra.mxu0 0.0
    %1235 = vmatpush.msra.mxu0 0.0
    %1236 = vmatpush.msra.mxu0 0.0
    %1237 = vmatpush.msra.mxu0 0.0
    %1238 = vmatpush.msra.mxu0 0.0
    %1239 = vmatpush.msra.mxu0 0.0
    %1240 = vmatpush.msra.mxu0 0.0
    %1241 = vmatpush.msra.mxu0 0.0
    %1242 = vmatpush.msra.mxu0 0.0
    %1243 = vmatpush.msra.mxu0 0.0
    %1244 = vmatpush.msra.mxu0 0.0
    %1245 = vmatpush.msra.mxu0 0.0
    %1246 = vmatpush.msra.mxu0 %v1226
    %1247 = vmatmul.f32.gmra.mxu0 %v1229
    %v1248 = vpop.f32.mrf.mxu0
    %v1249 = vadd.f32 0.0, %v1248
    %1250 = vdwg.mxu0
    %1252 = vrot.lane.b32.xlu0 %v1093, 32
    %v1253 = vpop.permute.xlu0 %1252
    %1256 = vrot.lane.b32.xlu0 %v1171, 64
    %v1257 = vpop.permute.xlu0 %1256
    %1260 = vrot.lane.b32.xlu0 %v1249, 96
    %v1261 = vpop.permute.xlu0 %1260
    %v1263 = vsel %vm576, %v1014, %v1253
    %v1264 = vsel %vm899, %v1263, %v1257
    %v1265 = vsel %vm901, %v1264, %v1261
    %v1266 = vld [vmem:[#allocation5] sm:$0xff]
    %v1267 = vld [vmem:[#allocation5 + $0x8] sm:$0xff]
    %v1268 = vld [vmem:[#allocation5 + $0x10] sm:$0xff]
    %v1269 = vld [vmem:[#allocation5 + $0x18] sm:$0xff]
    %v1270 = vld [vmem:[#allocation5 + $0x20] sm:$0xff]
    %v1271 = vld [vmem:[#allocation5 + $0x28] sm:$0xff]
    %v1272 = vld [vmem:[#allocation5 + $0x30] sm:$0xff]
    %v1273 = vld [vmem:[#allocation5 + $0x38] sm:$0xff]
    %v1274 = vld [vmem:[#allocation5 + $0x40] sm:$0xff]
    %v1275 = vld [vmem:[#allocation5 + $0x48] sm:$0xff]
    %v1276 = vld [vmem:[#allocation5 + $0x50] sm:$0xff]
    %v1277 = vld [vmem:[#allocation5 + $0x58] sm:$0xff]
    %v1278 = vld [vmem:[#allocation5 + $0x60] sm:$0xff]
    %v1279 = vld [vmem:[#allocation5 + $0x68] sm:$0xff]
    %v1280 = vld [vmem:[#allocation5 + $0x70] sm:$0xff]
    %v1281 = vld [vmem:[#allocation5 + $0x78] sm:$0xff]
    %v1282 = vld [vmem:[%s15] sm:$0x1]
    %v1284 = vperm.slane %v1282, 0
    %1286 = vmatpush.msra.mxu0 %v1281
    %1287 = vmatpush.msra.mxu0 %v1280
    %1288 = vmatpush.msra.mxu0 %v1279
    %1289 = vmatpush.msra.mxu0 %v1278
    %1290 = vmatpush.msra.mxu0 %v1277
    %1291 = vmatpush.msra.mxu0 %v1276
    %1292 = vmatpush.msra.mxu0 %v1275
    %1293 = vmatpush.msra.mxu0 %v1274
    %1294 = vmatpush.msra.mxu0 %v1273
    %1295 = vmatpush.msra.mxu0 %v1272
    %1296 = vmatpush.msra.mxu0 %v1271
    %1297 = vmatpush.msra.mxu0 %v1270
    %1298 = vmatpush.msra.mxu0 %v1269
    %1299 = vmatpush.msra.mxu0 %v1268
    %1300 = vmatpush.msra.mxu0 %v1267
    %1301 = vmatpush.msra.mxu0 %v1266
    %1302 = vmatmul.f32.gmra.mxu0 %v902
    %v1303 = vpop.f32.mrf.mxu0
    %v1304 = vadd.f32 %v1284, %v1303
    %1305 = vmatmul.f32.gmra.mxu0 %v1265
    %v1306 = vpop.f32.mrf.mxu0
    %v1307 = vadd.f32 %v1284, %v1306
    %1308 = vdwg.mxu0
    %v1309 = vadd.f32 %v448, %v1304
    %v1310 = vadd.f32 %v449, %v1307
    %1311 = vadd.xlane.f32.xlu0 %v1309
    %v1312 = vpop.xlane.xlu0 %1311
    %1313 = vadd.xlane.f32.xlu0 %v1310
    %v1314 = vpop.xlane.xlu0 %1313
    %v1315 = vrcp.pop 128.0
    %v1316 = vmul.f32 128.0, %v1315
    %v1317 = vsub.f32 1.0, %v1316
    %v1318 = vmul.f32 %v1315, %v1317
    %v1319 = vadd.f32 %v1315, %v1318
    %vm1320 = vweird.f32 %v1315
    %v1321 = vsel %vm1320, %v1315, %v1319
    %v1322 = vmul.f32 %v1312, %v1321
    %v1323 = vmul.f32 %v1314, %v1321
    %v1324 = vsub.f32 %v1309, %v1322
    %v1325 = vsub.f32 %v1310, %v1323
    %v1326 = vmul.f32 %v1324, %v1324
    %v1327 = vmul.f32 %v1325, %v1325
    %1328 = vadd.xlane.f32.xlu0 %v1326
    %v1329 = vpop.xlane.xlu0 %1328
    %1330 = vadd.xlane.f32.xlu0 %v1327
    %v1331 = vpop.xlane.xlu0 %1330
    %v1332 = vmul.f32 %v1329, %v1321
    %v1333 = vmul.f32 %v1331, %v1321
    %v1334 = vadd.f32 %v1332, 1e-05
    %v1335 = vadd.f32 %v1333, 1e-05
    %v1336 = vrsqrt.pop %v1334
    %v1337 = vmul.f32 %v1336, %v1334
    %v1338 = vmul.f32 %v1337, %v1336
    %v1339 = vmul.f32 0.5, %v1338
    %v1340 = vsub.f32 1.5, %v1339
    %v1341 = vmul.f32 %v1336, %v1340
    %vm1342 = vweird.f32 %v1334
    %vm1343 = vweird.f32 %v1336
    %vm1344 = vmor %vm1342, %vm1343
    %v1345 = vsel %vm1344, %v1336, %v1341
    %v1346 = vrsqrt.pop %v1335
    %v1347 = vmul.f32 %v1346, %v1335
    %v1348 = vmul.f32 %v1347, %v1346
    %v1349 = vmul.f32 0.5, %v1348
    %v1350 = vsub.f32 1.5, %v1349
    %v1351 = vmul.f32 %v1346, %v1350
    %vm1352 = vweird.f32 %v1335
    %vm1353 = vweird.f32 %v1346
    %vm1354 = vmor %vm1352, %vm1353
    %v1355 = vsel %vm1354, %v1346, %v1351
    %v1356 = vmul.f32 %v1324, %v1345
    %v1357 = vmul.f32 %v1325, %v1355
    %v1358 = vld [vmem:[%s17] sm:$0x1]
    %v1360 = vperm.slane %v1358, 0
    %v1362 = vmul.f32 %v1356, %v1360
    %v1363 = vmul.f32 %v1357, %v1360
    %v1364 = vld [vmem:[%s19] sm:$0x1]
    %v1366 = vperm.slane %v1364, 0
    %v1368 = vadd.f32 %v1362, %v1366
    %v1369 = vadd.f32 %v1363, %v1366
    %v1370 = vld [vmem:[#allocation7] sm:$0xff]
    %v1371 = vld [vmem:[#allocation7 + $0x8] sm:$0xff]
    %v1372 = vld [vmem:[#allocation7 + $0x10] sm:$0xff]
    %v1373 = vld [vmem:[#allocation7 + $0x18] sm:$0xff]
    %v1374 = vld [vmem:[#allocation7 + $0x20] sm:$0xff]
    %v1375 = vld [vmem:[#allocation7 + $0x28] sm:$0xff]
    %v1376 = vld [vmem:[#allocation7 + $0x30] sm:$0xff]
    %v1377 = vld [vmem:[#allocation7 + $0x38] sm:$0xff]
    %v1378 = vld [vmem:[#allocation7 + $0x40] sm:$0xff]
    %v1379 = vld [vmem:[#allocation7 + $0x48] sm:$0xff]
    %v1380 = vld [vmem:[#allocation7 + $0x50] sm:$0xff]
    %v1381 = vld [vmem:[#allocation7 + $0x58] sm:$0xff]
    %v1382 = vld [vmem:[#allocation7 + $0x60] sm:$0xff]
    %v1383 = vld [vmem:[#allocation7 + $0x68] sm:$0xff]
    %v1384 = vld [vmem:[#allocation7 + $0x70] sm:$0xff]
    %v1385 = vld [vmem:[#allocation7 + $0x78] sm:$0xff]
    %v1386 = vld [vmem:[%s23] sm:$0x1]
    %v1388 = vperm.slane %v1386, 0
    %1390 = vmatpush.msra.mxu0 %v1385
    %1391 = vmatpush.msra.mxu0 %v1384
    %1392 = vmatpush.msra.mxu0 %v1383
    %1393 = vmatpush.msra.mxu0 %v1382
    %1394 = vmatpush.msra.mxu0 %v1381
    %1395 = vmatpush.msra.mxu0 %v1380
    %1396 = vmatpush.msra.mxu0 %v1379
    %1397 = vmatpush.msra.mxu0 %v1378
    %1398 = vmatpush.msra.mxu0 %v1377
    %1399 = vmatpush.msra.mxu0 %v1376
    %1400 = vmatpush.msra.mxu0 %v1375
    %1401 = vmatpush.msra.mxu0 %v1374
    %1402 = vmatpush.msra.mxu0 %v1373
    %1403 = vmatpush.msra.mxu0 %v1372
    %1404 = vmatpush.msra.mxu0 %v1371
    %1405 = vmatpush.msra.mxu0 %v1370
    %1406 = vmatmul.f32.gmra.mxu0 %v1368
    %v1407 = vpop.f32.mrf.mxu0
    %v1408 = vadd.f32 %v1388, %v1407
    %1409 = vmatmul.f32.gmra.mxu0 %v1369
    %v1410 = vpop.f32.mrf.mxu0
    %v1411 = vadd.f32 %v1388, %v1410
    %1412 = vdwg.mxu0
    %v1413 = vld [vmem:[#allocation8] sm:$0xff]
    %v1414 = vld [vmem:[#allocation8 + $0x8] sm:$0xff]
    %v1415 = vld [vmem:[#allocation8 + $0x10] sm:$0xff]
    %v1416 = vld [vmem:[#allocation8 + $0x18] sm:$0xff]
    %v1417 = vld [vmem:[#allocation8 + $0x20] sm:$0xff]
    %v1418 = vld [vmem:[#allocation8 + $0x28] sm:$0xff]
    %v1419 = vld [vmem:[#allocation8 + $0x30] sm:$0xff]
    %v1420 = vld [vmem:[#allocation8 + $0x38] sm:$0xff]
    %v1421 = vld [vmem:[#allocation8 + $0x40] sm:$0xff]
    %v1422 = vld [vmem:[#allocation8 + $0x48] sm:$0xff]
    %v1423 = vld [vmem:[#allocation8 + $0x50] sm:$0xff]
    %v1424 = vld [vmem:[#allocation8 + $0x58] sm:$0xff]
    %v1425 = vld [vmem:[#allocation8 + $0x60] sm:$0xff]
    %v1426 = vld [vmem:[#allocation8 + $0x68] sm:$0xff]
    %v1427 = vld [vmem:[#allocation8 + $0x70] sm:$0xff]
    %v1428 = vld [vmem:[#allocation8 + $0x78] sm:$0xff]
    %v1429 = vld [vmem:[#allocation8 + $0x80] sm:$0xff]
    %v1430 = vld [vmem:[#allocation8 + $0x88] sm:$0xff]
    %v1431 = vld [vmem:[#allocation8 + $0x90] sm:$0xff]
    %v1432 = vld [vmem:[#allocation8 + $0x98] sm:$0xff]
    %v1433 = vld [vmem:[#allocation8 + $0xa0] sm:$0xff]
    %v1434 = vld [vmem:[#allocation8 + $0xa8] sm:$0xff]
    %v1435 = vld [vmem:[#allocation8 + $0xb0] sm:$0xff]
    %v1436 = vld [vmem:[#allocation8 + $0xb8] sm:$0xff]
    %v1437 = vld [vmem:[#allocation8 + $0xc0] sm:$0xff]
    %v1438 = vld [vmem:[#allocation8 + $0xc8] sm:$0xff]
    %v1439 = vld [vmem:[#allocation8 + $0xd0] sm:$0xff]
    %v1440 = vld [vmem:[#allocation8 + $0xd8] sm:$0xff]
    %v1441 = vld [vmem:[#allocation8 + $0xe0] sm:$0xff]
    %v1442 = vld [vmem:[#allocation8 + $0xe8] sm:$0xff]
    %v1443 = vld [vmem:[#allocation8 + $0xf0] sm:$0xff]
    %v1444 = vld [vmem:[#allocation8 + $0xf8] sm:$0xff]
    %v1445 = vld [vmem:[%s27] sm:$0x3]
    %v1447 = vperm.slane %v1445, 0
    %v1448 = vperm.slane %v1445, 1
    %1451 = vmatpush.msra.mxu0 %v1443
    %1452 = vmatpush.msra.mxu0 %v1441
    %1453 = vmatpush.msra.mxu0 %v1439
    %1454 = vmatpush.msra.mxu0 %v1437
    %1455 = vmatpush.msra.mxu0 %v1435
    %1456 = vmatpush.msra.mxu0 %v1433
    %1457 = vmatpush.msra.mxu0 %v1431
    %1458 = vmatpush.msra.mxu0 %v1429
    %1459 = vmatpush.msra.mxu0 %v1427
    %1460 = vmatpush.msra.mxu0 %v1425
    %1461 = vmatpush.msra.mxu0 %v1423
    %1462 = vmatpush.msra.mxu0 %v1421
    %1463 = vmatpush.msra.mxu0 %v1419
    %1464 = vmatpush.msra.mxu0 %v1417
    %1465 = vmatpush.msra.mxu0 %v1415
    %1466 = vmatpush.msra.mxu0 %v1413
    %1467 = vmatmul.f32.gmra.mxu0 %v450
    %v1468 = vpop.f32.mrf.mxu0
    %v1469 = vadd.f32 %v1447, %v1468
    %1470 = vmatmul.f32.gmra.mxu0 %v451
    %v1471 = vpop.f32.mrf.mxu0
    %v1472 = vadd.f32 %v1447, %v1471
    %1473 = vdwg.mxu0
    %1474 = vmatpush.msra.mxu0 %v1444
    %1475 = vmatpush.msra.mxu0 %v1442
    %1476 = vmatpush.msra.mxu0 %v1440
    %1477 = vmatpush.msra.mxu0 %v1438
    %1478 = vmatpush.msra.mxu0 %v1436
    %1479 = vmatpush.msra.mxu0 %v1434
    %1480 = vmatpush.msra.mxu0 %v1432
    %1481 = vmatpush.msra.mxu0 %v1430
    %1482 = vmatpush.msra.mxu0 %v1428
    %1483 = vmatpush.msra.mxu0 %v1426
    %1484 = vmatpush.msra.mxu0 %v1424
    %1485 = vmatpush.msra.mxu0 %v1422
    %1486 = vmatpush.msra.mxu0 %v1420
    %1487 = vmatpush.msra.mxu0 %v1418
    %1488 = vmatpush.msra.mxu0 %v1416
    %1489 = vmatpush.msra.mxu0 %v1414
    %1490 = vmatmul.f32.gmra.mxu0 %v450
    %v1491 = vpop.f32.mrf.mxu0
    %v1492 = vadd.f32 %v1448, %v1491
    %1493 = vmatmul.f32.gmra.mxu0 %v451
    %v1494 = vpop.f32.mrf.mxu0
    %v1495 = vadd.f32 %v1448, %v1494
    %1496 = vdwg.mxu0
    %v1498 = vsel %vm576, %v1408, 0
    %v1501 = vsel %vm576, %v1469, 0
    %v1504 = vsel %vm576, %v1472, 0
    %1506 = vmatpush.xpose.msra.mxu0 0.0
    %1507 = vmatpush.xpose.msra.mxu0 0.0
    %1508 = vmatpush.xpose.msra.mxu0 0.0
    %1509 = vmatpush.xpose.msra.mxu0 0.0
    %1510 = vmatpush.xpose.msra.mxu0 0.0
    %1511 = vmatpush.xpose.msra.mxu0 0.0
    %1512 = vmatpush.xpose.msra.mxu0 0.0
    %1513 = vmatpush.xpose.msra.mxu0 0.0
    %1514 = vmatpush.xpose.msra.mxu0 0.0
    %1515 = vmatpush.xpose.msra.mxu0 0.0
    %1516 = vmatpush.xpose.msra.mxu0 0.0
    %1517 = vmatpush.xpose.msra.mxu0 0.0
    %1518 = vmatpush.xpose.msra.mxu0 0.0
    %1519 = vmatpush.xpose.msra.mxu0 0.0
    %1520 = vmatpush.xpose.msra.mxu0 %v1504
    %1521 = vmatpush.xpose.msra.mxu0 %v1501
    %1522 = vmatmul.f32.gmra.mxu0 %v1498
    %v1523 = vpop.f32.mrf.mxu0
    %v1524 = vadd.f32 0.0, %v1523
    %1525 = vdwg.mxu0
    %vm1526 = vcmask 80896
    %v1527 = vsel %vm1526, %v1524, -inf
    %1528 = vmax.xlane.f32.xlu0 %v1527
    %v1529 = vpop.xlane.xlu0 %1528
    %v1530 = vsub.f32 %v1524, %v1529
    %v1531 = vmul.f32 %v1530, 1.442695
    %v1532 = vpow.pop %v1531
    %v1533 = vsel %vm1526, %v1532, 0.0
    %1534 = vadd.xlane.f32.xlu0 %v1533
    %v1535 = vpop.xlane.xlu0 %1534
    %v1536 = vrcp.pop %v1535
    %v1537 = vmul.f32 %v1535, %v1536
    %v1538 = vsub.f32 1.0, %v1537
    %v1539 = vmul.f32 %v1536, %v1538
    %v1540 = vadd.f32 %v1536, %v1539
    %vm1541 = vweird.f32 %v1535
    %vm1542 = vweird.f32 %v1536
    %vm1543 = vmor %vm1541, %vm1542
    %v1544 = vsel %vm1543, %v1536, %v1540
    %v1545 = vand.u32 2147483647, %v1535
    %vm1546 = vcmp.eq.f32.partialorder %v1545, 8.507059e+37
    %v1547 = vand.u32 %v1535, 2147483648
    %v1548 = vor.u32 1.1754944e-38, %v1547
    %v1549 = vsel %vm1546, %v1548, %v1544
    %v1550 = vmul.f32 %v1532, %v1549
    %v1552 = vsel %vm1526, %v1550, 0
    %vm1554 = vcmask 1041408
    %v1556 = vsel %vm1554, %v1495, 0
    %1558 = vmatpush.msra.mxu0 0.0
    %1559 = vmatpush.msra.mxu0 0.0
    %1560 = vmatpush.msra.mxu0 0.0
    %1561 = vmatpush.msra.mxu0 0.0
    %1562 = vmatpush.msra.mxu0 0.0
    %1563 = vmatpush.msra.mxu0 0.0
    %1564 = vmatpush.msra.mxu0 0.0
    %1565 = vmatpush.msra.mxu0 0.0
    %1566 = vmatpush.msra.mxu0 0.0
    %1567 = vmatpush.msra.mxu0 0.0
    %1568 = vmatpush.msra.mxu0 0.0
    %1569 = vmatpush.msra.mxu0 0.0
    %1570 = vmatpush.msra.mxu0 0.0
    %1571 = vmatpush.msra.mxu0 0.0
    %1572 = vmatpush.msra.mxu0 %v1556
    %1573 = vmatpush.msra.mxu0 %v1492
    %1574 = vmatmul.f32.gmra.mxu0 %v1552
    %v1575 = vpop.f32.mrf.mxu0
    %v1576 = vadd.f32 0.0, %v1575
    %1577 = vdwg.mxu0
    %1578 = vrot.lane.b32.xlu0 %v1408, 96
    %v1579 = vpop.permute.xlu0 %1578
    %1580 = vrot.lane.b32.xlu0 %v1469, 96
    %v1581 = vpop.permute.xlu0 %1580
    %1582 = vrot.lane.b32.xlu0 %v1472, 96
    %v1583 = vpop.permute.xlu0 %1582
    %v1584 = vsel %vm576, %v1579, 0
    %v1586 = vsel %vm576, %v1581, 0
    %v1588 = vsel %vm576, %v1583, 0
    %1590 = vmatpush.xpose.msra.mxu0 0.0
    %1591 = vmatpush.xpose.msra.mxu0 0.0
    %1592 = vmatpush.xpose.msra.mxu0 0.0
    %1593 = vmatpush.xpose.msra.mxu0 0.0
    %1594 = vmatpush.xpose.msra.mxu0 0.0
    %1595 = vmatpush.xpose.msra.mxu0 0.0
    %1596 = vmatpush.xpose.msra.mxu0 0.0
    %1597 = vmatpush.xpose.msra.mxu0 0.0
    %1598 = vmatpush.xpose.msra.mxu0 0.0
    %1599 = vmatpush.xpose.msra.mxu0 0.0
    %1600 = vmatpush.xpose.msra.mxu0 0.0
    %1601 = vmatpush.xpose.msra.mxu0 0.0
    %1602 = vmatpush.xpose.msra.mxu0 0.0
    %1603 = vmatpush.xpose.msra.mxu0 0.0
    %1604 = vmatpush.xpose.msra.mxu0 %v1588
    %1605 = vmatpush.xpose.msra.mxu0 %v1586
    %1606 = vmatmul.f32.gmra.mxu0 %v1584
    %v1607 = vpop.f32.mrf.mxu0
    %v1608 = vadd.f32 0.0, %v1607
    %1609 = vdwg.mxu0
    %v1610 = vsel %vm1526, %v1608, -inf
    %1611 = vmax.xlane.f32.xlu0 %v1610
    %v1612 = vpop.xlane.xlu0 %1611
    %v1613 = vsub.f32 %v1608, %v1612
    %v1614 = vmul.f32 %v1613, 1.442695
    %v1615 = vpow.pop %v1614
    %v1616 = vsel %vm1526, %v1615, 0.0
    %1617 = vadd.xlane.f32.xlu0 %v1616
    %v1618 = vpop.xlane.xlu0 %1617
    %v1619 = vrcp.pop %v1618
    %v1620 = vmul.f32 %v1618, %v1619
    %v1621 = vsub.f32 1.0, %v1620
    %v1622 = vmul.f32 %v1619, %v1621
    %v1623 = vadd.f32 %v1619, %v1622
    %vm1624 = vweird.f32 %v1618
    %vm1625 = vweird.f32 %v1619
    %vm1626 = vmor %vm1624, %vm1625
    %v1627 = vsel %vm1626, %v1619, %v1623
    %v1628 = vand.u32 2147483647, %v1618
    %vm1629 = vcmp.eq.f32.partialorder %v1628, 8.507059e+37
    %v1630 = vand.u32 %v1618, 2147483648
    %v1631 = vor.u32 1.1754944e-38, %v1630
    %v1632 = vsel %vm1629, %v1631, %v1627
    %v1633 = vmul.f32 %v1615, %v1632
    %1635 = vrot.lane.b32.xlu0 %v1492, 96
    %v1636 = vpop.permute.xlu0 %1635
    %1637 = vrot.lane.b32.xlu0 %v1495, 96
    %v1638 = vpop.permute.xlu0 %1637
    %v1641 = vsel %vm1526, %v1633, 0
    %v1643 = vsel %vm1554, %v1638, 0
    %1645 = vmatpush.msra.mxu0 0.0
    %1646 = vmatpush.msra.mxu0 0.0
    %1647 = vmatpush.msra.mxu0 0.0
    %1648 = vmatpush.msra.mxu0 0.0
    %1649 = vmatpush.msra.mxu0 0.0
    %1650 = vmatpush.msra.mxu0 0.0
    %1651 = vmatpush.msra.mxu0 0.0
    %1652 = vmatpush.msra.mxu0 0.0
    %1653 = vmatpush.msra.mxu0 0.0
    %1654 = vmatpush.msra.mxu0 0.0
    %1655 = vmatpush.msra.mxu0 0.0
    %1656 = vmatpush.msra.mxu0 0.0
    %1657 = vmatpush.msra.mxu0 0.0
    %1658 = vmatpush.msra.mxu0 0.0
    %1659 = vmatpush.msra.mxu0 %v1643
    %1660 = vmatpush.msra.mxu0 %v1636
    %1661 = vmatmul.f32.gmra.mxu0 %v1641
    %v1662 = vpop.f32.mrf.mxu0
    %v1663 = vadd.f32 0.0, %v1662
    %1664 = vdwg.mxu0
    %1665 = vrot.lane.b32.xlu0 %v1408, 64
    %v1666 = vpop.permute.xlu0 %1665
    %1667 = vrot.lane.b32.xlu0 %v1469, 64
    %v1668 = vpop.permute.xlu0 %1667
    %1669 = vrot.lane.b32.xlu0 %v1472, 64
    %v1670 = vpop.permute.xlu0 %1669
    %v1671 = vsel %vm576, %v1666, 0
    %v1673 = vsel %vm576, %v1668, 0
    %v1675 = vsel %vm576, %v1670, 0
    %1677 = vmatpush.xpose.msra.mxu0 0.0
    %1678 = vmatpush.xpose.msra.mxu0 0.0
    %1679 = vmatpush.xpose.msra.mxu0 0.0
    %1680 = vmatpush.xpose.msra.mxu0 0.0
    %1681 = vmatpush.xpose.msra.mxu0 0.0
    %1682 = vmatpush.xpose.msra.mxu0 0.0
    %1683 = vmatpush.xpose.msra.mxu0 0.0
    %1684 = vmatpush.xpose.msra.mxu0 0.0
    %1685 = vmatpush.xpose.msra.mxu0 0.0
    %1686 = vmatpush.xpose.msra.mxu0 0.0
    %1687 = vmatpush.xpose.msra.mxu0 0.0
    %1688 = vmatpush.xpose.msra.mxu0 0.0
    %1689 = vmatpush.xpose.msra.mxu0 0.0
    %1690 = vmatpush.xpose.msra.mxu0 0.0
    %1691 = vmatpush.xpose.msra.mxu0 %v1675
    %1692 = vmatpush.xpose.msra.mxu0 %v1673
    %1693 = vmatmul.f32.gmra.mxu0 %v1671
    %v1694 = vpop.f32.mrf.mxu0
    %v1695 = vadd.f32 0.0, %v1694
    %1696 = vdwg.mxu0
    %v1697 = vsel %vm1526, %v1695, -inf
    %1698 = vmax.xlane.f32.xlu0 %v1697
    %v1699 = vpop.xlane.xlu0 %1698
    %v1700 = vsub.f32 %v1695, %v1699
    %v1701 = vmul.f32 %v1700, 1.442695
    %v1702 = vpow.pop %v1701
    %v1703 = vsel %vm1526, %v1702, 0.0
    %1704 = vadd.xlane.f32.xlu0 %v1703
    %v1705 = vpop.xlane.xlu0 %1704
    %v1706 = vrcp.pop %v1705
    %v1707 = vmul.f32 %v1705, %v1706
    %v1708 = vsub.f32 1.0, %v1707
    %v1709 = vmul.f32 %v1706, %v1708
    %v1710 = vadd.f32 %v1706, %v1709
    %vm1711 = vweird.f32 %v1705
    %vm1712 = vweird.f32 %v1706
    %vm1713 = vmor %vm1711, %vm1712
    %v1714 = vsel %vm1713, %v1706, %v1710
    %v1715 = vand.u32 2147483647, %v1705
    %vm1716 = vcmp.eq.f32.partialorder %v1715, 8.507059e+37
    %v1717 = vand.u32 %v1705, 2147483648
    %v1718 = vor.u32 1.1754944e-38, %v1717
    %v1719 = vsel %vm1716, %v1718, %v1714
    %v1720 = vmul.f32 %v1702, %v1719
    %1721 = vrot.lane.b32.xlu0 %v1492, 64
    %v1722 = vpop.permute.xlu0 %1721
    %1723 = vrot.lane.b32.xlu0 %v1495, 64
    %v1724 = vpop.permute.xlu0 %1723
    %v1727 = vsel %vm1526, %v1720, 0
    %v1729 = vsel %vm1554, %v1724, 0
    %1731 = vmatpush.msra.mxu0 0.0
    %1732 = vmatpush.msra.mxu0 0.0
    %1733 = vmatpush.msra.mxu0 0.0
    %1734 = vmatpush.msra.mxu0 0.0
    %1735 = vmatpush.msra.mxu0 0.0
    %1736 = vmatpush.msra.mxu0 0.0
    %1737 = vmatpush.msra.mxu0 0.0
    %1738 = vmatpush.msra.mxu0 0.0
    %1739 = vmatpush.msra.mxu0 0.0
    %1740 = vmatpush.msra.mxu0 0.0
    %1741 = vmatpush.msra.mxu0 0.0
    %1742 = vmatpush.msra.mxu0 0.0
    %1743 = vmatpush.msra.mxu0 0.0
    %1744 = vmatpush.msra.mxu0 0.0
    %1745 = vmatpush.msra.mxu0 %v1729
    %1746 = vmatpush.msra.mxu0 %v1722
    %1747 = vmatmul.f32.gmra.mxu0 %v1727
    %v1748 = vpop.f32.mrf.mxu0
    %v1749 = vadd.f32 0.0, %v1748
    %1750 = vdwg.mxu0
    %1751 = vrot.lane.b32.xlu0 %v1408, 32
    %v1752 = vpop.permute.xlu0 %1751
    %1753 = vrot.lane.b32.xlu0 %v1469, 32
    %v1754 = vpop.permute.xlu0 %1753
    %1755 = vrot.lane.b32.xlu0 %v1472, 32
    %v1756 = vpop.permute.xlu0 %1755
    %v1757 = vsel %vm576, %v1752, 0
    %v1759 = vsel %vm576, %v1754, 0
    %v1761 = vsel %vm576, %v1756, 0
    %1763 = vmatpush.xpose.msra.mxu0 0.0
    %1764 = vmatpush.xpose.msra.mxu0 0.0
    %1765 = vmatpush.xpose.msra.mxu0 0.0
    %1766 = vmatpush.xpose.msra.mxu0 0.0
    %1767 = vmatpush.xpose.msra.mxu0 0.0
    %1768 = vmatpush.xpose.msra.mxu0 0.0
    %1769 = vmatpush.xpose.msra.mxu0 0.0
    %1770 = vmatpush.xpose.msra.mxu0 0.0
    %1771 = vmatpush.xpose.msra.mxu0 0.0
    %1772 = vmatpush.xpose.msra.mxu0 0.0
    %1773 = vmatpush.xpose.msra.mxu0 0.0
    %1774 = vmatpush.xpose.msra.mxu0 0.0
    %1775 = vmatpush.xpose.msra.mxu0 0.0
    %1776 = vmatpush.xpose.msra.mxu0 0.0
    %1777 = vmatpush.xpose.msra.mxu0 %v1761
    %1778 = vmatpush.xpose.msra.mxu0 %v1759
    %1779 = vmatmul.f32.gmra.mxu0 %v1757
    %v1780 = vpop.f32.mrf.mxu0
    %v1781 = vadd.f32 0.0, %v1780
    %1782 = vdwg.mxu0
    %v1783 = vsel %vm1526, %v1781, -inf
    %1784 = vmax.xlane.f32.xlu0 %v1783
    %v1785 = vpop.xlane.xlu0 %1784
    %v1786 = vsub.f32 %v1781, %v1785
    %v1787 = vmul.f32 %v1786, 1.442695
    %v1788 = vpow.pop %v1787
    %v1789 = vsel %vm1526, %v1788, 0.0
    %1790 = vadd.xlane.f32.xlu0 %v1789
    %v1791 = vpop.xlane.xlu0 %1790
    %v1792 = vrcp.pop %v1791
    %v1793 = vmul.f32 %v1791, %v1792
    %v1794 = vsub.f32 1.0, %v1793
    %v1795 = vmul.f32 %v1792, %v1794
    %v1796 = vadd.f32 %v1792, %v1795
    %vm1797 = vweird.f32 %v1791
    %vm1798 = vweird.f32 %v1792
    %vm1799 = vmor %vm1797, %vm1798
    %v1800 = vsel %vm1799, %v1792, %v1796
    %v1801 = vand.u32 2147483647, %v1791
    %vm1802 = vcmp.eq.f32.partialorder %v1801, 8.507059e+37
    %v1803 = vand.u32 %v1791, 2147483648
    %v1804 = vor.u32 1.1754944e-38, %v1803
    %v1805 = vsel %vm1802, %v1804, %v1800
    %v1806 = vmul.f32 %v1788, %v1805
    %1807 = vrot.lane.b32.xlu0 %v1492, 32
    %v1808 = vpop.permute.xlu0 %1807
    %1809 = vrot.lane.b32.xlu0 %v1495, 32
    %v1810 = vpop.permute.xlu0 %1809
    %v1813 = vsel %vm1526, %v1806, 0
    %v1815 = vsel %vm1554, %v1810, 0
    %1817 = vmatpush.msra.mxu0 0.0
    %1818 = vmatpush.msra.mxu0 0.0
    %1819 = vmatpush.msra.mxu0 0.0
    %1820 = vmatpush.msra.mxu0 0.0
    %1821 = vmatpush.msra.mxu0 0.0
    %1822 = vmatpush.msra.mxu0 0.0
    %1823 = vmatpush.msra.mxu0 0.0
    %1824 = vmatpush.msra.mxu0 0.0
    %1825 = vmatpush.msra.mxu0 0.0
    %1826 = vmatpush.msra.mxu0 0.0
    %1827 = vmatpush.msra.mxu0 0.0
    %1828 = vmatpush.msra.mxu0 0.0
    %1829 = vmatpush.msra.mxu0 0.0
    %1830 = vmatpush.msra.mxu0 0.0
    %1831 = vmatpush.msra.mxu0 %v1815
    %1832 = vmatpush.msra.mxu0 %v1808
    %1833 = vmatmul.f32.gmra.mxu0 %v1813
    %v1834 = vpop.f32.mrf.mxu0
    %v1835 = vadd.f32 0.0, %v1834
    %1836 = vdwg.mxu0
    %1838 = vrot.lane.b32.xlu0 %v1663, 32
    %v1839 = vpop.permute.xlu0 %1838
    %1842 = vrot.lane.b32.xlu0 %v1749, 64
    %v1843 = vpop.permute.xlu0 %1842
    %1846 = vrot.lane.b32.xlu0 %v1835, 96
    %v1847 = vpop.permute.xlu0 %1846
    %v1849 = vsel %vm576, %v1576, %v1839
    %v1850 = vsel %vm899, %v1849, %v1843
    %v1851 = vsel %vm901, %v1850, %v1847
    %1852 = vmatpush.msra.mxu0 %v1443
    %1853 = vmatpush.msra.mxu0 %v1441
    %1854 = vmatpush.msra.mxu0 %v1439
    %1855 = vmatpush.msra.mxu0 %v1437
    %1856 = vmatpush.msra.mxu0 %v1435
    %1857 = vmatpush.msra.mxu0 %v1433
    %1858 = vmatpush.msra.mxu0 %v1431
    %1859 = vmatpush.msra.mxu0 %v1429
    %1860 = vmatpush.msra.mxu0 %v1427
    %1861 = vmatpush.msra.mxu0 %v1425
    %1862 = vmatpush.msra.mxu0 %v1423
    %1863 = vmatpush.msra.mxu0 %v1421
    %1864 = vmatpush.msra.mxu0 %v1419
    %1865 = vmatpush.msra.mxu0 %v1417
    %1866 = vmatpush.msra.mxu0 %v1415
    %1867 = vmatpush.msra.mxu0 %v1413
    %1868 = vmatmul.f32.gmra.mxu0 %v453
    %v1869 = vpop.f32.mrf.mxu0
    %v1870 = vadd.f32 %v1447, %v1869
    %1871 = vmatmul.f32.gmra.mxu0 %v454
    %v1872 = vpop.f32.mrf.mxu0
    %v1873 = vadd.f32 %v1447, %v1872
    %1874 = vdwg.mxu0
    %1875 = vmatpush.msra.mxu0 %v1444
    %1876 = vmatpush.msra.mxu0 %v1442
    %1877 = vmatpush.msra.mxu0 %v1440
    %1878 = vmatpush.msra.mxu0 %v1438
    %1879 = vmatpush.msra.mxu0 %v1436
    %1880 = vmatpush.msra.mxu0 %v1434
    %1881 = vmatpush.msra.mxu0 %v1432
    %1882 = vmatpush.msra.mxu0 %v1430
    %1883 = vmatpush.msra.mxu0 %v1428
    %1884 = vmatpush.msra.mxu0 %v1426
    %1885 = vmatpush.msra.mxu0 %v1424
    %1886 = vmatpush.msra.mxu0 %v1422
    %1887 = vmatpush.msra.mxu0 %v1420
    %1888 = vmatpush.msra.mxu0 %v1418
    %1889 = vmatpush.msra.mxu0 %v1416
    %1890 = vmatpush.msra.mxu0 %v1414
    %1891 = vmatmul.f32.gmra.mxu0 %v453
    %v1892 = vpop.f32.mrf.mxu0
    %v1893 = vadd.f32 %v1448, %v1892
    %1894 = vmatmul.f32.gmra.mxu0 %v454
    %v1895 = vpop.f32.mrf.mxu0
    %v1896 = vadd.f32 %v1448, %v1895
    %1897 = vdwg.mxu0
    %v1899 = vsel %vm576, %v1411, 0
    %v1902 = vsel %vm576, %v1870, 0
    %v1905 = vsel %vm576, %v1873, 0
    %1907 = vmatpush.xpose.msra.mxu0 0.0
    %1908 = vmatpush.xpose.msra.mxu0 0.0
    %1909 = vmatpush.xpose.msra.mxu0 0.0
    %1910 = vmatpush.xpose.msra.mxu0 0.0
    %1911 = vmatpush.xpose.msra.mxu0 0.0
    %1912 = vmatpush.xpose.msra.mxu0 0.0
    %1913 = vmatpush.xpose.msra.mxu0 0.0
    %1914 = vmatpush.xpose.msra.mxu0 0.0
    %1915 = vmatpush.xpose.msra.mxu0 0.0
    %1916 = vmatpush.xpose.msra.mxu0 0.0
    %1917 = vmatpush.xpose.msra.mxu0 0.0
    %1918 = vmatpush.xpose.msra.mxu0 0.0
    %1919 = vmatpush.xpose.msra.mxu0 0.0
    %1920 = vmatpush.xpose.msra.mxu0 0.0
    %1921 = vmatpush.xpose.msra.mxu0 %v1905
    %1922 = vmatpush.xpose.msra.mxu0 %v1902
    %1923 = vmatmul.f32.gmra.mxu0 %v1899
    %v1924 = vpop.f32.mrf.mxu0
    %v1925 = vadd.f32 0.0, %v1924
    %1926 = vdwg.mxu0
    %v1927 = vsel %vm1526, %v1925, -inf
    %1928 = vmax.xlane.f32.xlu0 %v1927
    %v1929 = vpop.xlane.xlu0 %1928
    %v1930 = vsub.f32 %v1925, %v1929
    %v1931 = vmul.f32 %v1930, 1.442695
    %v1932 = vpow.pop %v1931
    %v1933 = vsel %vm1526, %v1932, 0.0
    %1934 = vadd.xlane.f32.xlu0 %v1933
    %v1935 = vpop.xlane.xlu0 %1934
    %v1936 = vrcp.pop %v1935
    %v1937 = vmul.f32 %v1935, %v1936
    %v1938 = vsub.f32 1.0, %v1937
    %v1939 = vmul.f32 %v1936, %v1938
    %v1940 = vadd.f32 %v1936, %v1939
    %vm1941 = vweird.f32 %v1935
    %vm1942 = vweird.f32 %v1936
    %vm1943 = vmor %vm1941, %vm1942
    %v1944 = vsel %vm1943, %v1936, %v1940
    %v1945 = vand.u32 2147483647, %v1935
    %vm1946 = vcmp.eq.f32.partialorder %v1945, 8.507059e+37
    %v1947 = vand.u32 %v1935, 2147483648
    %v1948 = vor.u32 1.1754944e-38, %v1947
    %v1949 = vsel %vm1946, %v1948, %v1944
    %v1950 = vmul.f32 %v1932, %v1949
    %v1952 = vsel %vm1526, %v1950, 0
    %v1955 = vsel %vm1554, %v1896, 0
    %1957 = vmatpush.msra.mxu0 0.0
    %1958 = vmatpush.msra.mxu0 0.0
    %1959 = vmatpush.msra.mxu0 0.0
    %1960 = vmatpush.msra.mxu0 0.0
    %1961 = vmatpush.msra.mxu0 0.0
    %1962 = vmatpush.msra.mxu0 0.0
    %1963 = vmatpush.msra.mxu0 0.0
    %1964 = vmatpush.msra.mxu0 0.0
    %1965 = vmatpush.msra.mxu0 0.0
    %1966 = vmatpush.msra.mxu0 0.0
    %1967 = vmatpush.msra.mxu0 0.0
    %1968 = vmatpush.msra.mxu0 0.0
    %1969 = vmatpush.msra.mxu0 0.0
    %1970 = vmatpush.msra.mxu0 0.0
    %1971 = vmatpush.msra.mxu0 %v1955
    %1972 = vmatpush.msra.mxu0 %v1893
    %1973 = vmatmul.f32.gmra.mxu0 %v1952
    %v1974 = vpop.f32.mrf.mxu0
    %v1975 = vadd.f32 0.0, %v1974
    %1976 = vdwg.mxu0
    %1977 = vrot.lane.b32.xlu0 %v1411, 96
    %v1978 = vpop.permute.xlu0 %1977
    %1979 = vrot.lane.b32.xlu0 %v1870, 96
    %v1980 = vpop.permute.xlu0 %1979
    %1981 = vrot.lane.b32.xlu0 %v1873, 96
    %v1982 = vpop.permute.xlu0 %1981
    %v1983 = vsel %vm576, %v1978, 0
    %v1985 = vsel %vm576, %v1980, 0
    %v1987 = vsel %vm576, %v1982, 0
    %1989 = vmatpush.xpose.msra.mxu0 0.0
    %1990 = vmatpush.xpose.msra.mxu0 0.0
    %1991 = vmatpush.xpose.msra.mxu0 0.0
    %1992 = vmatpush.xpose.msra.mxu0 0.0
    %1993 = vmatpush.xpose.msra.mxu0 0.0
    %1994 = vmatpush.xpose.msra.mxu0 0.0
    %1995 = vmatpush.xpose.msra.mxu0 0.0
    %1996 = vmatpush.xpose.msra.mxu0 0.0
    %1997 = vmatpush.xpose.msra.mxu0 0.0
    %1998 = vmatpush.xpose.msra.mxu0 0.0
    %1999 = vmatpush.xpose.msra.mxu0 0.0
    %2000 = vmatpush.xpose.msra.mxu0 0.0
    %2001 = vmatpush.xpose.msra.mxu0 0.0
    %2002 = vmatpush.xpose.msra.mxu0 0.0
    %2003 = vmatpush.xpose.msra.mxu0 %v1987
    %2004 = vmatpush.xpose.msra.mxu0 %v1985
    %2005 = vmatmul.f32.gmra.mxu0 %v1983
    %v2006 = vpop.f32.mrf.mxu0
    %v2007 = vadd.f32 0.0, %v2006
    %2008 = vdwg.mxu0
    %v2009 = vsel %vm1526, %v2007, -inf
    %2010 = vmax.xlane.f32.xlu0 %v2009
    %v2011 = vpop.xlane.xlu0 %2010
    %v2012 = vsub.f32 %v2007, %v2011
    %v2013 = vmul.f32 %v2012, 1.442695
    %v2014 = vpow.pop %v2013
    %v2015 = vsel %vm1526, %v2014, 0.0
    %2016 = vadd.xlane.f32.xlu0 %v2015
    %v2017 = vpop.xlane.xlu0 %2016
    %v2018 = vrcp.pop %v2017
    %v2019 = vmul.f32 %v2017, %v2018
    %v2020 = vsub.f32 1.0, %v2019
    %v2021 = vmul.f32 %v2018, %v2020
    %v2022 = vadd.f32 %v2018, %v2021
    %vm2023 = vweird.f32 %v2017
    %vm2024 = vweird.f32 %v2018
    %vm2025 = vmor %vm2023, %vm2024
    %v2026 = vsel %vm2025, %v2018, %v2022
    %v2027 = vand.u32 2147483647, %v2017
    %vm2028 = vcmp.eq.f32.partialorder %v2027, 8.507059e+37
    %v2029 = vand.u32 %v2017, 2147483648
    %v2030 = vor.u32 1.1754944e-38, %v2029
    %v2031 = vsel %vm2028, %v2030, %v2026
    %v2032 = vmul.f32 %v2014, %v2031
    %2034 = vrot.lane.b32.xlu0 %v1893, 96
    %v2035 = vpop.permute.xlu0 %2034
    %2036 = vrot.lane.b32.xlu0 %v1896, 96
    %v2037 = vpop.permute.xlu0 %2036
    %v2040 = vsel %vm1526, %v2032, 0
    %v2042 = vsel %vm1554, %v2037, 0
    %2044 = vmatpush.msra.mxu0 0.0
    %2045 = vmatpush.msra.mxu0 0.0
    %2046 = vmatpush.msra.mxu0 0.0
    %2047 = vmatpush.msra.mxu0 0.0
    %2048 = vmatpush.msra.mxu0 0.0
    %2049 = vmatpush.msra.mxu0 0.0
    %2050 = vmatpush.msra.mxu0 0.0
    %2051 = vmatpush.msra.mxu0 0.0
    %2052 = vmatpush.msra.mxu0 0.0
    %2053 = vmatpush.msra.mxu0 0.0
    %2054 = vmatpush.msra.mxu0 0.0
    %2055 = vmatpush.msra.mxu0 0.0
    %2056 = vmatpush.msra.mxu0 0.0
    %2057 = vmatpush.msra.mxu0 0.0
    %2058 = vmatpush.msra.mxu0 %v2042
    %2059 = vmatpush.msra.mxu0 %v2035
    %2060 = vmatmul.f32.gmra.mxu0 %v2040
    %v2061 = vpop.f32.mrf.mxu0
    %v2062 = vadd.f32 0.0, %v2061
    %2063 = vdwg.mxu0
    %2064 = vrot.lane.b32.xlu0 %v1411, 64
    %v2065 = vpop.permute.xlu0 %2064
    %2066 = vrot.lane.b32.xlu0 %v1870, 64
    %v2067 = vpop.permute.xlu0 %2066
    %2068 = vrot.lane.b32.xlu0 %v1873, 64
    %v2069 = vpop.permute.xlu0 %2068
    %v2070 = vsel %vm576, %v2065, 0
    %v2072 = vsel %vm576, %v2067, 0
    %v2074 = vsel %vm576, %v2069, 0
    %2076 = vmatpush.xpose.msra.mxu0 0.0
    %2077 = vmatpush.xpose.msra.mxu0 0.0
    %2078 = vmatpush.xpose.msra.mxu0 0.0
    %2079 = vmatpush.xpose.msra.mxu0 0.0
    %2080 = vmatpush.xpose.msra.mxu0 0.0
    %2081 = vmatpush.xpose.msra.mxu0 0.0
    %2082 = vmatpush.xpose.msra.mxu0 0.0
    %2083 = vmatpush.xpose.msra.mxu0 0.0
    %2084 = vmatpush.xpose.msra.mxu0 0.0
    %2085 = vmatpush.xpose.msra.mxu0 0.0
    %2086 = vmatpush.xpose.msra.mxu0 0.0
    %2087 = vmatpush.xpose.msra.mxu0 0.0
    %2088 = vmatpush.xpose.msra.mxu0 0.0
    %2089 = vmatpush.xpose.msra.mxu0 0.0
    %2090 = vmatpush.xpose.msra.mxu0 %v2074
    %2091 = vmatpush.xpose.msra.mxu0 %v2072
    %2092 = vmatmul.f32.gmra.mxu0 %v2070
    %v2093 = vpop.f32.mrf.mxu0
    %v2094 = vadd.f32 0.0, %v2093
    %2095 = vdwg.mxu0
    %v2096 = vsel %vm1526, %v2094, -inf
    %2097 = vmax.xlane.f32.xlu0 %v2096
    %v2098 = vpop.xlane.xlu0 %2097
    %v2099 = vsub.f32 %v2094, %v2098
    %v2100 = vmul.f32 %v2099, 1.442695
    %v2101 = vpow.pop %v2100
    %v2102 = vsel %vm1526, %v2101, 0.0
    %2103 = vadd.xlane.f32.xlu0 %v2102
    %v2104 = vpop.xlane.xlu0 %2103
    %v2105 = vrcp.pop %v2104
    %v2106 = vmul.f32 %v2104, %v2105
    %v2107 = vsub.f32 1.0, %v2106
    %v2108 = vmul.f32 %v2105, %v2107
    %v2109 = vadd.f32 %v2105, %v2108
    %vm2110 = vweird.f32 %v2104
    %vm2111 = vweird.f32 %v2105
    %vm2112 = vmor %vm2110, %vm2111
    %v2113 = vsel %vm2112, %v2105, %v2109
    %v2114 = vand.u32 2147483647, %v2104
    %vm2115 = vcmp.eq.f32.partialorder %v2114, 8.507059e+37
    %v2116 = vand.u32 %v2104, 2147483648
    %v2117 = vor.u32 1.1754944e-38, %v2116
    %v2118 = vsel %vm2115, %v2117, %v2113
    %v2119 = vmul.f32 %v2101, %v2118
    %2120 = vrot.lane.b32.xlu0 %v1893, 64
    %v2121 = vpop.permute.xlu0 %2120
    %2122 = vrot.lane.b32.xlu0 %v1896, 64
    %v2123 = vpop.permute.xlu0 %2122
    %v2126 = vsel %vm1526, %v2119, 0
    %v2128 = vsel %vm1554, %v2123, 0
    %2130 = vmatpush.msra.mxu0 0.0
    %2131 = vmatpush.msra.mxu0 0.0
    %2132 = vmatpush.msra.mxu0 0.0
    %2133 = vmatpush.msra.mxu0 0.0
    %2134 = vmatpush.msra.mxu0 0.0
    %2135 = vmatpush.msra.mxu0 0.0
    %2136 = vmatpush.msra.mxu0 0.0
    %2137 = vmatpush.msra.mxu0 0.0
    %2138 = vmatpush.msra.mxu0 0.0
    %2139 = vmatpush.msra.mxu0 0.0
    %2140 = vmatpush.msra.mxu0 0.0
    %2141 = vmatpush.msra.mxu0 0.0
    %2142 = vmatpush.msra.mxu0 0.0
    %2143 = vmatpush.msra.mxu0 0.0
    %2144 = vmatpush.msra.mxu0 %v2128
    %2145 = vmatpush.msra.mxu0 %v2121
    %2146 = vmatmul.f32.gmra.mxu0 %v2126
    %v2147 = vpop.f32.mrf.mxu0
    %v2148 = vadd.f32 0.0, %v2147
    %2149 = vdwg.mxu0
    %2150 = vrot.lane.b32.xlu0 %v1411, 32
    %v2151 = vpop.permute.xlu0 %2150
    %2152 = vrot.lane.b32.xlu0 %v1870, 32
    %v2153 = vpop.permute.xlu0 %2152
    %2154 = vrot.lane.b32.xlu0 %v1873, 32
    %v2155 = vpop.permute.xlu0 %2154
    %v2156 = vsel %vm576, %v2151, 0
    %v2158 = vsel %vm576, %v2153, 0
    %v2160 = vsel %vm576, %v2155, 0
    %2162 = vmatpush.xpose.msra.mxu0 0.0
    %2163 = vmatpush.xpose.msra.mxu0 0.0
    %2164 = vmatpush.xpose.msra.mxu0 0.0
    %2165 = vmatpush.xpose.msra.mxu0 0.0
    %2166 = vmatpush.xpose.msra.mxu0 0.0
    %2167 = vmatpush.xpose.msra.mxu0 0.0
    %2168 = vmatpush.xpose.msra.mxu0 0.0
    %2169 = vmatpush.xpose.msra.mxu0 0.0
    %2170 = vmatpush.xpose.msra.mxu0 0.0
    %2171 = vmatpush.xpose.msra.mxu0 0.0
    %2172 = vmatpush.xpose.msra.mxu0 0.0
    %2173 = vmatpush.xpose.msra.mxu0 0.0
    %2174 = vmatpush.xpose.msra.mxu0 0.0
    %2175 = vmatpush.xpose.msra.mxu0 0.0
    %2176 = vmatpush.xpose.msra.mxu0 %v2160
    %2177 = vmatpush.xpose.msra.mxu0 %v2158
    %2178 = vmatmul.f32.gmra.mxu0 %v2156
    %v2179 = vpop.f32.mrf.mxu0
    %v2180 = vadd.f32 0.0, %v2179
    %2181 = vdwg.mxu0
    %v2182 = vsel %vm1526, %v2180, -inf
    %2183 = vmax.xlane.f32.xlu0 %v2182
    %v2184 = vpop.xlane.xlu0 %2183
    %v2185 = vsub.f32 %v2180, %v2184
    %v2186 = vmul.f32 %v2185, 1.442695
    %v2187 = vpow.pop %v2186
    %v2188 = vsel %vm1526, %v2187, 0.0
    %2189 = vadd.xlane.f32.xlu0 %v2188
    %v2190 = vpop.xlane.xlu0 %2189
    %v2191 = vrcp.pop %v2190
    %v2192 = vmul.f32 %v2190, %v2191
    %v2193 = vsub.f32 1.0, %v2192
    %v2194 = vmul.f32 %v2191, %v2193
    %v2195 = vadd.f32 %v2191, %v2194
    %vm2196 = vweird.f32 %v2190
    %vm2197 = vweird.f32 %v2191
    %vm2198 = vmor %vm2196, %vm2197
    %v2199 = vsel %vm2198, %v2191, %v2195
    %v2200 = vand.u32 2147483647, %v2190
    %vm2201 = vcmp.eq.f32.partialorder %v2200, 8.507059e+37
    %v2202 = vand.u32 %v2190, 2147483648
    %v2203 = vor.u32 1.1754944e-38, %v2202
    %v2204 = vsel %vm2201, %v2203, %v2199
    %v2205 = vmul.f32 %v2187, %v2204
    %2206 = vrot.lane.b32.xlu0 %v1893, 32
    %v2207 = vpop.permute.xlu0 %2206
    %2208 = vrot.lane.b32.xlu0 %v1896, 32
    %v2209 = vpop.permute.xlu0 %2208
    %v2212 = vsel %vm1526, %v2205, 0
    %v2214 = vsel %vm1554, %v2209, 0
    %2216 = vmatpush.msra.mxu0 0.0
    %2217 = vmatpush.msra.mxu0 0.0
    %2218 = vmatpush.msra.mxu0 0.0
    %2219 = vmatpush.msra.mxu0 0.0
    %2220 = vmatpush.msra.mxu0 0.0
    %2221 = vmatpush.msra.mxu0 0.0
    %2222 = vmatpush.msra.mxu0 0.0
    %2223 = vmatpush.msra.mxu0 0.0
    %2224 = vmatpush.msra.mxu0 0.0
    %2225 = vmatpush.msra.mxu0 0.0
    %2226 = vmatpush.msra.mxu0 0.0
    %2227 = vmatpush.msra.mxu0 0.0
    %2228 = vmatpush.msra.mxu0 0.0
    %2229 = vmatpush.msra.mxu0 0.0
    %2230 = vmatpush.msra.mxu0 %v2214
    %2231 = vmatpush.msra.mxu0 %v2207
    %2232 = vmatmul.f32.gmra.mxu0 %v2212
    %v2233 = vpop.f32.mrf.mxu0
    %v2234 = vadd.f32 0.0, %v2233
    %2235 = vdwg.mxu0
    %2237 = vrot.lane.b32.xlu0 %v2062, 32
    %v2238 = vpop.permute.xlu0 %2237
    %2241 = vrot.lane.b32.xlu0 %v2148, 64
    %v2242 = vpop.permute.xlu0 %2241
    %2245 = vrot.lane.b32.xlu0 %v2234, 96
    %v2246 = vpop.permute.xlu0 %2245
    %v2248 = vsel %vm576, %v1975, %v2238
    %v2249 = vsel %vm899, %v2248, %v2242
    %v2250 = vsel %vm901, %v2249, %v2246
    %v2251 = vld [vmem:[#allocation10] sm:$0xff]
    %v2252 = vld [vmem:[#allocation10 + $0x8] sm:$0xff]
    %v2253 = vld [vmem:[#allocation10 + $0x10] sm:$0xff]
    %v2254 = vld [vmem:[#allocation10 + $0x18] sm:$0xff]
    %v2255 = vld [vmem:[#allocation10 + $0x20] sm:$0xff]
    %v2256 = vld [vmem:[#allocation10 + $0x28] sm:$0xff]
    %v2257 = vld [vmem:[#allocation10 + $0x30] sm:$0xff]
    %v2258 = vld [vmem:[#allocation10 + $0x38] sm:$0xff]
    %v2259 = vld [vmem:[#allocation10 + $0x40] sm:$0xff]
    %v2260 = vld [vmem:[#allocation10 + $0x48] sm:$0xff]
    %v2261 = vld [vmem:[#allocation10 + $0x50] sm:$0xff]
    %v2262 = vld [vmem:[#allocation10 + $0x58] sm:$0xff]
    %v2263 = vld [vmem:[#allocation10 + $0x60] sm:$0xff]
    %v2264 = vld [vmem:[#allocation10 + $0x68] sm:$0xff]
    %v2265 = vld [vmem:[#allocation10 + $0x70] sm:$0xff]
    %v2266 = vld [vmem:[#allocation10 + $0x78] sm:$0xff]
    %v2267 = vld [vmem:[%s31] sm:$0x1]
    %v2269 = vperm.slane %v2267, 0
    %2271 = vmatpush.msra.mxu0 %v2266
    %2272 = vmatpush.msra.mxu0 %v2265
    %2273 = vmatpush.msra.mxu0 %v2264
    %2274 = vmatpush.msra.mxu0 %v2263
    %2275 = vmatpush.msra.mxu0 %v2262
    %2276 = vmatpush.msra.mxu0 %v2261
    %2277 = vmatpush.msra.mxu0 %v2260
    %2278 = vmatpush.msra.mxu0 %v2259
    %2279 = vmatpush.msra.mxu0 %v2258
    %2280 = vmatpush.msra.mxu0 %v2257
    %2281 = vmatpush.msra.mxu0 %v2256
    %2282 = vmatpush.msra.mxu0 %v2255
    %2283 = vmatpush.msra.mxu0 %v2254
    %2284 = vmatpush.msra.mxu0 %v2253
    %2285 = vmatpush.msra.mxu0 %v2252
    %2286 = vmatpush.msra.mxu0 %v2251
    %2287 = vmatmul.f32.gmra.mxu0 %v1851
    %v2288 = vpop.f32.mrf.mxu0
    %v2289 = vadd.f32 %v2269, %v2288
    %2290 = vmatmul.f32.gmra.mxu0 %v2250
    %v2291 = vpop.f32.mrf.mxu0
    %v2292 = vadd.f32 %v2269, %v2291
    %2293 = vdwg.mxu0
    %v2294 = vadd.f32 %v1368, %v2289
    %v2295 = vadd.f32 %v1369, %v2292
    %2296 = vadd.xlane.f32.xlu0 %v2294
    %v2297 = vpop.xlane.xlu0 %2296
    %2298 = vadd.xlane.f32.xlu0 %v2295
    %v2299 = vpop.xlane.xlu0 %2298
    %v2300 = vmul.f32 %v2297, %v1321
    %v2301 = vmul.f32 %v2299, %v1321
    %v2302 = vsub.f32 %v2294, %v2300
    %v2303 = vsub.f32 %v2295, %v2301
    %v2304 = vmul.f32 %v2302, %v2302
    %v2305 = vmul.f32 %v2303, %v2303
    %2306 = vadd.xlane.f32.xlu0 %v2304
    %v2307 = vpop.xlane.xlu0 %2306
    %2308 = vadd.xlane.f32.xlu0 %v2305
    %v2309 = vpop.xlane.xlu0 %2308
    %v2310 = vmul.f32 %v2307, %v1321
    %v2311 = vmul.f32 %v2309, %v1321
    %v2312 = vadd.f32 %v2310, 1e-05
    %v2313 = vadd.f32 %v2311, 1e-05
    %v2314 = vrsqrt.pop %v2312
    %v2315 = vmul.f32 %v2314, %v2312
    %v2316 = vmul.f32 %v2315, %v2314
    %v2317 = vmul.f32 0.5, %v2316
    %v2318 = vsub.f32 1.5, %v2317
    %v2319 = vmul.f32 %v2314, %v2318
    %vm2320 = vweird.f32 %v2312
    %vm2321 = vweird.f32 %v2314
    %vm2322 = vmor %vm2320, %vm2321
    %v2323 = vsel %vm2322, %v2314, %v2319
    %v2324 = vrsqrt.pop %v2313
    %v2325 = vmul.f32 %v2324, %v2313
    %v2326 = vmul.f32 %v2325, %v2324
    %v2327 = vmul.f32 0.5, %v2326
    %v2328 = vsub.f32 1.5, %v2327
    %v2329 = vmul.f32 %v2324, %v2328
    %vm2330 = vweird.f32 %v2313
    %vm2331 = vweird.f32 %v2324
    %vm2332 = vmor %vm2330, %vm2331
    %v2333 = vsel %vm2332, %v2324, %v2329
    %v2334 = vmul.f32 %v2302, %v2323
    %v2335 = vmul.f32 %v2303, %v2333
    %v2336 = vld [vmem:[%s33] sm:$0x1]
    %v2338 = vperm.slane %v2336, 0
    %v2340 = vmul.f32 %v2334, %v2338
    %v2341 = vmul.f32 %v2335, %v2338
    %v2342 = vld [vmem:[%s35] sm:$0x1]
    %v2344 = vperm.slane %v2342, 0
    %v2346 = vadd.f32 %v2340, %v2344
    %v2347 = vadd.f32 %v2341, %v2344
    %v2348 = vld [vmem:[#allocation11] sm:$0xff]
    %v2349 = vld [vmem:[#allocation11 + $0x8] sm:$0xff]
    %v2350 = vld [vmem:[#allocation11 + $0x10] sm:$0xff]
    %v2351 = vld [vmem:[#allocation11 + $0x18] sm:$0xff]
    %v2352 = vld [vmem:[#allocation11 + $0x20] sm:$0xff]
    %v2353 = vld [vmem:[#allocation11 + $0x28] sm:$0xff]
    %v2354 = vld [vmem:[#allocation11 + $0x30] sm:$0xff]
    %v2355 = vld [vmem:[#allocation11 + $0x38] sm:$0xff]
    %v2356 = vld [vmem:[#allocation11 + $0x40] sm:$0xff]
    %v2357 = vld [vmem:[#allocation11 + $0x48] sm:$0xff]
    %v2358 = vld [vmem:[#allocation11 + $0x50] sm:$0xff]
    %v2359 = vld [vmem:[#allocation11 + $0x58] sm:$0xff]
    %v2360 = vld [vmem:[#allocation11 + $0x60] sm:$0xff]
    %v2361 = vld [vmem:[#allocation11 + $0x68] sm:$0xff]
    %v2362 = vld [vmem:[#allocation11 + $0x70] sm:$0xff]
    %v2363 = vld [vmem:[#allocation11 + $0x78] sm:$0xff]
    %v2364 = vld [vmem:[#allocation11 + $0x80] sm:$0xff]
    %v2365 = vld [vmem:[#allocation11 + $0x88] sm:$0xff]
    %v2366 = vld [vmem:[#allocation11 + $0x90] sm:$0xff]
    %v2367 = vld [vmem:[#allocation11 + $0x98] sm:$0xff]
    %v2368 = vld [vmem:[#allocation11 + $0xa0] sm:$0xff]
    %v2369 = vld [vmem:[#allocation11 + $0xa8] sm:$0xff]
    %v2370 = vld [vmem:[#allocation11 + $0xb0] sm:$0xff]
    %v2371 = vld [vmem:[#allocation11 + $0xb8] sm:$0xff]
    %v2372 = vld [vmem:[#allocation11 + $0xc0] sm:$0xff]
    %v2373 = vld [vmem:[#allocation11 + $0xc8] sm:$0xff]
    %v2374 = vld [vmem:[#allocation11 + $0xd0] sm:$0xff]
    %v2375 = vld [vmem:[#allocation11 + $0xd8] sm:$0xff]
    %v2376 = vld [vmem:[#allocation11 + $0xe0] sm:$0xff]
    %v2377 = vld [vmem:[#allocation11 + $0xe8] sm:$0xff]
    %v2378 = vld [vmem:[#allocation11 + $0xf0] sm:$0xff]
    %v2379 = vld [vmem:[#allocation11 + $0xf8] sm:$0xff]
    %v2380 = vld [vmem:[#allocation11 + $0x100] sm:$0xff]
    %v2381 = vld [vmem:[#allocation11 + $0x108] sm:$0xff]
    %v2382 = vld [vmem:[#allocation11 + $0x110] sm:$0xff]
    %v2383 = vld [vmem:[#allocation11 + $0x118] sm:$0xff]
    %v2384 = vld [vmem:[#allocation11 + $0x120] sm:$0xff]
    %v2385 = vld [vmem:[#allocation11 + $0x128] sm:$0xff]
    %v2386 = vld [vmem:[#allocation11 + $0x130] sm:$0xff]
    %v2387 = vld [vmem:[#allocation11 + $0x138] sm:$0xff]
    %v2388 = vld [vmem:[#allocation11 + $0x140] sm:$0xff]
    %v2389 = vld [vmem:[#allocation11 + $0x148] sm:$0xff]
    %v2390 = vld [vmem:[#allocation11 + $0x150] sm:$0xff]
    %v2391 = vld [vmem:[#allocation11 + $0x158] sm:$0xff]
    %v2392 = vld [vmem:[#allocation11 + $0x160] sm:$0xff]
    %v2393 = vld [vmem:[#allocation11 + $0x168] sm:$0xff]
    %v2394 = vld [vmem:[#allocation11 + $0x170] sm:$0xff]
    %v2395 = vld [vmem:[#allocation11 + $0x178] sm:$0xff]
    %v2396 = vld [vmem:[#allocation11 + $0x180] sm:$0xff]
    %v2397 = vld [vmem:[#allocation11 + $0x188] sm:$0xff]
    %v2398 = vld [vmem:[#allocation11 + $0x190] sm:$0xff]
    %v2399 = vld [vmem:[#allocation11 + $0x198] sm:$0xff]
    %v2400 = vld [vmem:[#allocation11 + $0x1a0] sm:$0xff]
    %v2401 = vld [vmem:[#allocation11 + $0x1a8] sm:$0xff]
    %v2402 = vld [vmem:[#allocation11 + $0x1b0] sm:$0xff]
    %v2403 = vld [vmem:[#allocation11 + $0x1b8] sm:$0xff]
    %v2404 = vld [vmem:[#allocation11 + $0x1c0] sm:$0xff]
    %v2405 = vld [vmem:[#allocation11 + $0x1c8] sm:$0xff]
    %v2406 = vld [vmem:[#allocation11 + $0x1d0] sm:$0xff]
    %v2407 = vld [vmem:[#allocation11 + $0x1d8] sm:$0xff]
    %v2408 = vld [vmem:[#allocation11 + $0x1e0] sm:$0xff]
    %v2409 = vld [vmem:[#allocation11 + $0x1e8] sm:$0xff]
    %v2410 = vld [vmem:[#allocation11 + $0x1f0] sm:$0xff]
    %v2411 = vld [vmem:[#allocation11 + $0x1f8] sm:$0xff]
    %v2412 = vld [vmem:[%s39] sm:$0xf]
    %v2414 = vperm.slane %v2412, 0
    %v2415 = vperm.slane %v2412, 1
    %v2416 = vperm.slane %v2412, 2
    %v2417 = vperm.slane %v2412, 3
    %2422 = vmatpush.msra.mxu0 %v2408
    %2423 = vmatpush.msra.mxu0 %v2404
    %2424 = vmatpush.msra.mxu0 %v2400
    %2425 = vmatpush.msra.mxu0 %v2396
    %2426 = vmatpush.msra.mxu0 %v2392
    %2427 = vmatpush.msra.mxu0 %v2388
    %2428 = vmatpush.msra.mxu0 %v2384
    %2429 = vmatpush.msra.mxu0 %v2380
    %2430 = vmatpush.msra.mxu0 %v2376
    %2431 = vmatpush.msra.mxu0 %v2372
    %2432 = vmatpush.msra.mxu0 %v2368
    %2433 = vmatpush.msra.mxu0 %v2364
    %2434 = vmatpush.msra.mxu0 %v2360
    %2435 = vmatpush.msra.mxu0 %v2356
    %2436 = vmatpush.msra.mxu0 %v2352
    %2437 = vmatpush.msra.mxu0 %v2348
    %2438 = vmatmul.f32.gmra.mxu0 %v2346
    %v2439 = vpop.f32.mrf.mxu0
    %v2440 = vadd.f32 %v2414, %v2439
    %2441 = vmatmul.f32.gmra.mxu0 %v2347
    %v2442 = vpop.f32.mrf.mxu0
    %v2443 = vadd.f32 %v2414, %v2442
    %2444 = vdwg.mxu0
    %2445 = vmatpush.msra.mxu0 %v2409
    %2446 = vmatpush.msra.mxu0 %v2405
    %2447 = vmatpush.msra.mxu0 %v2401
    %2448 = vmatpush.msra.mxu0 %v2397
    %2449 = vmatpush.msra.mxu0 %v2393
    %2450 = vmatpush.msra.mxu0 %v2389
    %2451 = vmatpush.msra.mxu0 %v2385
    %2452 = vmatpush.msra.mxu0 %v2381
    %2453 = vmatpush.msra.mxu0 %v2377
    %2454 = vmatpush.msra.mxu0 %v2373
    %2455 = vmatpush.msra.mxu0 %v2369
    %2456 = vmatpush.msra.mxu0 %v2365
    %2457 = vmatpush.msra.mxu0 %v2361
    %2458 = vmatpush.msra.mxu0 %v2357
    %2459 = vmatpush.msra.mxu0 %v2353
    %2460 = vmatpush.msra.mxu0 %v2349
    %2461 = vmatmul.f32.gmra.mxu0 %v2346
    %v2462 = vpop.f32.mrf.mxu0
    %v2463 = vadd.f32 %v2415, %v2462
    %2464 = vmatmul.f32.gmra.mxu0 %v2347
    %v2465 = vpop.f32.mrf.mxu0
    %v2466 = vadd.f32 %v2415, %v2465
    %2467 = vdwg.mxu0
    %2468 = vmatpush.msra.mxu0 %v2410
    %2469 = vmatpush.msra.mxu0 %v2406
    %2470 = vmatpush.msra.mxu0 %v2402
    %2471 = vmatpush.msra.mxu0 %v2398
    %2472 = vmatpush.msra.mxu0 %v2394
    %2473 = vmatpush.msra.mxu0 %v2390
    %2474 = vmatpush.msra.mxu0 %v2386
    %2475 = vmatpush.msra.mxu0 %v2382
    %2476 = vmatpush.msra.mxu0 %v2378
    %2477 = vmatpush.msra.mxu0 %v2374
    %2478 = vmatpush.msra.mxu0 %v2370
    %2479 = vmatpush.msra.mxu0 %v2366
    %2480 = vmatpush.msra.mxu0 %v2362
    %2481 = vmatpush.msra.mxu0 %v2358
    %2482 = vmatpush.msra.mxu0 %v2354
    %2483 = vmatpush.msra.mxu0 %v2350
    %2484 = vmatmul.f32.gmra.mxu0 %v2346
    %v2485 = vpop.f32.mrf.mxu0
    %v2486 = vadd.f32 %v2416, %v2485
    %2487 = vmatmul.f32.gmra.mxu0 %v2347
    %v2488 = vpop.f32.mrf.mxu0
    %v2489 = vadd.f32 %v2416, %v2488
    %2490 = vdwg.mxu0
    %2491 = vmatpush.msra.mxu0 %v2411
    %2492 = vmatpush.msra.mxu0 %v2407
    %2493 = vmatpush.msra.mxu0 %v2403
    %2494 = vmatpush.msra.mxu0 %v2399
    %2495 = vmatpush.msra.mxu0 %v2395
    %2496 = vmatpush.msra.mxu0 %v2391
    %2497 = vmatpush.msra.mxu0 %v2387
    %2498 = vmatpush.msra.mxu0 %v2383
    %2499 = vmatpush.msra.mxu0 %v2379
    %2500 = vmatpush.msra.mxu0 %v2375
    %2501 = vmatpush.msra.mxu0 %v2371
    %2502 = vmatpush.msra.mxu0 %v2367
    %2503 = vmatpush.msra.mxu0 %v2363
    %2504 = vmatpush.msra.mxu0 %v2359
    %2505 = vmatpush.msra.mxu0 %v2355
    %2506 = vmatpush.msra.mxu0 %v2351
    %2507 = vmatmul.f32.gmra.mxu0 %v2346
    %v2508 = vpop.f32.mrf.mxu0
    %v2509 = vadd.f32 %v2417, %v2508
    %2510 = vmatmul.f32.gmra.mxu0 %v2347
    %v2511 = vpop.f32.mrf.mxu0
    %v2512 = vadd.f32 %v2417, %v2511
    %2513 = vdwg.mxu0
    %v2514 = vmax.f32 %v2440, 0.0
    %v2515 = vmax.f32 %v2463, 0.0
    %v2516 = vmax.f32 %v2486, 0.0
    %v2517 = vmax.f32 %v2509, 0.0
    %v2518 = vmax.f32 %v2443, 0.0
    %v2519 = vmax.f32 %v2466, 0.0
    %v2520 = vmax.f32 %v2489, 0.0
    %v2521 = vmax.f32 %v2512, 0.0
    %v2522 = vld [vmem:[#allocation13] sm:$0xff]
    %v2523 = vld [vmem:[#allocation13 + $0x8] sm:$0xff]
    %v2524 = vld [vmem:[#allocation13 + $0x10] sm:$0xff]
    %v2525 = vld [vmem:[#allocation13 + $0x18] sm:$0xff]
    %v2526 = vld [vmem:[#allocation13 + $0x20] sm:$0xff]
    %v2527 = vld [vmem:[#allocation13 + $0x28] sm:$0xff]
    %v2528 = vld [vmem:[#allocation13 + $0x30] sm:$0xff]
    %v2529 = vld [vmem:[#allocation13 + $0x38] sm:$0xff]
    %v2530 = vld [vmem:[#allocation13 + $0x40] sm:$0xff]
    %v2531 = vld [vmem:[#allocation13 + $0x48] sm:$0xff]
    %v2532 = vld [vmem:[#allocation13 + $0x50] sm:$0xff]
    %v2533 = vld [vmem:[#allocation13 + $0x58] sm:$0xff]
    %v2534 = vld [vmem:[#allocation13 + $0x60] sm:$0xff]
    %v2535 = vld [vmem:[#allocation13 + $0x68] sm:$0xff]
    %v2536 = vld [vmem:[#allocation13 + $0x70] sm:$0xff]
    %v2537 = vld [vmem:[#allocation13 + $0x78] sm:$0xff]
    %v2538 = vld [vmem:[#allocation13 + $0x80] sm:$0xff]
    %v2539 = vld [vmem:[#allocation13 + $0x88] sm:$0xff]
    %v2540 = vld [vmem:[#allocation13 + $0x90] sm:$0xff]
    %v2541 = vld [vmem:[#allocation13 + $0x98] sm:$0xff]
    %v2542 = vld [vmem:[#allocation13 + $0xa0] sm:$0xff]
    %v2543 = vld [vmem:[#allocation13 + $0xa8] sm:$0xff]
    %v2544 = vld [vmem:[#allocation13 + $0xb0] sm:$0xff]
    %v2545 = vld [vmem:[#allocation13 + $0xb8] sm:$0xff]
    %v2546 = vld [vmem:[#allocation13 + $0xc0] sm:$0xff]
    %v2547 = vld [vmem:[#allocation13 + $0xc8] sm:$0xff]
    %v2548 = vld [vmem:[#allocation13 + $0xd0] sm:$0xff]
    %v2549 = vld [vmem:[#allocation13 + $0xd8] sm:$0xff]
    %v2550 = vld [vmem:[#allocation13 + $0xe0] sm:$0xff]
    %v2551 = vld [vmem:[#allocation13 + $0xe8] sm:$0xff]
    %v2552 = vld [vmem:[#allocation13 + $0xf0] sm:$0xff]
    %v2553 = vld [vmem:[#allocation13 + $0xf8] sm:$0xff]
    %v2554 = vld [vmem:[#allocation13 + $0x100] sm:$0xff]
    %v2555 = vld [vmem:[#allocation13 + $0x108] sm:$0xff]
    %v2556 = vld [vmem:[#allocation13 + $0x110] sm:$0xff]
    %v2557 = vld [vmem:[#allocation13 + $0x118] sm:$0xff]
    %v2558 = vld [vmem:[#allocation13 + $0x120] sm:$0xff]
    %v2559 = vld [vmem:[#allocation13 + $0x128] sm:$0xff]
    %v2560 = vld [vmem:[#allocation13 + $0x130] sm:$0xff]
    %v2561 = vld [vmem:[#allocation13 + $0x138] sm:$0xff]
    %v2562 = vld [vmem:[#allocation13 + $0x140] sm:$0xff]
    %v2563 = vld [vmem:[#allocation13 + $0x148] sm:$0xff]
    %v2564 = vld [vmem:[#allocation13 + $0x150] sm:$0xff]
    %v2565 = vld [vmem:[#allocation13 + $0x158] sm:$0xff]
    %v2566 = vld [vmem:[#allocation13 + $0x160] sm:$0xff]
    %v2567 = vld [vmem:[#allocation13 + $0x168] sm:$0xff]
    %v2568 = vld [vmem:[#allocation13 + $0x170] sm:$0xff]
    %v2569 = vld [vmem:[#allocation13 + $0x178] sm:$0xff]
    %v2570 = vld [vmem:[#allocation13 + $0x180] sm:$0xff]
    %v2571 = vld [vmem:[#allocation13 + $0x188] sm:$0xff]
    %v2572 = vld [vmem:[#allocation13 + $0x190] sm:$0xff]
    %v2573 = vld [vmem:[#allocation13 + $0x198] sm:$0xff]
    %v2574 = vld [vmem:[#allocation13 + $0x1a0] sm:$0xff]
    %v2575 = vld [vmem:[#allocation13 + $0x1a8] sm:$0xff]
    %v2576 = vld [vmem:[#allocation13 + $0x1b0] sm:$0xff]
    %v2577 = vld [vmem:[#allocation13 + $0x1b8] sm:$0xff]
    %v2578 = vld [vmem:[#allocation13 + $0x1c0] sm:$0xff]
    %v2579 = vld [vmem:[#allocation13 + $0x1c8] sm:$0xff]
    %v2580 = vld [vmem:[#allocation13 + $0x1d0] sm:$0xff]
    %v2581 = vld [vmem:[#allocation13 + $0x1d8] sm:$0xff]
    %v2582 = vld [vmem:[#allocation13 + $0x1e0] sm:$0xff]
    %v2583 = vld [vmem:[#allocation13 + $0x1e8] sm:$0xff]
    %v2584 = vld [vmem:[#allocation13 + $0x1f0] sm:$0xff]
    %v2585 = vld [vmem:[#allocation13 + $0x1f8] sm:$0xff]
    %2586 = vmatpush.msra.mxu0 %v2537
    %2587 = vmatpush.msra.mxu0 %v2536
    %2588 = vmatpush.msra.mxu0 %v2535
    %2589 = vmatpush.msra.mxu0 %v2534
    %2590 = vmatpush.msra.mxu0 %v2533
    %2591 = vmatpush.msra.mxu0 %v2532
    %2592 = vmatpush.msra.mxu0 %v2531
    %2593 = vmatpush.msra.mxu0 %v2530
    %2594 = vmatpush.msra.mxu0 %v2529
    %2595 = vmatpush.msra.mxu0 %v2528
    %2596 = vmatpush.msra.mxu0 %v2527
    %2597 = vmatpush.msra.mxu0 %v2526
    %2598 = vmatpush.msra.mxu0 %v2525
    %2599 = vmatpush.msra.mxu0 %v2524
    %2600 = vmatpush.msra.mxu0 %v2523
    %2601 = vmatpush.msra.mxu0 %v2522
    %2602 = vmatmul.f32.gmra.mxu0 %v2514
    %v2603 = vpop.f32.mrf.mxu0
    %v2604 = vadd.f32 0.0, %v2603
    %2605 = vmatmul.f32.gmra.mxu0 %v2518
    %v2606 = vpop.f32.mrf.mxu0
    %v2607 = vadd.f32 0.0, %v2606
    %2608 = vdwg.mxu0
    %2609 = vmatpush.msra.mxu0 %v2553
    %2610 = vmatpush.msra.mxu0 %v2552
    %2611 = vmatpush.msra.mxu0 %v2551
    %2612 = vmatpush.msra.mxu0 %v2550
    %2613 = vmatpush.msra.mxu0 %v2549
    %2614 = vmatpush.msra.mxu0 %v2548
    %2615 = vmatpush.msra.mxu0 %v2547
    %2616 = vmatpush.msra.mxu0 %v2546
    %2617 = vmatpush.msra.mxu0 %v2545
    %2618 = vmatpush.msra.mxu0 %v2544
    %2619 = vmatpush.msra.mxu0 %v2543
    %2620 = vmatpush.msra.mxu0 %v2542
    %2621 = vmatpush.msra.mxu0 %v2541
    %2622 = vmatpush.msra.mxu0 %v2540
    %2623 = vmatpush.msra.mxu0 %v2539
    %2624 = vmatpush.msra.mxu0 %v2538
    %2625 = vmatmul.f32.gmra.mxu0 %v2515
    %v2626 = vpop.f32.mrf.mxu0
    %v2627 = vadd.f32 %v2604, %v2626
    %2628 = vmatmul.f32.gmra.mxu0 %v2519
    %v2629 = vpop.f32.mrf.mxu0
    %v2630 = vadd.f32 %v2607, %v2629
    %2631 = vdwg.mxu0
    %2632 = vmatpush.msra.mxu0 %v2569
    %2633 = vmatpush.msra.mxu0 %v2568
    %2634 = vmatpush.msra.mxu0 %v2567
    %2635 = vmatpush.msra.mxu0 %v2566
    %2636 = vmatpush.msra.mxu0 %v2565
    %2637 = vmatpush.msra.mxu0 %v2564
    %2638 = vmatpush.msra.mxu0 %v2563
    %2639 = vmatpush.msra.mxu0 %v2562
    %2640 = vmatpush.msra.mxu0 %v2561
    %2641 = vmatpush.msra.mxu0 %v2560
    %2642 = vmatpush.msra.mxu0 %v2559
    %2643 = vmatpush.msra.mxu0 %v2558
    %2644 = vmatpush.msra.mxu0 %v2557
    %2645 = vmatpush.msra.mxu0 %v2556
    %2646 = vmatpush.msra.mxu0 %v2555
    %2647 = vmatpush.msra.mxu0 %v2554
    %2648 = vmatmul.f32.gmra.mxu0 %v2516
    %v2649 = vpop.f32.mrf.mxu0
    %v2650 = vadd.f32 %v2627, %v2649
    %2651 = vmatmul.f32.gmra.mxu0 %v2520
    %v2652 = vpop.f32.mrf.mxu0
    %v2653 = vadd.f32 %v2630, %v2652
    %2654 = vdwg.mxu0
    %2655 = vmatpush.msra.mxu0 %v2585
    %2656 = vmatpush.msra.mxu0 %v2584
    %2657 = vmatpush.msra.mxu0 %v2583
    %2658 = vmatpush.msra.mxu0 %v2582
    %2659 = vmatpush.msra.mxu0 %v2581
    %2660 = vmatpush.msra.mxu0 %v2580
    %2661 = vmatpush.msra.mxu0 %v2579
    %2662 = vmatpush.msra.mxu0 %v2578
    %2663 = vmatpush.msra.mxu0 %v2577
    %2664 = vmatpush.msra.mxu0 %v2576
    %2665 = vmatpush.msra.mxu0 %v2575
    %2666 = vmatpush.msra.mxu0 %v2574
    %2667 = vmatpush.msra.mxu0 %v2573
    %2668 = vmatpush.msra.mxu0 %v2572
    %2669 = vmatpush.msra.mxu0 %v2571
    %2670 = vmatpush.msra.mxu0 %v2570
    %2671 = vmatmul.f32.gmra.mxu0 %v2517
    %v2672 = vpop.f32.mrf.mxu0
    %v2673 = vadd.f32 %v2650, %v2672
    %2674 = vmatmul.f32.gmra.mxu0 %v2521
    %v2675 = vpop.f32.mrf.mxu0
    %v2676 = vadd.f32 %v2653, %v2675
    %2677 = vdwg.mxu0
    %v2678 = vadd.f32 %v2346, %v2673
    %v2679 = vadd.f32 %v2347, %v2676
    %v2680 = vld [vmem:[%s43] sm:$0x1]
    %v2682 = vperm.slane %v2680, 0
    %v2684 = vadd.f32 %v2678, %v2682
    %v2685 = vadd.f32 %v2679, %v2682
    %2686 = vadd.xlane.f32.xlu0 %v2684
    %v2687 = vpop.xlane.xlu0 %2686
    %2688 = vadd.xlane.f32.xlu0 %v2685
    %v2689 = vpop.xlane.xlu0 %2688
    %v2690 = vmul.f32 %v2687, %v1321
    %v2691 = vmul.f32 %v2689, %v1321
    %v2692 = vsub.f32 %v2684, %v2690
    %v2693 = vsub.f32 %v2685, %v2691
    %v2694 = vmul.f32 %v2692, %v2692
    %v2695 = vmul.f32 %v2693, %v2693
    %2696 = vadd.xlane.f32.xlu0 %v2694
    %v2697 = vpop.xlane.xlu0 %2696
    %2698 = vadd.xlane.f32.xlu0 %v2695
    %v2699 = vpop.xlane.xlu0 %2698
    %v2700 = vmul.f32 %v2697, %v1321
    %v2701 = vmul.f32 %v2699, %v1321
    %v2702 = vadd.f32 %v2700, 1e-05
    %v2703 = vadd.f32 %v2701, 1e-05
    %v2704 = vrsqrt.pop %v2702
    %v2705 = vmul.f32 %v2704, %v2702
    %v2706 = vmul.f32 %v2705, %v2704
    %v2707 = vmul.f32 0.5, %v2706
    %v2708 = vsub.f32 1.5, %v2707
    %v2709 = vmul.f32 %v2704, %v2708
    %vm2710 = vweird.f32 %v2702
    %vm2711 = vweird.f32 %v2704
    %vm2712 = vmor %vm2710, %vm2711
    %v2713 = vsel %vm2712, %v2704, %v2709
    %v2714 = vrsqrt.pop %v2703
    %v2715 = vmul.f32 %v2714, %v2703
    %v2716 = vmul.f32 %v2715, %v2714
    %v2717 = vmul.f32 0.5, %v2716
    %v2718 = vsub.f32 1.5, %v2717
    %v2719 = vmul.f32 %v2714, %v2718
    %vm2720 = vweird.f32 %v2703
    %vm2721 = vweird.f32 %v2714
    %vm2722 = vmor %vm2720, %vm2721
    %v2723 = vsel %vm2722, %v2714, %v2719
    %v2724 = vmul.f32 %v2692, %v2713
    %v2725 = vmul.f32 %v2693, %v2723
    %v2726 = vld [vmem:[%s45] sm:$0x1]
    %v2728 = vperm.slane %v2726, 0
    %v2730 = vmul.f32 %v2724, %v2728
    %v2731 = vmul.f32 %v2725, %v2728
    %v2732 = vld [vmem:[%s47] sm:$0x1]
    %v2734 = vperm.slane %v2732, 0
    %v2736 = vadd.f32 %v2730, %v2734
    %v2737 = vadd.f32 %v2731, %v2734
    %v2738 = vld [vmem:[#allocation14] sm:$0xff]
    %v2739 = vld [vmem:[#allocation14 + $0x8] sm:$0xff]
    %v2740 = vld [vmem:[#allocation14 + $0x10] sm:$0xff]
    %v2741 = vld [vmem:[#allocation14 + $0x18] sm:$0xff]
    %v2742 = vld [vmem:[#allocation14 + $0x20] sm:$0xff]
    %v2743 = vld [vmem:[#allocation14 + $0x28] sm:$0xff]
    %v2744 = vld [vmem:[#allocation14 + $0x30] sm:$0xff]
    %v2745 = vld [vmem:[#allocation14 + $0x38] sm:$0xff]
    %v2746 = vld [vmem:[#allocation14 + $0x40] sm:$0xff]
    %v2747 = vld [vmem:[#allocation14 + $0x48] sm:$0xff]
    %v2748 = vld [vmem:[#allocation14 + $0x50] sm:$0xff]
    %v2749 = vld [vmem:[#allocation14 + $0x58] sm:$0xff]
    %v2750 = vld [vmem:[#allocation14 + $0x60] sm:$0xff]
    %v2751 = vld [vmem:[#allocation14 + $0x68] sm:$0xff]
    %v2752 = vld [vmem:[#allocation14 + $0x70] sm:$0xff]
    %v2753 = vld [vmem:[#allocation14 + $0x78] sm:$0xff]
    %v2754 = vld [vmem:[%s51] sm:$0x1]
    %v2756 = vperm.slane %v2754, 0
    %2758 = vmatpush.msra.mxu0 %v2753
    %2759 = vmatpush.msra.mxu0 %v2752
    %2760 = vmatpush.msra.mxu0 %v2751
    %2761 = vmatpush.msra.mxu0 %v2750
    %2762 = vmatpush.msra.mxu0 %v2749
    %2763 = vmatpush.msra.mxu0 %v2748
    %2764 = vmatpush.msra.mxu0 %v2747
    %2765 = vmatpush.msra.mxu0 %v2746
    %2766 = vmatpush.msra.mxu0 %v2745
    %2767 = vmatpush.msra.mxu0 %v2744
    %2768 = vmatpush.msra.mxu0 %v2743
    %2769 = vmatpush.msra.mxu0 %v2742
    %2770 = vmatpush.msra.mxu0 %v2741
    %2771 = vmatpush.msra.mxu0 %v2740
    %2772 = vmatpush.msra.mxu0 %v2739
    %2773 = vmatpush.msra.mxu0 %v2738
    %2774 = vmatmul.f32.gmra.mxu0 %v2736
    %v2775 = vpop.f32.mrf.mxu0
    %v2776 = vadd.f32 %v2756, %v2775
    %2777 = vmatmul.f32.gmra.mxu0 %v2737
    %v2778 = vpop.f32.mrf.mxu0
    %v2779 = vadd.f32 %v2756, %v2778
    %2780 = vdwg.mxu0
    %v2781 = vld [vmem:[#allocation16] sm:$0xff]
    %v2782 = vld [vmem:[#allocation16 + $0x8] sm:$0xff]
    %v2783 = vld [vmem:[#allocation16 + $0x10] sm:$0xff]
    %v2784 = vld [vmem:[#allocation16 + $0x18] sm:$0xff]
    %v2785 = vld [vmem:[#allocation16 + $0x20] sm:$0xff]
    %v2786 = vld [vmem:[#allocation16 + $0x28] sm:$0xff]
    %v2787 = vld [vmem:[#allocation16 + $0x30] sm:$0xff]
    %v2788 = vld [vmem:[#allocation16 + $0x38] sm:$0xff]
    %v2789 = vld [vmem:[#allocation16 + $0x40] sm:$0xff]
    %v2790 = vld [vmem:[#allocation16 + $0x48] sm:$0xff]
    %v2791 = vld [vmem:[#allocation16 + $0x50] sm:$0xff]
    %v2792 = vld [vmem:[#allocation16 + $0x58] sm:$0xff]
    %v2793 = vld [vmem:[#allocation16 + $0x60] sm:$0xff]
    %v2794 = vld [vmem:[#allocation16 + $0x68] sm:$0xff]
    %v2795 = vld [vmem:[#allocation16 + $0x70] sm:$0xff]
    %v2796 = vld [vmem:[#allocation16 + $0x78] sm:$0xff]
    %v2797 = vld [vmem:[#allocation16 + $0x80] sm:$0xff]
    %v2798 = vld [vmem:[#allocation16 + $0x88] sm:$0xff]
    %v2799 = vld [vmem:[#allocation16 + $0x90] sm:$0xff]
    %v2800 = vld [vmem:[#allocation16 + $0x98] sm:$0xff]
    %v2801 = vld [vmem:[#allocation16 + $0xa0] sm:$0xff]
    %v2802 = vld [vmem:[#allocation16 + $0xa8] sm:$0xff]
    %v2803 = vld [vmem:[#allocation16 + $0xb0] sm:$0xff]
    %v2804 = vld [vmem:[#allocation16 + $0xb8] sm:$0xff]
    %v2805 = vld [vmem:[#allocation16 + $0xc0] sm:$0xff]
    %v2806 = vld [vmem:[#allocation16 + $0xc8] sm:$0xff]
    %v2807 = vld [vmem:[#allocation16 + $0xd0] sm:$0xff]
    %v2808 = vld [vmem:[#allocation16 + $0xd8] sm:$0xff]
    %v2809 = vld [vmem:[#allocation16 + $0xe0] sm:$0xff]
    %v2810 = vld [vmem:[#allocation16 + $0xe8] sm:$0xff]
    %v2811 = vld [vmem:[#allocation16 + $0xf0] sm:$0xff]
    %v2812 = vld [vmem:[#allocation16 + $0xf8] sm:$0xff]
    %v2813 = vld [vmem:[%s55] sm:$0x3]
    %v2815 = vperm.slane %v2813, 0
    %v2816 = vperm.slane %v2813, 1
    %2819 = vmatpush.msra.mxu0 %v2811
    %2820 = vmatpush.msra.mxu0 %v2809
    %2821 = vmatpush.msra.mxu0 %v2807
    %2822 = vmatpush.msra.mxu0 %v2805
    %2823 = vmatpush.msra.mxu0 %v2803
    %2824 = vmatpush.msra.mxu0 %v2801
    %2825 = vmatpush.msra.mxu0 %v2799
    %2826 = vmatpush.msra.mxu0 %v2797
    %2827 = vmatpush.msra.mxu0 %v2795
    %2828 = vmatpush.msra.mxu0 %v2793
    %2829 = vmatpush.msra.mxu0 %v2791
    %2830 = vmatpush.msra.mxu0 %v2789
    %2831 = vmatpush.msra.mxu0 %v2787
    %2832 = vmatpush.msra.mxu0 %v2785
    %2833 = vmatpush.msra.mxu0 %v2783
    %2834 = vmatpush.msra.mxu0 %v2781
    %2835 = vmatmul.f32.gmra.mxu0 %v2736
    %v2836 = vpop.f32.mrf.mxu0
    %v2837 = vadd.f32 %v2815, %v2836
    %2838 = vdwg.mxu0
    %2839 = vmatpush.msra.mxu0 %v2812
    %2840 = vmatpush.msra.mxu0 %v2810
    %2841 = vmatpush.msra.mxu0 %v2808
    %2842 = vmatpush.msra.mxu0 %v2806
    %2843 = vmatpush.msra.mxu0 %v2804
    %2844 = vmatpush.msra.mxu0 %v2802
    %2845 = vmatpush.msra.mxu0 %v2800
    %2846 = vmatpush.msra.mxu0 %v2798
    %2847 = vmatpush.msra.mxu0 %v2796
    %2848 = vmatpush.msra.mxu0 %v2794
    %2849 = vmatpush.msra.mxu0 %v2792
    %2850 = vmatpush.msra.mxu0 %v2790
    %2851 = vmatpush.msra.mxu0 %v2788
    %2852 = vmatpush.msra.mxu0 %v2786
    %2853 = vmatpush.msra.mxu0 %v2784
    %2854 = vmatpush.msra.mxu0 %v2782
    %2855 = vmatmul.f32.gmra.mxu0 %v2736
    %v2856 = vpop.f32.mrf.mxu0
    %v2857 = vadd.f32 %v2816, %v2856
    %2858 = vdwg.mxu0
    %v2860 = vsel %vm576, %v2776, 0
    %v2863 = vsel %vm576, %v2837, 0
    %2865 = vmatpush.xpose.msra.mxu0 0.0
    %2866 = vmatpush.xpose.msra.mxu0 0.0
    %2867 = vmatpush.xpose.msra.mxu0 0.0
    %2868 = vmatpush.xpose.msra.mxu0 0.0
    %2869 = vmatpush.xpose.msra.mxu0 0.0
    %2870 = vmatpush.xpose.msra.mxu0 0.0
    %2871 = vmatpush.xpose.msra.mxu0 0.0
    %2872 = vmatpush.xpose.msra.mxu0 0.0
    %2873 = vmatpush.xpose.msra.mxu0 0.0
    %2874 = vmatpush.xpose.msra.mxu0 0.0
    %2875 = vmatpush.xpose.msra.mxu0 0.0
    %2876 = vmatpush.xpose.msra.mxu0 0.0
    %2877 = vmatpush.xpose.msra.mxu0 0.0
    %2878 = vmatpush.xpose.msra.mxu0 0.0
    %2879 = vmatpush.xpose.msra.mxu0 0.0
    %2880 = vmatpush.xpose.msra.mxu0 %v2863
    %2881 = vmatmul.f32.gmra.mxu0 %v2860
    %v2882 = vpop.f32.mrf.mxu0
    %v2883 = vadd.f32 0.0, %v2882
    %2884 = vdwg.mxu0
    %v2885 = vsel %vm603, %v2883, -inf
    %2886 = vmax.xlane.f32.xlu0 %v2885
    %v2887 = vpop.xlane.xlu0 %2886
    %v2888 = vsub.f32 %v2883, %v2887
    %v2889 = vmul.f32 %v2888, 1.442695
    %v2890 = vpow.pop %v2889
    %v2891 = vsel %vm603, %v2890, 0.0
    %2892 = vadd.xlane.f32.xlu0 %v2891
    %v2893 = vpop.xlane.xlu0 %2892
    %v2894 = vrcp.pop %v2893
    %v2895 = vmul.f32 %v2893, %v2894
    %v2896 = vsub.f32 1.0, %v2895
    %v2897 = vmul.f32 %v2894, %v2896
    %v2898 = vadd.f32 %v2894, %v2897
    %vm2899 = vweird.f32 %v2893
    %vm2900 = vweird.f32 %v2894
    %vm2901 = vmor %vm2899, %vm2900
    %v2902 = vsel %vm2901, %v2894, %v2898
    %v2903 = vand.u32 2147483647, %v2893
    %vm2904 = vcmp.eq.f32.partialorder %v2903, 8.507059e+37
    %v2905 = vand.u32 %v2893, 2147483648
    %v2906 = vor.u32 1.1754944e-38, %v2905
    %v2907 = vsel %vm2904, %v2906, %v2902
    %v2908 = vmul.f32 %v2890, %v2907
    %v2910 = vsel %vm603, %v2908, 0
    %2912 = vmatpush.msra.mxu0 0.0
    %2913 = vmatpush.msra.mxu0 0.0
    %2914 = vmatpush.msra.mxu0 0.0
    %2915 = vmatpush.msra.mxu0 0.0
    %2916 = vmatpush.msra.mxu0 0.0
    %2917 = vmatpush.msra.mxu0 0.0
    %2918 = vmatpush.msra.mxu0 0.0
    %2919 = vmatpush.msra.mxu0 0.0
    %2920 = vmatpush.msra.mxu0 0.0
    %2921 = vmatpush.msra.mxu0 0.0
    %2922 = vmatpush.msra.mxu0 0.0
    %2923 = vmatpush.msra.mxu0 0.0
    %2924 = vmatpush.msra.mxu0 0.0
    %2925 = vmatpush.msra.mxu0 0.0
    %2926 = vmatpush.msra.mxu0 0.0
    %2927 = vmatpush.msra.mxu0 %v2857
    %2928 = vmatmul.f32.gmra.mxu0 %v2910
    %v2929 = vpop.f32.mrf.mxu0
    %v2930 = vadd.f32 0.0, %v2929
    %2931 = vdwg.mxu0
    %2932 = vrot.lane.b32.xlu0 %v2776, 96
    %v2933 = vpop.permute.xlu0 %2932
    %2934 = vrot.lane.b32.xlu0 %v2837, 96
    %v2935 = vpop.permute.xlu0 %2934
    %v2936 = vsel %vm576, %v2933, 0
    %v2938 = vsel %vm576, %v2935, 0
    %2940 = vmatpush.xpose.msra.mxu0 0.0
    %2941 = vmatpush.xpose.msra.mxu0 0.0
    %2942 = vmatpush.xpose.msra.mxu0 0.0
    %2943 = vmatpush.xpose.msra.mxu0 0.0
    %2944 = vmatpush.xpose.msra.mxu0 0.0
    %2945 = vmatpush.xpose.msra.mxu0 0.0
    %2946 = vmatpush.xpose.msra.mxu0 0.0
    %2947 = vmatpush.xpose.msra.mxu0 0.0
    %2948 = vmatpush.xpose.msra.mxu0 0.0
    %2949 = vmatpush.xpose.msra.mxu0 0.0
    %2950 = vmatpush.xpose.msra.mxu0 0.0
    %2951 = vmatpush.xpose.msra.mxu0 0.0
    %2952 = vmatpush.xpose.msra.mxu0 0.0
    %2953 = vmatpush.xpose.msra.mxu0 0.0
    %2954 = vmatpush.xpose.msra.mxu0 0.0
    %2955 = vmatpush.xpose.msra.mxu0 %v2938
    %2956 = vmatmul.f32.gmra.mxu0 %v2936
    %v2957 = vpop.f32.mrf.mxu0
    %v2958 = vadd.f32 0.0, %v2957
    %2959 = vdwg.mxu0
    %v2960 = vsel %vm603, %v2958, -inf
    %2961 = vmax.xlane.f32.xlu0 %v2960
    %v2962 = vpop.xlane.xlu0 %2961
    %v2963 = vsub.f32 %v2958, %v2962
    %v2964 = vmul.f32 %v2963, 1.442695
    %v2965 = vpow.pop %v2964
    %v2966 = vsel %vm603, %v2965, 0.0
    %2967 = vadd.xlane.f32.xlu0 %v2966
    %v2968 = vpop.xlane.xlu0 %2967
    %v2969 = vrcp.pop %v2968
    %v2970 = vmul.f32 %v2968, %v2969
    %v2971 = vsub.f32 1.0, %v2970
    %v2972 = vmul.f32 %v2969, %v2971
    %v2973 = vadd.f32 %v2969, %v2972
    %vm2974 = vweird.f32 %v2968
    %vm2975 = vweird.f32 %v2969
    %vm2976 = vmor %vm2974, %vm2975
    %v2977 = vsel %vm2976, %v2969, %v2973
    %v2978 = vand.u32 2147483647, %v2968
    %vm2979 = vcmp.eq.f32.partialorder %v2978, 8.507059e+37
    %v2980 = vand.u32 %v2968, 2147483648
    %v2981 = vor.u32 1.1754944e-38, %v2980
    %v2982 = vsel %vm2979, %v2981, %v2977
    %v2983 = vmul.f32 %v2965, %v2982
    %2985 = vrot.lane.b32.xlu0 %v2857, 96
    %v2986 = vpop.permute.xlu0 %2985
    %v2989 = vsel %vm603, %v2983, 0
    %2991 = vmatpush.msra.mxu0 0.0
    %2992 = vmatpush.msra.mxu0 0.0
    %2993 = vmatpush.msra.mxu0 0.0
    %2994 = vmatpush.msra.mxu0 0.0
    %2995 = vmatpush.msra.mxu0 0.0
    %2996 = vmatpush.msra.mxu0 0.0
    %2997 = vmatpush.msra.mxu0 0.0
    %2998 = vmatpush.msra.mxu0 0.0
    %2999 = vmatpush.msra.mxu0 0.0
    %3000 = vmatpush.msra.mxu0 0.0
    %3001 = vmatpush.msra.mxu0 0.0
    %3002 = vmatpush.msra.mxu0 0.0
    %3003 = vmatpush.msra.mxu0 0.0
    %3004 = vmatpush.msra.mxu0 0.0
    %3005 = vmatpush.msra.mxu0 0.0
    %3006 = vmatpush.msra.mxu0 %v2986
    %3007 = vmatmul.f32.gmra.mxu0 %v2989
    %v3008 = vpop.f32.mrf.mxu0
    %v3009 = vadd.f32 0.0, %v3008
    %3010 = vdwg.mxu0
    %3011 = vrot.lane.b32.xlu0 %v2776, 64
    %v3012 = vpop.permute.xlu0 %3011
    %3013 = vrot.lane.b32.xlu0 %v2837, 64
    %v3014 = vpop.permute.xlu0 %3013
    %v3015 = vsel %vm576, %v3012, 0
    %v3017 = vsel %vm576, %v3014, 0
    %3019 = vmatpush.xpose.msra.mxu0 0.0
    %3020 = vmatpush.xpose.msra.mxu0 0.0
    %3021 = vmatpush.xpose.msra.mxu0 0.0
    %3022 = vmatpush.xpose.msra.mxu0 0.0
    %3023 = vmatpush.xpose.msra.mxu0 0.0
    %3024 = vmatpush.xpose.msra.mxu0 0.0
    %3025 = vmatpush.xpose.msra.mxu0 0.0
    %3026 = vmatpush.xpose.msra.mxu0 0.0
    %3027 = vmatpush.xpose.msra.mxu0 0.0
    %3028 = vmatpush.xpose.msra.mxu0 0.0
    %3029 = vmatpush.xpose.msra.mxu0 0.0
    %3030 = vmatpush.xpose.msra.mxu0 0.0
    %3031 = vmatpush.xpose.msra.mxu0 0.0
    %3032 = vmatpush.xpose.msra.mxu0 0.0
    %3033 = vmatpush.xpose.msra.mxu0 0.0
    %3034 = vmatpush.xpose.msra.mxu0 %v3017
    %3035 = vmatmul.f32.gmra.mxu0 %v3015
    %v3036 = vpop.f32.mrf.mxu0
    %v3037 = vadd.f32 0.0, %v3036
    %3038 = vdwg.mxu0
    %v3039 = vsel %vm603, %v3037, -inf
    %3040 = vmax.xlane.f32.xlu0 %v3039
    %v3041 = vpop.xlane.xlu0 %3040
    %v3042 = vsub.f32 %v3037, %v3041
    %v3043 = vmul.f32 %v3042, 1.442695
    %v3044 = vpow.pop %v3043
    %v3045 = vsel %vm603, %v3044, 0.0
    %3046 = vadd.xlane.f32.xlu0 %v3045
    %v3047 = vpop.xlane.xlu0 %3046
    %v3048 = vrcp.pop %v3047
    %v3049 = vmul.f32 %v3047, %v3048
    %v3050 = vsub.f32 1.0, %v3049
    %v3051 = vmul.f32 %v3048, %v3050
    %v3052 = vadd.f32 %v3048, %v3051
    %vm3053 = vweird.f32 %v3047
    %vm3054 = vweird.f32 %v3048
    %vm3055 = vmor %vm3053, %vm3054
    %v3056 = vsel %vm3055, %v3048, %v3052
    %v3057 = vand.u32 2147483647, %v3047
    %vm3058 = vcmp.eq.f32.partialorder %v3057, 8.507059e+37
    %v3059 = vand.u32 %v3047, 2147483648
    %v3060 = vor.u32 1.1754944e-38, %v3059
    %v3061 = vsel %vm3058, %v3060, %v3056
    %v3062 = vmul.f32 %v3044, %v3061
    %3063 = vrot.lane.b32.xlu0 %v2857, 64
    %v3064 = vpop.permute.xlu0 %3063
    %v3067 = vsel %vm603, %v3062, 0
    %3069 = vmatpush.msra.mxu0 0.0
    %3070 = vmatpush.msra.mxu0 0.0
    %3071 = vmatpush.msra.mxu0 0.0
    %3072 = vmatpush.msra.mxu0 0.0
    %3073 = vmatpush.msra.mxu0 0.0
    %3074 = vmatpush.msra.mxu0 0.0
    %3075 = vmatpush.msra.mxu0 0.0
    %3076 = vmatpush.msra.mxu0 0.0
    %3077 = vmatpush.msra.mxu0 0.0
    %3078 = vmatpush.msra.mxu0 0.0
    %3079 = vmatpush.msra.mxu0 0.0
    %3080 = vmatpush.msra.mxu0 0.0
    %3081 = vmatpush.msra.mxu0 0.0
    %3082 = vmatpush.msra.mxu0 0.0
    %3083 = vmatpush.msra.mxu0 0.0
    %3084 = vmatpush.msra.mxu0 %v3064
    %3085 = vmatmul.f32.gmra.mxu0 %v3067
    %v3086 = vpop.f32.mrf.mxu0
    %v3087 = vadd.f32 0.0, %v3086
    %3088 = vdwg.mxu0
    %3089 = vrot.lane.b32.xlu0 %v2776, 32
    %v3090 = vpop.permute.xlu0 %3089
    %3091 = vrot.lane.b32.xlu0 %v2837, 32
    %v3092 = vpop.permute.xlu0 %3091
    %v3093 = vsel %vm576, %v3090, 0
    %v3095 = vsel %vm576, %v3092, 0
    %3097 = vmatpush.xpose.msra.mxu0 0.0
    %3098 = vmatpush.xpose.msra.mxu0 0.0
    %3099 = vmatpush.xpose.msra.mxu0 0.0
    %3100 = vmatpush.xpose.msra.mxu0 0.0
    %3101 = vmatpush.xpose.msra.mxu0 0.0
    %3102 = vmatpush.xpose.msra.mxu0 0.0
    %3103 = vmatpush.xpose.msra.mxu0 0.0
    %3104 = vmatpush.xpose.msra.mxu0 0.0
    %3105 = vmatpush.xpose.msra.mxu0 0.0
    %3106 = vmatpush.xpose.msra.mxu0 0.0
    %3107 = vmatpush.xpose.msra.mxu0 0.0
    %3108 = vmatpush.xpose.msra.mxu0 0.0
    %3109 = vmatpush.xpose.msra.mxu0 0.0
    %3110 = vmatpush.xpose.msra.mxu0 0.0
    %3111 = vmatpush.xpose.msra.mxu0 0.0
    %3112 = vmatpush.xpose.msra.mxu0 %v3095
    %3113 = vmatmul.f32.gmra.mxu0 %v3093
    %v3114 = vpop.f32.mrf.mxu0
    %v3115 = vadd.f32 0.0, %v3114
    %3116 = vdwg.mxu0
    %v3117 = vsel %vm603, %v3115, -inf
    %3118 = vmax.xlane.f32.xlu0 %v3117
    %v3119 = vpop.xlane.xlu0 %3118
    %v3120 = vsub.f32 %v3115, %v3119
    %v3121 = vmul.f32 %v3120, 1.442695
    %v3122 = vpow.pop %v3121
    %v3123 = vsel %vm603, %v3122, 0.0
    %3124 = vadd.xlane.f32.xlu0 %v3123
    %v3125 = vpop.xlane.xlu0 %3124
    %v3126 = vrcp.pop %v3125
    %v3127 = vmul.f32 %v3125, %v3126
    %v3128 = vsub.f32 1.0, %v3127
    %v3129 = vmul.f32 %v3126, %v3128
    %v3130 = vadd.f32 %v3126, %v3129
    %vm3131 = vweird.f32 %v3125
    %vm3132 = vweird.f32 %v3126
    %vm3133 = vmor %vm3131, %vm3132
    %v3134 = vsel %vm3133, %v3126, %v3130
    %v3135 = vand.u32 2147483647, %v3125
    %vm3136 = vcmp.eq.f32.partialorder %v3135, 8.507059e+37
    %v3137 = vand.u32 %v3125, 2147483648
    %v3138 = vor.u32 1.1754944e-38, %v3137
    %v3139 = vsel %vm3136, %v3138, %v3134
    %v3140 = vmul.f32 %v3122, %v3139
    %3141 = vrot.lane.b32.xlu0 %v2857, 32
    %v3142 = vpop.permute.xlu0 %3141
    %v3145 = vsel %vm603, %v3140, 0
    %3147 = vmatpush.msra.mxu0 0.0
    %3148 = vmatpush.msra.mxu0 0.0
    %3149 = vmatpush.msra.mxu0 0.0
    %3150 = vmatpush.msra.mxu0 0.0
    %3151 = vmatpush.msra.mxu0 0.0
    %3152 = vmatpush.msra.mxu0 0.0
    %3153 = vmatpush.msra.mxu0 0.0
    %3154 = vmatpush.msra.mxu0 0.0
    %3155 = vmatpush.msra.mxu0 0.0
    %3156 = vmatpush.msra.mxu0 0.0
    %3157 = vmatpush.msra.mxu0 0.0
    %3158 = vmatpush.msra.mxu0 0.0
    %3159 = vmatpush.msra.mxu0 0.0
    %3160 = vmatpush.msra.mxu0 0.0
    %3161 = vmatpush.msra.mxu0 0.0
    %3162 = vmatpush.msra.mxu0 %v3142
    %3163 = vmatmul.f32.gmra.mxu0 %v3145
    %v3164 = vpop.f32.mrf.mxu0
    %v3165 = vadd.f32 0.0, %v3164
    %3166 = vdwg.mxu0
    %3168 = vrot.lane.b32.xlu0 %v3009, 32
    %v3169 = vpop.permute.xlu0 %3168
    %3172 = vrot.lane.b32.xlu0 %v3087, 64
    %v3173 = vpop.permute.xlu0 %3172
    %3176 = vrot.lane.b32.xlu0 %v3165, 96
    %v3177 = vpop.permute.xlu0 %3176
    %v3179 = vsel %vm576, %v2930, %v3169
    %v3180 = vsel %vm899, %v3179, %v3173
    %v3181 = vsel %vm901, %v3180, %v3177
    %3182 = vmatpush.msra.mxu0 %v2811
    %3183 = vmatpush.msra.mxu0 %v2809
    %3184 = vmatpush.msra.mxu0 %v2807
    %3185 = vmatpush.msra.mxu0 %v2805
    %3186 = vmatpush.msra.mxu0 %v2803
    %3187 = vmatpush.msra.mxu0 %v2801
    %3188 = vmatpush.msra.mxu0 %v2799
    %3189 = vmatpush.msra.mxu0 %v2797
    %3190 = vmatpush.msra.mxu0 %v2795
    %3191 = vmatpush.msra.mxu0 %v2793
    %3192 = vmatpush.msra.mxu0 %v2791
    %3193 = vmatpush.msra.mxu0 %v2789
    %3194 = vmatpush.msra.mxu0 %v2787
    %3195 = vmatpush.msra.mxu0 %v2785
    %3196 = vmatpush.msra.mxu0 %v2783
    %3197 = vmatpush.msra.mxu0 %v2781
    %3198 = vmatmul.f32.gmra.mxu0 %v2737
    %v3199 = vpop.f32.mrf.mxu0
    %v3200 = vadd.f32 %v2815, %v3199
    %3201 = vdwg.mxu0
    %3202 = vmatpush.msra.mxu0 %v2812
    %3203 = vmatpush.msra.mxu0 %v2810
    %3204 = vmatpush.msra.mxu0 %v2808
    %3205 = vmatpush.msra.mxu0 %v2806
    %3206 = vmatpush.msra.mxu0 %v2804
    %3207 = vmatpush.msra.mxu0 %v2802
    %3208 = vmatpush.msra.mxu0 %v2800
    %3209 = vmatpush.msra.mxu0 %v2798
    %3210 = vmatpush.msra.mxu0 %v2796
    %3211 = vmatpush.msra.mxu0 %v2794
    %3212 = vmatpush.msra.mxu0 %v2792
    %3213 = vmatpush.msra.mxu0 %v2790
    %3214 = vmatpush.msra.mxu0 %v2788
    %3215 = vmatpush.msra.mxu0 %v2786
    %3216 = vmatpush.msra.mxu0 %v2784
    %3217 = vmatpush.msra.mxu0 %v2782
    %3218 = vmatmul.f32.gmra.mxu0 %v2737
    %v3219 = vpop.f32.mrf.mxu0
    %v3220 = vadd.f32 %v2816, %v3219
    %3221 = vdwg.mxu0
    %v3223 = vsel %vm576, %v2779, 0
    %v3226 = vsel %vm576, %v3200, 0
    %3228 = vmatpush.xpose.msra.mxu0 0.0
    %3229 = vmatpush.xpose.msra.mxu0 0.0
    %3230 = vmatpush.xpose.msra.mxu0 0.0
    %3231 = vmatpush.xpose.msra.mxu0 0.0
    %3232 = vmatpush.xpose.msra.mxu0 0.0
    %3233 = vmatpush.xpose.msra.mxu0 0.0
    %3234 = vmatpush.xpose.msra.mxu0 0.0
    %3235 = vmatpush.xpose.msra.mxu0 0.0
    %3236 = vmatpush.xpose.msra.mxu0 0.0
    %3237 = vmatpush.xpose.msra.mxu0 0.0
    %3238 = vmatpush.xpose.msra.mxu0 0.0
    %3239 = vmatpush.xpose.msra.mxu0 0.0
    %3240 = vmatpush.xpose.msra.mxu0 0.0
    %3241 = vmatpush.xpose.msra.mxu0 0.0
    %3242 = vmatpush.xpose.msra.mxu0 0.0
    %3243 = vmatpush.xpose.msra.mxu0 %v3226
    %3244 = vmatmul.f32.gmra.mxu0 %v3223
    %v3245 = vpop.f32.mrf.mxu0
    %v3246 = vadd.f32 0.0, %v3245
    %3247 = vdwg.mxu0
    %v3248 = vsel %vm603, %v3246, -inf
    %3249 = vmax.xlane.f32.xlu0 %v3248
    %v3250 = vpop.xlane.xlu0 %3249
    %v3251 = vsub.f32 %v3246, %v3250
    %v3252 = vmul.f32 %v3251, 1.442695
    %v3253 = vpow.pop %v3252
    %v3254 = vsel %vm603, %v3253, 0.0
    %3255 = vadd.xlane.f32.xlu0 %v3254
    %v3256 = vpop.xlane.xlu0 %3255
    %v3257 = vrcp.pop %v3256
    %v3258 = vmul.f32 %v3256, %v3257
    %v3259 = vsub.f32 1.0, %v3258
    %v3260 = vmul.f32 %v3257, %v3259
    %v3261 = vadd.f32 %v3257, %v3260
    %vm3262 = vweird.f32 %v3256
    %vm3263 = vweird.f32 %v3257
    %vm3264 = vmor %vm3262, %vm3263
    %v3265 = vsel %vm3264, %v3257, %v3261
    %v3266 = vand.u32 2147483647, %v3256
    %vm3267 = vcmp.eq.f32.partialorder %v3266, 8.507059e+37
    %v3268 = vand.u32 %v3256, 2147483648
    %v3269 = vor.u32 1.1754944e-38, %v3268
    %v3270 = vsel %vm3267, %v3269, %v3265
    %v3271 = vmul.f32 %v3253, %v3270
    %v3273 = vsel %vm603, %v3271, 0
    %3275 = vmatpush.msra.mxu0 0.0
    %3276 = vmatpush.msra.mxu0 0.0
    %3277 = vmatpush.msra.mxu0 0.0
    %3278 = vmatpush.msra.mxu0 0.0
    %3279 = vmatpush.msra.mxu0 0.0
    %3280 = vmatpush.msra.mxu0 0.0
    %3281 = vmatpush.msra.mxu0 0.0
    %3282 = vmatpush.msra.mxu0 0.0
    %3283 = vmatpush.msra.mxu0 0.0
    %3284 = vmatpush.msra.mxu0 0.0
    %3285 = vmatpush.msra.mxu0 0.0
    %3286 = vmatpush.msra.mxu0 0.0
    %3287 = vmatpush.msra.mxu0 0.0
    %3288 = vmatpush.msra.mxu0 0.0
    %3289 = vmatpush.msra.mxu0 0.0
    %3290 = vmatpush.msra.mxu0 %v3220
    %3291 = vmatmul.f32.gmra.mxu0 %v3273
    %v3292 = vpop.f32.mrf.mxu0
    %v3293 = vadd.f32 0.0, %v3292
    %3294 = vdwg.mxu0
    %3295 = vrot.lane.b32.xlu0 %v2779, 96
    %v3296 = vpop.permute.xlu0 %3295
    %3297 = vrot.lane.b32.xlu0 %v3200, 96
    %v3298 = vpop.permute.xlu0 %3297
    %v3299 = vsel %vm576, %v3296, 0
    %v3301 = vsel %vm576, %v3298, 0
    %3303 = vmatpush.xpose.msra.mxu0 0.0
    %3304 = vmatpush.xpose.msra.mxu0 0.0
    %3305 = vmatpush.xpose.msra.mxu0 0.0
    %3306 = vmatpush.xpose.msra.mxu0 0.0
    %3307 = vmatpush.xpose.msra.mxu0 0.0
    %3308 = vmatpush.xpose.msra.mxu0 0.0
    %3309 = vmatpush.xpose.msra.mxu0 0.0
    %3310 = vmatpush.xpose.msra.mxu0 0.0
    %3311 = vmatpush.xpose.msra.mxu0 0.0
    %3312 = vmatpush.xpose.msra.mxu0 0.0
    %3313 = vmatpush.xpose.msra.mxu0 0.0
    %3314 = vmatpush.xpose.msra.mxu0 0.0
    %3315 = vmatpush.xpose.msra.mxu0 0.0
    %3316 = vmatpush.xpose.msra.mxu0 0.0
    %3317 = vmatpush.xpose.msra.mxu0 0.0
    %3318 = vmatpush.xpose.msra.mxu0 %v3301
    %3319 = vmatmul.f32.gmra.mxu0 %v3299
    %v3320 = vpop.f32.mrf.mxu0
    %v3321 = vadd.f32 0.0, %v3320
    %3322 = vdwg.mxu0
    %v3323 = vsel %vm603, %v3321, -inf
    %3324 = vmax.xlane.f32.xlu0 %v3323
    %v3325 = vpop.xlane.xlu0 %3324
    %v3326 = vsub.f32 %v3321, %v3325
    %v3327 = vmul.f32 %v3326, 1.442695
    %v3328 = vpow.pop %v3327
    %v3329 = vsel %vm603, %v3328, 0.0
    %3330 = vadd.xlane.f32.xlu0 %v3329
    %v3331 = vpop.xlane.xlu0 %3330
    %v3332 = vrcp.pop %v3331
    %v3333 = vmul.f32 %v3331, %v3332
    %v3334 = vsub.f32 1.0, %v3333
    %v3335 = vmul.f32 %v3332, %v3334
    %v3336 = vadd.f32 %v3332, %v3335
    %vm3337 = vweird.f32 %v3331
    %vm3338 = vweird.f32 %v3332
    %vm3339 = vmor %vm3337, %vm3338
    %v3340 = vsel %vm3339, %v3332, %v3336
    %v3341 = vand.u32 2147483647, %v3331
    %vm3342 = vcmp.eq.f32.partialorder %v3341, 8.507059e+37
    %v3343 = vand.u32 %v3331, 2147483648
    %v3344 = vor.u32 1.1754944e-38, %v3343
    %v3345 = vsel %vm3342, %v3344, %v3340
    %v3346 = vmul.f32 %v3328, %v3345
    %3348 = vrot.lane.b32.xlu0 %v3220, 96
    %v3349 = vpop.permute.xlu0 %3348
    %v3352 = vsel %vm603, %v3346, 0
    %3354 = vmatpush.msra.mxu0 0.0
    %3355 = vmatpush.msra.mxu0 0.0
    %3356 = vmatpush.msra.mxu0 0.0
    %3357 = vmatpush.msra.mxu0 0.0
    %3358 = vmatpush.msra.mxu0 0.0
    %3359 = vmatpush.msra.mxu0 0.0
    %3360 = vmatpush.msra.mxu0 0.0
    %3361 = vmatpush.msra.mxu0 0.0
    %3362 = vmatpush.msra.mxu0 0.0
    %3363 = vmatpush.msra.mxu0 0.0
    %3364 = vmatpush.msra.mxu0 0.0
    %3365 = vmatpush.msra.mxu0 0.0
    %3366 = vmatpush.msra.mxu0 0.0
    %3367 = vmatpush.msra.mxu0 0.0
    %3368 = vmatpush.msra.mxu0 0.0
    %3369 = vmatpush.msra.mxu0 %v3349
    %3370 = vmatmul.f32.gmra.mxu0 %v3352
    %v3371 = vpop.f32.mrf.mxu0
    %v3372 = vadd.f32 0.0, %v3371
    %3373 = vdwg.mxu0
    %3374 = vrot.lane.b32.xlu0 %v2779, 64
    %v3375 = vpop.permute.xlu0 %3374
    %3376 = vrot.lane.b32.xlu0 %v3200, 64
    %v3377 = vpop.permute.xlu0 %3376
    %v3378 = vsel %vm576, %v3375, 0
    %v3380 = vsel %vm576, %v3377, 0
    %3382 = vmatpush.xpose.msra.mxu0 0.0
    %3383 = vmatpush.xpose.msra.mxu0 0.0
    %3384 = vmatpush.xpose.msra.mxu0 0.0
    %3385 = vmatpush.xpose.msra.mxu0 0.0
    %3386 = vmatpush.xpose.msra.mxu0 0.0
    %3387 = vmatpush.xpose.msra.mxu0 0.0
    %3388 = vmatpush.xpose.msra.mxu0 0.0
    %3389 = vmatpush.xpose.msra.mxu0 0.0
    %3390 = vmatpush.xpose.msra.mxu0 0.0
    %3391 = vmatpush.xpose.msra.mxu0 0.0
    %3392 = vmatpush.xpose.msra.mxu0 0.0
    %3393 = vmatpush.xpose.msra.mxu0 0.0
    %3394 = vmatpush.xpose.msra.mxu0 0.0
    %3395 = vmatpush.xpose.msra.mxu0 0.0
    %3396 = vmatpush.xpose.msra.mxu0 0.0
    %3397 = vmatpush.xpose.msra.mxu0 %v3380
    %3398 = vmatmul.f32.gmra.mxu0 %v3378
    %v3399 = vpop.f32.mrf.mxu0
    %v3400 = vadd.f32 0.0, %v3399
    %3401 = vdwg.mxu0
    %v3402 = vsel %vm603, %v3400, -inf
    %3403 = vmax.xlane.f32.xlu0 %v3402
    %v3404 = vpop.xlane.xlu0 %3403
    %v3405 = vsub.f32 %v3400, %v3404
    %v3406 = vmul.f32 %v3405, 1.442695
    %v3407 = vpow.pop %v3406
    %v3408 = vsel %vm603, %v3407, 0.0
    %3409 = vadd.xlane.f32.xlu0 %v3408
    %v3410 = vpop.xlane.xlu0 %3409
    %v3411 = vrcp.pop %v3410
    %v3412 = vmul.f32 %v3410, %v3411
    %v3413 = vsub.f32 1.0, %v3412
    %v3414 = vmul.f32 %v3411, %v3413
    %v3415 = vadd.f32 %v3411, %v3414
    %vm3416 = vweird.f32 %v3410
    %vm3417 = vweird.f32 %v3411
    %vm3418 = vmor %vm3416, %vm3417
    %v3419 = vsel %vm3418, %v3411, %v3415
    %v3420 = vand.u32 2147483647, %v3410
    %vm3421 = vcmp.eq.f32.partialorder %v3420, 8.507059e+37
    %v3422 = vand.u32 %v3410, 2147483648
    %v3423 = vor.u32 1.1754944e-38, %v3422
    %v3424 = vsel %vm3421, %v3423, %v3419
    %v3425 = vmul.f32 %v3407, %v3424
    %3426 = vrot.lane.b32.xlu0 %v3220, 64
    %v3427 = vpop.permute.xlu0 %3426
    %v3430 = vsel %vm603, %v3425, 0
    %3432 = vmatpush.msra.mxu0 0.0
    %3433 = vmatpush.msra.mxu0 0.0
    %3434 = vmatpush.msra.mxu0 0.0
    %3435 = vmatpush.msra.mxu0 0.0
    %3436 = vmatpush.msra.mxu0 0.0
    %3437 = vmatpush.msra.mxu0 0.0
    %3438 = vmatpush.msra.mxu0 0.0
    %3439 = vmatpush.msra.mxu0 0.0
    %3440 = vmatpush.msra.mxu0 0.0
    %3441 = vmatpush.msra.mxu0 0.0
    %3442 = vmatpush.msra.mxu0 0.0
    %3443 = vmatpush.msra.mxu0 0.0
    %3444 = vmatpush.msra.mxu0 0.0
    %3445 = vmatpush.msra.mxu0 0.0
    %3446 = vmatpush.msra.mxu0 0.0
    %3447 = vmatpush.msra.mxu0 %v3427
    %3448 = vmatmul.f32.gmra.mxu0 %v3430
    %v3449 = vpop.f32.mrf.mxu0
    %v3450 = vadd.f32 0.0, %v3449
    %3451 = vdwg.mxu0
    %3452 = vrot.lane.b32.xlu0 %v2779, 32
    %v3453 = vpop.permute.xlu0 %3452
    %3454 = vrot.lane.b32.xlu0 %v3200, 32
    %v3455 = vpop.permute.xlu0 %3454
    %v3456 = vsel %vm576, %v3453, 0
    %v3458 = vsel %vm576, %v3455, 0
    %3460 = vmatpush.xpose.msra.mxu0 0.0
    %3461 = vmatpush.xpose.msra.mxu0 0.0
    %3462 = vmatpush.xpose.msra.mxu0 0.0
    %3463 = vmatpush.xpose.msra.mxu0 0.0
    %3464 = vmatpush.xpose.msra.mxu0 0.0
    %3465 = vmatpush.xpose.msra.mxu0 0.0
    %3466 = vmatpush.xpose.msra.mxu0 0.0
    %3467 = vmatpush.xpose.msra.mxu0 0.0
    %3468 = vmatpush.xpose.msra.mxu0 0.0
    %3469 = vmatpush.xpose.msra.mxu0 0.0
    %3470 = vmatpush.xpose.msra.mxu0 0.0
    %3471 = vmatpush.xpose.msra.mxu0 0.0
    %3472 = vmatpush.xpose.msra.mxu0 0.0
    %3473 = vmatpush.xpose.msra.mxu0 0.0
    %3474 = vmatpush.xpose.msra.mxu0 0.0
    %3475 = vmatpush.xpose.msra.mxu0 %v3458
    %3476 = vmatmul.f32.gmra.mxu0 %v3456
    %v3477 = vpop.f32.mrf.mxu0
    %v3478 = vadd.f32 0.0, %v3477
    %3479 = vdwg.mxu0
    %v3480 = vsel %vm603, %v3478, -inf
    %3481 = vmax.xlane.f32.xlu0 %v3480
    %v3482 = vpop.xlane.xlu0 %3481
    %v3483 = vsub.f32 %v3478, %v3482
    %v3484 = vmul.f32 %v3483, 1.442695
    %v3485 = vpow.pop %v3484
    %v3486 = vsel %vm603, %v3485, 0.0
    %3487 = vadd.xlane.f32.xlu0 %v3486
    %v3488 = vpop.xlane.xlu0 %3487
    %v3489 = vrcp.pop %v3488
    %v3490 = vmul.f32 %v3488, %v3489
    %v3491 = vsub.f32 1.0, %v3490
    %v3492 = vmul.f32 %v3489, %v3491
    %v3493 = vadd.f32 %v3489, %v3492
    %vm3494 = vweird.f32 %v3488
    %vm3495 = vweird.f32 %v3489
    %vm3496 = vmor %vm3494, %vm3495
    %v3497 = vsel %vm3496, %v3489, %v3493
    %v3498 = vand.u32 2147483647, %v3488
    %vm3499 = vcmp.eq.f32.partialorder %v3498, 8.507059e+37
    %v3500 = vand.u32 %v3488, 2147483648
    %v3501 = vor.u32 1.1754944e-38, %v3500
    %v3502 = vsel %vm3499, %v3501, %v3497
    %v3503 = vmul.f32 %v3485, %v3502
    %3504 = vrot.lane.b32.xlu0 %v3220, 32
    %v3505 = vpop.permute.xlu0 %3504
    %v3508 = vsel %vm603, %v3503, 0
    %3510 = vmatpush.msra.mxu0 0.0
    %3511 = vmatpush.msra.mxu0 0.0
    %3512 = vmatpush.msra.mxu0 0.0
    %3513 = vmatpush.msra.mxu0 0.0
    %3514 = vmatpush.msra.mxu0 0.0
    %3515 = vmatpush.msra.mxu0 0.0
    %3516 = vmatpush.msra.mxu0 0.0
    %3517 = vmatpush.msra.mxu0 0.0
    %3518 = vmatpush.msra.mxu0 0.0
    %3519 = vmatpush.msra.mxu0 0.0
    %3520 = vmatpush.msra.mxu0 0.0
    %3521 = vmatpush.msra.mxu0 0.0
    %3522 = vmatpush.msra.mxu0 0.0
    %3523 = vmatpush.msra.mxu0 0.0
    %3524 = vmatpush.msra.mxu0 0.0
    %3525 = vmatpush.msra.mxu0 %v3505
    %3526 = vmatmul.f32.gmra.mxu0 %v3508
    %v3527 = vpop.f32.mrf.mxu0
    %v3528 = vadd.f32 0.0, %v3527
    %3529 = vdwg.mxu0
    %3531 = vrot.lane.b32.xlu0 %v3372, 32
    %v3532 = vpop.permute.xlu0 %3531
    %3535 = vrot.lane.b32.xlu0 %v3450, 64
    %v3536 = vpop.permute.xlu0 %3535
    %3539 = vrot.lane.b32.xlu0 %v3528, 96
    %v3540 = vpop.permute.xlu0 %3539
    %v3542 = vsel %vm576, %v3293, %v3532
    %v3543 = vsel %vm899, %v3542, %v3536
    %v3544 = vsel %vm901, %v3543, %v3540
    %v3545 = vld [vmem:[#allocation17] sm:$0xff]
    %v3546 = vld [vmem:[#allocation17 + $0x8] sm:$0xff]
    %v3547 = vld [vmem:[#allocation17 + $0x10] sm:$0xff]
    %v3548 = vld [vmem:[#allocation17 + $0x18] sm:$0xff]
    %v3549 = vld [vmem:[#allocation17 + $0x20] sm:$0xff]
    %v3550 = vld [vmem:[#allocation17 + $0x28] sm:$0xff]
    %v3551 = vld [vmem:[#allocation17 + $0x30] sm:$0xff]
    %v3552 = vld [vmem:[#allocation17 + $0x38] sm:$0xff]
    %v3553 = vld [vmem:[#allocation17 + $0x40] sm:$0xff]
    %v3554 = vld [vmem:[#allocation17 + $0x48] sm:$0xff]
    %v3555 = vld [vmem:[#allocation17 + $0x50] sm:$0xff]
    %v3556 = vld [vmem:[#allocation17 + $0x58] sm:$0xff]
    %v3557 = vld [vmem:[#allocation17 + $0x60] sm:$0xff]
    %v3558 = vld [vmem:[#allocation17 + $0x68] sm:$0xff]
    %v3559 = vld [vmem:[#allocation17 + $0x70] sm:$0xff]
    %v3560 = vld [vmem:[#allocation17 + $0x78] sm:$0xff]
    %v3561 = vld [vmem:[%s59] sm:$0x1]
    %v3563 = vperm.slane %v3561, 0
    %3565 = vmatpush.msra.mxu0 %v3560
    %3566 = vmatpush.msra.mxu0 %v3559
    %3567 = vmatpush.msra.mxu0 %v3558
    %3568 = vmatpush.msra.mxu0 %v3557
    %3569 = vmatpush.msra.mxu0 %v3556
    %3570 = vmatpush.msra.mxu0 %v3555
    %3571 = vmatpush.msra.mxu0 %v3554
    %3572 = vmatpush.msra.mxu0 %v3553
    %3573 = vmatpush.msra.mxu0 %v3552
    %3574 = vmatpush.msra.mxu0 %v3551
    %3575 = vmatpush.msra.mxu0 %v3550
    %3576 = vmatpush.msra.mxu0 %v3549
    %3577 = vmatpush.msra.mxu0 %v3548
    %3578 = vmatpush.msra.mxu0 %v3547
    %3579 = vmatpush.msra.mxu0 %v3546
    %3580 = vmatpush.msra.mxu0 %v3545
    %3581 = vmatmul.f32.gmra.mxu0 %v3181
    %v3582 = vpop.f32.mrf.mxu0
    %v3583 = vadd.f32 %v3563, %v3582
    %3584 = vmatmul.f32.gmra.mxu0 %v3544
    %v3585 = vpop.f32.mrf.mxu0
    %v3586 = vadd.f32 %v3563, %v3585
    %3587 = vdwg.mxu0
    %v3588 = vadd.f32 %v2736, %v3583
    %v3589 = vadd.f32 %v2737, %v3586
    %3590 = vadd.xlane.f32.xlu0 %v3588
    %v3591 = vpop.xlane.xlu0 %3590
    %3592 = vadd.xlane.f32.xlu0 %v3589
    %v3593 = vpop.xlane.xlu0 %3592
    %v3594 = vmul.f32 %v3591, %v1321
    %v3595 = vmul.f32 %v3593, %v1321
    %v3596 = vsub.f32 %v3588, %v3594
    %v3597 = vsub.f32 %v3589, %v3595
    %v3598 = vmul.f32 %v3596, %v3596
    %v3599 = vmul.f32 %v3597, %v3597
    %3600 = vadd.xlane.f32.xlu0 %v3598
    %v3601 = vpop.xlane.xlu0 %3600
    %3602 = vadd.xlane.f32.xlu0 %v3599
    %v3603 = vpop.xlane.xlu0 %3602
    %v3604 = vmul.f32 %v3601, %v1321
    %v3605 = vmul.f32 %v3603, %v1321
    %v3606 = vadd.f32 %v3604, 1e-05
    %v3607 = vadd.f32 %v3605, 1e-05
    %v3608 = vrsqrt.pop %v3606
    %v3609 = vmul.f32 %v3608, %v3606
    %v3610 = vmul.f32 %v3609, %v3608
    %v3611 = vmul.f32 0.5, %v3610
    %v3612 = vsub.f32 1.5, %v3611
    %v3613 = vmul.f32 %v3608, %v3612
    %vm3614 = vweird.f32 %v3606
    %vm3615 = vweird.f32 %v3608
    %vm3616 = vmor %vm3614, %vm3615
    %v3617 = vsel %vm3616, %v3608, %v3613
    %v3618 = vrsqrt.pop %v3607
    %v3619 = vmul.f32 %v3618, %v3607
    %v3620 = vmul.f32 %v3619, %v3618
    %v3621 = vmul.f32 0.5, %v3620
    %v3622 = vsub.f32 1.5, %v3621
    %v3623 = vmul.f32 %v3618, %v3622
    %vm3624 = vweird.f32 %v3607
    %vm3625 = vweird.f32 %v3618
    %vm3626 = vmor %vm3624, %vm3625
    %v3627 = vsel %vm3626, %v3618, %v3623
    %v3628 = vmul.f32 %v3596, %v3617
    %v3629 = vmul.f32 %v3597, %v3627
    %v3630 = vld [vmem:[%s61] sm:$0x1]
    %v3632 = vperm.slane %v3630, 0
    %v3634 = vmul.f32 %v3628, %v3632
    %v3635 = vmul.f32 %v3629, %v3632
    %v3636 = vld [vmem:[%s63] sm:$0x1]
    %v3638 = vperm.slane %v3636, 0
    %v3640 = vadd.f32 %v3634, %v3638
    %v3641 = vadd.f32 %v3635, %v3638
    %v3642 = vld [vmem:[#allocation19] sm:$0xff]
    %v3643 = vld [vmem:[#allocation19 + $0x8] sm:$0xff]
    %v3644 = vld [vmem:[#allocation19 + $0x10] sm:$0xff]
    %v3645 = vld [vmem:[#allocation19 + $0x18] sm:$0xff]
    %v3646 = vld [vmem:[#allocation19 + $0x20] sm:$0xff]
    %v3647 = vld [vmem:[#allocation19 + $0x28] sm:$0xff]
    %v3648 = vld [vmem:[#allocation19 + $0x30] sm:$0xff]
    %v3649 = vld [vmem:[#allocation19 + $0x38] sm:$0xff]
    %v3650 = vld [vmem:[#allocation19 + $0x40] sm:$0xff]
    %v3651 = vld [vmem:[#allocation19 + $0x48] sm:$0xff]
    %v3652 = vld [vmem:[#allocation19 + $0x50] sm:$0xff]
    %v3653 = vld [vmem:[#allocation19 + $0x58] sm:$0xff]
    %v3654 = vld [vmem:[#allocation19 + $0x60] sm:$0xff]
    %v3655 = vld [vmem:[#allocation19 + $0x68] sm:$0xff]
    %v3656 = vld [vmem:[#allocation19 + $0x70] sm:$0xff]
    %v3657 = vld [vmem:[#allocation19 + $0x78] sm:$0xff]
    %v3658 = vld [vmem:[%s67] sm:$0x1]
    %v3660 = vperm.slane %v3658, 0
    %3662 = vmatpush.msra.mxu0 %v3657
    %3663 = vmatpush.msra.mxu0 %v3656
    %3664 = vmatpush.msra.mxu0 %v3655
    %3665 = vmatpush.msra.mxu0 %v3654
    %3666 = vmatpush.msra.mxu0 %v3653
    %3667 = vmatpush.msra.mxu0 %v3652
    %3668 = vmatpush.msra.mxu0 %v3651
    %3669 = vmatpush.msra.mxu0 %v3650
    %3670 = vmatpush.msra.mxu0 %v3649
    %3671 = vmatpush.msra.mxu0 %v3648
    %3672 = vmatpush.msra.mxu0 %v3647
    %3673 = vmatpush.msra.mxu0 %v3646
    %3674 = vmatpush.msra.mxu0 %v3645
    %3675 = vmatpush.msra.mxu0 %v3644
    %3676 = vmatpush.msra.mxu0 %v3643
    %3677 = vmatpush.msra.mxu0 %v3642
    %3678 = vmatmul.f32.gmra.mxu0 %v3640
    %v3679 = vpop.f32.mrf.mxu0
    %v3680 = vadd.f32 %v3660, %v3679
    %3681 = vmatmul.f32.gmra.mxu0 %v3641
    %v3682 = vpop.f32.mrf.mxu0
    %v3683 = vadd.f32 %v3660, %v3682
    %3684 = vdwg.mxu0
    %v3685 = vld [vmem:[#allocation20] sm:$0xff]
    %v3686 = vld [vmem:[#allocation20 + $0x8] sm:$0xff]
    %v3687 = vld [vmem:[#allocation20 + $0x10] sm:$0xff]
    %v3688 = vld [vmem:[#allocation20 + $0x18] sm:$0xff]
    %v3689 = vld [vmem:[#allocation20 + $0x20] sm:$0xff]
    %v3690 = vld [vmem:[#allocation20 + $0x28] sm:$0xff]
    %v3691 = vld [vmem:[#allocation20 + $0x30] sm:$0xff]
    %v3692 = vld [vmem:[#allocation20 + $0x38] sm:$0xff]
    %v3693 = vld [vmem:[#allocation20 + $0x40] sm:$0xff]
    %v3694 = vld [vmem:[#allocation20 + $0x48] sm:$0xff]
    %v3695 = vld [vmem:[#allocation20 + $0x50] sm:$0xff]
    %v3696 = vld [vmem:[#allocation20 + $0x58] sm:$0xff]
    %v3697 = vld [vmem:[#allocation20 + $0x60] sm:$0xff]
    %v3698 = vld [vmem:[#allocation20 + $0x68] sm:$0xff]
    %v3699 = vld [vmem:[#allocation20 + $0x70] sm:$0xff]
    %v3700 = vld [vmem:[#allocation20 + $0x78] sm:$0xff]
    %v3701 = vld [vmem:[#allocation20 + $0x80] sm:$0xff]
    %v3702 = vld [vmem:[#allocation20 + $0x88] sm:$0xff]
    %v3703 = vld [vmem:[#allocation20 + $0x90] sm:$0xff]
    %v3704 = vld [vmem:[#allocation20 + $0x98] sm:$0xff]
    %v3705 = vld [vmem:[#allocation20 + $0xa0] sm:$0xff]
    %v3706 = vld [vmem:[#allocation20 + $0xa8] sm:$0xff]
    %v3707 = vld [vmem:[#allocation20 + $0xb0] sm:$0xff]
    %v3708 = vld [vmem:[#allocation20 + $0xb8] sm:$0xff]
    %v3709 = vld [vmem:[#allocation20 + $0xc0] sm:$0xff]
    %v3710 = vld [vmem:[#allocation20 + $0xc8] sm:$0xff]
    %v3711 = vld [vmem:[#allocation20 + $0xd0] sm:$0xff]
    %v3712 = vld [vmem:[#allocation20 + $0xd8] sm:$0xff]
    %v3713 = vld [vmem:[#allocation20 + $0xe0] sm:$0xff]
    %v3714 = vld [vmem:[#allocation20 + $0xe8] sm:$0xff]
    %v3715 = vld [vmem:[#allocation20 + $0xf0] sm:$0xff]
    %v3716 = vld [vmem:[#allocation20 + $0xf8] sm:$0xff]
    %v3717 = vld [vmem:[%s71] sm:$0x3]
    %v3719 = vperm.slane %v3717, 0
    %v3720 = vperm.slane %v3717, 1
    %3723 = vmatpush.msra.mxu0 %v3715
    %3724 = vmatpush.msra.mxu0 %v3713
    %3725 = vmatpush.msra.mxu0 %v3711
    %3726 = vmatpush.msra.mxu0 %v3709
    %3727 = vmatpush.msra.mxu0 %v3707
    %3728 = vmatpush.msra.mxu0 %v3705
    %3729 = vmatpush.msra.mxu0 %v3703
    %3730 = vmatpush.msra.mxu0 %v3701
    %3731 = vmatpush.msra.mxu0 %v3699
    %3732 = vmatpush.msra.mxu0 %v3697
    %3733 = vmatpush.msra.mxu0 %v3695
    %3734 = vmatpush.msra.mxu0 %v3693
    %3735 = vmatpush.msra.mxu0 %v3691
    %3736 = vmatpush.msra.mxu0 %v3689
    %3737 = vmatpush.msra.mxu0 %v3687
    %3738 = vmatpush.msra.mxu0 %v3685
    %3739 = vmatmul.f32.gmra.mxu0 %v450
    %v3740 = vpop.f32.mrf.mxu0
    %v3741 = vadd.f32 %v3719, %v3740
    %3742 = vmatmul.f32.gmra.mxu0 %v451
    %v3743 = vpop.f32.mrf.mxu0
    %v3744 = vadd.f32 %v3719, %v3743
    %3745 = vdwg.mxu0
    %3746 = vmatpush.msra.mxu0 %v3716
    %3747 = vmatpush.msra.mxu0 %v3714
    %3748 = vmatpush.msra.mxu0 %v3712
    %3749 = vmatpush.msra.mxu0 %v3710
    %3750 = vmatpush.msra.mxu0 %v3708
    %3751 = vmatpush.msra.mxu0 %v3706
    %3752 = vmatpush.msra.mxu0 %v3704
    %3753 = vmatpush.msra.mxu0 %v3702
    %3754 = vmatpush.msra.mxu0 %v3700
    %3755 = vmatpush.msra.mxu0 %v3698
    %3756 = vmatpush.msra.mxu0 %v3696
    %3757 = vmatpush.msra.mxu0 %v3694
    %3758 = vmatpush.msra.mxu0 %v3692
    %3759 = vmatpush.msra.mxu0 %v3690
    %3760 = vmatpush.msra.mxu0 %v3688
    %3761 = vmatpush.msra.mxu0 %v3686
    %3762 = vmatmul.f32.gmra.mxu0 %v450
    %v3763 = vpop.f32.mrf.mxu0
    %v3764 = vadd.f32 %v3720, %v3763
    %3765 = vmatmul.f32.gmra.mxu0 %v451
    %v3766 = vpop.f32.mrf.mxu0
    %v3767 = vadd.f32 %v3720, %v3766
    %3768 = vdwg.mxu0
    %v3770 = vsel %vm576, %v3680, 0
    %v3773 = vsel %vm576, %v3741, 0
    %v3776 = vsel %vm576, %v3744, 0
    %3778 = vmatpush.xpose.msra.mxu0 0.0
    %3779 = vmatpush.xpose.msra.mxu0 0.0
    %3780 = vmatpush.xpose.msra.mxu0 0.0
    %3781 = vmatpush.xpose.msra.mxu0 0.0
    %3782 = vmatpush.xpose.msra.mxu0 0.0
    %3783 = vmatpush.xpose.msra.mxu0 0.0
    %3784 = vmatpush.xpose.msra.mxu0 0.0
    %3785 = vmatpush.xpose.msra.mxu0 0.0
    %3786 = vmatpush.xpose.msra.mxu0 0.0
    %3787 = vmatpush.xpose.msra.mxu0 0.0
    %3788 = vmatpush.xpose.msra.mxu0 0.0
    %3789 = vmatpush.xpose.msra.mxu0 0.0
    %3790 = vmatpush.xpose.msra.mxu0 0.0
    %3791 = vmatpush.xpose.msra.mxu0 0.0
    %3792 = vmatpush.xpose.msra.mxu0 %v3776
    %3793 = vmatpush.xpose.msra.mxu0 %v3773
    %3794 = vmatmul.f32.gmra.mxu0 %v3770
    %v3795 = vpop.f32.mrf.mxu0
    %v3796 = vadd.f32 0.0, %v3795
    %3797 = vdwg.mxu0
    %v3798 = vsel %vm1526, %v3796, -inf
    %3799 = vmax.xlane.f32.xlu0 %v3798
    %v3800 = vpop.xlane.xlu0 %3799
    %v3801 = vsub.f32 %v3796, %v3800
    %v3802 = vmul.f32 %v3801, 1.442695
    %v3803 = vpow.pop %v3802
    %v3804 = vsel %vm1526, %v3803, 0.0
    %3805 = vadd.xlane.f32.xlu0 %v3804
    %v3806 = vpop.xlane.xlu0 %3805
    %v3807 = vrcp.pop %v3806
    %v3808 = vmul.f32 %v3806, %v3807
    %v3809 = vsub.f32 1.0, %v3808
    %v3810 = vmul.f32 %v3807, %v3809
    %v3811 = vadd.f32 %v3807, %v3810
    %vm3812 = vweird.f32 %v3806
    %vm3813 = vweird.f32 %v3807
    %vm3814 = vmor %vm3812, %vm3813
    %v3815 = vsel %vm3814, %v3807, %v3811
    %v3816 = vand.u32 2147483647, %v3806
    %vm3817 = vcmp.eq.f32.partialorder %v3816, 8.507059e+37
    %v3818 = vand.u32 %v3806, 2147483648
    %v3819 = vor.u32 1.1754944e-38, %v3818
    %v3820 = vsel %vm3817, %v3819, %v3815
    %v3821 = vmul.f32 %v3803, %v3820
    %v3823 = vsel %vm1526, %v3821, 0
    %v3826 = vsel %vm1554, %v3767, 0
    %3828 = vmatpush.msra.mxu0 0.0
    %3829 = vmatpush.msra.mxu0 0.0
    %3830 = vmatpush.msra.mxu0 0.0
    %3831 = vmatpush.msra.mxu0 0.0
    %3832 = vmatpush.msra.mxu0 0.0
    %3833 = vmatpush.msra.mxu0 0.0
    %3834 = vmatpush.msra.mxu0 0.0
    %3835 = vmatpush.msra.mxu0 0.0
    %3836 = vmatpush.msra.mxu0 0.0
    %3837 = vmatpush.msra.mxu0 0.0
    %3838 = vmatpush.msra.mxu0 0.0
    %3839 = vmatpush.msra.mxu0 0.0
    %3840 = vmatpush.msra.mxu0 0.0
    %3841 = vmatpush.msra.mxu0 0.0
    %3842 = vmatpush.msra.mxu0 %v3826
    %3843 = vmatpush.msra.mxu0 %v3764
    %3844 = vmatmul.f32.gmra.mxu0 %v3823
    %v3845 = vpop.f32.mrf.mxu0
    %v3846 = vadd.f32 0.0, %v3845
    %3847 = vdwg.mxu0
    %3848 = vrot.lane.b32.xlu0 %v3680, 96
    %v3849 = vpop.permute.xlu0 %3848
    %3850 = vrot.lane.b32.xlu0 %v3741, 96
    %v3851 = vpop.permute.xlu0 %3850
    %3852 = vrot.lane.b32.xlu0 %v3744, 96
    %v3853 = vpop.permute.xlu0 %3852
    %v3854 = vsel %vm576, %v3849, 0
    %v3856 = vsel %vm576, %v3851, 0
    %v3858 = vsel %vm576, %v3853, 0
    %3860 = vmatpush.xpose.msra.mxu0 0.0
    %3861 = vmatpush.xpose.msra.mxu0 0.0
    %3862 = vmatpush.xpose.msra.mxu0 0.0
    %3863 = vmatpush.xpose.msra.mxu0 0.0
    %3864 = vmatpush.xpose.msra.mxu0 0.0
    %3865 = vmatpush.xpose.msra.mxu0 0.0
    %3866 = vmatpush.xpose.msra.mxu0 0.0
    %3867 = vmatpush.xpose.msra.mxu0 0.0
    %3868 = vmatpush.xpose.msra.mxu0 0.0
    %3869 = vmatpush.xpose.msra.mxu0 0.0
    %3870 = vmatpush.xpose.msra.mxu0 0.0
    %3871 = vmatpush.xpose.msra.mxu0 0.0
    %3872 = vmatpush.xpose.msra.mxu0 0.0
    %3873 = vmatpush.xpose.msra.mxu0 0.0
    %3874 = vmatpush.xpose.msra.mxu0 %v3858
    %3875 = vmatpush.xpose.msra.mxu0 %v3856
    %3876 = vmatmul.f32.gmra.mxu0 %v3854
    %v3877 = vpop.f32.mrf.mxu0
    %v3878 = vadd.f32 0.0, %v3877
    %3879 = vdwg.mxu0
    %v3880 = vsel %vm1526, %v3878, -inf
    %3881 = vmax.xlane.f32.xlu0 %v3880
    %v3882 = vpop.xlane.xlu0 %3881
    %v3883 = vsub.f32 %v3878, %v3882
    %v3884 = vmul.f32 %v3883, 1.442695
    %v3885 = vpow.pop %v3884
    %v3886 = vsel %vm1526, %v3885, 0.0
    %3887 = vadd.xlane.f32.xlu0 %v3886
    %v3888 = vpop.xlane.xlu0 %3887
    %v3889 = vrcp.pop %v3888
    %v3890 = vmul.f32 %v3888, %v3889
    %v3891 = vsub.f32 1.0, %v3890
    %v3892 = vmul.f32 %v3889, %v3891
    %v3893 = vadd.f32 %v3889, %v3892
    %vm3894 = vweird.f32 %v3888
    %vm3895 = vweird.f32 %v3889
    %vm3896 = vmor %vm3894, %vm3895
    %v3897 = vsel %vm3896, %v3889, %v3893
    %v3898 = vand.u32 2147483647, %v3888
    %vm3899 = vcmp.eq.f32.partialorder %v3898, 8.507059e+37
    %v3900 = vand.u32 %v3888, 2147483648
    %v3901 = vor.u32 1.1754944e-38, %v3900
    %v3902 = vsel %vm3899, %v3901, %v3897
    %v3903 = vmul.f32 %v3885, %v3902
    %3905 = vrot.lane.b32.xlu0 %v3764, 96
    %v3906 = vpop.permute.xlu0 %3905
    %3907 = vrot.lane.b32.xlu0 %v3767, 96
    %v3908 = vpop.permute.xlu0 %3907
    %v3911 = vsel %vm1526, %v3903, 0
    %v3913 = vsel %vm1554, %v3908, 0
    %3915 = vmatpush.msra.mxu0 0.0
    %3916 = vmatpush.msra.mxu0 0.0
    %3917 = vmatpush.msra.mxu0 0.0
    %3918 = vmatpush.msra.mxu0 0.0
    %3919 = vmatpush.msra.mxu0 0.0
    %3920 = vmatpush.msra.mxu0 0.0
    %3921 = vmatpush.msra.mxu0 0.0
    %3922 = vmatpush.msra.mxu0 0.0
    %3923 = vmatpush.msra.mxu0 0.0
    %3924 = vmatpush.msra.mxu0 0.0
    %3925 = vmatpush.msra.mxu0 0.0
    %3926 = vmatpush.msra.mxu0 0.0
    %3927 = vmatpush.msra.mxu0 0.0
    %3928 = vmatpush.msra.mxu0 0.0
    %3929 = vmatpush.msra.mxu0 %v3913
    %3930 = vmatpush.msra.mxu0 %v3906
    %3931 = vmatmul.f32.gmra.mxu0 %v3911
    %v3932 = vpop.f32.mrf.mxu0
    %v3933 = vadd.f32 0.0, %v3932
    %3934 = vdwg.mxu0
    %3935 = vrot.lane.b32.xlu0 %v3680, 64
    %v3936 = vpop.permute.xlu0 %3935
    %3937 = vrot.lane.b32.xlu0 %v3741, 64
    %v3938 = vpop.permute.xlu0 %3937
    %3939 = vrot.lane.b32.xlu0 %v3744, 64
    %v3940 = vpop.permute.xlu0 %3939
    %v3941 = vsel %vm576, %v3936, 0
    %v3943 = vsel %vm576, %v3938, 0
    %v3945 = vsel %vm576, %v3940, 0
    %3947 = vmatpush.xpose.msra.mxu0 0.0
    %3948 = vmatpush.xpose.msra.mxu0 0.0
    %3949 = vmatpush.xpose.msra.mxu0 0.0
    %3950 = vmatpush.xpose.msra.mxu0 0.0
    %3951 = vmatpush.xpose.msra.mxu0 0.0
    %3952 = vmatpush.xpose.msra.mxu0 0.0
    %3953 = vmatpush.xpose.msra.mxu0 0.0
    %3954 = vmatpush.xpose.msra.mxu0 0.0
    %3955 = vmatpush.xpose.msra.mxu0 0.0
    %3956 = vmatpush.xpose.msra.mxu0 0.0
    %3957 = vmatpush.xpose.msra.mxu0 0.0
    %3958 = vmatpush.xpose.msra.mxu0 0.0
    %3959 = vmatpush.xpose.msra.mxu0 0.0
    %3960 = vmatpush.xpose.msra.mxu0 0.0
    %3961 = vmatpush.xpose.msra.mxu0 %v3945
    %3962 = vmatpush.xpose.msra.mxu0 %v3943
    %3963 = vmatmul.f32.gmra.mxu0 %v3941
    %v3964 = vpop.f32.mrf.mxu0
    %v3965 = vadd.f32 0.0, %v3964
    %3966 = vdwg.mxu0
    %v3967 = vsel %vm1526, %v3965, -inf
    %3968 = vmax.xlane.f32.xlu0 %v3967
    %v3969 = vpop.xlane.xlu0 %3968
    %v3970 = vsub.f32 %v3965, %v3969
    %v3971 = vmul.f32 %v3970, 1.442695
    %v3972 = vpow.pop %v3971
    %v3973 = vsel %vm1526, %v3972, 0.0
    %3974 = vadd.xlane.f32.xlu0 %v3973
    %v3975 = vpop.xlane.xlu0 %3974
    %v3976 = vrcp.pop %v3975
    %v3977 = vmul.f32 %v3975, %v3976
    %v3978 = vsub.f32 1.0, %v3977
    %v3979 = vmul.f32 %v3976, %v3978
    %v3980 = vadd.f32 %v3976, %v3979
    %vm3981 = vweird.f32 %v3975
    %vm3982 = vweird.f32 %v3976
    %vm3983 = vmor %vm3981, %vm3982
    %v3984 = vsel %vm3983, %v3976, %v3980
    %v3985 = vand.u32 2147483647, %v3975
    %vm3986 = vcmp.eq.f32.partialorder %v3985, 8.507059e+37
    %v3987 = vand.u32 %v3975, 2147483648
    %v3988 = vor.u32 1.1754944e-38, %v3987
    %v3989 = vsel %vm3986, %v3988, %v3984
    %v3990 = vmul.f32 %v3972, %v3989
    %3991 = vrot.lane.b32.xlu0 %v3764, 64
    %v3992 = vpop.permute.xlu0 %3991
    %3993 = vrot.lane.b32.xlu0 %v3767, 64
    %v3994 = vpop.permute.xlu0 %3993
    %v3997 = vsel %vm1526, %v3990, 0
    %v3999 = vsel %vm1554, %v3994, 0
    %4001 = vmatpush.msra.mxu0 0.0
    %4002 = vmatpush.msra.mxu0 0.0
    %4003 = vmatpush.msra.mxu0 0.0
    %4004 = vmatpush.msra.mxu0 0.0
    %4005 = vmatpush.msra.mxu0 0.0
    %4006 = vmatpush.msra.mxu0 0.0
    %4007 = vmatpush.msra.mxu0 0.0
    %4008 = vmatpush.msra.mxu0 0.0
    %4009 = vmatpush.msra.mxu0 0.0
    %4010 = vmatpush.msra.mxu0 0.0
    %4011 = vmatpush.msra.mxu0 0.0
    %4012 = vmatpush.msra.mxu0 0.0
    %4013 = vmatpush.msra.mxu0 0.0
    %4014 = vmatpush.msra.mxu0 0.0
    %4015 = vmatpush.msra.mxu0 %v3999
    %4016 = vmatpush.msra.mxu0 %v3992
    %4017 = vmatmul.f32.gmra.mxu0 %v3997
    %v4018 = vpop.f32.mrf.mxu0
    %v4019 = vadd.f32 0.0, %v4018
    %4020 = vdwg.mxu0
    %4021 = vrot.lane.b32.xlu0 %v3680, 32
    %v4022 = vpop.permute.xlu0 %4021
    %4023 = vrot.lane.b32.xlu0 %v3741, 32
    %v4024 = vpop.permute.xlu0 %4023
    %4025 = vrot.lane.b32.xlu0 %v3744, 32
    %v4026 = vpop.permute.xlu0 %4025
    %v4027 = vsel %vm576, %v4022, 0
    %v4029 = vsel %vm576, %v4024, 0
    %v4031 = vsel %vm576, %v4026, 0
    %4033 = vmatpush.xpose.msra.mxu0 0.0
    %4034 = vmatpush.xpose.msra.mxu0 0.0
    %4035 = vmatpush.xpose.msra.mxu0 0.0
    %4036 = vmatpush.xpose.msra.mxu0 0.0
    %4037 = vmatpush.xpose.msra.mxu0 0.0
    %4038 = vmatpush.xpose.msra.mxu0 0.0
    %4039 = vmatpush.xpose.msra.mxu0 0.0
    %4040 = vmatpush.xpose.msra.mxu0 0.0
    %4041 = vmatpush.xpose.msra.mxu0 0.0
    %4042 = vmatpush.xpose.msra.mxu0 0.0
    %4043 = vmatpush.xpose.msra.mxu0 0.0
    %4044 = vmatpush.xpose.msra.mxu0 0.0
    %4045 = vmatpush.xpose.msra.mxu0 0.0
    %4046 = vmatpush.xpose.msra.mxu0 0.0
    %4047 = vmatpush.xpose.msra.mxu0 %v4031
    %4048 = vmatpush.xpose.msra.mxu0 %v4029
    %4049 = vmatmul.f32.gmra.mxu0 %v4027
    %v4050 = vpop.f32.mrf.mxu0
    %v4051 = vadd.f32 0.0, %v4050
    %4052 = vdwg.mxu0
    %v4053 = vsel %vm1526, %v4051, -inf
    %4054 = vmax.xlane.f32.xlu0 %v4053
    %v4055 = vpop.xlane.xlu0 %4054
    %v4056 = vsub.f32 %v4051, %v4055
    %v4057 = vmul.f32 %v4056, 1.442695
    %v4058 = vpow.pop %v4057
    %v4059 = vsel %vm1526, %v4058, 0.0
    %4060 = vadd.xlane.f32.xlu0 %v4059
    %v4061 = vpop.xlane.xlu0 %4060
    %v4062 = vrcp.pop %v4061
    %v4063 = vmul.f32 %v4061, %v4062
    %v4064 = vsub.f32 1.0, %v4063
    %v4065 = vmul.f32 %v4062, %v4064
    %v4066 = vadd.f32 %v4062, %v4065
    %vm4067 = vweird.f32 %v4061
    %vm4068 = vweird.f32 %v4062
    %vm4069 = vmor %vm4067, %vm4068
    %v4070 = vsel %vm4069, %v4062, %v4066
    %v4071 = vand.u32 2147483647, %v4061
    %vm4072 = vcmp.eq.f32.partialorder %v4071, 8.507059e+37
    %v4073 = vand.u32 %v4061, 2147483648
    %v4074 = vor.u32 1.1754944e-38, %v4073
    %v4075 = vsel %vm4072, %v4074, %v4070
    %v4076 = vmul.f32 %v4058, %v4075
    %4077 = vrot.lane.b32.xlu0 %v3764, 32
    %v4078 = vpop.permute.xlu0 %4077
    %4079 = vrot.lane.b32.xlu0 %v3767, 32
    %v4080 = vpop.permute.xlu0 %4079
    %v4083 = vsel %vm1526, %v4076, 0
    %v4085 = vsel %vm1554, %v4080, 0
    %4087 = vmatpush.msra.mxu0 0.0
    %4088 = vmatpush.msra.mxu0 0.0
    %4089 = vmatpush.msra.mxu0 0.0
    %4090 = vmatpush.msra.mxu0 0.0
    %4091 = vmatpush.msra.mxu0 0.0
    %4092 = vmatpush.msra.mxu0 0.0
    %4093 = vmatpush.msra.mxu0 0.0
    %4094 = vmatpush.msra.mxu0 0.0
    %4095 = vmatpush.msra.mxu0 0.0
    %4096 = vmatpush.msra.mxu0 0.0
    %4097 = vmatpush.msra.mxu0 0.0
    %4098 = vmatpush.msra.mxu0 0.0
    %4099 = vmatpush.msra.mxu0 0.0
    %4100 = vmatpush.msra.mxu0 0.0
    %4101 = vmatpush.msra.mxu0 %v4085
    %4102 = vmatpush.msra.mxu0 %v4078
    %4103 = vmatmul.f32.gmra.mxu0 %v4083
    %v4104 = vpop.f32.mrf.mxu0
    %v4105 = vadd.f32 0.0, %v4104
    %4106 = vdwg.mxu0
    %4108 = vrot.lane.b32.xlu0 %v3933, 32
    %v4109 = vpop.permute.xlu0 %4108
    %4112 = vrot.lane.b32.xlu0 %v4019, 64
    %v4113 = vpop.permute.xlu0 %4112
    %4116 = vrot.lane.b32.xlu0 %v4105, 96
    %v4117 = vpop.permute.xlu0 %4116
    %v4119 = vsel %vm576, %v3846, %v4109
    %v4120 = vsel %vm899, %v4119, %v4113
    %v4121 = vsel %vm901, %v4120, %v4117
    %4122 = vmatpush.msra.mxu0 %v3715
    %4123 = vmatpush.msra.mxu0 %v3713
    %4124 = vmatpush.msra.mxu0 %v3711
    %4125 = vmatpush.msra.mxu0 %v3709
    %4126 = vmatpush.msra.mxu0 %v3707
    %4127 = vmatpush.msra.mxu0 %v3705
    %4128 = vmatpush.msra.mxu0 %v3703
    %4129 = vmatpush.msra.mxu0 %v3701
    %4130 = vmatpush.msra.mxu0 %v3699
    %4131 = vmatpush.msra.mxu0 %v3697
    %4132 = vmatpush.msra.mxu0 %v3695
    %4133 = vmatpush.msra.mxu0 %v3693
    %4134 = vmatpush.msra.mxu0 %v3691
    %4135 = vmatpush.msra.mxu0 %v3689
    %4136 = vmatpush.msra.mxu0 %v3687
    %4137 = vmatpush.msra.mxu0 %v3685
    %4138 = vmatmul.f32.gmra.mxu0 %v453
    %v4139 = vpop.f32.mrf.mxu0
    %v4140 = vadd.f32 %v3719, %v4139
    %4141 = vmatmul.f32.gmra.mxu0 %v454
    %v4142 = vpop.f32.mrf.mxu0
    %v4143 = vadd.f32 %v3719, %v4142
    %4144 = vdwg.mxu0
    %4145 = vmatpush.msra.mxu0 %v3716
    %4146 = vmatpush.msra.mxu0 %v3714
    %4147 = vmatpush.msra.mxu0 %v3712
    %4148 = vmatpush.msra.mxu0 %v3710
    %4149 = vmatpush.msra.mxu0 %v3708
    %4150 = vmatpush.msra.mxu0 %v3706
    %4151 = vmatpush.msra.mxu0 %v3704
    %4152 = vmatpush.msra.mxu0 %v3702
    %4153 = vmatpush.msra.mxu0 %v3700
    %4154 = vmatpush.msra.mxu0 %v3698
    %4155 = vmatpush.msra.mxu0 %v3696
    %4156 = vmatpush.msra.mxu0 %v3694
    %4157 = vmatpush.msra.mxu0 %v3692
    %4158 = vmatpush.msra.mxu0 %v3690
    %4159 = vmatpush.msra.mxu0 %v3688
    %4160 = vmatpush.msra.mxu0 %v3686
    %4161 = vmatmul.f32.gmra.mxu0 %v453
    %v4162 = vpop.f32.mrf.mxu0
    %v4163 = vadd.f32 %v3720, %v4162
    %4164 = vmatmul.f32.gmra.mxu0 %v454
    %v4165 = vpop.f32.mrf.mxu0
    %v4166 = vadd.f32 %v3720, %v4165
    %4167 = vdwg.mxu0
    %v4169 = vsel %vm576, %v3683, 0
    %v4172 = vsel %vm576, %v4140, 0
    %v4175 = vsel %vm576, %v4143, 0
    %4177 = vmatpush.xpose.msra.mxu0 0.0
    %4178 = vmatpush.xpose.msra.mxu0 0.0
    %4179 = vmatpush.xpose.msra.mxu0 0.0
    %4180 = vmatpush.xpose.msra.mxu0 0.0
    %4181 = vmatpush.xpose.msra.mxu0 0.0
    %4182 = vmatpush.xpose.msra.mxu0 0.0
    %4183 = vmatpush.xpose.msra.mxu0 0.0
    %4184 = vmatpush.xpose.msra.mxu0 0.0
    %4185 = vmatpush.xpose.msra.mxu0 0.0
    %4186 = vmatpush.xpose.msra.mxu0 0.0
    %4187 = vmatpush.xpose.msra.mxu0 0.0
    %4188 = vmatpush.xpose.msra.mxu0 0.0
    %4189 = vmatpush.xpose.msra.mxu0 0.0
    %4190 = vmatpush.xpose.msra.mxu0 0.0
    %4191 = vmatpush.xpose.msra.mxu0 %v4175
    %4192 = vmatpush.xpose.msra.mxu0 %v4172
    %4193 = vmatmul.f32.gmra.mxu0 %v4169
    %v4194 = vpop.f32.mrf.mxu0
    %v4195 = vadd.f32 0.0, %v4194
    %4196 = vdwg.mxu0
    %v4197 = vsel %vm1526, %v4195, -inf
    %4198 = vmax.xlane.f32.xlu0 %v4197
    %v4199 = vpop.xlane.xlu0 %4198
    %v4200 = vsub.f32 %v4195, %v4199
    %v4201 = vmul.f32 %v4200, 1.442695
    %v4202 = vpow.pop %v4201
    %v4203 = vsel %vm1526, %v4202, 0.0
    %4204 = vadd.xlane.f32.xlu0 %v4203
    %v4205 = vpop.xlane.xlu0 %4204
    %v4206 = vrcp.pop %v4205
    %v4207 = vmul.f32 %v4205, %v4206
    %v4208 = vsub.f32 1.0, %v4207
    %v4209 = vmul.f32 %v4206, %v4208
    %v4210 = vadd.f32 %v4206, %v4209
    %vm4211 = vweird.f32 %v4205
    %vm4212 = vweird.f32 %v4206
    %vm4213 = vmor %vm4211, %vm4212
    %v4214 = vsel %vm4213, %v4206, %v4210
    %v4215 = vand.u32 2147483647, %v4205
    %vm4216 = vcmp.eq.f32.partialorder %v4215, 8.507059e+37
    %v4217 = vand.u32 %v4205, 2147483648
    %v4218 = vor.u32 1.1754944e-38, %v4217
    %v4219 = vsel %vm4216, %v4218, %v4214
    %v4220 = vmul.f32 %v4202, %v4219
    %v4222 = vsel %vm1526, %v4220, 0
    %v4225 = vsel %vm1554, %v4166, 0
    %4227 = vmatpush.msra.mxu0 0.0
    %4228 = vmatpush.msra.mxu0 0.0
    %4229 = vmatpush.msra.mxu0 0.0
    %4230 = vmatpush.msra.mxu0 0.0
    %4231 = vmatpush.msra.mxu0 0.0
    %4232 = vmatpush.msra.mxu0 0.0
    %4233 = vmatpush.msra.mxu0 0.0
    %4234 = vmatpush.msra.mxu0 0.0
    %4235 = vmatpush.msra.mxu0 0.0
    %4236 = vmatpush.msra.mxu0 0.0
    %4237 = vmatpush.msra.mxu0 0.0
    %4238 = vmatpush.msra.mxu0 0.0
    %4239 = vmatpush.msra.mxu0 0.0
    %4240 = vmatpush.msra.mxu0 0.0
    %4241 = vmatpush.msra.mxu0 %v4225
    %4242 = vmatpush.msra.mxu0 %v4163
    %4243 = vmatmul.f32.gmra.mxu0 %v4222
    %v4244 = vpop.f32.mrf.mxu0
    %v4245 = vadd.f32 0.0, %v4244
    %4246 = vdwg.mxu0
    %4247 = vrot.lane.b32.xlu0 %v3683, 96
    %v4248 = vpop.permute.xlu0 %4247
    %4249 = vrot.lane.b32.xlu0 %v4140, 96
    %v4250 = vpop.permute.xlu0 %4249
    %4251 = vrot.lane.b32.xlu0 %v4143, 96
    %v4252 = vpop.permute.xlu0 %4251
    %v4253 = vsel %vm576, %v4248, 0
    %v4255 = vsel %vm576, %v4250, 0
    %v4257 = vsel %vm576, %v4252, 0
    %4259 = vmatpush.xpose.msra.mxu0 0.0
    %4260 = vmatpush.xpose.msra.mxu0 0.0
    %4261 = vmatpush.xpose.msra.mxu0 0.0
    %4262 = vmatpush.xpose.msra.mxu0 0.0
    %4263 = vmatpush.xpose.msra.mxu0 0.0
    %4264 = vmatpush.xpose.msra.mxu0 0.0
    %4265 = vmatpush.xpose.msra.mxu0 0.0
    %4266 = vmatpush.xpose.msra.mxu0 0.0
    %4267 = vmatpush.xpose.msra.mxu0 0.0
    %4268 = vmatpush.xpose.msra.mxu0 0.0
    %4269 = vmatpush.xpose.msra.mxu0 0.0
    %4270 = vmatpush.xpose.msra.mxu0 0.0
    %4271 = vmatpush.xpose.msra.mxu0 0.0
    %4272 = vmatpush.xpose.msra.mxu0 0.0
    %4273 = vmatpush.xpose.msra.mxu0 %v4257
    %4274 = vmatpush.xpose.msra.mxu0 %v4255
    %4275 = vmatmul.f32.gmra.mxu0 %v4253
    %v4276 = vpop.f32.mrf.mxu0
    %v4277 = vadd.f32 0.0, %v4276
    %4278 = vdwg.mxu0
    %v4279 = vsel %vm1526, %v4277, -inf
    %4280 = vmax.xlane.f32.xlu0 %v4279
    %v4281 = vpop.xlane.xlu0 %4280
    %v4282 = vsub.f32 %v4277, %v4281
    %v4283 = vmul.f32 %v4282, 1.442695
    %v4284 = vpow.pop %v4283
    %v4285 = vsel %vm1526, %v4284, 0.0
    %4286 = vadd.xlane.f32.xlu0 %v4285
    %v4287 = vpop.xlane.xlu0 %4286
    %v4288 = vrcp.pop %v4287
    %v4289 = vmul.f32 %v4287, %v4288
    %v4290 = vsub.f32 1.0, %v4289
    %v4291 = vmul.f32 %v4288, %v4290
    %v4292 = vadd.f32 %v4288, %v4291
    %vm4293 = vweird.f32 %v4287
    %vm4294 = vweird.f32 %v4288
    %vm4295 = vmor %vm4293, %vm4294
    %v4296 = vsel %vm4295, %v4288, %v4292
    %v4297 = vand.u32 2147483647, %v4287
    %vm4298 = vcmp.eq.f32.partialorder %v4297, 8.507059e+37
    %v4299 = vand.u32 %v4287, 2147483648
    %v4300 = vor.u32 1.1754944e-38, %v4299
    %v4301 = vsel %vm4298, %v4300, %v4296
    %v4302 = vmul.f32 %v4284, %v4301
    %4304 = vrot.lane.b32.xlu0 %v4163, 96
    %v4305 = vpop.permute.xlu0 %4304
    %4306 = vrot.lane.b32.xlu0 %v4166, 96
    %v4307 = vpop.permute.xlu0 %4306
    %v4310 = vsel %vm1526, %v4302, 0
    %v4312 = vsel %vm1554, %v4307, 0
    %4314 = vmatpush.msra.mxu0 0.0
    %4315 = vmatpush.msra.mxu0 0.0
    %4316 = vmatpush.msra.mxu0 0.0
    %4317 = vmatpush.msra.mxu0 0.0
    %4318 = vmatpush.msra.mxu0 0.0
    %4319 = vmatpush.msra.mxu0 0.0
    %4320 = vmatpush.msra.mxu0 0.0
    %4321 = vmatpush.msra.mxu0 0.0
    %4322 = vmatpush.msra.mxu0 0.0
    %4323 = vmatpush.msra.mxu0 0.0
    %4324 = vmatpush.msra.mxu0 0.0
    %4325 = vmatpush.msra.mxu0 0.0
    %4326 = vmatpush.msra.mxu0 0.0
    %4327 = vmatpush.msra.mxu0 0.0
    %4328 = vmatpush.msra.mxu0 %v4312
    %4329 = vmatpush.msra.mxu0 %v4305
    %4330 = vmatmul.f32.gmra.mxu0 %v4310
    %v4331 = vpop.f32.mrf.mxu0
    %v4332 = vadd.f32 0.0, %v4331
    %4333 = vdwg.mxu0
    %4334 = vrot.lane.b32.xlu0 %v3683, 64
    %v4335 = vpop.permute.xlu0 %4334
    %4336 = vrot.lane.b32.xlu0 %v4140, 64
    %v4337 = vpop.permute.xlu0 %4336
    %4338 = vrot.lane.b32.xlu0 %v4143, 64
    %v4339 = vpop.permute.xlu0 %4338
    %v4340 = vsel %vm576, %v4335, 0
    %v4342 = vsel %vm576, %v4337, 0
    %v4344 = vsel %vm576, %v4339, 0
    %4346 = vmatpush.xpose.msra.mxu0 0.0
    %4347 = vmatpush.xpose.msra.mxu0 0.0
    %4348 = vmatpush.xpose.msra.mxu0 0.0
    %4349 = vmatpush.xpose.msra.mxu0 0.0
    %4350 = vmatpush.xpose.msra.mxu0 0.0
    %4351 = vmatpush.xpose.msra.mxu0 0.0
    %4352 = vmatpush.xpose.msra.mxu0 0.0
    %4353 = vmatpush.xpose.msra.mxu0 0.0
    %4354 = vmatpush.xpose.msra.mxu0 0.0
    %4355 = vmatpush.xpose.msra.mxu0 0.0
    %4356 = vmatpush.xpose.msra.mxu0 0.0
    %4357 = vmatpush.xpose.msra.mxu0 0.0
    %4358 = vmatpush.xpose.msra.mxu0 0.0
    %4359 = vmatpush.xpose.msra.mxu0 0.0
    %4360 = vmatpush.xpose.msra.mxu0 %v4344
    %4361 = vmatpush.xpose.msra.mxu0 %v4342
    %4362 = vmatmul.f32.gmra.mxu0 %v4340
    %v4363 = vpop.f32.mrf.mxu0
    %v4364 = vadd.f32 0.0, %v4363
    %4365 = vdwg.mxu0
    %v4366 = vsel %vm1526, %v4364, -inf
    %4367 = vmax.xlane.f32.xlu0 %v4366
    %v4368 = vpop.xlane.xlu0 %4367
    %v4369 = vsub.f32 %v4364, %v4368
    %v4370 = vmul.f32 %v4369, 1.442695
    %v4371 = vpow.pop %v4370
    %v4372 = vsel %vm1526, %v4371, 0.0
    %4373 = vadd.xlane.f32.xlu0 %v4372
    %v4374 = vpop.xlane.xlu0 %4373
    %v4375 = vrcp.pop %v4374
    %v4376 = vmul.f32 %v4374, %v4375
    %v4377 = vsub.f32 1.0, %v4376
    %v4378 = vmul.f32 %v4375, %v4377
    %v4379 = vadd.f32 %v4375, %v4378
    %vm4380 = vweird.f32 %v4374
    %vm4381 = vweird.f32 %v4375
    %vm4382 = vmor %vm4380, %vm4381
    %v4383 = vsel %vm4382, %v4375, %v4379
    %v4384 = vand.u32 2147483647, %v4374
    %vm4385 = vcmp.eq.f32.partialorder %v4384, 8.507059e+37
    %v4386 = vand.u32 %v4374, 2147483648
    %v4387 = vor.u32 1.1754944e-38, %v4386
    %v4388 = vsel %vm4385, %v4387, %v4383
    %v4389 = vmul.f32 %v4371, %v4388
    %4390 = vrot.lane.b32.xlu0 %v4163, 64
    %v4391 = vpop.permute.xlu0 %4390
    %4392 = vrot.lane.b32.xlu0 %v4166, 64
    %v4393 = vpop.permute.xlu0 %4392
    %v4396 = vsel %vm1526, %v4389, 0
    %v4398 = vsel %vm1554, %v4393, 0
    %4400 = vmatpush.msra.mxu0 0.0
    %4401 = vmatpush.msra.mxu0 0.0
    %4402 = vmatpush.msra.mxu0 0.0
    %4403 = vmatpush.msra.mxu0 0.0
    %4404 = vmatpush.msra.mxu0 0.0
    %4405 = vmatpush.msra.mxu0 0.0
    %4406 = vmatpush.msra.mxu0 0.0
    %4407 = vmatpush.msra.mxu0 0.0
    %4408 = vmatpush.msra.mxu0 0.0
    %4409 = vmatpush.msra.mxu0 0.0
    %4410 = vmatpush.msra.mxu0 0.0
    %4411 = vmatpush.msra.mxu0 0.0
    %4412 = vmatpush.msra.mxu0 0.0
    %4413 = vmatpush.msra.mxu0 0.0
    %4414 = vmatpush.msra.mxu0 %v4398
    %4415 = vmatpush.msra.mxu0 %v4391
    %4416 = vmatmul.f32.gmra.mxu0 %v4396
    %v4417 = vpop.f32.mrf.mxu0
    %v4418 = vadd.f32 0.0, %v4417
    %4419 = vdwg.mxu0
    %4420 = vrot.lane.b32.xlu0 %v3683, 32
    %v4421 = vpop.permute.xlu0 %4420
    %4422 = vrot.lane.b32.xlu0 %v4140, 32
    %v4423 = vpop.permute.xlu0 %4422
    %4424 = vrot.lane.b32.xlu0 %v4143, 32
    %v4425 = vpop.permute.xlu0 %4424
    %v4426 = vsel %vm576, %v4421, 0
    %v4428 = vsel %vm576, %v4423, 0
    %v4430 = vsel %vm576, %v4425, 0
    %4432 = vmatpush.xpose.msra.mxu0 0.0
    %4433 = vmatpush.xpose.msra.mxu0 0.0
    %4434 = vmatpush.xpose.msra.mxu0 0.0
    %4435 = vmatpush.xpose.msra.mxu0 0.0
    %4436 = vmatpush.xpose.msra.mxu0 0.0
    %4437 = vmatpush.xpose.msra.mxu0 0.0
    %4438 = vmatpush.xpose.msra.mxu0 0.0
    %4439 = vmatpush.xpose.msra.mxu0 0.0
    %4440 = vmatpush.xpose.msra.mxu0 0.0
    %4441 = vmatpush.xpose.msra.mxu0 0.0
    %4442 = vmatpush.xpose.msra.mxu0 0.0
    %4443 = vmatpush.xpose.msra.mxu0 0.0
    %4444 = vmatpush.xpose.msra.mxu0 0.0
    %4445 = vmatpush.xpose.msra.mxu0 0.0
    %4446 = vmatpush.xpose.msra.mxu0 %v4430
    %4447 = vmatpush.xpose.msra.mxu0 %v4428
    %4448 = vmatmul.f32.gmra.mxu0 %v4426
    %v4449 = vpop.f32.mrf.mxu0
    %v4450 = vadd.f32 0.0, %v4449
    %4451 = vdwg.mxu0
    %v4452 = vsel %vm1526, %v4450, -inf
    %4453 = vmax.xlane.f32.xlu0 %v4452
    %v4454 = vpop.xlane.xlu0 %4453
    %v4455 = vsub.f32 %v4450, %v4454
    %v4456 = vmul.f32 %v4455, 1.442695
    %v4457 = vpow.pop %v4456
    %v4458 = vsel %vm1526, %v4457, 0.0
    %4459 = vadd.xlane.f32.xlu0 %v4458
    %v4460 = vpop.xlane.xlu0 %4459
    %v4461 = vrcp.pop %v4460
    %v4462 = vmul.f32 %v4460, %v4461
    %v4463 = vsub.f32 1.0, %v4462
    %v4464 = vmul.f32 %v4461, %v4463
    %v4465 = vadd.f32 %v4461, %v4464
    %vm4466 = vweird.f32 %v4460
    %vm4467 = vweird.f32 %v4461
    %vm4468 = vmor %vm4466, %vm4467
    %v4469 = vsel %vm4468, %v4461, %v4465
    %v4470 = vand.u32 2147483647, %v4460
    %vm4471 = vcmp.eq.f32.partialorder %v4470, 8.507059e+37
    %v4472 = vand.u32 %v4460, 2147483648
    %v4473 = vor.u32 1.1754944e-38, %v4472
    %v4474 = vsel %vm4471, %v4473, %v4469
    %v4475 = vmul.f32 %v4457, %v4474
    %4476 = vrot.lane.b32.xlu0 %v4163, 32
    %v4477 = vpop.permute.xlu0 %4476
    %4478 = vrot.lane.b32.xlu0 %v4166, 32
    %v4479 = vpop.permute.xlu0 %4478
    %v4482 = vsel %vm1526, %v4475, 0
    %v4484 = vsel %vm1554, %v4479, 0
    %4486 = vmatpush.msra.mxu0 0.0
    %4487 = vmatpush.msra.mxu0 0.0
    %4488 = vmatpush.msra.mxu0 0.0
    %4489 = vmatpush.msra.mxu0 0.0
    %4490 = vmatpush.msra.mxu0 0.0
    %4491 = vmatpush.msra.mxu0 0.0
    %4492 = vmatpush.msra.mxu0 0.0
    %4493 = vmatpush.msra.mxu0 0.0
    %4494 = vmatpush.msra.mxu0 0.0
    %4495 = vmatpush.msra.mxu0 0.0
    %4496 = vmatpush.msra.mxu0 0.0
    %4497 = vmatpush.msra.mxu0 0.0
    %4498 = vmatpush.msra.mxu0 0.0
    %4499 = vmatpush.msra.mxu0 0.0
    %4500 = vmatpush.msra.mxu0 %v4484
    %4501 = vmatpush.msra.mxu0 %v4477
    %4502 = vmatmul.f32.gmra.mxu0 %v4482
    %v4503 = vpop.f32.mrf.mxu0
    %v4504 = vadd.f32 0.0, %v4503
    %4505 = vdwg.mxu0
    %4507 = vrot.lane.b32.xlu0 %v4332, 32
    %v4508 = vpop.permute.xlu0 %4507
    %4511 = vrot.lane.b32.xlu0 %v4418, 64
    %v4512 = vpop.permute.xlu0 %4511
    %4515 = vrot.lane.b32.xlu0 %v4504, 96
    %v4516 = vpop.permute.xlu0 %4515
    %v4518 = vsel %vm576, %v4245, %v4508
    %v4519 = vsel %vm899, %v4518, %v4512
    %v4520 = vsel %vm901, %v4519, %v4516
    %v4521 = vld [vmem:[#allocation22] sm:$0xff]
    %v4522 = vld [vmem:[#allocation22 + $0x8] sm:$0xff]
    %v4523 = vld [vmem:[#allocation22 + $0x10] sm:$0xff]
    %v4524 = vld [vmem:[#allocation22 + $0x18] sm:$0xff]
    %v4525 = vld [vmem:[#allocation22 + $0x20] sm:$0xff]
    %v4526 = vld [vmem:[#allocation22 + $0x28] sm:$0xff]
    %v4527 = vld [vmem:[#allocation22 + $0x30] sm:$0xff]
    %v4528 = vld [vmem:[#allocation22 + $0x38] sm:$0xff]
    %v4529 = vld [vmem:[#allocation22 + $0x40] sm:$0xff]
    %v4530 = vld [vmem:[#allocation22 + $0x48] sm:$0xff]
    %v4531 = vld [vmem:[#allocation22 + $0x50] sm:$0xff]
    %v4532 = vld [vmem:[#allocation22 + $0x58] sm:$0xff]
    %v4533 = vld [vmem:[#allocation22 + $0x60] sm:$0xff]
    %v4534 = vld [vmem:[#allocation22 + $0x68] sm:$0xff]
    %v4535 = vld [vmem:[#allocation22 + $0x70] sm:$0xff]
    %v4536 = vld [vmem:[#allocation22 + $0x78] sm:$0xff]
    %v4537 = vld [vmem:[%s75] sm:$0x1]
    %v4539 = vperm.slane %v4537, 0
    %4541 = vmatpush.msra.mxu0 %v4536
    %4542 = vmatpush.msra.mxu0 %v4535
    %4543 = vmatpush.msra.mxu0 %v4534
    %4544 = vmatpush.msra.mxu0 %v4533
    %4545 = vmatpush.msra.mxu0 %v4532
    %4546 = vmatpush.msra.mxu0 %v4531
    %4547 = vmatpush.msra.mxu0 %v4530
    %4548 = vmatpush.msra.mxu0 %v4529
    %4549 = vmatpush.msra.mxu0 %v4528
    %4550 = vmatpush.msra.mxu0 %v4527
    %4551 = vmatpush.msra.mxu0 %v4526
    %4552 = vmatpush.msra.mxu0 %v4525
    %4553 = vmatpush.msra.mxu0 %v4524
    %4554 = vmatpush.msra.mxu0 %v4523
    %4555 = vmatpush.msra.mxu0 %v4522
    %4556 = vmatpush.msra.mxu0 %v4521
    %4557 = vmatmul.f32.gmra.mxu0 %v4121
    %v4558 = vpop.f32.mrf.mxu0
    %v4559 = vadd.f32 %v4539, %v4558
    %4560 = vmatmul.f32.gmra.mxu0 %v4520
    %v4561 = vpop.f32.mrf.mxu0
    %v4562 = vadd.f32 %v4539, %v4561
    %4563 = vdwg.mxu0
    %v4564 = vadd.f32 %v3640, %v4559
    %v4565 = vadd.f32 %v3641, %v4562
    %4566 = vadd.xlane.f32.xlu0 %v4564
    %v4567 = vpop.xlane.xlu0 %4566
    %4568 = vadd.xlane.f32.xlu0 %v4565
    %v4569 = vpop.xlane.xlu0 %4568
    %v4570 = vmul.f32 %v4567, %v1321
    %v4571 = vmul.f32 %v4569, %v1321
    %v4572 = vsub.f32 %v4564, %v4570
    %v4573 = vsub.f32 %v4565, %v4571
    %v4574 = vmul.f32 %v4572, %v4572
    %v4575 = vmul.f32 %v4573, %v4573
    %4576 = vadd.xlane.f32.xlu0 %v4574
    %v4577 = vpop.xlane.xlu0 %4576
    %4578 = vadd.xlane.f32.xlu0 %v4575
    %v4579 = vpop.xlane.xlu0 %4578
    %v4580 = vmul.f32 %v4577, %v1321
    %v4581 = vmul.f32 %v4579, %v1321
    %v4582 = vadd.f32 %v4580, 1e-05
    %v4583 = vadd.f32 %v4581, 1e-05
    %v4584 = vrsqrt.pop %v4582
    %v4585 = vmul.f32 %v4584, %v4582
    %v4586 = vmul.f32 %v4585, %v4584
    %v4587 = vmul.f32 0.5, %v4586
    %v4588 = vsub.f32 1.5, %v4587
    %v4589 = vmul.f32 %v4584, %v4588
    %vm4590 = vweird.f32 %v4582
    %vm4591 = vweird.f32 %v4584
    %vm4592 = vmor %vm4590, %vm4591
    %v4593 = vsel %vm4592, %v4584, %v4589
    %v4594 = vrsqrt.pop %v4583
    %v4595 = vmul.f32 %v4594, %v4583
    %v4596 = vmul.f32 %v4595, %v4594
    %v4597 = vmul.f32 0.5, %v4596
    %v4598 = vsub.f32 1.5, %v4597
    %v4599 = vmul.f32 %v4594, %v4598
    %vm4600 = vweird.f32 %v4583
    %vm4601 = vweird.f32 %v4594
    %vm4602 = vmor %vm4600, %vm4601
    %v4603 = vsel %vm4602, %v4594, %v4599
    %v4604 = vmul.f32 %v4572, %v4593
    %v4605 = vmul.f32 %v4573, %v4603
    %v4606 = vld [vmem:[%s77] sm:$0x1]
    %v4608 = vperm.slane %v4606, 0
    %v4610 = vmul.f32 %v4604, %v4608
    %v4611 = vmul.f32 %v4605, %v4608
    %v4612 = vld [vmem:[%s79] sm:$0x1]
    %v4614 = vperm.slane %v4612, 0
    %v4616 = vadd.f32 %v4610, %v4614
    %v4617 = vadd.f32 %v4611, %v4614
    %v4618 = vld [vmem:[#allocation23] sm:$0xff]
    %v4619 = vld [vmem:[#allocation23 + $0x8] sm:$0xff]
    %v4620 = vld [vmem:[#allocation23 + $0x10] sm:$0xff]
    %v4621 = vld [vmem:[#allocation23 + $0x18] sm:$0xff]
    %v4622 = vld [vmem:[#allocation23 + $0x20] sm:$0xff]
    %v4623 = vld [vmem:[#allocation23 + $0x28] sm:$0xff]
    %v4624 = vld [vmem:[#allocation23 + $0x30] sm:$0xff]
    %v4625 = vld [vmem:[#allocation23 + $0x38] sm:$0xff]
    %v4626 = vld [vmem:[#allocation23 + $0x40] sm:$0xff]
    %v4627 = vld [vmem:[#allocation23 + $0x48] sm:$0xff]
    %v4628 = vld [vmem:[#allocation23 + $0x50] sm:$0xff]
    %v4629 = vld [vmem:[#allocation23 + $0x58] sm:$0xff]
    %v4630 = vld [vmem:[#allocation23 + $0x60] sm:$0xff]
    %v4631 = vld [vmem:[#allocation23 + $0x68] sm:$0xff]
    %v4632 = vld [vmem:[#allocation23 + $0x70] sm:$0xff]
    %v4633 = vld [vmem:[#allocation23 + $0x78] sm:$0xff]
    %v4634 = vld [vmem:[#allocation23 + $0x80] sm:$0xff]
    %v4635 = vld [vmem:[#allocation23 + $0x88] sm:$0xff]
    %v4636 = vld [vmem:[#allocation23 + $0x90] sm:$0xff]
    %v4637 = vld [vmem:[#allocation23 + $0x98] sm:$0xff]
    %v4638 = vld [vmem:[#allocation23 + $0xa0] sm:$0xff]
    %v4639 = vld [vmem:[#allocation23 + $0xa8] sm:$0xff]
    %v4640 = vld [vmem:[#allocation23 + $0xb0] sm:$0xff]
    %v4641 = vld [vmem:[#allocation23 + $0xb8] sm:$0xff]
    %v4642 = vld [vmem:[#allocation23 + $0xc0] sm:$0xff]
    %v4643 = vld [vmem:[#allocation23 + $0xc8] sm:$0xff]
    %v4644 = vld [vmem:[#allocation23 + $0xd0] sm:$0xff]
    %v4645 = vld [vmem:[#allocation23 + $0xd8] sm:$0xff]
    %v4646 = vld [vmem:[#allocation23 + $0xe0] sm:$0xff]
    %v4647 = vld [vmem:[#allocation23 + $0xe8] sm:$0xff]
    %v4648 = vld [vmem:[#allocation23 + $0xf0] sm:$0xff]
    %v4649 = vld [vmem:[#allocation23 + $0xf8] sm:$0xff]
    %v4650 = vld [vmem:[#allocation23 + $0x100] sm:$0xff]
    %v4651 = vld [vmem:[#allocation23 + $0x108] sm:$0xff]
    %v4652 = vld [vmem:[#allocation23 + $0x110] sm:$0xff]
    %v4653 = vld [vmem:[#allocation23 + $0x118] sm:$0xff]
    %v4654 = vld [vmem:[#allocation23 + $0x120] sm:$0xff]
    %v4655 = vld [vmem:[#allocation23 + $0x128] sm:$0xff]
    %v4656 = vld [vmem:[#allocation23 + $0x130] sm:$0xff]
    %v4657 = vld [vmem:[#allocation23 + $0x138] sm:$0xff]
    %v4658 = vld [vmem:[#allocation23 + $0x140] sm:$0xff]
    %v4659 = vld [vmem:[#allocation23 + $0x148] sm:$0xff]
    %v4660 = vld [vmem:[#allocation23 + $0x150] sm:$0xff]
    %v4661 = vld [vmem:[#allocation23 + $0x158] sm:$0xff]
    %v4662 = vld [vmem:[#allocation23 + $0x160] sm:$0xff]
    %v4663 = vld [vmem:[#allocation23 + $0x168] sm:$0xff]
    %v4664 = vld [vmem:[#allocation23 + $0x170] sm:$0xff]
    %v4665 = vld [vmem:[#allocation23 + $0x178] sm:$0xff]
    %v4666 = vld [vmem:[#allocation23 + $0x180] sm:$0xff]
    %v4667 = vld [vmem:[#allocation23 + $0x188] sm:$0xff]
    %v4668 = vld [vmem:[#allocation23 + $0x190] sm:$0xff]
    %v4669 = vld [vmem:[#allocation23 + $0x198] sm:$0xff]
    %v4670 = vld [vmem:[#allocation23 + $0x1a0] sm:$0xff]
    %v4671 = vld [vmem:[#allocation23 + $0x1a8] sm:$0xff]
    %v4672 = vld [vmem:[#allocation23 + $0x1b0] sm:$0xff]
    %v4673 = vld [vmem:[#allocation23 + $0x1b8] sm:$0xff]
    %v4674 = vld [vmem:[#allocation23 + $0x1c0] sm:$0xff]
    %v4675 = vld [vmem:[#allocation23 + $0x1c8] sm:$0xff]
    %v4676 = vld [vmem:[#allocation23 + $0x1d0] sm:$0xff]
    %v4677 = vld [vmem:[#allocation23 + $0x1d8] sm:$0xff]
    %v4678 = vld [vmem:[#allocation23 + $0x1e0] sm:$0xff]
    %v4679 = vld [vmem:[#allocation23 + $0x1e8] sm:$0xff]
    %v4680 = vld [vmem:[#allocation23 + $0x1f0] sm:$0xff]
    %v4681 = vld [vmem:[#allocation23 + $0x1f8] sm:$0xff]
    %v4682 = vld [vmem:[%s83] sm:$0xf]
    %v4684 = vperm.slane %v4682, 0
    %v4685 = vperm.slane %v4682, 1
    %v4686 = vperm.slane %v4682, 2
    %v4687 = vperm.slane %v4682, 3
    %4692 = vmatpush.msra.mxu0 %v4678
    %4693 = vmatpush.msra.mxu0 %v4674
    %4694 = vmatpush.msra.mxu0 %v4670
    %4695 = vmatpush.msra.mxu0 %v4666
    %4696 = vmatpush.msra.mxu0 %v4662
    %4697 = vmatpush.msra.mxu0 %v4658
    %4698 = vmatpush.msra.mxu0 %v4654
    %4699 = vmatpush.msra.mxu0 %v4650
    %4700 = vmatpush.msra.mxu0 %v4646
    %4701 = vmatpush.msra.mxu0 %v4642
    %4702 = vmatpush.msra.mxu0 %v4638
    %4703 = vmatpush.msra.mxu0 %v4634
    %4704 = vmatpush.msra.mxu0 %v4630
    %4705 = vmatpush.msra.mxu0 %v4626
    %4706 = vmatpush.msra.mxu0 %v4622
    %4707 = vmatpush.msra.mxu0 %v4618
    %4708 = vmatmul.f32.gmra.mxu0 %v4616
    %v4709 = vpop.f32.mrf.mxu0
    %v4710 = vadd.f32 %v4684, %v4709
    %4711 = vmatmul.f32.gmra.mxu0 %v4617
    %v4712 = vpop.f32.mrf.mxu0
    %v4713 = vadd.f32 %v4684, %v4712
    %4714 = vdwg.mxu0
    %4715 = vmatpush.msra.mxu0 %v4679
    %4716 = vmatpush.msra.mxu0 %v4675
    %4717 = vmatpush.msra.mxu0 %v4671
    %4718 = vmatpush.msra.mxu0 %v4667
    %4719 = vmatpush.msra.mxu0 %v4663
    %4720 = vmatpush.msra.mxu0 %v4659
    %4721 = vmatpush.msra.mxu0 %v4655
    %4722 = vmatpush.msra.mxu0 %v4651
    %4723 = vmatpush.msra.mxu0 %v4647
    %4724 = vmatpush.msra.mxu0 %v4643
    %4725 = vmatpush.msra.mxu0 %v4639
    %4726 = vmatpush.msra.mxu0 %v4635
    %4727 = vmatpush.msra.mxu0 %v4631
    %4728 = vmatpush.msra.mxu0 %v4627
    %4729 = vmatpush.msra.mxu0 %v4623
    %4730 = vmatpush.msra.mxu0 %v4619
    %4731 = vmatmul.f32.gmra.mxu0 %v4616
    %v4732 = vpop.f32.mrf.mxu0
    %v4733 = vadd.f32 %v4685, %v4732
    %4734 = vmatmul.f32.gmra.mxu0 %v4617
    %v4735 = vpop.f32.mrf.mxu0
    %v4736 = vadd.f32 %v4685, %v4735
    %4737 = vdwg.mxu0
    %4738 = vmatpush.msra.mxu0 %v4680
    %4739 = vmatpush.msra.mxu0 %v4676
    %4740 = vmatpush.msra.mxu0 %v4672
    %4741 = vmatpush.msra.mxu0 %v4668
    %4742 = vmatpush.msra.mxu0 %v4664
    %4743 = vmatpush.msra.mxu0 %v4660
    %4744 = vmatpush.msra.mxu0 %v4656
    %4745 = vmatpush.msra.mxu0 %v4652
    %4746 = vmatpush.msra.mxu0 %v4648
    %4747 = vmatpush.msra.mxu0 %v4644
    %4748 = vmatpush.msra.mxu0 %v4640
    %4749 = vmatpush.msra.mxu0 %v4636
    %4750 = vmatpush.msra.mxu0 %v4632
    %4751 = vmatpush.msra.mxu0 %v4628
    %4752 = vmatpush.msra.mxu0 %v4624
    %4753 = vmatpush.msra.mxu0 %v4620
    %4754 = vmatmul.f32.gmra.mxu0 %v4616
    %v4755 = vpop.f32.mrf.mxu0
    %v4756 = vadd.f32 %v4686, %v4755
    %4757 = vmatmul.f32.gmra.mxu0 %v4617
    %v4758 = vpop.f32.mrf.mxu0
    %v4759 = vadd.f32 %v4686, %v4758
    %4760 = vdwg.mxu0
    %4761 = vmatpush.msra.mxu0 %v4681
    %4762 = vmatpush.msra.mxu0 %v4677
    %4763 = vmatpush.msra.mxu0 %v4673
    %4764 = vmatpush.msra.mxu0 %v4669
    %4765 = vmatpush.msra.mxu0 %v4665
    %4766 = vmatpush.msra.mxu0 %v4661
    %4767 = vmatpush.msra.mxu0 %v4657
    %4768 = vmatpush.msra.mxu0 %v4653
    %4769 = vmatpush.msra.mxu0 %v4649
    %4770 = vmatpush.msra.mxu0 %v4645
    %4771 = vmatpush.msra.mxu0 %v4641
    %4772 = vmatpush.msra.mxu0 %v4637
    %4773 = vmatpush.msra.mxu0 %v4633
    %4774 = vmatpush.msra.mxu0 %v4629
    %4775 = vmatpush.msra.mxu0 %v4625
    %4776 = vmatpush.msra.mxu0 %v4621
    %4777 = vmatmul.f32.gmra.mxu0 %v4616
    %v4778 = vpop.f32.mrf.mxu0
    %v4779 = vadd.f32 %v4687, %v4778
    %4780 = vmatmul.f32.gmra.mxu0 %v4617
    %v4781 = vpop.f32.mrf.mxu0
    %v4782 = vadd.f32 %v4687, %v4781
    %4783 = vdwg.mxu0
    %v4784 = vmax.f32 %v4710, 0.0
    %v4785 = vmax.f32 %v4733, 0.0
    %v4786 = vmax.f32 %v4756, 0.0
    %v4787 = vmax.f32 %v4779, 0.0
    %v4788 = vmax.f32 %v4713, 0.0
    %v4789 = vmax.f32 %v4736, 0.0
    %v4790 = vmax.f32 %v4759, 0.0
    %v4791 = vmax.f32 %v4782, 0.0
    %v4792 = vld [vmem:[#allocation25] sm:$0xff]
    %v4793 = vld [vmem:[#allocation25 + $0x8] sm:$0xff]
    %v4794 = vld [vmem:[#allocation25 + $0x10] sm:$0xff]
    %v4795 = vld [vmem:[#allocation25 + $0x18] sm:$0xff]
    %v4796 = vld [vmem:[#allocation25 + $0x20] sm:$0xff]
    %v4797 = vld [vmem:[#allocation25 + $0x28] sm:$0xff]
    %v4798 = vld [vmem:[#allocation25 + $0x30] sm:$0xff]
    %v4799 = vld [vmem:[#allocation25 + $0x38] sm:$0xff]
    %v4800 = vld [vmem:[#allocation25 + $0x40] sm:$0xff]
    %v4801 = vld [vmem:[#allocation25 + $0x48] sm:$0xff]
    %v4802 = vld [vmem:[#allocation25 + $0x50] sm:$0xff]
    %v4803 = vld [vmem:[#allocation25 + $0x58] sm:$0xff]
    %v4804 = vld [vmem:[#allocation25 + $0x60] sm:$0xff]
    %v4805 = vld [vmem:[#allocation25 + $0x68] sm:$0xff]
    %v4806 = vld [vmem:[#allocation25 + $0x70] sm:$0xff]
    %v4807 = vld [vmem:[#allocation25 + $0x78] sm:$0xff]
    %v4808 = vld [vmem:[#allocation25 + $0x80] sm:$0xff]
    %v4809 = vld [vmem:[#allocation25 + $0x88] sm:$0xff]
    %v4810 = vld [vmem:[#allocation25 + $0x90] sm:$0xff]
    %v4811 = vld [vmem:[#allocation25 + $0x98] sm:$0xff]
    %v4812 = vld [vmem:[#allocation25 + $0xa0] sm:$0xff]
    %v4813 = vld [vmem:[#allocation25 + $0xa8] sm:$0xff]
    %v4814 = vld [vmem:[#allocation25 + $0xb0] sm:$0xff]
    %v4815 = vld [vmem:[#allocation25 + $0xb8] sm:$0xff]
    %v4816 = vld [vmem:[#allocation25 + $0xc0] sm:$0xff]
    %v4817 = vld [vmem:[#allocation25 + $0xc8] sm:$0xff]
    %v4818 = vld [vmem:[#allocation25 + $0xd0] sm:$0xff]
    %v4819 = vld [vmem:[#allocation25 + $0xd8] sm:$0xff]
    %v4820 = vld [vmem:[#allocation25 + $0xe0] sm:$0xff]
    %v4821 = vld [vmem:[#allocation25 + $0xe8] sm:$0xff]
    %v4822 = vld [vmem:[#allocation25 + $0xf0] sm:$0xff]
    %v4823 = vld [vmem:[#allocation25 + $0xf8] sm:$0xff]
    %v4824 = vld [vmem:[#allocation25 + $0x100] sm:$0xff]
    %v4825 = vld [vmem:[#allocation25 + $0x108] sm:$0xff]
    %v4826 = vld [vmem:[#allocation25 + $0x110] sm:$0xff]
    %v4827 = vld [vmem:[#allocation25 + $0x118] sm:$0xff]
    %v4828 = vld [vmem:[#allocation25 + $0x120] sm:$0xff]
    %v4829 = vld [vmem:[#allocation25 + $0x128] sm:$0xff]
    %v4830 = vld [vmem:[#allocation25 + $0x130] sm:$0xff]
    %v4831 = vld [vmem:[#allocation25 + $0x138] sm:$0xff]
    %v4832 = vld [vmem:[#allocation25 + $0x140] sm:$0xff]
    %v4833 = vld [vmem:[#allocation25 + $0x148] sm:$0xff]
    %v4834 = vld [vmem:[#allocation25 + $0x150] sm:$0xff]
    %v4835 = vld [vmem:[#allocation25 + $0x158] sm:$0xff]
    %v4836 = vld [vmem:[#allocation25 + $0x160] sm:$0xff]
    %v4837 = vld [vmem:[#allocation25 + $0x168] sm:$0xff]
    %v4838 = vld [vmem:[#allocation25 + $0x170] sm:$0xff]
    %v4839 = vld [vmem:[#allocation25 + $0x178] sm:$0xff]
    %v4840 = vld [vmem:[#allocation25 + $0x180] sm:$0xff]
    %v4841 = vld [vmem:[#allocation25 + $0x188] sm:$0xff]
    %v4842 = vld [vmem:[#allocation25 + $0x190] sm:$0xff]
    %v4843 = vld [vmem:[#allocation25 + $0x198] sm:$0xff]
    %v4844 = vld [vmem:[#allocation25 + $0x1a0] sm:$0xff]
    %v4845 = vld [vmem:[#allocation25 + $0x1a8] sm:$0xff]
    %v4846 = vld [vmem:[#allocation25 + $0x1b0] sm:$0xff]
    %v4847 = vld [vmem:[#allocation25 + $0x1b8] sm:$0xff]
    %v4848 = vld [vmem:[#allocation25 + $0x1c0] sm:$0xff]
    %v4849 = vld [vmem:[#allocation25 + $0x1c8] sm:$0xff]
    %v4850 = vld [vmem:[#allocation25 + $0x1d0] sm:$0xff]
    %v4851 = vld [vmem:[#allocation25 + $0x1d8] sm:$0xff]
    %v4852 = vld [vmem:[#allocation25 + $0x1e0] sm:$0xff]
    %v4853 = vld [vmem:[#allocation25 + $0x1e8] sm:$0xff]
    %v4854 = vld [vmem:[#allocation25 + $0x1f0] sm:$0xff]
    %v4855 = vld [vmem:[#allocation25 + $0x1f8] sm:$0xff]
    %4856 = vmatpush.msra.mxu0 %v4807
    %4857 = vmatpush.msra.mxu0 %v4806
    %4858 = vmatpush.msra.mxu0 %v4805
    %4859 = vmatpush.msra.mxu0 %v4804
    %4860 = vmatpush.msra.mxu0 %v4803
    %4861 = vmatpush.msra.mxu0 %v4802
    %4862 = vmatpush.msra.mxu0 %v4801
    %4863 = vmatpush.msra.mxu0 %v4800
    %4864 = vmatpush.msra.mxu0 %v4799
    %4865 = vmatpush.msra.mxu0 %v4798
    %4866 = vmatpush.msra.mxu0 %v4797
    %4867 = vmatpush.msra.mxu0 %v4796
    %4868 = vmatpush.msra.mxu0 %v4795
    %4869 = vmatpush.msra.mxu0 %v4794
    %4870 = vmatpush.msra.mxu0 %v4793
    %4871 = vmatpush.msra.mxu0 %v4792
    %4872 = vmatmul.f32.gmra.mxu0 %v4784
    %v4873 = vpop.f32.mrf.mxu0
    %v4874 = vadd.f32 0.0, %v4873
    %4875 = vmatmul.f32.gmra.mxu0 %v4788
    %v4876 = vpop.f32.mrf.mxu0
    %v4877 = vadd.f32 0.0, %v4876
    %4878 = vdwg.mxu0
    %4879 = vmatpush.msra.mxu0 %v4823
    %4880 = vmatpush.msra.mxu0 %v4822
    %4881 = vmatpush.msra.mxu0 %v4821
    %4882 = vmatpush.msra.mxu0 %v4820
    %4883 = vmatpush.msra.mxu0 %v4819
    %4884 = vmatpush.msra.mxu0 %v4818
    %4885 = vmatpush.msra.mxu0 %v4817
    %4886 = vmatpush.msra.mxu0 %v4816
    %4887 = vmatpush.msra.mxu0 %v4815
    %4888 = vmatpush.msra.mxu0 %v4814
    %4889 = vmatpush.msra.mxu0 %v4813
    %4890 = vmatpush.msra.mxu0 %v4812
    %4891 = vmatpush.msra.mxu0 %v4811
    %4892 = vmatpush.msra.mxu0 %v4810
    %4893 = vmatpush.msra.mxu0 %v4809
    %4894 = vmatpush.msra.mxu0 %v4808
    %4895 = vmatmul.f32.gmra.mxu0 %v4785
    %v4896 = vpop.f32.mrf.mxu0
    %v4897 = vadd.f32 %v4874, %v4896
    %4898 = vmatmul.f32.gmra.mxu0 %v4789
    %v4899 = vpop.f32.mrf.mxu0
    %v4900 = vadd.f32 %v4877, %v4899
    %4901 = vdwg.mxu0
    %4902 = vmatpush.msra.mxu0 %v4839
    %4903 = vmatpush.msra.mxu0 %v4838
    %4904 = vmatpush.msra.mxu0 %v4837
    %4905 = vmatpush.msra.mxu0 %v4836
    %4906 = vmatpush.msra.mxu0 %v4835
    %4907 = vmatpush.msra.mxu0 %v4834
    %4908 = vmatpush.msra.mxu0 %v4833
    %4909 = vmatpush.msra.mxu0 %v4832
    %4910 = vmatpush.msra.mxu0 %v4831
    %4911 = vmatpush.msra.mxu0 %v4830
    %4912 = vmatpush.msra.mxu0 %v4829
    %4913 = vmatpush.msra.mxu0 %v4828
    %4914 = vmatpush.msra.mxu0 %v4827
    %4915 = vmatpush.msra.mxu0 %v4826
    %4916 = vmatpush.msra.mxu0 %v4825
    %4917 = vmatpush.msra.mxu0 %v4824
    %4918 = vmatmul.f32.gmra.mxu0 %v4786
    %v4919 = vpop.f32.mrf.mxu0
    %v4920 = vadd.f32 %v4897, %v4919
    %4921 = vmatmul.f32.gmra.mxu0 %v4790
    %v4922 = vpop.f32.mrf.mxu0
    %v4923 = vadd.f32 %v4900, %v4922
    %4924 = vdwg.mxu0
    %4925 = vmatpush.msra.mxu0 %v4855
    %4926 = vmatpush.msra.mxu0 %v4854
    %4927 = vmatpush.msra.mxu0 %v4853
    %4928 = vmatpush.msra.mxu0 %v4852
    %4929 = vmatpush.msra.mxu0 %v4851
    %4930 = vmatpush.msra.mxu0 %v4850
    %4931 = vmatpush.msra.mxu0 %v4849
    %4932 = vmatpush.msra.mxu0 %v4848
    %4933 = vmatpush.msra.mxu0 %v4847
    %4934 = vmatpush.msra.mxu0 %v4846
    %4935 = vmatpush.msra.mxu0 %v4845
    %4936 = vmatpush.msra.mxu0 %v4844
    %4937 = vmatpush.msra.mxu0 %v4843
    %4938 = vmatpush.msra.mxu0 %v4842
    %4939 = vmatpush.msra.mxu0 %v4841
    %4940 = vmatpush.msra.mxu0 %v4840
    %4941 = vmatmul.f32.gmra.mxu0 %v4787
    %v4942 = vpop.f32.mrf.mxu0
    %v4943 = vadd.f32 %v4920, %v4942
    %4944 = vmatmul.f32.gmra.mxu0 %v4791
    %v4945 = vpop.f32.mrf.mxu0
    %v4946 = vadd.f32 %v4923, %v4945
    %4947 = vdwg.mxu0
    %v4948 = vadd.f32 %v4616, %v4943
    %v4949 = vadd.f32 %v4617, %v4946
    %v4950 = vld [vmem:[%s87] sm:$0x1]
    %v4952 = vperm.slane %v4950, 0
    %v4954 = vadd.f32 %v4948, %v4952
    %v4955 = vadd.f32 %v4949, %v4952
    %4956 = vadd.xlane.f32.xlu0 %v4954
    %v4957 = vpop.xlane.xlu0 %4956
    %4958 = vadd.xlane.f32.xlu0 %v4955
    %v4959 = vpop.xlane.xlu0 %4958
    %v4960 = vmul.f32 %v4957, %v1321
    %v4961 = vmul.f32 %v4959, %v1321
    %v4962 = vsub.f32 %v4954, %v4960
    %v4963 = vsub.f32 %v4955, %v4961
    %v4964 = vmul.f32 %v4962, %v4962
    %v4965 = vmul.f32 %v4963, %v4963
    %4966 = vadd.xlane.f32.xlu0 %v4964
    %v4967 = vpop.xlane.xlu0 %4966
    %4968 = vadd.xlane.f32.xlu0 %v4965
    %v4969 = vpop.xlane.xlu0 %4968
    %v4970 = vmul.f32 %v4967, %v1321
    %v4971 = vmul.f32 %v4969, %v1321
    %v4972 = vadd.f32 %v4970, 1e-05
    %v4973 = vadd.f32 %v4971, 1e-05
    %v4974 = vrsqrt.pop %v4972
    %v4975 = vmul.f32 %v4974, %v4972
    %v4976 = vmul.f32 %v4975, %v4974
    %v4977 = vmul.f32 0.5, %v4976
    %v4978 = vsub.f32 1.5, %v4977
    %v4979 = vmul.f32 %v4974, %v4978
    %vm4980 = vweird.f32 %v4972
    %vm4981 = vweird.f32 %v4974
    %vm4982 = vmor %vm4980, %vm4981
    %v4983 = vsel %vm4982, %v4974, %v4979
    %v4984 = vrsqrt.pop %v4973
    %v4985 = vmul.f32 %v4984, %v4973
    %v4986 = vmul.f32 %v4985, %v4984
    %v4987 = vmul.f32 0.5, %v4986
    %v4988 = vsub.f32 1.5, %v4987
    %v4989 = vmul.f32 %v4984, %v4988
    %vm4990 = vweird.f32 %v4973
    %vm4991 = vweird.f32 %v4984
    %vm4992 = vmor %vm4990, %vm4991
    %v4993 = vsel %vm4992, %v4984, %v4989
    %v4994 = vmul.f32 %v4962, %v4983
    %v4995 = vmul.f32 %v4963, %v4993
    %v4996 = vld [vmem:[%s89] sm:$0x1]
    %v4998 = vperm.slane %v4996, 0
    %v5000 = vmul.f32 %v4994, %v4998
    %v5001 = vmul.f32 %v4995, %v4998
    %v5002 = vld [vmem:[%s91] sm:$0x1]
    %v5004 = vperm.slane %v5002, 0
    %v5006 = vadd.f32 %v5000, %v5004
    %v5007 = vadd.f32 %v5001, %v5004
    %v5008 = vld [vmem:[#allocation26] sm:$0xff]
    %v5009 = vld [vmem:[#allocation26 + $0x8] sm:$0xff]
    %v5010 = vld [vmem:[#allocation26 + $0x10] sm:$0xff]
    %v5011 = vld [vmem:[#allocation26 + $0x18] sm:$0xff]
    %v5012 = vld [vmem:[#allocation26 + $0x20] sm:$0xff]
    %v5013 = vld [vmem:[#allocation26 + $0x28] sm:$0xff]
    %v5014 = vld [vmem:[#allocation26 + $0x30] sm:$0xff]
    %v5015 = vld [vmem:[#allocation26 + $0x38] sm:$0xff]
    %v5016 = vld [vmem:[#allocation26 + $0x40] sm:$0xff]
    %v5017 = vld [vmem:[#allocation26 + $0x48] sm:$0xff]
    %v5018 = vld [vmem:[#allocation26 + $0x50] sm:$0xff]
    %v5019 = vld [vmem:[#allocation26 + $0x58] sm:$0xff]
    %v5020 = vld [vmem:[#allocation26 + $0x60] sm:$0xff]
    %v5021 = vld [vmem:[#allocation26 + $0x68] sm:$0xff]
    %v5022 = vld [vmem:[#allocation26 + $0x70] sm:$0xff]
    %v5023 = vld [vmem:[#allocation26 + $0x78] sm:$0xff]
    %v5024 = vld [vmem:[%s95] sm:$0x1]
    %v5026 = vperm.slane %v5024, 0
    %5028 = vmatpush.msra.mxu0 %v5023
    %5029 = vmatpush.msra.mxu0 %v5022
    %5030 = vmatpush.msra.mxu0 %v5021
    %5031 = vmatpush.msra.mxu0 %v5020
    %5032 = vmatpush.msra.mxu0 %v5019
    %5033 = vmatpush.msra.mxu0 %v5018
    %5034 = vmatpush.msra.mxu0 %v5017
    %5035 = vmatpush.msra.mxu0 %v5016
    %5036 = vmatpush.msra.mxu0 %v5015
    %5037 = vmatpush.msra.mxu0 %v5014
    %5038 = vmatpush.msra.mxu0 %v5013
    %5039 = vmatpush.msra.mxu0 %v5012
    %5040 = vmatpush.msra.mxu0 %v5011
    %5041 = vmatpush.msra.mxu0 %v5010
    %5042 = vmatpush.msra.mxu0 %v5009
    %5043 = vmatpush.msra.mxu0 %v5008
    %5044 = vmatmul.f32.gmra.mxu0 %v5006
    %v5045 = vpop.f32.mrf.mxu0
    %v5046 = vadd.f32 %v5026, %v5045
    %5047 = vmatmul.f32.gmra.mxu0 %v5007
    %v5048 = vpop.f32.mrf.mxu0
    %v5049 = vadd.f32 %v5026, %v5048
    %5050 = vdwg.mxu0
    %5051 = vst [vmem:[#allocation28] sm:$0xff] %v5046
    %5052 = vst [vmem:[#allocation28 + $0x8] sm:$0xff] %v5049
    // Predicated region
    $region258: #{transformer_decoder_forward.1} parent=1 // pred_check
      _
    $region259: #{transformer_decoder_forward.1} parent=1 // pred_check_branch
      %5054 = sbr.rel (0) target = $region261
    $region260: #{transformer_decoder_forward.1} parent=1 // pred_region
      %5056 = vsyncadd [#allocation4], 0
      %s5057 = sshll.u32 [#allocation28], 4
      %s5058 = int_to_ptr.vmem [resolvable:$true] %s5057
      %s5059 = sshll.u32 %s97, 4
      %s5060 = int_to_ptr.hbm [resolvable:$true] %s5059
      %5065 = dma.vmem_to_hbm [thread:$0]  %s5058, 256, %s5060, [#allocation4], 128, 128, 8
    $region261: #{transformer_decoder_forward.1} parent=1 // pred_fallthru
      _
    // Predicated region
    $region262: #{transformer_decoder_forward.1} parent=1 // pred_check
      _
    $region263: #{transformer_decoder_forward.1} parent=1 // pred_check_branch
      %5067 = sbr.rel (0) target = $region265
    $region264: #{transformer_decoder_forward.1} parent=1 // pred_region
      %5069 = dma.done [#allocation4], 256
    $region265: #{transformer_decoder_forward.1} parent=1 // pred_fallthru
      _
    %5070 = vsyncpa [#allocation3], 1
    %5071 = vsyncpa [#allocation6], 1
    %5072 = vsyncpa [#allocation9], 1
    %5073 = vsyncpa [#allocation12], 1
    %5074 = vsyncpa [#allocation15], 1
    %5075 = vsyncpa [#allocation18], 1
    %5076 = vsyncpa [#allocation21], 1
    %5077 = vsyncpa [#allocation24], 1
    %5078 = vsyncpa [#allocation27], 1
    %5079 = vsyncpa [#allocation4], 1

</llo_original>
